<compile_context>
chip_gen: v7x
topology: tpu7x:2x2x1
jax: 0.10.0
libtpu: 0.0.40
codegen_flags: <defaults>
</compile_context>

<pallas_src>
import functools

import jax
import jax.numpy as jnp
from jax import lax
from jax.experimental import pallas as pl
from jax.experimental.pallas import tpu as pltpu


_EDGE_TILE = 512            # edges per scoring tile (multiple of 128)
_VMEM_LIMIT_CACHE = None


def _round_up(x, m):
    return ((x + m - 1) // m) * m


def _vmem_limit_bytes():
    """Generation-aware scoped-VMEM limit (~3/4 of physical, capped at 112 MiB)."""
    global _VMEM_LIMIT_CACHE
    if _VMEM_LIMIT_CACHE is None:
        cap = 64 * 1024 * 1024                      # safe fallback (v7x physical)
        try:
            cap = int(pltpu.get_tpu_info().vmem_capacity_bytes)
        except Exception:
            pass
        _VMEM_LIMIT_CACHE = min((cap * 3) // 4, 112 * 1024 * 1024)
    return _VMEM_LIMIT_CACHE


def _pick_tiles(n):
    """(tm, tk, n_pad): propagation GEMM tiles and the padded node count.

    Bigger tiles -> closer to HBM streaming rate (measured 512-tile ~85% vs
    128-tile ~29% of roofline).  tm is kept small enough that n_pad//tm >= 2 so
    the "parallel" row axis can shard across TensorCores.
    """
    if n >= 2048:
        tm = 512
    elif n >= 512:
        tm = 256
    else:
        tm = 128
    if n >= 8192:
        tk = 2048
    elif n >= 2048:
        tk = 1024
    elif n >= 1024:
        tk = 512
    else:
        tk = 256
    blk = max(tm, tk)
    n_pad = _round_up(max(n, blk), blk)
    return tm, tk, n_pad


def _should_keep_x_resident(n_pad, d):
    """Keep the whole (n_pad, d) bf16 x in VMEM if it fits the budget."""
    x_bytes = 2 * n_pad * d * 2          # conservatively assume double-buffered
    return x_bytes <= _vmem_limit_bytes() // 3


# ----------------------------- propagation kernel ---------------------------

def _layer_kernel(alpha_ref, a_ref, x_ref, out_prev_ref,
                  x_new_ref, out_new_ref, acc_ref, *, tk, x_resident):
    """One LGConv layer + running alpha-weighted sum, tiled over (row, K).

        x_new   = A_norm @ x                (bf16 operands, f32 MXU accumulate)
        out_new = out_prev + alpha * x_new  (f32)
    """
    k = pl.program_id(1)

    @pl.when(k == 0)
    def _():
        acc_ref[...] = jnp.zeros_like(acc_ref)

    if x_resident:
        # x is the full (n_pad, d) VMEM-resident array; slice the K chunk.
        off = pl.multiple_of(k * tk, tk)
        x_blk = x_ref[pl.ds(off, tk), :]
    else:
        x_blk = x_ref[...]

    acc_ref[...] += jnp.dot(a_ref[...], x_blk,
                            preferred_element_type=jnp.float32)

    @pl.when(k == pl.num_programs(1) - 1)
    def _():
        acc = acc_ref[...]
        x_new_ref[...] = acc.astype(x_new_ref.dtype)
        out_new_ref[...] = out_prev_ref[...] + alpha_ref[0] * acc


def _lgconv_layer(a16, x16, out_prev, alpha_i, tm, tk, x_resident):
    """One propagation layer as a tiled Pallas GEMM with fused alpha accumulation."""
    n_pad, d = out_prev.shape
    grid = (n_pad // tm, n_pad // tk)

    if x_resident:
        x_spec = pl.BlockSpec((n_pad, d), lambda i, k: (0, 0))   # resident, no re-stream
    else:
        x_spec = pl.BlockSpec((tk, d), lambda i, k: (k, 0))

    kernel = functools.partial(_layer_kernel, tk=tk, x_resident=x_resident)

    # TODO(synk): optionally add pipeline_mode=pl.Buffered(3) on the A_norm spec
    # for v5e/v6e-class VMEM budgets, and fuse all layers into one pallas_call
    # (ping-pong resident x) for small/medium N.
    x_new, out_new = pl.pallas_call(
        kernel,
        out_shape=(
            jax.ShapeDtypeStruct((n_pad, d), jnp.bfloat16),   # x for the next layer
            jax.ShapeDtypeStruct((n_pad, d), jnp.float32),    # running weighted sum
        ),
        grid_spec=pltpu.PrefetchScalarGridSpec(
            num_scalar_prefetch=0,
            grid=grid,
            in_specs=[
                pl.BlockSpec(memory_space=pltpu.MemorySpace.SMEM),   # alpha (1,)
                pl.BlockSpec((tm, tk), lambda i, k: (i, k)),         # A_norm tile
                x_spec,                                              # x (resident/tile)
                pl.BlockSpec((tm, d), lambda i, k: (i, 0)),          # out_prev tile
            ],
            out_specs=[
                pl.BlockSpec((tm, d), lambda i, k: (i, 0)),          # x_new
                pl.BlockSpec((tm, d), lambda i, k: (i, 0)),          # out_new
            ],
            scratch_shapes=[pltpu.VMEM((tm, d), jnp.float32)],
        ),
        input_output_aliases={3: 1},   # out_prev buffer is reused for out_new
        compiler_params=pltpu.CompilerParams(
            dimension_semantics=("parallel", "arbitrary"),
            vmem_limit_bytes=_vmem_limit_bytes(),
        ),
    )(alpha_i, a16, x16, out_prev)
    return x_new, out_new


# ------------------------- fused gather + edge scoring ----------------------

def _edge_score_kernel(src_idx_ref, dst_idx_ref,   # SMEM scalar-prefetch (E_pad,)
                       out_hbm,                    # (n_pad, d) f32, HBM (pl.ANY)
                       o_ref,                      # (te, 1) f32 output block
                       src_buf, dst_buf, sem):     # VMEM (2, te, d) x2, DMA sems
    """score[e] = <out[src[e]], out[dst[e]]>, rows gathered by manual DMA."""
    i = pl.program_id(0)
    n_tiles = pl.num_programs(0)
    te = src_buf.shape[1]
    slot = i % 2

    def issue(tile, slot_):
        base = tile * te

        def body(e, carry):
            s_row = src_idx_ref[base + e]
            d_row = dst_idx_ref[base + e]
            pltpu.make_async_copy(out_hbm.at[pl.ds(s_row, 1), :],
                                  src_buf.at[slot_, pl.ds(e, 1), :],
                                  sem.at[0, slot_]).start()
            pltpu.make_async_copy(out_hbm.at[pl.ds(d_row, 1), :],
                                  dst_buf.at[slot_, pl.ds(e, 1), :],
                                  sem.at[1, slot_]).start()
            return carry

        lax.fori_loop(0, te, body, 0)

    def wait_all(slot_):
        def body(e, carry):
            pltpu.make_async_copy(out_hbm.at[pl.ds(0, 1), :],
                                  src_buf.at[slot_, pl.ds(e, 1), :],
                                  sem.at[0, slot_]).wait()
            pltpu.make_async_copy(out_hbm.at[pl.ds(0, 1), :],
                                  dst_buf.at[slot_, pl.ds(e, 1), :],
                                  sem.at[1, slot_]).wait()
            return carry

        lax.fori_loop(0, te, body, 0)

    @pl.when(i == 0)
    def _():
        issue(0, 0)                      # prime slot 0

    wait_all(slot)                       # rows for tile i are in slot i%2

    @pl.when(i + 1 < n_tiles)
    def _():
        issue(i + 1, 1 - slot)           # prefetch next tile into the other slot

    prod = src_buf[slot] * dst_buf[slot]                  # (te, d) f32
    o_ref[...] = jnp.sum(prod, axis=1, keepdims=True)     # (te, 1)


def _edge_scores(out_padded, edge_label_index):
    """Fused gather + dot-product scoring; `out_padded` never leaves HBM."""
    n_pad, d = out_padded.shape
    e = edge_label_index.shape[1]
    te = _EDGE_TILE
    e_pad = _round_up(e, te)

    src_idx = edge_label_index[0].astype(jnp.int32)
    dst_idx = edge_label_index[1].astype(jnp.int32)
    if e_pad != e:
        pad = e_pad - e
        src_idx = jnp.pad(src_idx, (0, pad))     # pad with row 0 (valid, discarded)
        dst_idx = jnp.pad(dst_idx, (0, pad))

    # TODO(synk): for very large E, stream the index arrays per tile instead of
    # scalar-prefetching the whole (E_pad,) vectors into SMEM.
    scores = pl.pallas_call(
        _edge_score_kernel,
        out_shape=jax.ShapeDtypeStruct((e_pad, 1), jnp.float32),
        grid_spec=pltpu.PrefetchScalarGridSpec(
            num_scalar_prefetch=2,
            grid=(e_pad // te,),
            in_specs=[pl.BlockSpec(memory_space=pl.ANY)],        # out stays in HBM
            out_specs=pl.BlockSpec((te, 1), lambda i, s, t: (i, 0)),
            scratch_shapes=[
                pltpu.VMEM((2, te, d), jnp.float32),             # src rows (2 slots)
                pltpu.VMEM((2, te, d), jnp.float32),             # dst rows (2 slots)
                pltpu.SemaphoreType.DMA((2, 2)),
            ],
        ),
        compiler_params=pltpu.CompilerParams(
            dimension_semantics=("arbitrary",),   # slots/sems carry across steps
            vmem_limit_bytes=_vmem_limit_bytes(),
        ),
    )(src_idx, dst_idx, out_padded)
    return scores[:e, 0]


# ------------------------------ model wrappers -------------------------------

def prepare_adjacency(a_norm):
    """One-time preprocessing (hoisted out of the forward hot path):
    pad the dense normalized adjacency to the propagation tile and cast to bf16."""
    n = a_norm.shape[0]
    _, _, n_pad = _pick_tiles(n)
    a = a_norm
    if n_pad != n:
        a = jnp.pad(a, ((0, n_pad - n), (0, n_pad - n)))
    return a.astype(jnp.bfloat16)


def _get_embedding_padded(a16, emb0, alpha, x_resident):
    n, d = emb0.shape
    tm, tk, n_pad = _pick_tiles(n)
    assert a16.shape == (n_pad, n_pad), "a16 must come from prepare_adjacency()"

    if x_resident is None:
        x_resident = _should_keep_x_resident(n_pad, d)

    x0 = emb0 if n_pad == n else jnp.pad(emb0, ((0, n_pad - n), (0, 0)))
    x16 = x0.astype(jnp.bfloat16)
    out = x0 * alpha[0]                      # layer-0 term (elementwise glue)

    num_layers = alpha.shape[0] - 1
    for i in range(num_layers):
        x16, out = _lgconv_layer(a16, x16, out, alpha[i + 1:i + 2],
                                 tm, tk, x_resident)
    return out                               # (n_pad, d) f32; padded rows are 0


def lightgcn_get_embedding(a16, emb0, alpha, x_resident=None):
    """Pallas version of LightGCN.get_embedding (dense normalized adjacency)."""
    n = emb0.shape[0]
    return _get_embedding_padded(a16, emb0, alpha, x_resident)[:n]


def lightgcn_forward(a16, emb0, alpha, edge_label_index, x_resident=None):
    """Pallas version of LightGCN.forward (edge_label_index given explicitly)."""
    out = _get_embedding_padded(a16, emb0, alpha, x_resident)
    return _edge_scores(out, edge_label_index)


# --------------------------- reference (pure JAX) ----------------------------

def _reference_forward(a_norm, emb0, alpha, edge_label_index):
    """Reference with the same bf16-operand / f32-accumulate policy as the kernel."""
    a16 = a_norm.astype(jnp.bfloat16)
    x16 = emb0.astype(jnp.bfloat16)
    out = emb0 * alpha[0]
    for i in range(alpha.shape[0] - 1):
        xf = jnp.dot(a16, x16, preferred_element_type=jnp.float32)
        out = out + xf * alpha[i + 1]
        x16 = xf.astype(jnp.bfloat16)
    return (out[edge_label_index[0]] * out[edge_label_index[1]]).sum(-1)


# --------------------------------- main --------------------------------------

if __name__ == "__main__":
    # Small synthetic sizes, but big enough to exercise: multi-tile rows,
    # K-axis accumulation, the resident-x and streamed-x paths, and the
    # double-buffered edge-gather path (2 edge tiles).
    NUM_NODES = 1024         # num_nodes
    EMB_DIM = 128            # embedding_dim
    NUM_LAYERS = 3           # num_layers
    E_HALF = 300             # undirected edges (doubled to make them symmetric)

    key = jax.random.PRNGKey(0)
    k_src, k_dst, k_emb = jax.random.split(key, 3)

    # Symmetric edge_index (2, E).
    src = jax.random.randint(k_src, (E_HALF,), 0, NUM_NODES)
    dst = jax.random.randint(k_dst, (E_HALF,), 0, NUM_NODES)
    edge_index = jnp.stack(
        [jnp.concatenate([src, dst]), jnp.concatenate([dst, src])]
    ).astype(jnp.int32)
    edge_label_index = edge_index   # forward() default when edge_label_index is None

    # Embedding.weight with xavier_uniform_ init (as in reset_parameters).
    bound = (6.0 / (NUM_NODES + EMB_DIM)) ** 0.5
    emb0 = jax.random.uniform(
        k_emb, (NUM_NODES, EMB_DIM), jnp.float32, -bound, bound
    )

    # alpha buffer: 1 / (num_layers + 1) replicated.
    alpha = jnp.full((NUM_LAYERS + 1,), 1.0 / (NUM_LAYERS + 1), jnp.float32)

    # Dense symmetric-normalized adjacency (LGConv's gcn_norm, no self-loops).
    A = jnp.zeros((NUM_NODES, NUM_NODES), jnp.float32).at[
        edge_index[1], edge_index[0]
    ].add(1.0)
    deg = A.sum(axis=1)
    dinv = jnp.where(deg > 0, jax.lax.rsqrt(jnp.maximum(deg, 1e-12)), 0.0)
    a_norm = dinv[:, None] * A * dinv[None, :]

    # One-time preprocessing hoisted out of the forward hot path (bf16 + pad).
    a16 = jax.block_until_ready(prepare_adjacency(a_norm))

    # TODO(synk): predict_link / recommend / BPR & BCE loss heads and the CLIP
    # feature blending are not exercised; only the forward() hot path
    # (propagation + fused edge gather/scoring).

    forward = jax.jit(lightgcn_forward, static_argnames=("x_resident",))

    scores = jax.block_until_ready(forward(a16, emb0, alpha, edge_label_index))
    scores_stream = jax.block_until_ready(
        forward(a16, emb0, alpha, edge_label_index, x_resident=False))

    ref = _reference_forward(a_norm, emb0, alpha, edge_label_index)
    assert scores.shape == (2 * E_HALF,)
    assert jnp.allclose(scores, ref, atol=2e-3, rtol=2e-3), (
        float(jnp.max(jnp.abs(scores - ref))))
    assert jnp.allclose(scores_stream, ref, atol=2e-3, rtol=2e-3), (
        float(jnp.max(jnp.abs(scores_stream - ref))))

    print("KERNEL_OK")
</pallas_src>

<mosaic_0001>
module attributes {stable_mosaic.version = 11 : i64} {
  func.func @_layer_kernel(%arg0: i32, %arg1: i32, %arg2: memref<1xf32, #tpu.memory_space<smem>>, %arg3: memref<256x512xbf16, #tpu.memory_space<vmem>>, %arg4: memref<1024x128xbf16, #tpu.memory_space<vmem>>, %arg5: memref<256x128xf32, #tpu.memory_space<vmem>>, %arg6: memref<256x128xbf16, #tpu.memory_space<vmem>>, %arg7: memref<256x128xf32, #tpu.memory_space<vmem>>, %arg8: memref<256x128xf32, #tpu.memory_space<vmem>>) attributes {dimension_semantics = [#tpu.dimension_semantics<parallel>, #tpu.dimension_semantics<arbitrary>], iteration_bounds = array<i64: 4, 2>, scalar_prefetch = 0 : i64, scratch_operands = 1 : i64, tpu.core_type = #tpu.core_type<tc>, window_params = [{transform_indices = @transform_0, window_bounds = array<i64: 1>}, {transform_indices = @transform_1, window_bounds = array<i64: 256, 512>}, {pipeline_mode = #tpu.pipeline_mode<synchronous>, transform_indices = @transform_2, window_bounds = array<i64: 1024, 128>}, {transform_indices = @transform_3, window_bounds = array<i64: 256, 128>}, {transform_indices = @transform_4, window_bounds = array<i64: 256, 128>}, {transform_indices = @transform_5, window_bounds = array<i64: 256, 128>}]} {
    %c0_i32 = arith.constant 0 : i32
    %0 = arith.cmpi eq, %arg1, %c0_i32 : i32
    %1 = arith.extui %0 : i1 to i32
    %c0_i32_0 = arith.constant 0 : i32
    %2 = arith.cmpi ne, %1, %c0_i32_0 : i32
    scf.if %2 {
      %cst_8 = arith.constant 0.000000e+00 : f32
      %15 = vector.broadcast %cst_8 : f32 to vector<256x128xf32>
      %c0_9 = arith.constant 0 : index
      %c0_10 = arith.constant 0 : index
      %16 = vector.load %arg8[%c0_9, %c0_10] : memref<256x128xf32, #tpu.memory_space<vmem>>, vector<256x128xf32>
      tpu.vector_store %arg8[%c0_9, %c0_10], %15 {strides = array<i32>} : memref<256x128xf32, #tpu.memory_space<vmem>>, vector<256x128xf32>,
    } else {
    }
    %c512_i32 = arith.constant 512 : i32
    %3 = arith.muli %arg1, %c512_i32 : i32
    %4 = tpu.assume_multiple %3, 512 : i32
    %5 = arith.index_cast %4 : i32 to index
    %c0 = arith.constant 0 : index
    %6 = vector.load %arg4[%5, %c0] : memref<1024x128xbf16, #tpu.memory_space<vmem>>, vector<512x128xbf16>
    %c0_1 = arith.constant 0 : index
    %c0_2 = arith.constant 0 : index
    %7 = vector.load %arg8[%c0_1, %c0_2] : memref<256x128xf32, #tpu.memory_space<vmem>>, vector<256x128xf32>
    %c0_3 = arith.constant 0 : index
    %c0_4 = arith.constant 0 : index
    %8 = vector.load %arg3[%c0_3, %c0_4] : memref<256x512xbf16, #tpu.memory_space<vmem>>, vector<256x512xbf16>
    %cst = arith.constant dense<0.000000e+00> : vector<256x128xf32>
    %9 = tpu.matmul %8, %6, %cst {dimension_numbers = #tpu.dot_dimension_numbers<[1], [0], [0], [1], [0, 0, 1, 1], [], []>} : vector<256x512xbf16>, vector<512x128xbf16>, vector<256x128xf32> -> vector<256x128xf32>
    %10 = arith.addf %7, %9 : vector<256x128xf32>
    %c0_5 = arith.constant 0 : index
    %c0_6 = arith.constant 0 : index
    %11 = vector.load %arg8[%c0_5, %c0_6] : memref<256x128xf32, #tpu.memory_space<vmem>>, vector<256x128xf32>
    tpu.vector_store %arg8[%c0_5, %c0_6], %10 {strides = array<i32>} : memref<256x128xf32, #tpu.memory_space<vmem>>, vector<256x128xf32>,
    %c1_i32 = arith.constant 1 : i32
    %12 = arith.cmpi eq, %arg1, %c1_i32 : i32
    %13 = arith.extui %12 : i1 to i32
    %c0_i32_7 = arith.constant 0 : i32
    %14 = arith.cmpi ne, %13, %c0_i32_7 : i32
    scf.if %14 {
      %c0_8 = arith.constant 0 : index
      %c0_9 = arith.constant 0 : index
      %15 = vector.load %arg8[%c0_8, %c0_9] : memref<256x128xf32, #tpu.memory_space<vmem>>, vector<256x128xf32>
      %16 = arith.truncf %15 : vector<256x128xf32> to vector<256x128xbf16>
      %c0_10 = arith.constant 0 : index
      %c0_11 = arith.constant 0 : index
      %17 = vector.load %arg6[%c0_10, %c0_11] : memref<256x128xbf16, #tpu.memory_space<vmem>>, vector<256x128xbf16>
      tpu.vector_store %arg6[%c0_10, %c0_11], %16 {strides = array<i32>} : memref<256x128xbf16, #tpu.memory_space<vmem>>, vector<256x128xbf16>,
      %c0_12 = arith.constant 0 : index
      %c0_13 = arith.constant 0 : index
      %18 = vector.load %arg5[%c0_12, %c0_13] : memref<256x128xf32, #tpu.memory_space<vmem>>, vector<256x128xf32>
      %c0_14 = arith.constant 0 : index
      %19 = memref.load %arg2[%c0_14] : memref<1xf32, #tpu.memory_space<smem>>
      %20 = vector.broadcast %19 : f32 to vector<256x128xf32>
      %21 = arith.mulf %20, %15 : vector<256x128xf32>
      %22 = arith.addf %18, %21 : vector<256x128xf32>
      %c0_15 = arith.constant 0 : index
      %c0_16 = arith.constant 0 : index
      %23 = vector.load %arg7[%c0_15, %c0_16] : memref<256x128xf32, #tpu.memory_space<vmem>>, vector<256x128xf32>
      tpu.vector_store %arg7[%c0_15, %c0_16], %22 {strides = array<i32>} : memref<256x128xf32, #tpu.memory_space<vmem>>, vector<256x128xf32>,
    } else {
    }
    return
  }
  func.func @transform_0(%arg0: i32, %arg1: i32) -> i32 {
    %c0_i32 = arith.constant 0 : i32
    %c0_i32_0 = arith.constant 0 : i32
    return %c0_i32 : i32
  }
  func.func @transform_1(%arg0: i32, %arg1: i32) -> (i32, i32) {
    %c0_i32 = arith.constant 0 : i32
    return %arg0, %arg1 : i32, i32
  }
  func.func @transform_2(%arg0: i32, %arg1: i32) -> (i32, i32) {
    %c0_i32 = arith.constant 0 : i32
    %c0_i32_0 = arith.constant 0 : i32
    %c0_i32_1 = arith.constant 0 : i32
    return %c0_i32, %c0_i32_0 : i32, i32
  }
  func.func @transform_3(%arg0: i32, %arg1: i32) -> (i32, i32) {
    %c0_i32 = arith.constant 0 : i32
    %c0_i32_0 = arith.constant 0 : i32
    return %arg0, %c0_i32 : i32, i32
  }
  func.func @transform_4(%arg0: i32, %arg1: i32) -> (i32, i32) {
    %c0_i32 = arith.constant 0 : i32
    %c0_i32_0 = arith.constant 0 : i32
    return %arg0, %c0_i32 : i32, i32
  }
  func.func @transform_5(%arg0: i32, %arg1: i32) -> (i32, i32) {
    %c0_i32 = arith.constant 0 : i32
    %c0_i32_0 = arith.constant 0 : i32
    return %arg0, %c0_i32 : i32, i32
  }
}

module attributes {stable_mosaic.version = 11 : i64} {
  func.func @_layer_kernel(%arg0: i32, %arg1: i32, %arg2: memref<1xf32, #tpu.memory_space<smem>>, %arg3: memref<256x512xbf16, #tpu.memory_space<vmem>>, %arg4: memref<1024x128xbf16, #tpu.memory_space<vmem>>, %arg5: memref<256x128xf32, #tpu.memory_space<vmem>>, %arg6: memref<256x128xbf16, #tpu.memory_space<vmem>>, %arg7: memref<256x128xf32, #tpu.memory_space<vmem>>, %arg8: memref<256x128xf32, #tpu.memory_space<vmem>>) attributes {dimension_semantics = [#tpu.dimension_semantics<parallel>, #tpu.dimension_semantics<arbitrary>], iteration_bounds = array<i64: 4, 2>, scalar_prefetch = 0 : i64, scratch_operands = 1 : i64, tpu.core_type = #tpu.core_type<tc>, window_params = [{transform_indices = @transform_0, window_bounds = array<i64: 1>}, {transform_indices = @transform_1, window_bounds = array<i64: 256, 512>}, {pipeline_mode = #tpu.pipeline_mode<synchronous>, transform_indices = @transform_2, window_bounds = array<i64: 1024, 128>}, {transform_indices = @transform_3, window_bounds = array<i64: 256, 128>}, {transform_indices = @transform_4, window_bounds = array<i64: 256, 128>}, {transform_indices = @transform_5, window_bounds = array<i64: 256, 128>}]} {
    %c0_i32 = arith.constant 0 : i32
    %0 = arith.cmpi eq, %arg1, %c0_i32 : i32
    %1 = arith.extui %0 : i1 to i32
    %c0_i32_0 = arith.constant 0 : i32
    %2 = arith.cmpi ne, %1, %c0_i32_0 : i32
    scf.if %2 {
      %cst_8 = arith.constant 0.000000e+00 : f32
      %15 = vector.broadcast %cst_8 : f32 to vector<256x128xf32>
      %c0_9 = arith.constant 0 : index
      %c0_10 = arith.constant 0 : index
      %16 = vector.load %arg8[%c0_9, %c0_10] : memref<256x128xf32, #tpu.memory_space<vmem>>, vector<256x128xf32>
      tpu.vector_store %arg8[%c0_9, %c0_10], %15 {strides = array<i32>} : memref<256x128xf32, #tpu.memory_space<vmem>>, vector<256x128xf32>,
    } else {
    }
    %c512_i32 = arith.constant 512 : i32
    %3 = arith.muli %arg1, %c512_i32 : i32
    %4 = tpu.assume_multiple %3, 512 : i32
    %5 = arith.index_cast %4 : i32 to index
    %c0 = arith.constant 0 : index
    %6 = vector.load %arg4[%5, %c0] : memref<1024x128xbf16, #tpu.memory_space<vmem>>, vector<512x128xbf16>
    %c0_1 = arith.constant 0 : index
    %c0_2 = arith.constant 0 : index
    %7 = vector.load %arg8[%c0_1, %c0_2] : memref<256x128xf32, #tpu.memory_space<vmem>>, vector<256x128xf32>
    %c0_3 = arith.constant 0 : index
    %c0_4 = arith.constant 0 : index
    %8 = vector.load %arg3[%c0_3, %c0_4] : memref<256x512xbf16, #tpu.memory_space<vmem>>, vector<256x512xbf16>
    %cst = arith.constant dense<0.000000e+00> : vector<256x128xf32>
    %9 = tpu.matmul %8, %6, %cst {dimension_numbers = #tpu.dot_dimension_numbers<[1], [0], [0], [1], [0, 0, 1, 1], [], []>} : vector<256x512xbf16>, vector<512x128xbf16>, vector<256x128xf32> -> vector<256x128xf32>
    %10 = arith.addf %7, %9 : vector<256x128xf32>
    %c0_5 = arith.constant 0 : index
    %c0_6 = arith.constant 0 : index
    %11 = vector.load %arg8[%c0_5, %c0_6] : memref<256x128xf32, #tpu.memory_space<vmem>>, vector<256x128xf32>
    tpu.vector_store %arg8[%c0_5, %c0_6], %10 {strides = array<i32>} : memref<256x128xf32, #tpu.memory_space<vmem>>, vector<256x128xf32>,
    %c1_i32 = arith.constant 1 : i32
    %12 = arith.cmpi eq, %arg1, %c1_i32 : i32
    %13 = arith.extui %12 : i1 to i32
    %c0_i32_7 = arith.constant 0 : i32
    %14 = arith.cmpi ne, %13, %c0_i32_7 : i32
    scf.if %14 {
      %c0_8 = arith.constant 0 : index
      %c0_9 = arith.constant 0 : index
      %15 = vector.load %arg8[%c0_8, %c0_9] : memref<256x128xf32, #tpu.memory_space<vmem>>, vector<256x128xf32>
      %16 = arith.truncf %15 : vector<256x128xf32> to vector<256x128xbf16>
      %c0_10 = arith.constant 0 : index
      %c0_11 = arith.constant 0 : index
      %17 = vector.load %arg6[%c0_10, %c0_11] : memref<256x128xbf16, #tpu.memory_space<vmem>>, vector<256x128xbf16>
      tpu.vector_store %arg6[%c0_10, %c0_11], %16 {strides = array<i32>} : memref<256x128xbf16, #tpu.memory_space<vmem>>, vector<256x128xbf16>,
      %c0_12 = arith.constant 0 : index
      %c0_13 = arith.constant 0 : index
      %18 = vector.load %arg5[%c0_12, %c0_13] : memref<256x128xf32, #tpu.memory_space<vmem>>, vector<256x128xf32>
      %c0_14 = arith.constant 0 : index
      %19 = memref.load %arg2[%c0_14] : memref<1xf32, #tpu.memory_space<smem>>
      %20 = vector.broadcast %19 : f32 to vector<256x128xf32>
      %21 = arith.mulf %20, %15 : vector<256x128xf32>
      %22 = arith.addf %18, %21 : vector<256x128xf32>
      %c0_15 = arith.constant 0 : index
      %c0_16 = arith.constant 0 : index
      %23 = vector.load %arg7[%c0_15, %c0_16] : memref<256x128xf32, #tpu.memory_space<vmem>>, vector<256x128xf32>
      tpu.vector_store %arg7[%c0_15, %c0_16], %22 {strides = array<i32>} : memref<256x128xf32, #tpu.memory_space<vmem>>, vector<256x128xf32>,
    } else {
    }
    return
  }
  func.func @transform_0(%arg0: i32, %arg1: i32) -> i32 {
    %c0_i32 = arith.constant 0 : i32
    %c0_i32_0 = arith.constant 0 : i32
    return %c0_i32 : i32
  }
  func.func @transform_1(%arg0: i32, %arg1: i32) -> (i32, i32) {
    %c0_i32 = arith.constant 0 : i32
    return %arg0, %arg1 : i32, i32
  }
  func.func @transform_2(%arg0: i32, %arg1: i32) -> (i32, i32) {
    %c0_i32 = arith.constant 0 : i32
    %c0_i32_0 = arith.constant 0 : i32
    %c0_i32_1 = arith.constant 0 : i32
    return %c0_i32, %c0_i32_0 : i32, i32
  }
  func.func @transform_3(%arg0: i32, %arg1: i32) -> (i32, i32) {
    %c0_i32 = arith.constant 0 : i32
    %c0_i32_0 = arith.constant 0 : i32
    return %arg0, %c0_i32 : i32, i32
  }
  func.func @transform_4(%arg0: i32, %arg1: i32) -> (i32, i32) {
    %c0_i32 = arith.constant 0 : i32
    %c0_i32_0 = arith.constant 0 : i32
    return %arg0, %c0_i32 : i32, i32
  }
  func.func @transform_5(%arg0: i32, %arg1: i32) -> (i32, i32) {
    %c0_i32 = arith.constant 0 : i32
    %c0_i32_0 = arith.constant 0 : i32
    return %arg0, %c0_i32 : i32, i32
  }
}

module attributes {stable_mosaic.version = 11 : i64} {
  func.func @_layer_kernel(%arg0: i32, %arg1: i32, %arg2: memref<1xf32, #tpu.memory_space<smem>>, %arg3: memref<256x512xbf16, #tpu.memory_space<vmem>>, %arg4: memref<1024x128xbf16, #tpu.memory_space<vmem>>, %arg5: memref<256x128xf32, #tpu.memory_space<vmem>>, %arg6: memref<256x128xbf16, #tpu.memory_space<vmem>>, %arg7: memref<256x128xf32, #tpu.memory_space<vmem>>, %arg8: memref<256x128xf32, #tpu.memory_space<vmem>>) attributes {dimension_semantics = [#tpu.dimension_semantics<parallel>, #tpu.dimension_semantics<arbitrary>], iteration_bounds = array<i64: 4, 2>, scalar_prefetch = 0 : i64, scratch_operands = 1 : i64, tpu.core_type = #tpu.core_type<tc>, window_params = [{transform_indices = @transform_0, window_bounds = array<i64: 1>}, {transform_indices = @transform_1, window_bounds = array<i64: 256, 512>}, {pipeline_mode = #tpu.pipeline_mode<synchronous>, transform_indices = @transform_2, window_bounds = array<i64: 1024, 128>}, {transform_indices = @transform_3, window_bounds = array<i64: 256, 128>}, {transform_indices = @transform_4, window_bounds = array<i64: 256, 128>}, {transform_indices = @transform_5, window_bounds = array<i64: 256, 128>}]} {
    %c0_i32 = arith.constant 0 : i32
    %0 = arith.cmpi eq, %arg1, %c0_i32 : i32
    %1 = arith.extui %0 : i1 to i32
    %c0_i32_0 = arith.constant 0 : i32
    %2 = arith.cmpi ne, %1, %c0_i32_0 : i32
    scf.if %2 {
      %cst_8 = arith.constant 0.000000e+00 : f32
      %15 = vector.broadcast %cst_8 : f32 to vector<256x128xf32>
      %c0_9 = arith.constant 0 : index
      %c0_10 = arith.constant 0 : index
      %16 = vector.load %arg8[%c0_9, %c0_10] : memref<256x128xf32, #tpu.memory_space<vmem>>, vector<256x128xf32>
      tpu.vector_store %arg8[%c0_9, %c0_10], %15 {strides = array<i32>} : memref<256x128xf32, #tpu.memory_space<vmem>>, vector<256x128xf32>,
    } else {
    }
    %c512_i32 = arith.constant 512 : i32
    %3 = arith.muli %arg1, %c512_i32 : i32
    %4 = tpu.assume_multiple %3, 512 : i32
    %5 = arith.index_cast %4 : i32 to index
    %c0 = arith.constant 0 : index
    %6 = vector.load %arg4[%5, %c0] : memref<1024x128xbf16, #tpu.memory_space<vmem>>, vector<512x128xbf16>
    %c0_1 = arith.constant 0 : index
    %c0_2 = arith.constant 0 : index
    %7 = vector.load %arg8[%c0_1, %c0_2] : memref<256x128xf32, #tpu.memory_space<vmem>>, vector<256x128xf32>
    %c0_3 = arith.constant 0 : index
    %c0_4 = arith.constant 0 : index
    %8 = vector.load %arg3[%c0_3, %c0_4] : memref<256x512xbf16, #tpu.memory_space<vmem>>, vector<256x512xbf16>
    %cst = arith.constant dense<0.000000e+00> : vector<256x128xf32>
    %9 = tpu.matmul %8, %6, %cst {dimension_numbers = #tpu.dot_dimension_numbers<[1], [0], [0], [1], [0, 0, 1, 1], [], []>} : vector<256x512xbf16>, vector<512x128xbf16>, vector<256x128xf32> -> vector<256x128xf32>
    %10 = arith.addf %7, %9 : vector<256x128xf32>
    %c0_5 = arith.constant 0 : index
    %c0_6 = arith.constant 0 : index
    %11 = vector.load %arg8[%c0_5, %c0_6] : memref<256x128xf32, #tpu.memory_space<vmem>>, vector<256x128xf32>
    tpu.vector_store %arg8[%c0_5, %c0_6], %10 {strides = array<i32>} : memref<256x128xf32, #tpu.memory_space<vmem>>, vector<256x128xf32>,
    %c1_i32 = arith.constant 1 : i32
    %12 = arith.cmpi eq, %arg1, %c1_i32 : i32
    %13 = arith.extui %12 : i1 to i32
    %c0_i32_7 = arith.constant 0 : i32
    %14 = arith.cmpi ne, %13, %c0_i32_7 : i32
    scf.if %14 {
      %c0_8 = arith.constant 0 : index
      %c0_9 = arith.constant 0 : index
      %15 = vector.load %arg8[%c0_8, %c0_9] : memref<256x128xf32, #tpu.memory_space<vmem>>, vector<256x128xf32>
      %16 = arith.truncf %15 : vector<256x128xf32> to vector<256x128xbf16>
      %c0_10 = arith.constant 0 : index
      %c0_11 = arith.constant 0 : index
      %17 = vector.load %arg6[%c0_10, %c0_11] : memref<256x128xbf16, #tpu.memory_space<vmem>>, vector<256x128xbf16>
      tpu.vector_store %arg6[%c0_10, %c0_11], %16 {strides = array<i32>} : memref<256x128xbf16, #tpu.memory_space<vmem>>, vector<256x128xbf16>,
      %c0_12 = arith.constant 0 : index
      %c0_13 = arith.constant 0 : index
      %18 = vector.load %arg5[%c0_12, %c0_13] : memref<256x128xf32, #tpu.memory_space<vmem>>, vector<256x128xf32>
      %c0_14 = arith.constant 0 : index
      %19 = memref.load %arg2[%c0_14] : memref<1xf32, #tpu.memory_space<smem>>
      %20 = vector.broadcast %19 : f32 to vector<256x128xf32>
      %21 = arith.mulf %20, %15 : vector<256x128xf32>
      %22 = arith.addf %18, %21 : vector<256x128xf32>
      %c0_15 = arith.constant 0 : index
      %c0_16 = arith.constant 0 : index
      %23 = vector.load %arg7[%c0_15, %c0_16] : memref<256x128xf32, #tpu.memory_space<vmem>>, vector<256x128xf32>
      tpu.vector_store %arg7[%c0_15, %c0_16], %22 {strides = array<i32>} : memref<256x128xf32, #tpu.memory_space<vmem>>, vector<256x128xf32>,
    } else {
    }
    return
  }
  func.func @transform_0(%arg0: i32, %arg1: i32) -> i32 {
    %c0_i32 = arith.constant 0 : i32
    %c0_i32_0 = arith.constant 0 : i32
    return %c0_i32 : i32
  }
  func.func @transform_1(%arg0: i32, %arg1: i32) -> (i32, i32) {
    %c0_i32 = arith.constant 0 : i32
    return %arg0, %arg1 : i32, i32
  }
  func.func @transform_2(%arg0: i32, %arg1: i32) -> (i32, i32) {
    %c0_i32 = arith.constant 0 : i32
    %c0_i32_0 = arith.constant 0 : i32
    %c0_i32_1 = arith.constant 0 : i32
    return %c0_i32, %c0_i32_0 : i32, i32
  }
  func.func @transform_3(%arg0: i32, %arg1: i32) -> (i32, i32) {
    %c0_i32 = arith.constant 0 : i32
    %c0_i32_0 = arith.constant 0 : i32
    return %arg0, %c0_i32 : i32, i32
  }
  func.func @transform_4(%arg0: i32, %arg1: i32) -> (i32, i32) {
    %c0_i32 = arith.constant 0 : i32
    %c0_i32_0 = arith.constant 0 : i32
    return %arg0, %c0_i32 : i32, i32
  }
  func.func @transform_5(%arg0: i32, %arg1: i32) -> (i32, i32) {
    %c0_i32 = arith.constant 0 : i32
    %c0_i32_0 = arith.constant 0 : i32
    return %arg0, %c0_i32 : i32, i32
  }
}

module attributes {stable_mosaic.version = 11 : i64} {
  func.func @_edge_score_kernel(%arg0: i32, %arg1: memref<1024xi32, #tpu.memory_space<smem>>, %arg2: memref<1024xi32, #tpu.memory_space<smem>>, %arg3: memref<1024x128xf32, #tpu.memory_space<any>>, %arg4: memref<512x1xf32, #tpu.memory_space<vmem>>, %arg5: memref<2x512x128xf32, #tpu.memory_space<vmem>>, %arg6: memref<2x512x128xf32, #tpu.memory_space<vmem>>, %arg7: memref<2x2x!tpu.dma_semaphore, #tpu.memory_space<semaphore_mem>>) attributes {dimension_semantics = [#tpu.dimension_semantics<arbitrary>], iteration_bounds = array<i64: 2>, scalar_prefetch = 2 : i64, scratch_operands = 3 : i64, tpu.core_type = #tpu.core_type<tc>, window_params = [{}, {transform_indices = @transform_1, window_bounds = array<i64: 512, 1>}]} {
    %c2_i32 = arith.constant 2 : i32
    %c0_i32 = arith.constant 0 : i32
    %0 = arith.cmpi eq, %c2_i32, %c0_i32 : i32
    %c1_i32 = arith.constant 1 : i32
    %1 = arith.select %0, %c1_i32, %c2_i32 : i32
    %2 = arith.remsi %arg0, %1 : i32
    %c0_i32_0 = arith.constant 0 : i32
    %3 = arith.cmpi ne, %2, %c0_i32_0 : i32
    %c0_i32_1 = arith.constant 0 : i32
    %4 = arith.cmpi slt, %2, %c0_i32_1 : i32
    %c0_i32_2 = arith.constant 0 : i32
    %5 = arith.cmpi slt, %1, %c0_i32_2 : i32
    %6 = arith.xori %4, %5 : i1
    %7 = arith.andi %6, %3 : i1
    %8 = arith.addi %2, %1 : i32
    %9 = arith.select %7, %8, %2 : i32
    %c0_i32_3 = arith.constant 0 : i32
    %10 = arith.cmpi eq, %arg0, %c0_i32_3 : i32
    %11 = arith.extui %10 : i1 to i32
    %c0_i32_4 = arith.constant 0 : i32
    %12 = arith.cmpi ne, %11, %c0_i32_4 : i32
    scf.if %12 {
      %c0_i32_16 = arith.constant 0 : i32
      %c512_i32_17 = arith.constant 512 : i32
      %28 = arith.addi %c0_i32_16, %c512_i32_17 : i32
      %c1_i32_18 = arith.constant 1 : i32
      scf.for %arg8 = %c0_i32_16 to %28 step %c1_i32_18  : i32 {
        %c0_i32_20 = arith.constant 0 : i32
        %29 = arith.addi %c0_i32_20, %arg8 : i32
        %30 = arith.index_cast %29 : i32 to index
        %31 = memref.load %arg1[%30] : memref<1024xi32, #tpu.memory_space<smem>>
        %c0_i32_21 = arith.constant 0 : i32
        %32 = arith.addi %c0_i32_21, %arg8 : i32
        %33 = arith.index_cast %32 : i32 to index
        %34 = memref.load %arg2[%33] : memref<1024xi32, #tpu.memory_space<smem>>
        %c0_i32_22 = arith.constant 0 : i32
        %c0_i32_23 = arith.constant 0 : i32
        %c0_i32_24 = arith.constant 0 : i32
        %c0_i32_25 = arith.constant 0 : i32
        %35 = tpu.memref_slice %arg3[%31, %c0_i32_25] : memref<1024x128xf32, #tpu.memory_space<any>> -> memref<1x128xf32, #tpu.memory_space<any>>
        %c0_i32_26 = arith.constant 0 : i32
        %36 = tpu.memref_slice %arg5[%c0_i32_22, %arg8, %c0_i32_26] : memref<2x512x128xf32, #tpu.memory_space<vmem>> -> memref<1x1x128xf32, #tpu.memory_space<vmem>>
        %37 = tpu.memref_squeeze %36 : memref<1x1x128xf32, #tpu.memory_space<vmem>> -> memref<1x128xf32, #tpu.memory_space<vmem>>
        %38 = tpu.memref_slice %arg7[%c0_i32_23, %c0_i32_24] : memref<2x2x!tpu.dma_semaphore, #tpu.memory_space<semaphore_mem>> -> memref<1x1x!tpu.dma_semaphore, #tpu.memory_space<semaphore_mem>>
        %39 = tpu.memref_squeeze %38 : memref<1x1x!tpu.dma_semaphore, #tpu.memory_space<semaphore_mem>> -> memref<!tpu.dma_semaphore, #tpu.memory_space<semaphore_mem>>
        tpu.enqueue_dma source(%35 : memref<1x128xf32, #tpu.memory_space<any>>) target(%37 : memref<1x128xf32, #tpu.memory_space<vmem>>) target_semaphore(%39 : memref<!tpu.dma_semaphore, #tpu.memory_space<semaphore_mem>>)
        %c0_i32_27 = arith.constant 0 : i32
        %c1_i32_28 = arith.constant 1 : i32
        %c0_i32_29 = arith.constant 0 : i32
        %c0_i32_30 = arith.constant 0 : i32
        %40 = tpu.memref_slice %arg3[%34, %c0_i32_30] : memref<1024x128xf32, #tpu.memory_space<any>> -> memref<1x128xf32, #tpu.memory_space<any>>
        %c0_i32_31 = arith.constant 0 : i32
        %41 = tpu.memref_slice %arg6[%c0_i32_27, %arg8, %c0_i32_31] : memref<2x512x128xf32, #tpu.memory_space<vmem>> -> memref<1x1x128xf32, #tpu.memory_space<vmem>>
        %42 = tpu.memref_squeeze %41 : memref<1x1x128xf32, #tpu.memory_space<vmem>> -> memref<1x128xf32, #tpu.memory_space<vmem>>
        %43 = tpu.memref_slice %arg7[%c1_i32_28, %c0_i32_29] : memref<2x2x!tpu.dma_semaphore, #tpu.memory_space<semaphore_mem>> -> memref<1x1x!tpu.dma_semaphore, #tpu.memory_space<semaphore_mem>>
        %44 = tpu.memref_squeeze %43 : memref<1x1x!tpu.dma_semaphore, #tpu.memory_space<semaphore_mem>> -> memref<!tpu.dma_semaphore, #tpu.memory_space<semaphore_mem>>
        tpu.enqueue_dma source(%40 : memref<1x128xf32, #tpu.memory_space<any>>) target(%42 : memref<1x128xf32, #tpu.memory_space<vmem>>) target_semaphore(%44 : memref<!tpu.dma_semaphore, #tpu.memory_space<semaphore_mem>>)
      }
      %c512_i32_19 = arith.constant 512 : i32
    } else {
    }
    %c0_i32_5 = arith.constant 0 : i32
    %c512_i32 = arith.constant 512 : i32
    %13 = arith.addi %c0_i32_5, %c512_i32 : i32
    %c1_i32_6 = arith.constant 1 : i32
    scf.for %arg8 = %c0_i32_5 to %13 step %c1_i32_6  : i32 {
      %c0_i32_16 = arith.constant 0 : i32
      %c0_i32_17 = arith.constant 0 : i32
      %c0_i32_18 = arith.constant 0 : i32
      %28 = tpu.memref_slice %arg3[%c0_i32_17, %c0_i32_18] : memref<1024x128xf32, #tpu.memory_space<any>> -> memref<1x128xf32, #tpu.memory_space<any>>
      %c0_i32_19 = arith.constant 0 : i32
      %29 = tpu.memref_slice %arg5[%9, %arg8, %c0_i32_19] : memref<2x512x128xf32, #tpu.memory_space<vmem>> -> memref<1x1x128xf32, #tpu.memory_space<vmem>>
      %30 = tpu.memref_squeeze %29 : memref<1x1x128xf32, #tpu.memory_space<vmem>> -> memref<1x128xf32, #tpu.memory_space<vmem>>
      %31 = tpu.memref_slice %arg7[%c0_i32_16, %9] : memref<2x2x!tpu.dma_semaphore, #tpu.memory_space<semaphore_mem>> -> memref<1x1x!tpu.dma_semaphore, #tpu.memory_space<semaphore_mem>>
      %32 = tpu.memref_squeeze %31 : memref<1x1x!tpu.dma_semaphore, #tpu.memory_space<semaphore_mem>> -> memref<!tpu.dma_semaphore, #tpu.memory_space<semaphore_mem>>
      tpu.wait_dma2 semaphore(%32 : memref<!tpu.dma_semaphore, #tpu.memory_space<semaphore_mem>>) src(%28 : memref<1x128xf32, #tpu.memory_space<any>>) dst(%30 : memref<1x128xf32, #tpu.memory_space<vmem>>)
      %c1_i32_20 = arith.constant 1 : i32
      %c0_i32_21 = arith.constant 0 : i32
      %c0_i32_22 = arith.constant 0 : i32
      %33 = tpu.memref_slice %arg3[%c0_i32_21, %c0_i32_22] : memref<1024x128xf32, #tpu.memory_space<any>> -> memref<1x128xf32, #tpu.memory_space<any>>
      %c0_i32_23 = arith.constant 0 : i32
      %34 = tpu.memref_slice %arg6[%9, %arg8, %c0_i32_23] : memref<2x512x128xf32, #tpu.memory_space<vmem>> -> memref<1x1x128xf32, #tpu.memory_space<vmem>>
      %35 = tpu.memref_squeeze %34 : memref<1x1x128xf32, #tpu.memory_space<vmem>> -> memref<1x128xf32, #tpu.memory_space<vmem>>
      %36 = tpu.memref_slice %arg7[%c1_i32_20, %9] : memref<2x2x!tpu.dma_semaphore, #tpu.memory_space<semaphore_mem>> -> memref<1x1x!tpu.dma_semaphore, #tpu.memory_space<semaphore_mem>>
      %37 = tpu.memref_squeeze %36 : memref<1x1x!tpu.dma_semaphore, #tpu.memory_space<semaphore_mem>> -> memref<!tpu.dma_semaphore, #tpu.memory_space<semaphore_mem>>
      tpu.wait_dma2 semaphore(%37 : memref<!tpu.dma_semaphore, #tpu.memory_space<semaphore_mem>>) src(%33 : memref<1x128xf32, #tpu.memory_space<any>>) dst(%35 : memref<1x128xf32, #tpu.memory_space<vmem>>)
    }
    %c512_i32_7 = arith.constant 512 : i32
    %c1_i32_8 = arith.constant 1 : i32
    %14 = arith.addi %arg0, %c1_i32_8 : i32
    %c2_i32_9 = arith.constant 2 : i32
    %15 = arith.cmpi slt, %14, %c2_i32_9 : i32
    %16 = arith.extui %15 : i1 to i32
    %c0_i32_10 = arith.constant 0 : i32
    %17 = arith.cmpi ne, %16, %c0_i32_10 : i32
    scf.if %17 {
      %c1_i32_16 = arith.constant 1 : i32
      %28 = arith.addi %arg0, %c1_i32_16 : i32
      %c1_i32_17 = arith.constant 1 : i32
      %29 = arith.subi %c1_i32_17, %9 : i32
      %c512_i32_18 = arith.constant 512 : i32
      %30 = arith.muli %28, %c512_i32_18 : i32
      %c0_i32_19 = arith.constant 0 : i32
      %c512_i32_20 = arith.constant 512 : i32
      %31 = arith.addi %c0_i32_19, %c512_i32_20 : i32
      %c1_i32_21 = arith.constant 1 : i32
      scf.for %arg8 = %c0_i32_19 to %31 step %c1_i32_21  : i32 {
        %32 = arith.addi %30, %arg8 : i32
        %33 = arith.index_cast %32 : i32 to index
        %34 = memref.load %arg1[%33] : memref<1024xi32, #tpu.memory_space<smem>>
        %35 = arith.addi %30, %arg8 : i32
        %36 = arith.index_cast %35 : i32 to index
        %37 = memref.load %arg2[%36] : memref<1024xi32, #tpu.memory_space<smem>>
        %c0_i32_23 = arith.constant 0 : i32
        %c0_i32_24 = arith.constant 0 : i32
        %38 = tpu.memref_slice %arg3[%34, %c0_i32_24] : memref<1024x128xf32, #tpu.memory_space<any>> -> memref<1x128xf32, #tpu.memory_space<any>>
        %c0_i32_25 = arith.constant 0 : i32
        %39 = tpu.memref_slice %arg5[%29, %arg8, %c0_i32_25] : memref<2x512x128xf32, #tpu.memory_space<vmem>> -> memref<1x1x128xf32, #tpu.memory_space<vmem>>
        %40 = tpu.memref_squeeze %39 : memref<1x1x128xf32, #tpu.memory_space<vmem>> -> memref<1x128xf32, #tpu.memory_space<vmem>>
        %41 = tpu.memref_slice %arg7[%c0_i32_23, %29] : memref<2x2x!tpu.dma_semaphore, #tpu.memory_space<semaphore_mem>> -> memref<1x1x!tpu.dma_semaphore, #tpu.memory_space<semaphore_mem>>
        %42 = tpu.memref_squeeze %41 : memref<1x1x!tpu.dma_semaphore, #tpu.memory_space<semaphore_mem>> -> memref<!tpu.dma_semaphore, #tpu.memory_space<semaphore_mem>>
        tpu.enqueue_dma source(%38 : memref<1x128xf32, #tpu.memory_space<any>>) target(%40 : memref<1x128xf32, #tpu.memory_space<vmem>>) target_semaphore(%42 : memref<!tpu.dma_semaphore, #tpu.memory_space<semaphore_mem>>)
        %c1_i32_26 = arith.constant 1 : i32
        %c0_i32_27 = arith.constant 0 : i32
        %43 = tpu.memref_slice %arg3[%37, %c0_i32_27] : memref<1024x128xf32, #tpu.memory_space<any>> -> memref<1x128xf32, #tpu.memory_space<any>>
        %c0_i32_28 = arith.constant 0 : i32
        %44 = tpu.memref_slice %arg6[%29, %arg8, %c0_i32_28] : memref<2x512x128xf32, #tpu.memory_space<vmem>> -> memref<1x1x128xf32, #tpu.memory_space<vmem>>
        %45 = tpu.memref_squeeze %44 : memref<1x1x128xf32, #tpu.memory_space<vmem>> -> memref<1x128xf32, #tpu.memory_space<vmem>>
        %46 = tpu.memref_slice %arg7[%c1_i32_26, %29] : memref<2x2x!tpu.dma_semaphore, #tpu.memory_space<semaphore_mem>> -> memref<1x1x!tpu.dma_semaphore, #tpu.memory_space<semaphore_mem>>
        %47 = tpu.memref_squeeze %46 : memref<1x1x!tpu.dma_semaphore, #tpu.memory_space<semaphore_mem>> -> memref<!tpu.dma_semaphore, #tpu.memory_space<semaphore_mem>>
        tpu.enqueue_dma source(%43 : memref<1x128xf32, #tpu.memory_space<any>>) target(%45 : memref<1x128xf32, #tpu.memory_space<vmem>>) target_semaphore(%47 : memref<!tpu.dma_semaphore, #tpu.memory_space<semaphore_mem>>)
      }
      %c512_i32_22 = arith.constant 512 : i32
    } else {
    }
    %18 = arith.index_cast %9 : i32 to index
    %c0 = arith.constant 0 : index
    %c0_11 = arith.constant 0 : index
    %19 = vector.load %arg5[%18, %c0, %c0_11] : memref<2x512x128xf32, #tpu.memory_space<vmem>>, vector<1x512x128xf32>
    %20 = vector.shape_cast %19 : vector<1x512x128xf32> to vector<512x128xf32>
    %21 = arith.index_cast %9 : i32 to index
    %c0_12 = arith.constant 0 : index
    %c0_13 = arith.constant 0 : index
    %22 = vector.load %arg6[%21, %c0_12, %c0_13] : memref<2x512x128xf32, #tpu.memory_space<vmem>>, vector<1x512x128xf32>
    %23 = vector.shape_cast %22 : vector<1x512x128xf32> to vector<512x128xf32>
    %24 = arith.mulf %20, %23 : vector<512x128xf32>
    %cst = arith.constant dense<0.000000e+00> : vector<512xf32>
    %25 = vector.multi_reduction <add>, %24, %cst [1] : vector<512x128xf32> to vector<512xf32>
    %26 = vector.shape_cast %25 : vector<512xf32> to vector<512x1xf32>
    %c0_14 = arith.constant 0 : index
    %c0_15 = arith.constant 0 : index
    %27 = vector.load %arg4[%c0_14, %c0_15] : memref<512x1xf32, #tpu.memory_space<vmem>>, vector<512x1xf32>
    tpu.vector_store %arg4[%c0_14, %c0_15], %26 {strides = array<i32>} : memref<512x1xf32, #tpu.memory_space<vmem>>, vector<512x1xf32>,
    return
  }
  func.func @transform_1(%arg0: i32, %arg1: memref<1024xi32, #tpu.memory_space<smem>>, %arg2: memref<1024xi32, #tpu.memory_space<smem>>) -> (i32, i32) {
    %c0_i32 = arith.constant 0 : i32
    %c0_i32_0 = arith.constant 0 : i32
    return %arg0, %c0_i32 : i32, i32
  }
}

</mosaic_0001>

<llo_original>
// kernel: lightgcn_forward.4
$region0: #{lightgcn_forward.4}
  #allocation0 [shape = 'u32[]', space=smem, size = 0x4, offset = 0x4, fixed_abs, tag = 'smem constant byte address 0x4 - core index']
  #allocation1 [shape = 'u32[144,128]{1,0:T(1,128)}', space=vmem, size = 0x12000, scoped, tag = 'internal scratch']
  #allocation2 [shape = 'f32[256,128]{1,0:T(8,128)}', space=vmem, size = 0x20000, scoped, tag = 'scratch operand']
  #allocation3 [shape = 'f32[1]{0:T(128)S(6)}', space=smem, size = 0x200, scoped, tag = 'scoped memory for lightgcn_forward.4']
  %s0 = inlined_call_operand.<no memory space> [shape: f32[1], index: 0, kind: input, shape index: {}]
  %s1 = inlined_call_operand.hbm [shape: bf16[1024,1024], index: 1, kind: input, shape index: {}]
  %s2 = inlined_call_operand.vmem [shape: bf16[1024,128], index: 2, kind: input, shape index: {}]
  %s3 = inlined_call_operand.vmem [shape: f32[1024,128], index: 3, kind: input, shape index: {}, may-alias: {3,5}]
  %s4 = inlined_call_operand.vmem [shape: bf16[1024,128], index: 4, kind: output, shape index: {0}]
  %s5 = inlined_call_operand.vmem [shape: f32[1024,128], index: 5, kind: output, shape index: {1}, may-alias: {3,5}]
  %6 = xla_tuple %s4, %s5
  %s7 = sld [smem:[#allocation0]]
  $region69: #{lightgcn_forward.4} parent=0
    _
  %s9 = ssub.s32 1, %s7
  %s10 = scalar_select 0, %s9, %s7
  %11 = sst [smem:[#allocation3]] %s0
  $region1: #{lightgcn_forward.4} parent=0
    #allocation4 [shape = 'u8[524288]{0}', space=vmem, size = 0x80000, scoped, tag = 'input window, operand 1']
    #allocation5 [shape = 's32[2]{0}', space=sflag, size = 0x8, scoped, tag = 'scoped memory for lightgcn_forward.4']
    %12 = vsyncpa [#allocation5], 0
    %s13 = scalar_lea.sflag [#allocation5], 1
    %14 = vsyncpa %s13, 0
    loop: start=0, step=1, limit=10
    $region2: #{lightgcn_forward.4} parent=1 // loop_pre_header
      _
    $region3: #{lightgcn_forward.4} parent=1 // loop_header
      %s16 = sphi 0, %s20
      %p17 = scmp.ge.s32.totalorder %s16, 10
      %s23 = sphi 0, %s35
      %s24 = sphi 0, %s31
      %s25 = sphi 0, %s23
      %s26 = sphi 0, %s24
      %s27 = sphi 0, %s25
      %s28 = sphi 0, %s26
      %s36 = sphi 0, %s36
      %s38 = sphi 0, %s36
      %s39 = sphi 0, %s38
      %s53 = sphi 0, %s39
      %s61 = sphi 0, %s63
      %s64 = sphi 0, %s61
      %s65 = sphi 0, %s64
      %s81 = sphi 0, %s65
      %s85 = sphi 0, %s85
      %s87 = sphi 0, %s85
      %s88 = sphi 0, %s87
      %s102 = sphi 0, %s88
      %s108 = sphi 0, %s110
      %s111 = sphi 0, %s108
      %s112 = sphi 0, %s111
      %s128 = sphi 0, %s112
      %s134 = sphi 0, %s136
      %s137 = sphi 0, %s134
      %s138 = sphi 0, %s137
      %s154 = sphi 0, %s138
      %s160 = sphi 0, %s162
      %s163 = sphi 0, %s160
      %s164 = sphi 0, %s163
      %s180 = sphi 0, %s164
    $region4: #{lightgcn_forward.4} parent=1 // loop_header_branch
      %19 = sbr.rel (%p17) target = $region8
    $region5: #{lightgcn_forward.4} parent=1 // loop_body
      %s21 = ssub.s32 %s16, 1
      %s22 = ssub.s32 %s16, 2
      %s29 = sadd.s32 1, %s24
      %p30 = scmp.ge.s32.totalorder %s29, 2
      %s31 = scalar_select %p30, 0, %s29
      %s32 = sadd.s32 1, %s23
      %s33 = scalar_select %p30, %s32, %s23
      %p34 = scmp.ge.s32.totalorder %s33, 4
      %s35 = scalar_select %p34, 0, %s33
      %s37 = sadd.s32 %s36, 1
      %p40 = scmp.eq.s32.totalorder %s16, 7
      %p41 = scmp.ne.s32.totalorder %s36, %s38
      %p42 = scmp.eq.s32.totalorder %s16, 0
      %p43 = por %p41, %p42
      %p44 = scmp.ne.s32.totalorder %s36, %s38
      %p45 = scmp.eq.s32.totalorder %s21, 7
      %p46 = por %p44, %p45
      %p47 = scmp.ne.s32.totalorder %s38, %s39
      %p48 = scmp.eq.s32.totalorder %s21, 0
      %p49 = por %p47, %p48
      %p50 = scmp.ne.s32.totalorder %s38, %s39
      %p51 = scmp.eq.s32.totalorder %s22, 7
      %p52 = por %p50, %p51
      %p54 = scmp.ne.s32.totalorder %s39, %s53
      %p55 = scmp.eq.s32.totalorder %s22, 0
      %p56 = por %p54, %p55
      %s57 = ssub.s32 %s23, %s35
      %s58 = ssub.s32 %s24, %s31
      %s59 = sor.u32 %s57, %s58
      %p60 = scmp.eq.s32.totalorder %s59, 0
      %s62 = sadd.s32 %s61, 1
      %s63 = scalar_select %p60, %s61, %s62
      %p66 = pneg %p60
      %p67 = scmp.eq.s32.totalorder %s16, 7
      %p68 = por %p66, %p67
      %p69 = scmp.ne.s32.totalorder %s61, %s64
      %p70 = scmp.eq.s32.totalorder %s16, 0
      %p71 = por %p69, %p70
      %p72 = scmp.ne.s32.totalorder %s61, %s64
      %p73 = scmp.eq.s32.totalorder %s21, 7
      %p74 = por %p72, %p73
      %p75 = scmp.ne.s32.totalorder %s64, %s65
      %p76 = scmp.eq.s32.totalorder %s21, 0
      %p77 = por %p75, %p76
      %p78 = scmp.ne.s32.totalorder %s64, %s65
      %p79 = scmp.eq.s32.totalorder %s22, 7
      %p80 = por %p78, %p79
      %p82 = scmp.ne.s32.totalorder %s65, %s81
      %p83 = scmp.eq.s32.totalorder %s22, 0
      %p84 = por %p82, %p83
      %s86 = sadd.s32 %s85, 1
      %p89 = scmp.eq.s32.totalorder %s16, 7
      %p90 = scmp.ne.s32.totalorder %s85, %s87
      %p91 = scmp.eq.s32.totalorder %s16, 0
      %p92 = por %p90, %p91
      %p93 = scmp.ne.s32.totalorder %s85, %s87
      %p94 = scmp.eq.s32.totalorder %s21, 7
      %p95 = por %p93, %p94
      %p96 = scmp.ne.s32.totalorder %s87, %s88
      %p97 = scmp.eq.s32.totalorder %s21, 0
      %p98 = por %p96, %p97
      %p99 = scmp.ne.s32.totalorder %s87, %s88
      %p100 = scmp.eq.s32.totalorder %s22, 7
      %p101 = por %p99, %p100
      %p103 = scmp.ne.s32.totalorder %s88, %s102
      %p104 = scmp.eq.s32.totalorder %s22, 0
      %p105 = por %p103, %p104
      %s106 = ssub.s32 %s23, %s35
      %p107 = scmp.eq.s32.totalorder %s106, 0
      %s109 = sadd.s32 %s108, 1
      %s110 = scalar_select %p107, %s108, %s109
      %p113 = pneg %p107
      %p114 = scmp.eq.s32.totalorder %s16, 7
      %p115 = por %p113, %p114
      %p116 = scmp.ne.s32.totalorder %s108, %s111
      %p117 = scmp.eq.s32.totalorder %s16, 0
      %p118 = por %p116, %p117
      %p119 = scmp.ne.s32.totalorder %s108, %s111
      %p120 = scmp.eq.s32.totalorder %s21, 7
      %p121 = por %p119, %p120
      %p122 = scmp.ne.s32.totalorder %s111, %s112
      %p123 = scmp.eq.s32.totalorder %s21, 0
      %p124 = por %p122, %p123
      %p125 = scmp.ne.s32.totalorder %s111, %s112
      %p126 = scmp.eq.s32.totalorder %s22, 7
      %p127 = por %p125, %p126
      %p129 = scmp.ne.s32.totalorder %s112, %s128
      %p130 = scmp.eq.s32.totalorder %s22, 0
      %p131 = por %p129, %p130
      %s132 = ssub.s32 %s23, %s35
      %p133 = scmp.eq.s32.totalorder %s132, 0
      %s135 = sadd.s32 %s134, 1
      %s136 = scalar_select %p133, %s134, %s135
      %p139 = pneg %p133
      %p140 = scmp.eq.s32.totalorder %s16, 7
      %p141 = por %p139, %p140
      %p142 = scmp.ne.s32.totalorder %s134, %s137
      %p143 = scmp.eq.s32.totalorder %s16, 0
      %p144 = por %p142, %p143
      %p145 = scmp.ne.s32.totalorder %s134, %s137
      %p146 = scmp.eq.s32.totalorder %s21, 7
      %p147 = por %p145, %p146
      %p148 = scmp.ne.s32.totalorder %s137, %s138
      %p149 = scmp.eq.s32.totalorder %s21, 0
      %p150 = por %p148, %p149
      %p151 = scmp.ne.s32.totalorder %s137, %s138
      %p152 = scmp.eq.s32.totalorder %s22, 7
      %p153 = por %p151, %p152
      %p155 = scmp.ne.s32.totalorder %s138, %s154
      %p156 = scmp.eq.s32.totalorder %s22, 0
      %p157 = por %p155, %p156
      %s158 = ssub.s32 %s23, %s35
      %p159 = scmp.eq.s32.totalorder %s158, 0
      %s161 = sadd.s32 %s160, 1
      %s162 = scalar_select %p159, %s160, %s161
      %p165 = pneg %p159
      %p166 = scmp.eq.s32.totalorder %s16, 7
      %p167 = por %p165, %p166
      %p168 = scmp.ne.s32.totalorder %s160, %s163
      %p169 = scmp.eq.s32.totalorder %s16, 0
      %p170 = por %p168, %p169
      %p171 = scmp.ne.s32.totalorder %s160, %s163
      %p172 = scmp.eq.s32.totalorder %s21, 7
      %p173 = por %p171, %p172
      %p174 = scmp.ne.s32.totalorder %s163, %s164
      %p175 = scmp.eq.s32.totalorder %s21, 0
      %p176 = por %p174, %p175
      %p177 = scmp.ne.s32.totalorder %s163, %s164
      %p178 = scmp.eq.s32.totalorder %s22, 7
      %p179 = por %p177, %p178
      %p181 = scmp.ne.s32.totalorder %s164, %s180
      %p182 = scmp.eq.s32.totalorder %s22, 0
      %p183 = por %p181, %p182
      %p184 = scmp.le.s32.totalorder 1, %s16
      %p185 = scmp.lt.s32.totalorder %s16, 9
      %p186 = pnand %p184, %p185
      %p187 = pneg %p186
      // Predicated region
      $region9: #{lightgcn_forward.4} parent=5 // pred_check
        _
      $region10: #{lightgcn_forward.4} parent=5 // pred_check_branch
        %189 = sbr.rel (%p186) target = $region12
      $region11: #{lightgcn_forward.4} parent=5 // pred_region
        %s190 = ssub.s32 %s16, 1
        // Predicated region
        $region13: #{lightgcn_forward.4} parent=11 // pred_check
          %p191 = pneg %p49
        $region14: #{lightgcn_forward.4} parent=11 // pred_check_branch
          %193 = sbr.rel (%p191) target = $region16
        $region15: #{lightgcn_forward.4} parent=11 // pred_region
          _
        $region16: #{lightgcn_forward.4} parent=11 // pred_fallthru
          _
        // Predicated region
        $region17: #{lightgcn_forward.4} parent=11 // pred_check
          %p194 = pneg %p98
        $region18: #{lightgcn_forward.4} parent=11 // pred_check_branch
          %196 = sbr.rel (%p194) target = $region20
        $region19: #{lightgcn_forward.4} parent=11 // pred_region
          _
        $region20: #{lightgcn_forward.4} parent=11 // pred_fallthru
          _
      $region12: #{lightgcn_forward.4} parent=5 // pred_fallthru
        _
      %p197 = scmp.lt.s32.totalorder %s16, 8
      // Predicated region
      $region21: #{lightgcn_forward.4} parent=5 // pred_check
        %p198 = pneg %p197
      $region22: #{lightgcn_forward.4} parent=5 // pred_check_branch
        %200 = sbr.rel (%p198) target = $region24
      $region23: #{lightgcn_forward.4} parent=5 // pred_region
        // Predicated region
        $region25: #{lightgcn_forward.4} parent=23 // pred_check
          %p201 = pneg %p71
        $region26: #{lightgcn_forward.4} parent=23 // pred_check_branch
          %203 = sbr.rel (%p201) target = $region28
        $region27: #{lightgcn_forward.4} parent=23 // pred_region
          %s204 = sand.u32 %s61, 1
          %s205 = scalar_lea.sflag [#allocation5], %s204
          %s206 = sand.u32 %s61, 1
          %s207 = smul.addr %s206, 512
          %s208 = scalar_lea.vmem [#allocation4], %s207
          %s209 = smul.u32 32, %s23
          %s210 = smul.u32 4, %s24
          %s212 = ssub.s32 8192, 8192
          %213 = vsyncadd %s205, %s212
          %s214 = smul.addr %s209, 8
          %s215 = sadd.s32 %s210, %s214
          %s216 = smul.addr %s215, 64
          %s217 = scalar_lea.hbm %s1, %s216
          %s218 = sshll.u32 %s208, 4
          %s219 = int_to_ptr.vmem [resolvable:$true] %s218
          %224 = dma.hbm_to_vmem [thread:$0]  %s217, 8192, %s219, %s205, 512, 256, 16
        $region28: #{lightgcn_forward.4} parent=23 // pred_fallthru
          _
        // Predicated region
        $region29: #{lightgcn_forward.4} parent=23 // pred_check
          %p225 = pneg %p118
        $region30: #{lightgcn_forward.4} parent=23 // pred_check_branch
          %227 = sbr.rel (%p225) target = $region32
        $region31: #{lightgcn_forward.4} parent=23 // pred_region
          %s228 = smul.u32 32, %s23
          %p229 = scmp.lt.s32.totalorder %s228, 127
          %s230 = scalar_select %p229, %s228, 127
          %s231 = smul.addr %s230, 8
          %s232 = scalar_lea.vmem %s3, %s231
          %s233 = smul.u32 32, %s23
        $region32: #{lightgcn_forward.4} parent=23 // pred_fallthru
          _
      $region24: #{lightgcn_forward.4} parent=5 // pred_fallthru
        _
      %p234 = scmp.le.s32.totalorder 1, %s16
      %p235 = scmp.lt.s32.totalorder %s16, 9
      %p236 = pnand %p234, %p235
      %p237 = pneg %p236
      // Predicated region
      $region33: #{lightgcn_forward.4} parent=5 // pred_check
        _
      $region34: #{lightgcn_forward.4} parent=5 // pred_check_branch
        %239 = sbr.rel (%p236) target = $region36
      $region35: #{lightgcn_forward.4} parent=5 // pred_region
        %s240 = ssub.s32 %s16, 1
        %s241 = sand.u32 %s64, 1
        %s242 = scalar_lea.sflag [#allocation5], %s241
        %s243 = sand.u32 %s64, 1
        %s244 = smul.addr %s243, 512
        %s245 = scalar_lea.vmem [#allocation4], %s244
        // Predicated region
        $region37: #{lightgcn_forward.4} parent=35 // pred_check
          %p246 = pneg %p77
        $region38: #{lightgcn_forward.4} parent=35 // pred_check_branch
          %248 = sbr.rel (%p246) target = $region40
        $region39: #{lightgcn_forward.4} parent=35 // pred_region
          %249 = dma.done %s242, 8192
        $region40: #{lightgcn_forward.4} parent=35 // pred_fallthru
          _
        %p250 = pneg %p49
        %p251 = pneg %p46
        %s252 = sand.u32 %s64, 1
        %s253 = scalar_lea.sflag [#allocation5], %s252
        %s254 = sand.u32 %s64, 1
        %s255 = smul.addr %s254, 512
        %s256 = scalar_lea.vmem [#allocation4], %s255
        %p257 = pneg %p77
        %p258 = pneg %p74
        %p259 = pneg %p98
        %p260 = pneg %p95
        %s261 = smul.u32 32, %s25
        %p262 = scmp.lt.s32.totalorder %s261, 127
        %s263 = scalar_select %p262, %s261, 127
        %s264 = smul.addr %s263, 8
        %s265 = scalar_lea.vmem %s3, %s264
        %p266 = pneg %p124
        %p267 = pneg %p121
        %p268 = pneg %p150
        %p269 = pneg %p147
        %s270 = smul.u32 32, %s25
        %p271 = scmp.lt.s32.totalorder %s270, 127
        %s272 = scalar_select %p271, %s270, 127
        %s273 = smul.addr %s272, 4
        %s274 = scalar_lea.vmem %s4, %s273
        %p275 = pneg %p176
        %p276 = pneg %p173
        %s277 = smul.u32 32, %s25
        %p278 = scmp.lt.s32.totalorder %s277, 127
        %s279 = scalar_select %p278, %s277, 127
        %s280 = smul.addr %s279, 8
        %s281 = scalar_lea.vmem %s5, %s280
        %s282 = smul.u32 32, %s25
        %s283 = smul.u32 4, %s26
        %s284 = smul.u32 32, %s25
        %p285 = scmp.lt.s32.totalorder %s284, 127
        %s286 = scalar_select %p285, %s284, 127
        %s287 = smul.addr %s286, 8
        %s288 = scalar_lea.vmem %s3, %s287
        %s289 = smul.u32 32, %s25
        %s290 = smul.u32 32, %s25
        %p291 = scmp.lt.s32.totalorder %s290, 127
        %s292 = scalar_select %p291, %s290, 127
        %s293 = smul.addr %s292, 4
        %s294 = scalar_lea.vmem %s4, %s293
        %s295 = smul.u32 32, %s25
        %s296 = smul.u32 32, %s25
        %p297 = scmp.lt.s32.totalorder %s296, 127
        %s298 = scalar_select %p297, %s296, 127
        %s299 = smul.addr %s298, 8
        %s300 = scalar_lea.vmem %s5, %s299
        %s301 = smul.u32 32, %s25
        %p303 = scmp.eq.s32.totalorder %s26, 0
        // Predicated region
        $region41: #{lightgcn_forward.4} parent=35 // pred_check
          %p304 = pneg %p303
        $region42: #{lightgcn_forward.4} parent=35 // pred_check_branch
          %306 = sbr.rel (%p304) target = $region44
        $region43: #{lightgcn_forward.4} parent=35 // pred_region
          %307 = vst [vmem:[#allocation2] sm:$0xff] 0.0
          %308 = vst [vmem:[#allocation2 + $0x8] sm:$0xff] 0.0
          %309 = vst [vmem:[#allocation2 + $0x10] sm:$0xff] 0.0
          %310 = vst [vmem:[#allocation2 + $0x18] sm:$0xff] 0.0
          %311 = vst [vmem:[#allocation2 + $0x20] sm:$0xff] 0.0
          %312 = vst [vmem:[#allocation2 + $0x28] sm:$0xff] 0.0
          %313 = vst [vmem:[#allocation2 + $0x30] sm:$0xff] 0.0
          %314 = vst [vmem:[#allocation2 + $0x38] sm:$0xff] 0.0
          %315 = vst [vmem:[#allocation2 + $0x40] sm:$0xff] 0.0
          %316 = vst [vmem:[#allocation2 + $0x48] sm:$0xff] 0.0
          %317 = vst [vmem:[#allocation2 + $0x50] sm:$0xff] 0.0
          %318 = vst [vmem:[#allocation2 + $0x58] sm:$0xff] 0.0
          %319 = vst [vmem:[#allocation2 + $0x60] sm:$0xff] 0.0
          %320 = vst [vmem:[#allocation2 + $0x68] sm:$0xff] 0.0
          %321 = vst [vmem:[#allocation2 + $0x70] sm:$0xff] 0.0
          %322 = vst [vmem:[#allocation2 + $0x78] sm:$0xff] 0.0
          %323 = vst [vmem:[#allocation2 + $0x80] sm:$0xff] 0.0
          %324 = vst [vmem:[#allocation2 + $0x88] sm:$0xff] 0.0
          %325 = vst [vmem:[#allocation2 + $0x90] sm:$0xff] 0.0
          %326 = vst [vmem:[#allocation2 + $0x98] sm:$0xff] 0.0
          %327 = vst [vmem:[#allocation2 + $0xa0] sm:$0xff] 0.0
          %328 = vst [vmem:[#allocation2 + $0xa8] sm:$0xff] 0.0
          %329 = vst [vmem:[#allocation2 + $0xb0] sm:$0xff] 0.0
          %330 = vst [vmem:[#allocation2 + $0xb8] sm:$0xff] 0.0
          %331 = vst [vmem:[#allocation2 + $0xc0] sm:$0xff] 0.0
          %332 = vst [vmem:[#allocation2 + $0xc8] sm:$0xff] 0.0
          %333 = vst [vmem:[#allocation2 + $0xd0] sm:$0xff] 0.0
          %334 = vst [vmem:[#allocation2 + $0xd8] sm:$0xff] 0.0
          %335 = vst [vmem:[#allocation2 + $0xe0] sm:$0xff] 0.0
          %336 = vst [vmem:[#allocation2 + $0xe8] sm:$0xff] 0.0
          %337 = vst [vmem:[#allocation2 + $0xf0] sm:$0xff] 0.0
          %338 = vst [vmem:[#allocation2 + $0xf8] sm:$0xff] 0.0
        $region44: #{lightgcn_forward.4} parent=35 // pred_fallthru
          _
        %s339 = smul.u32 %s26, 512
        %s340 = sshra.s32 %s339, 3
        %s341 = sand.u32 %s339, 7
        %s342 = smul.addr %s340, 4
        %s343 = scalar_lea.vmem %s2, %s342
        %v344 = vld [vmem:[%s343] sm:$0xf]
        %v345 = vld [vmem:[%s343 + $0x4] sm:$0xf]
        %v346 = vld [vmem:[%s343 + $0x8] sm:$0xf]
        %v347 = vld [vmem:[%s343 + $0xc] sm:$0xf]
        %v348 = vld [vmem:[%s343 + $0x10] sm:$0xf]
        %v349 = vld [vmem:[%s343 + $0x14] sm:$0xf]
        %v350 = vld [vmem:[%s343 + $0x18] sm:$0xf]
        %v351 = vld [vmem:[%s343 + $0x1c] sm:$0xf]
        %v352 = vld [vmem:[%s343 + $0x20] sm:$0xf]
        %v353 = vld [vmem:[%s343 + $0x24] sm:$0xf]
        %v354 = vld [vmem:[%s343 + $0x28] sm:$0xf]
        %v355 = vld [vmem:[%s343 + $0x2c] sm:$0xf]
        %v356 = vld [vmem:[%s343 + $0x30] sm:$0xf]
        %v357 = vld [vmem:[%s343 + $0x34] sm:$0xf]
        %v358 = vld [vmem:[%s343 + $0x38] sm:$0xf]
        %v359 = vld [vmem:[%s343 + $0x3c] sm:$0xf]
        %v360 = vld [vmem:[%s343 + $0x40] sm:$0xf]
        %v361 = vld [vmem:[%s343 + $0x44] sm:$0xf]
        %v362 = vld [vmem:[%s343 + $0x48] sm:$0xf]
        %v363 = vld [vmem:[%s343 + $0x4c] sm:$0xf]
        %v364 = vld [vmem:[%s343 + $0x50] sm:$0xf]
        %v365 = vld [vmem:[%s343 + $0x54] sm:$0xf]
        %v366 = vld [vmem:[%s343 + $0x58] sm:$0xf]
        %v367 = vld [vmem:[%s343 + $0x5c] sm:$0xf]
        %v368 = vld [vmem:[%s343 + $0x60] sm:$0xf]
        %v369 = vld [vmem:[%s343 + $0x64] sm:$0xf]
        %v370 = vld [vmem:[%s343 + $0x68] sm:$0xf]
        %v371 = vld [vmem:[%s343 + $0x6c] sm:$0xf]
        %v372 = vld [vmem:[%s343 + $0x70] sm:$0xf]
        %v373 = vld [vmem:[%s343 + $0x74] sm:$0xf]
        %v374 = vld [vmem:[%s343 + $0x78] sm:$0xf]
        %v375 = vld [vmem:[%s343 + $0x7c] sm:$0xf]
        %v376 = vld [vmem:[%s343 + $0x80] sm:$0xf]
        %v377 = vld [vmem:[%s343 + $0x84] sm:$0xf]
        %v378 = vld [vmem:[%s343 + $0x88] sm:$0xf]
        %v379 = vld [vmem:[%s343 + $0x8c] sm:$0xf]
        %v380 = vld [vmem:[%s343 + $0x90] sm:$0xf]
        %v381 = vld [vmem:[%s343 + $0x94] sm:$0xf]
        %v382 = vld [vmem:[%s343 + $0x98] sm:$0xf]
        %v383 = vld [vmem:[%s343 + $0x9c] sm:$0xf]
        %v384 = vld [vmem:[%s343 + $0xa0] sm:$0xf]
        %v385 = vld [vmem:[%s343 + $0xa4] sm:$0xf]
        %v386 = vld [vmem:[%s343 + $0xa8] sm:$0xf]
        %v387 = vld [vmem:[%s343 + $0xac] sm:$0xf]
        %v388 = vld [vmem:[%s343 + $0xb0] sm:$0xf]
        %v389 = vld [vmem:[%s343 + $0xb4] sm:$0xf]
        %v390 = vld [vmem:[%s343 + $0xb8] sm:$0xf]
        %v391 = vld [vmem:[%s343 + $0xbc] sm:$0xf]
        %v392 = vld [vmem:[%s343 + $0xc0] sm:$0xf]
        %v393 = vld [vmem:[%s343 + $0xc4] sm:$0xf]
        %v394 = vld [vmem:[%s343 + $0xc8] sm:$0xf]
        %v395 = vld [vmem:[%s343 + $0xcc] sm:$0xf]
        %v396 = vld [vmem:[%s343 + $0xd0] sm:$0xf]
        %v397 = vld [vmem:[%s343 + $0xd4] sm:$0xf]
        %v398 = vld [vmem:[%s343 + $0xd8] sm:$0xf]
        %v399 = vld [vmem:[%s343 + $0xdc] sm:$0xf]
        %v400 = vld [vmem:[%s343 + $0xe0] sm:$0xf]
        %v401 = vld [vmem:[%s343 + $0xe4] sm:$0xf]
        %v402 = vld [vmem:[%s343 + $0xe8] sm:$0xf]
        %v403 = vld [vmem:[%s343 + $0xec] sm:$0xf]
        %v404 = vld [vmem:[%s343 + $0xf0] sm:$0xf]
        %v405 = vld [vmem:[%s343 + $0xf4] sm:$0xf]
        %v406 = vld [vmem:[%s343 + $0xf8] sm:$0xf]
        %v407 = vld [vmem:[%s343 + $0xfc] sm:$0xf]
        %v408 = vld [vmem:[#allocation2] sm:$0xff]
        %v409 = vld [vmem:[#allocation2 + $0x8] sm:$0xff]
        %v410 = vld [vmem:[#allocation2 + $0x10] sm:$0xff]
        %v411 = vld [vmem:[#allocation2 + $0x18] sm:$0xff]
        %v412 = vld [vmem:[#allocation2 + $0x20] sm:$0xff]
        %v413 = vld [vmem:[#allocation2 + $0x28] sm:$0xff]
        %v414 = vld [vmem:[#allocation2 + $0x30] sm:$0xff]
        %v415 = vld [vmem:[#allocation2 + $0x38] sm:$0xff]
        %v416 = vld [vmem:[#allocation2 + $0x40] sm:$0xff]
        %v417 = vld [vmem:[#allocation2 + $0x48] sm:$0xff]
        %v418 = vld [vmem:[#allocation2 + $0x50] sm:$0xff]
        %v419 = vld [vmem:[#allocation2 + $0x58] sm:$0xff]
        %v420 = vld [vmem:[#allocation2 + $0x60] sm:$0xff]
        %v421 = vld [vmem:[#allocation2 + $0x68] sm:$0xff]
        %v422 = vld [vmem:[#allocation2 + $0x70] sm:$0xff]
        %v423 = vld [vmem:[#allocation2 + $0x78] sm:$0xff]
        %v424 = vld [vmem:[#allocation2 + $0x80] sm:$0xff]
        %v425 = vld [vmem:[#allocation2 + $0x88] sm:$0xff]
        %v426 = vld [vmem:[#allocation2 + $0x90] sm:$0xff]
        %v427 = vld [vmem:[#allocation2 + $0x98] sm:$0xff]
        %v428 = vld [vmem:[#allocation2 + $0xa0] sm:$0xff]
        %v429 = vld [vmem:[#allocation2 + $0xa8] sm:$0xff]
        %v430 = vld [vmem:[#allocation2 + $0xb0] sm:$0xff]
        %v431 = vld [vmem:[#allocation2 + $0xb8] sm:$0xff]
        %v432 = vld [vmem:[#allocation2 + $0xc0] sm:$0xff]
        %v433 = vld [vmem:[#allocation2 + $0xc8] sm:$0xff]
        %v434 = vld [vmem:[#allocation2 + $0xd0] sm:$0xff]
        %v435 = vld [vmem:[#allocation2 + $0xd8] sm:$0xff]
        %v436 = vld [vmem:[#allocation2 + $0xe0] sm:$0xff]
        %v437 = vld [vmem:[#allocation2 + $0xe8] sm:$0xff]
        %v438 = vld [vmem:[#allocation2 + $0xf0] sm:$0xff]
        %v439 = vld [vmem:[#allocation2 + $0xf8] sm:$0xff]
        %v440 = vld [vmem:[%s245] sm:$0xff]
        %v441 = vld [vmem:[%s245 + $0x8] sm:$0xff]
        %v442 = vld [vmem:[%s245 + $0x10] sm:$0xff]
        %v443 = vld [vmem:[%s245 + $0x18] sm:$0xff]
        %v444 = vld [vmem:[%s245 + $0x20] sm:$0xff]
        %v445 = vld [vmem:[%s245 + $0x28] sm:$0xff]
        %v446 = vld [vmem:[%s245 + $0x30] sm:$0xff]
        %v447 = vld [vmem:[%s245 + $0x38] sm:$0xff]
        %v448 = vld [vmem:[%s245 + $0x40] sm:$0xff]
        %v449 = vld [vmem:[%s245 + $0x48] sm:$0xff]
        %v450 = vld [vmem:[%s245 + $0x50] sm:$0xff]
        %v451 = vld [vmem:[%s245 + $0x58] sm:$0xff]
        %v452 = vld [vmem:[%s245 + $0x60] sm:$0xff]
        %v453 = vld [vmem:[%s245 + $0x68] sm:$0xff]
        %v454 = vld [vmem:[%s245 + $0x70] sm:$0xff]
        %v455 = vld [vmem:[%s245 + $0x78] sm:$0xff]
        %v456 = vld [vmem:[%s245 + $0x80] sm:$0xff]
        %v457 = vld [vmem:[%s245 + $0x88] sm:$0xff]
        %v458 = vld [vmem:[%s245 + $0x90] sm:$0xff]
        %v459 = vld [vmem:[%s245 + $0x98] sm:$0xff]
        %v460 = vld [vmem:[%s245 + $0xa0] sm:$0xff]
        %v461 = vld [vmem:[%s245 + $0xa8] sm:$0xff]
        %v462 = vld [vmem:[%s245 + $0xb0] sm:$0xff]
        %v463 = vld [vmem:[%s245 + $0xb8] sm:$0xff]
        %v464 = vld [vmem:[%s245 + $0xc0] sm:$0xff]
        %v465 = vld [vmem:[%s245 + $0xc8] sm:$0xff]
        %v466 = vld [vmem:[%s245 + $0xd0] sm:$0xff]
        %v467 = vld [vmem:[%s245 + $0xd8] sm:$0xff]
        %v468 = vld [vmem:[%s245 + $0xe0] sm:$0xff]
        %v469 = vld [vmem:[%s245 + $0xe8] sm:$0xff]
        %v470 = vld [vmem:[%s245 + $0xf0] sm:$0xff]
        %v471 = vld [vmem:[%s245 + $0xf8] sm:$0xff]
        %v472 = vld [vmem:[%s245 + $0x100] sm:$0xff]
        %v473 = vld [vmem:[%s245 + $0x108] sm:$0xff]
        %v474 = vld [vmem:[%s245 + $0x110] sm:$0xff]
        %v475 = vld [vmem:[%s245 + $0x118] sm:$0xff]
        %v476 = vld [vmem:[%s245 + $0x120] sm:$0xff]
        %v477 = vld [vmem:[%s245 + $0x128] sm:$0xff]
        %v478 = vld [vmem:[%s245 + $0x130] sm:$0xff]
        %v479 = vld [vmem:[%s245 + $0x138] sm:$0xff]
        %v480 = vld [vmem:[%s245 + $0x140] sm:$0xff]
        %v481 = vld [vmem:[%s245 + $0x148] sm:$0xff]
        %v482 = vld [vmem:[%s245 + $0x150] sm:$0xff]
        %v483 = vld [vmem:[%s245 + $0x158] sm:$0xff]
        %v484 = vld [vmem:[%s245 + $0x160] sm:$0xff]
        %v485 = vld [vmem:[%s245 + $0x168] sm:$0xff]
        %v486 = vld [vmem:[%s245 + $0x170] sm:$0xff]
        %v487 = vld [vmem:[%s245 + $0x178] sm:$0xff]
        %v488 = vld [vmem:[%s245 + $0x180] sm:$0xff]
        %v489 = vld [vmem:[%s245 + $0x188] sm:$0xff]
        %v490 = vld [vmem:[%s245 + $0x190] sm:$0xff]
        %v491 = vld [vmem:[%s245 + $0x198] sm:$0xff]
        %v492 = vld [vmem:[%s245 + $0x1a0] sm:$0xff]
        %v493 = vld [vmem:[%s245 + $0x1a8] sm:$0xff]
        %v494 = vld [vmem:[%s245 + $0x1b0] sm:$0xff]
        %v495 = vld [vmem:[%s245 + $0x1b8] sm:$0xff]
        %v496 = vld [vmem:[%s245 + $0x1c0] sm:$0xff]
        %v497 = vld [vmem:[%s245 + $0x1c8] sm:$0xff]
        %v498 = vld [vmem:[%s245 + $0x1d0] sm:$0xff]
        %v499 = vld [vmem:[%s245 + $0x1d8] sm:$0xff]
        %v500 = vld [vmem:[%s245 + $0x1e0] sm:$0xff]
        %v501 = vld [vmem:[%s245 + $0x1e8] sm:$0xff]
        %v502 = vld [vmem:[%s245 + $0x1f0] sm:$0xff]
        %v503 = vld [vmem:[%s245 + $0x1f8] sm:$0xff]
        %v568 = vunpack.c.l.b16 %v440
        %v569 = vunpack.c.h.b16 %v440
        %v570 = vunpack.c.l.b16 %v441
        %v571 = vunpack.c.h.b16 %v441
        %v572 = vunpack.c.l.b16 %v442
        %v573 = vunpack.c.h.b16 %v442
        %v574 = vunpack.c.l.b16 %v443
        %v575 = vunpack.c.h.b16 %v443
        %v576 = vunpack.c.l.b16 %v444
        %v577 = vunpack.c.h.b16 %v444
        %v578 = vunpack.c.l.b16 %v445
        %v579 = vunpack.c.h.b16 %v445
        %v580 = vunpack.c.l.b16 %v446
        %v581 = vunpack.c.h.b16 %v446
        %v582 = vunpack.c.l.b16 %v447
        %v583 = vunpack.c.h.b16 %v447
        %v584 = vunpack.c.l.b16 %v448
        %v585 = vunpack.c.h.b16 %v448
        %v586 = vunpack.c.l.b16 %v449
        %v587 = vunpack.c.h.b16 %v449
        %v588 = vunpack.c.l.b16 %v450
        %v589 = vunpack.c.h.b16 %v450
        %v590 = vunpack.c.l.b16 %v451
        %v591 = vunpack.c.h.b16 %v451
        %v592 = vunpack.c.l.b16 %v452
        %v593 = vunpack.c.h.b16 %v452
        %v594 = vunpack.c.l.b16 %v453
        %v595 = vunpack.c.h.b16 %v453
        %v596 = vunpack.c.l.b16 %v454
        %v597 = vunpack.c.h.b16 %v454
        %v598 = vunpack.c.l.b16 %v455
        %v599 = vunpack.c.h.b16 %v455
        %v600 = vunpack.c.l.b16 %v456
        %v601 = vunpack.c.h.b16 %v456
        %v602 = vunpack.c.l.b16 %v457
        %v603 = vunpack.c.h.b16 %v457
        %v604 = vunpack.c.l.b16 %v458
        %v605 = vunpack.c.h.b16 %v458
        %v606 = vunpack.c.l.b16 %v459
        %v607 = vunpack.c.h.b16 %v459
        %v608 = vunpack.c.l.b16 %v460
        %v609 = vunpack.c.h.b16 %v460
        %v610 = vunpack.c.l.b16 %v461
        %v611 = vunpack.c.h.b16 %v461
        %v612 = vunpack.c.l.b16 %v462
        %v613 = vunpack.c.h.b16 %v462
        %v614 = vunpack.c.l.b16 %v463
        %v615 = vunpack.c.h.b16 %v463
        %v616 = vunpack.c.l.b16 %v464
        %v617 = vunpack.c.h.b16 %v464
        %v618 = vunpack.c.l.b16 %v465
        %v619 = vunpack.c.h.b16 %v465
        %v620 = vunpack.c.l.b16 %v466
        %v621 = vunpack.c.h.b16 %v466
        %v622 = vunpack.c.l.b16 %v467
        %v623 = vunpack.c.h.b16 %v467
        %v624 = vunpack.c.l.b16 %v468
        %v625 = vunpack.c.h.b16 %v468
        %v626 = vunpack.c.l.b16 %v469
        %v627 = vunpack.c.h.b16 %v469
        %v628 = vunpack.c.l.b16 %v470
        %v629 = vunpack.c.h.b16 %v470
        %v630 = vunpack.c.l.b16 %v471
        %v631 = vunpack.c.h.b16 %v471
        %v632 = vunpack.c.l.b16 %v472
        %v633 = vunpack.c.h.b16 %v472
        %v634 = vunpack.c.l.b16 %v473
        %v635 = vunpack.c.h.b16 %v473
        %v636 = vunpack.c.l.b16 %v474
        %v637 = vunpack.c.h.b16 %v474
        %v638 = vunpack.c.l.b16 %v475
        %v639 = vunpack.c.h.b16 %v475
        %v640 = vunpack.c.l.b16 %v476
        %v641 = vunpack.c.h.b16 %v476
        %v642 = vunpack.c.l.b16 %v477
        %v643 = vunpack.c.h.b16 %v477
        %v644 = vunpack.c.l.b16 %v478
        %v645 = vunpack.c.h.b16 %v478
        %v646 = vunpack.c.l.b16 %v479
        %v647 = vunpack.c.h.b16 %v479
        %v648 = vunpack.c.l.b16 %v480
        %v649 = vunpack.c.h.b16 %v480
        %v650 = vunpack.c.l.b16 %v481
        %v651 = vunpack.c.h.b16 %v481
        %v652 = vunpack.c.l.b16 %v482
        %v653 = vunpack.c.h.b16 %v482
        %v654 = vunpack.c.l.b16 %v483
        %v655 = vunpack.c.h.b16 %v483
        %v656 = vunpack.c.l.b16 %v484
        %v657 = vunpack.c.h.b16 %v484
        %v658 = vunpack.c.l.b16 %v485
        %v659 = vunpack.c.h.b16 %v485
        %v660 = vunpack.c.l.b16 %v486
        %v661 = vunpack.c.h.b16 %v486
        %v662 = vunpack.c.l.b16 %v487
        %v663 = vunpack.c.h.b16 %v487
        %v664 = vunpack.c.l.b16 %v488
        %v665 = vunpack.c.h.b16 %v488
        %v666 = vunpack.c.l.b16 %v489
        %v667 = vunpack.c.h.b16 %v489
        %v668 = vunpack.c.l.b16 %v490
        %v669 = vunpack.c.h.b16 %v490
        %v670 = vunpack.c.l.b16 %v491
        %v671 = vunpack.c.h.b16 %v491
        %v672 = vunpack.c.l.b16 %v492
        %v673 = vunpack.c.h.b16 %v492
        %v674 = vunpack.c.l.b16 %v493
        %v675 = vunpack.c.h.b16 %v493
        %v676 = vunpack.c.l.b16 %v494
        %v677 = vunpack.c.h.b16 %v494
        %v678 = vunpack.c.l.b16 %v495
        %v679 = vunpack.c.h.b16 %v495
        %v680 = vunpack.c.l.b16 %v496
        %v681 = vunpack.c.h.b16 %v496
        %v682 = vunpack.c.l.b16 %v497
        %v683 = vunpack.c.h.b16 %v497
        %v684 = vunpack.c.l.b16 %v498
        %v685 = vunpack.c.h.b16 %v498
        %v686 = vunpack.c.l.b16 %v499
        %v687 = vunpack.c.h.b16 %v499
        %v688 = vunpack.c.l.b16 %v500
        %v689 = vunpack.c.h.b16 %v500
        %v690 = vunpack.c.l.b16 %v501
        %v691 = vunpack.c.h.b16 %v501
        %v692 = vunpack.c.l.b16 %v502
        %v693 = vunpack.c.h.b16 %v502
        %v694 = vunpack.c.l.b16 %v503
        %v695 = vunpack.c.h.b16 %v503
        %v696 = vpack.c.b16 %v572, %v568
        %v697 = vpack.c.b16 %v573, %v569
        %v698 = vpack.c.b16 %v574, %v570
        %v699 = vpack.c.b16 %v575, %v571
        %v700 = vpack.c.b16 %v580, %v576
        %v701 = vpack.c.b16 %v581, %v577
        %v702 = vpack.c.b16 %v582, %v578
        %v703 = vpack.c.b16 %v583, %v579
        %v704 = vpack.c.b16 %v588, %v584
        %v705 = vpack.c.b16 %v589, %v585
        %v706 = vpack.c.b16 %v590, %v586
        %v707 = vpack.c.b16 %v591, %v587
        %v708 = vpack.c.b16 %v596, %v592
        %v709 = vpack.c.b16 %v597, %v593
        %v710 = vpack.c.b16 %v598, %v594
        %v711 = vpack.c.b16 %v599, %v595
        %v712 = vpack.c.b16 %v604, %v600
        %v713 = vpack.c.b16 %v605, %v601
        %v714 = vpack.c.b16 %v606, %v602
        %v715 = vpack.c.b16 %v607, %v603
        %v716 = vpack.c.b16 %v612, %v608
        %v717 = vpack.c.b16 %v613, %v609
        %v718 = vpack.c.b16 %v614, %v610
        %v719 = vpack.c.b16 %v615, %v611
        %v720 = vpack.c.b16 %v620, %v616
        %v721 = vpack.c.b16 %v621, %v617
        %v722 = vpack.c.b16 %v622, %v618
        %v723 = vpack.c.b16 %v623, %v619
        %v724 = vpack.c.b16 %v628, %v624
        %v725 = vpack.c.b16 %v629, %v625
        %v726 = vpack.c.b16 %v630, %v626
        %v727 = vpack.c.b16 %v631, %v627
        %v728 = vpack.c.b16 %v636, %v632
        %v729 = vpack.c.b16 %v637, %v633
        %v730 = vpack.c.b16 %v638, %v634
        %v731 = vpack.c.b16 %v639, %v635
        %v732 = vpack.c.b16 %v644, %v640
        %v733 = vpack.c.b16 %v645, %v641
        %v734 = vpack.c.b16 %v646, %v642
        %v735 = vpack.c.b16 %v647, %v643
        %v736 = vpack.c.b16 %v652, %v648
        %v737 = vpack.c.b16 %v653, %v649
        %v738 = vpack.c.b16 %v654, %v650
        %v739 = vpack.c.b16 %v655, %v651
        %v740 = vpack.c.b16 %v660, %v656
        %v741 = vpack.c.b16 %v661, %v657
        %v742 = vpack.c.b16 %v662, %v658
        %v743 = vpack.c.b16 %v663, %v659
        %v744 = vpack.c.b16 %v668, %v664
        %v745 = vpack.c.b16 %v669, %v665
        %v746 = vpack.c.b16 %v670, %v666
        %v747 = vpack.c.b16 %v671, %v667
        %v748 = vpack.c.b16 %v676, %v672
        %v749 = vpack.c.b16 %v677, %v673
        %v750 = vpack.c.b16 %v678, %v674
        %v751 = vpack.c.b16 %v679, %v675
        %v752 = vpack.c.b16 %v684, %v680
        %v753 = vpack.c.b16 %v685, %v681
        %v754 = vpack.c.b16 %v686, %v682
        %v755 = vpack.c.b16 %v687, %v683
        %v756 = vpack.c.b16 %v692, %v688
        %v757 = vpack.c.b16 %v693, %v689
        %v758 = vpack.c.b16 %v694, %v690
        %v759 = vpack.c.b16 %v695, %v691
        %v888 = vunpack.c.l.b16 %v344
        %v889 = vunpack.c.l.b16 %v345
        %v890 = vunpack.c.l.b16 %v346
        %v891 = vunpack.c.l.b16 %v347
        %v892 = vunpack.c.l.b16 %v348
        %v893 = vunpack.c.l.b16 %v349
        %v894 = vunpack.c.l.b16 %v350
        %v895 = vunpack.c.l.b16 %v351
        %v896 = vunpack.c.l.b16 %v352
        %v897 = vunpack.c.l.b16 %v353
        %v898 = vunpack.c.l.b16 %v354
        %v899 = vunpack.c.l.b16 %v355
        %v900 = vunpack.c.l.b16 %v356
        %v901 = vunpack.c.l.b16 %v357
        %v902 = vunpack.c.l.b16 %v358
        %v903 = vunpack.c.l.b16 %v359
        %v904 = vunpack.c.l.b16 %v360
        %v905 = vunpack.c.l.b16 %v361
        %v906 = vunpack.c.l.b16 %v362
        %v907 = vunpack.c.l.b16 %v363
        %v908 = vunpack.c.l.b16 %v364
        %v909 = vunpack.c.l.b16 %v365
        %v910 = vunpack.c.l.b16 %v366
        %v911 = vunpack.c.l.b16 %v367
        %v912 = vunpack.c.l.b16 %v368
        %v913 = vunpack.c.l.b16 %v369
        %v914 = vunpack.c.l.b16 %v370
        %v915 = vunpack.c.l.b16 %v371
        %v916 = vunpack.c.l.b16 %v372
        %v917 = vunpack.c.l.b16 %v373
        %v918 = vunpack.c.l.b16 %v374
        %v919 = vunpack.c.l.b16 %v375
        %v920 = vunpack.c.l.b16 %v376
        %v921 = vunpack.c.l.b16 %v377
        %v922 = vunpack.c.l.b16 %v378
        %v923 = vunpack.c.l.b16 %v379
        %v924 = vunpack.c.l.b16 %v380
        %v925 = vunpack.c.l.b16 %v381
        %v926 = vunpack.c.l.b16 %v382
        %v927 = vunpack.c.l.b16 %v383
        %v928 = vunpack.c.l.b16 %v384
        %v929 = vunpack.c.l.b16 %v385
        %v930 = vunpack.c.l.b16 %v386
        %v931 = vunpack.c.l.b16 %v387
        %v932 = vunpack.c.l.b16 %v388
        %v933 = vunpack.c.l.b16 %v389
        %v934 = vunpack.c.l.b16 %v390
        %v935 = vunpack.c.l.b16 %v391
        %v936 = vunpack.c.l.b16 %v392
        %v937 = vunpack.c.l.b16 %v393
        %v938 = vunpack.c.l.b16 %v394
        %v939 = vunpack.c.l.b16 %v395
        %v940 = vunpack.c.l.b16 %v396
        %v941 = vunpack.c.l.b16 %v397
        %v942 = vunpack.c.l.b16 %v398
        %v943 = vunpack.c.l.b16 %v399
        %v944 = vunpack.c.l.b16 %v400
        %v945 = vunpack.c.l.b16 %v401
        %v946 = vunpack.c.l.b16 %v402
        %v947 = vunpack.c.l.b16 %v403
        %v948 = vunpack.c.l.b16 %v404
        %v949 = vunpack.c.l.b16 %v405
        %v950 = vunpack.c.l.b16 %v406
        %v951 = vunpack.c.l.b16 %v407
        %v952 = vpack.c.b16 %v889, %v888
        %v953 = vpack.c.b16 %v891, %v890
        %v954 = vpack.c.b16 %v893, %v892
        %v955 = vpack.c.b16 %v895, %v894
        %v956 = vpack.c.b16 %v897, %v896
        %v957 = vpack.c.b16 %v899, %v898
        %v958 = vpack.c.b16 %v901, %v900
        %v959 = vpack.c.b16 %v903, %v902
        %v960 = vpack.c.b16 %v905, %v904
        %v961 = vpack.c.b16 %v907, %v906
        %v962 = vpack.c.b16 %v909, %v908
        %v963 = vpack.c.b16 %v911, %v910
        %v964 = vpack.c.b16 %v913, %v912
        %v965 = vpack.c.b16 %v915, %v914
        %v966 = vpack.c.b16 %v917, %v916
        %v967 = vpack.c.b16 %v919, %v918
        %v968 = vpack.c.b16 %v921, %v920
        %v969 = vpack.c.b16 %v923, %v922
        %v970 = vpack.c.b16 %v925, %v924
        %v971 = vpack.c.b16 %v927, %v926
        %v972 = vpack.c.b16 %v929, %v928
        %v973 = vpack.c.b16 %v931, %v930
        %v974 = vpack.c.b16 %v933, %v932
        %v975 = vpack.c.b16 %v935, %v934
        %v976 = vpack.c.b16 %v937, %v936
        %v977 = vpack.c.b16 %v939, %v938
        %v978 = vpack.c.b16 %v941, %v940
        %v979 = vpack.c.b16 %v943, %v942
        %v980 = vpack.c.b16 %v945, %v944
        %v981 = vpack.c.b16 %v947, %v946
        %v982 = vpack.c.b16 %v949, %v948
        %v983 = vpack.c.b16 %v951, %v950
        %1016 = vmatprep.subr.bf16.mxu0 0
        %1017 = vmatpush1.bf16.msra.mxu0 %v952
        %1018 = vmatprep.subr.bf16.mxu0 0
        %1019 = vmatpush1.bf16.msra.mxu0 %v953
        %1020 = vmatprep.subr.bf16.mxu0 0
        %1021 = vmatpush1.bf16.msra.mxu0 %v954
        %1022 = vmatprep.subr.bf16.mxu0 0
        %1023 = vmatpush1.bf16.msra.mxu0 %v955
        %1024 = vmatprep.subr.bf16.mxu0 0
        %1025 = vmatpush1.bf16.msra.mxu0 %v956
        %1026 = vmatprep.subr.bf16.mxu0 0
        %1027 = vmatpush1.bf16.msra.mxu0 %v957
        %1028 = vmatprep.subr.bf16.mxu0 0
        %1029 = vmatpush1.bf16.msra.mxu0 %v958
        %1030 = vmatprep.subr.bf16.mxu0 0
        %1031 = vmatpush1.bf16.msra.mxu0 %v959
        %1032 = vmatprep.subr.bf16.mxu0 0
        %1033 = vmatpush1.bf16.msra.mxu0 %v960
        %1034 = vmatprep.subr.bf16.mxu0 0
        %1035 = vmatpush1.bf16.msra.mxu0 %v961
        %1036 = vmatprep.subr.bf16.mxu0 0
        %1037 = vmatpush1.bf16.msra.mxu0 %v962
        %1038 = vmatprep.subr.bf16.mxu0 0
        %1039 = vmatpush1.bf16.msra.mxu0 %v963
        %1040 = vmatprep.subr.bf16.mxu0 0
        %1041 = vmatpush1.bf16.msra.mxu0 %v964
        %1042 = vmatprep.subr.bf16.mxu0 0
        %1043 = vmatpush1.bf16.msra.mxu0 %v965
        %1044 = vmatprep.subr.bf16.mxu0 0
        %1045 = vmatpush1.bf16.msra.mxu0 %v966
        %1046 = vmatprep.subr.bf16.mxu0 0
        %1047 = vmatpush1.bf16.msra.mxu0 %v967
        %1048 = vmatprep.mubr.bf16.mxu0 %v697
        %1049 = vmatmul.mubr.bf16.gmra.mrb[0].mxu0 %v696
        %v1050 = vpop.f32.mrb[0].mxu0
        %v1051 = vadd.f32 0.0, %v1050
        %v1052 = vpop.f32.mrb[0].mxu0
        %v1053 = vpop.f32.mrb[0].mxu0
        %v1054 = vadd.f32 0.0, %v1053
        %v1055 = vpop.f32.mrb[0].mxu0
        %1056 = vmatprep.mubr.bf16.mxu0 %v701
        %1057 = vmatmul.mubr.bf16.gmra.mrb[0].mxu0 %v700
        %v1058 = vpop.f32.mrb[0].mxu0
        %v1059 = vadd.f32 0.0, %v1058
        %v1060 = vpop.f32.mrb[0].mxu0
        %v1061 = vpop.f32.mrb[0].mxu0
        %v1062 = vadd.f32 0.0, %v1061
        %v1063 = vpop.f32.mrb[0].mxu0
        %1064 = vmatprep.mubr.bf16.mxu0 %v705
        %1065 = vmatmul.mubr.bf16.gmra.mrb[0].mxu0 %v704
        %v1066 = vpop.f32.mrb[0].mxu0
        %v1067 = vadd.f32 0.0, %v1066
        %v1068 = vpop.f32.mrb[0].mxu0
        %v1069 = vpop.f32.mrb[0].mxu0
        %v1070 = vadd.f32 0.0, %v1069
        %v1071 = vpop.f32.mrb[0].mxu0
        %1072 = vmatprep.mubr.bf16.mxu0 %v709
        %1073 = vmatmul.mubr.bf16.gmra.mrb[0].mxu0 %v708
        %v1074 = vpop.f32.mrb[0].mxu0
        %v1075 = vadd.f32 0.0, %v1074
        %v1076 = vpop.f32.mrb[0].mxu0
        %v1077 = vpop.f32.mrb[0].mxu0
        %v1078 = vadd.f32 0.0, %v1077
        %v1079 = vpop.f32.mrb[0].mxu0
        %1080 = vmatprep.mubr.bf16.mxu0 %v713
        %1081 = vmatmul.mubr.bf16.gmra.mrb[0].mxu0 %v712
        %v1082 = vpop.f32.mrb[0].mxu0
        %v1083 = vadd.f32 0.0, %v1082
        %v1084 = vpop.f32.mrb[0].mxu0
        %v1085 = vpop.f32.mrb[0].mxu0
        %v1086 = vadd.f32 0.0, %v1085
        %v1087 = vpop.f32.mrb[0].mxu0
        %1088 = vmatprep.mubr.bf16.mxu0 %v717
        %1089 = vmatmul.mubr.bf16.gmra.mrb[0].mxu0 %v716
        %v1090 = vpop.f32.mrb[0].mxu0
        %v1091 = vadd.f32 0.0, %v1090
        %v1092 = vpop.f32.mrb[0].mxu0
        %v1093 = vpop.f32.mrb[0].mxu0
        %v1094 = vadd.f32 0.0, %v1093
        %v1095 = vpop.f32.mrb[0].mxu0
        %1096 = vmatprep.mubr.bf16.mxu0 %v721
        %1097 = vmatmul.mubr.bf16.gmra.mrb[0].mxu0 %v720
        %v1098 = vpop.f32.mrb[0].mxu0
        %v1099 = vadd.f32 0.0, %v1098
        %v1100 = vpop.f32.mrb[0].mxu0
        %v1101 = vpop.f32.mrb[0].mxu0
        %v1102 = vadd.f32 0.0, %v1101
        %v1103 = vpop.f32.mrb[0].mxu0
        %1104 = vmatprep.mubr.bf16.mxu0 %v725
        %1105 = vmatmul.mubr.bf16.gmra.mrb[0].mxu0 %v724
        %v1106 = vpop.f32.mrb[0].mxu0
        %v1107 = vadd.f32 0.0, %v1106
        %v1108 = vpop.f32.mrb[0].mxu0
        %v1109 = vpop.f32.mrb[0].mxu0
        %v1110 = vadd.f32 0.0, %v1109
        %v1111 = vpop.f32.mrb[0].mxu0
        %1112 = vmatprep.mubr.bf16.mxu0 %v729
        %1113 = vmatmul.mubr.bf16.gmra.mrb[0].mxu0 %v728
        %v1114 = vpop.f32.mrb[0].mxu0
        %v1115 = vadd.f32 0.0, %v1114
        %v1116 = vpop.f32.mrb[0].mxu0
        %v1117 = vpop.f32.mrb[0].mxu0
        %v1118 = vadd.f32 0.0, %v1117
        %v1119 = vpop.f32.mrb[0].mxu0
        %1120 = vmatprep.mubr.bf16.mxu0 %v733
        %1121 = vmatmul.mubr.bf16.gmra.mrb[0].mxu0 %v732
        %v1122 = vpop.f32.mrb[0].mxu0
        %v1123 = vadd.f32 0.0, %v1122
        %v1124 = vpop.f32.mrb[0].mxu0
        %v1125 = vpop.f32.mrb[0].mxu0
        %v1126 = vadd.f32 0.0, %v1125
        %v1127 = vpop.f32.mrb[0].mxu0
        %1128 = vmatprep.mubr.bf16.mxu0 %v737
        %1129 = vmatmul.mubr.bf16.gmra.mrb[0].mxu0 %v736
        %v1130 = vpop.f32.mrb[0].mxu0
        %v1131 = vadd.f32 0.0, %v1130
        %v1132 = vpop.f32.mrb[0].mxu0
        %v1133 = vpop.f32.mrb[0].mxu0
        %v1134 = vadd.f32 0.0, %v1133
        %v1135 = vpop.f32.mrb[0].mxu0
        %1136 = vmatprep.mubr.bf16.mxu0 %v741
        %1137 = vmatmul.mubr.bf16.gmra.mrb[0].mxu0 %v740
        %v1138 = vpop.f32.mrb[0].mxu0
        %v1139 = vadd.f32 0.0, %v1138
        %v1140 = vpop.f32.mrb[0].mxu0
        %v1141 = vpop.f32.mrb[0].mxu0
        %v1142 = vadd.f32 0.0, %v1141
        %v1143 = vpop.f32.mrb[0].mxu0
        %1144 = vmatprep.mubr.bf16.mxu0 %v745
        %1145 = vmatmul.mubr.bf16.gmra.mrb[0].mxu0 %v744
        %v1146 = vpop.f32.mrb[0].mxu0
        %v1147 = vadd.f32 0.0, %v1146
        %v1148 = vpop.f32.mrb[0].mxu0
        %v1149 = vpop.f32.mrb[0].mxu0
        %v1150 = vadd.f32 0.0, %v1149
        %v1151 = vpop.f32.mrb[0].mxu0
        %1152 = vmatprep.mubr.bf16.mxu0 %v749
        %1153 = vmatmul.mubr.bf16.gmra.mrb[0].mxu0 %v748
        %v1154 = vpop.f32.mrb[0].mxu0
        %v1155 = vadd.f32 0.0, %v1154
        %v1156 = vpop.f32.mrb[0].mxu0
        %v1157 = vpop.f32.mrb[0].mxu0
        %v1158 = vadd.f32 0.0, %v1157
        %v1159 = vpop.f32.mrb[0].mxu0
        %1160 = vmatprep.mubr.bf16.mxu0 %v753
        %1161 = vmatmul.mubr.bf16.gmra.mrb[0].mxu0 %v752
        %v1162 = vpop.f32.mrb[0].mxu0
        %v1163 = vadd.f32 0.0, %v1162
        %v1164 = vpop.f32.mrb[0].mxu0
        %v1165 = vpop.f32.mrb[0].mxu0
        %v1166 = vadd.f32 0.0, %v1165
        %v1167 = vpop.f32.mrb[0].mxu0
        %1168 = vmatprep.mubr.bf16.mxu0 %v757
        %1169 = vmatmul.mubr.bf16.gmra.mrb[0].mxu0 %v756
        %v1170 = vpop.f32.mrb[0].mxu0
        %v1171 = vadd.f32 0.0, %v1170
        %v1172 = vpop.f32.mrb[0].mxu0
        %v1173 = vpop.f32.mrb[0].mxu0
        %v1174 = vadd.f32 0.0, %v1173
        %v1175 = vpop.f32.mrb[0].mxu0
        %1176 = vdwg.mxu0
        %1177 = vmatprep.subr.bf16.mxu0 0
        %1178 = vmatpush1.bf16.msra.mxu0 %v968
        %1179 = vmatprep.subr.bf16.mxu0 0
        %1180 = vmatpush1.bf16.msra.mxu0 %v969
        %1181 = vmatprep.subr.bf16.mxu0 0
        %1182 = vmatpush1.bf16.msra.mxu0 %v970
        %1183 = vmatprep.subr.bf16.mxu0 0
        %1184 = vmatpush1.bf16.msra.mxu0 %v971
        %1185 = vmatprep.subr.bf16.mxu0 0
        %1186 = vmatpush1.bf16.msra.mxu0 %v972
        %1187 = vmatprep.subr.bf16.mxu0 0
        %1188 = vmatpush1.bf16.msra.mxu0 %v973
        %1189 = vmatprep.subr.bf16.mxu0 0
        %1190 = vmatpush1.bf16.msra.mxu0 %v974
        %1191 = vmatprep.subr.bf16.mxu0 0
        %1192 = vmatpush1.bf16.msra.mxu0 %v975
        %1193 = vmatprep.subr.bf16.mxu0 0
        %1194 = vmatpush1.bf16.msra.mxu0 %v976
        %1195 = vmatprep.subr.bf16.mxu0 0
        %1196 = vmatpush1.bf16.msra.mxu0 %v977
        %1197 = vmatprep.subr.bf16.mxu0 0
        %1198 = vmatpush1.bf16.msra.mxu0 %v978
        %1199 = vmatprep.subr.bf16.mxu0 0
        %1200 = vmatpush1.bf16.msra.mxu0 %v979
        %1201 = vmatprep.subr.bf16.mxu0 0
        %1202 = vmatpush1.bf16.msra.mxu0 %v980
        %1203 = vmatprep.subr.bf16.mxu0 0
        %1204 = vmatpush1.bf16.msra.mxu0 %v981
        %1205 = vmatprep.subr.bf16.mxu0 0
        %1206 = vmatpush1.bf16.msra.mxu0 %v982
        %1207 = vmatprep.subr.bf16.mxu0 0
        %1208 = vmatpush1.bf16.msra.mxu0 %v983
        %1209 = vmatprep.mubr.bf16.mxu0 %v699
        %1210 = vmatmul.mubr.bf16.gmra.mrb[0].mxu0 %v698
        %v1211 = vpop.f32.mrb[0].mxu0
        %v1212 = vadd.f32 %v1051, %v1211
        %v1213 = vpop.f32.mrb[0].mxu0
        %v1214 = vpop.f32.mrb[0].mxu0
        %v1215 = vadd.f32 %v1054, %v1214
        %v1216 = vpop.f32.mrb[0].mxu0
        %1217 = vmatprep.mubr.bf16.mxu0 %v703
        %1218 = vmatmul.mubr.bf16.gmra.mrb[0].mxu0 %v702
        %v1219 = vpop.f32.mrb[0].mxu0
        %v1220 = vadd.f32 %v1059, %v1219
        %v1221 = vpop.f32.mrb[0].mxu0
        %v1222 = vpop.f32.mrb[0].mxu0
        %v1223 = vadd.f32 %v1062, %v1222
        %v1224 = vpop.f32.mrb[0].mxu0
        %1225 = vmatprep.mubr.bf16.mxu0 %v707
        %1226 = vmatmul.mubr.bf16.gmra.mrb[0].mxu0 %v706
        %v1227 = vpop.f32.mrb[0].mxu0
        %v1228 = vadd.f32 %v1067, %v1227
        %v1229 = vpop.f32.mrb[0].mxu0
        %v1230 = vpop.f32.mrb[0].mxu0
        %v1231 = vadd.f32 %v1070, %v1230
        %v1232 = vpop.f32.mrb[0].mxu0
        %1233 = vmatprep.mubr.bf16.mxu0 %v711
        %1234 = vmatmul.mubr.bf16.gmra.mrb[0].mxu0 %v710
        %v1235 = vpop.f32.mrb[0].mxu0
        %v1236 = vadd.f32 %v1075, %v1235
        %v1237 = vpop.f32.mrb[0].mxu0
        %v1238 = vpop.f32.mrb[0].mxu0
        %v1239 = vadd.f32 %v1078, %v1238
        %v1240 = vpop.f32.mrb[0].mxu0
        %1241 = vmatprep.mubr.bf16.mxu0 %v715
        %1242 = vmatmul.mubr.bf16.gmra.mrb[0].mxu0 %v714
        %v1243 = vpop.f32.mrb[0].mxu0
        %v1244 = vadd.f32 %v1083, %v1243
        %v1245 = vpop.f32.mrb[0].mxu0
        %v1246 = vpop.f32.mrb[0].mxu0
        %v1247 = vadd.f32 %v1086, %v1246
        %v1248 = vpop.f32.mrb[0].mxu0
        %1249 = vmatprep.mubr.bf16.mxu0 %v719
        %1250 = vmatmul.mubr.bf16.gmra.mrb[0].mxu0 %v718
        %v1251 = vpop.f32.mrb[0].mxu0
        %v1252 = vadd.f32 %v1091, %v1251
        %v1253 = vpop.f32.mrb[0].mxu0
        %v1254 = vpop.f32.mrb[0].mxu0
        %v1255 = vadd.f32 %v1094, %v1254
        %v1256 = vpop.f32.mrb[0].mxu0
        %1257 = vmatprep.mubr.bf16.mxu0 %v723
        %1258 = vmatmul.mubr.bf16.gmra.mrb[0].mxu0 %v722
        %v1259 = vpop.f32.mrb[0].mxu0
        %v1260 = vadd.f32 %v1099, %v1259
        %v1261 = vpop.f32.mrb[0].mxu0
        %v1262 = vpop.f32.mrb[0].mxu0
        %v1263 = vadd.f32 %v1102, %v1262
        %v1264 = vpop.f32.mrb[0].mxu0
        %1265 = vmatprep.mubr.bf16.mxu0 %v727
        %1266 = vmatmul.mubr.bf16.gmra.mrb[0].mxu0 %v726
        %v1267 = vpop.f32.mrb[0].mxu0
        %v1268 = vadd.f32 %v1107, %v1267
        %v1269 = vpop.f32.mrb[0].mxu0
        %v1270 = vpop.f32.mrb[0].mxu0
        %v1271 = vadd.f32 %v1110, %v1270
        %v1272 = vpop.f32.mrb[0].mxu0
        %1273 = vmatprep.mubr.bf16.mxu0 %v731
        %1274 = vmatmul.mubr.bf16.gmra.mrb[0].mxu0 %v730
        %v1275 = vpop.f32.mrb[0].mxu0
        %v1276 = vadd.f32 %v1115, %v1275
        %v1277 = vpop.f32.mrb[0].mxu0
        %v1278 = vpop.f32.mrb[0].mxu0
        %v1279 = vadd.f32 %v1118, %v1278
        %v1280 = vpop.f32.mrb[0].mxu0
        %1281 = vmatprep.mubr.bf16.mxu0 %v735
        %1282 = vmatmul.mubr.bf16.gmra.mrb[0].mxu0 %v734
        %v1283 = vpop.f32.mrb[0].mxu0
        %v1284 = vadd.f32 %v1123, %v1283
        %v1285 = vpop.f32.mrb[0].mxu0
        %v1286 = vpop.f32.mrb[0].mxu0
        %v1287 = vadd.f32 %v1126, %v1286
        %v1288 = vpop.f32.mrb[0].mxu0
        %1289 = vmatprep.mubr.bf16.mxu0 %v739
        %1290 = vmatmul.mubr.bf16.gmra.mrb[0].mxu0 %v738
        %v1291 = vpop.f32.mrb[0].mxu0
        %v1292 = vadd.f32 %v1131, %v1291
        %v1293 = vpop.f32.mrb[0].mxu0
        %v1294 = vpop.f32.mrb[0].mxu0
        %v1295 = vadd.f32 %v1134, %v1294
        %v1296 = vpop.f32.mrb[0].mxu0
        %1297 = vmatprep.mubr.bf16.mxu0 %v743
        %1298 = vmatmul.mubr.bf16.gmra.mrb[0].mxu0 %v742
        %v1299 = vpop.f32.mrb[0].mxu0
        %v1300 = vadd.f32 %v1139, %v1299
        %v1301 = vpop.f32.mrb[0].mxu0
        %v1302 = vpop.f32.mrb[0].mxu0
        %v1303 = vadd.f32 %v1142, %v1302
        %v1304 = vpop.f32.mrb[0].mxu0
        %1305 = vmatprep.mubr.bf16.mxu0 %v747
        %1306 = vmatmul.mubr.bf16.gmra.mrb[0].mxu0 %v746
        %v1307 = vpop.f32.mrb[0].mxu0
        %v1308 = vadd.f32 %v1147, %v1307
        %v1309 = vpop.f32.mrb[0].mxu0
        %v1310 = vpop.f32.mrb[0].mxu0
        %v1311 = vadd.f32 %v1150, %v1310
        %v1312 = vpop.f32.mrb[0].mxu0
        %1313 = vmatprep.mubr.bf16.mxu0 %v751
        %1314 = vmatmul.mubr.bf16.gmra.mrb[0].mxu0 %v750
        %v1315 = vpop.f32.mrb[0].mxu0
        %v1316 = vadd.f32 %v1155, %v1315
        %v1317 = vpop.f32.mrb[0].mxu0
        %v1318 = vpop.f32.mrb[0].mxu0
        %v1319 = vadd.f32 %v1158, %v1318
        %v1320 = vpop.f32.mrb[0].mxu0
        %1321 = vmatprep.mubr.bf16.mxu0 %v755
        %1322 = vmatmul.mubr.bf16.gmra.mrb[0].mxu0 %v754
        %v1323 = vpop.f32.mrb[0].mxu0
        %v1324 = vadd.f32 %v1163, %v1323
        %v1325 = vpop.f32.mrb[0].mxu0
        %v1326 = vpop.f32.mrb[0].mxu0
        %v1327 = vadd.f32 %v1166, %v1326
        %v1328 = vpop.f32.mrb[0].mxu0
        %1329 = vmatprep.mubr.bf16.mxu0 %v759
        %1330 = vmatmul.mubr.bf16.gmra.mrb[0].mxu0 %v758
        %v1331 = vpop.f32.mrb[0].mxu0
        %v1332 = vadd.f32 %v1171, %v1331
        %v1333 = vpop.f32.mrb[0].mxu0
        %v1334 = vpop.f32.mrb[0].mxu0
        %v1335 = vadd.f32 %v1174, %v1334
        %v1336 = vpop.f32.mrb[0].mxu0
        %1337 = vdwg.mxu0
        %v1338 = vadd.f32 %v408, %v1212
        %v1339 = vadd.f32 %v409, %v1215
        %v1340 = vadd.f32 %v410, %v1220
        %v1341 = vadd.f32 %v411, %v1223
        %v1342 = vadd.f32 %v412, %v1228
        %v1343 = vadd.f32 %v413, %v1231
        %v1344 = vadd.f32 %v414, %v1236
        %v1345 = vadd.f32 %v415, %v1239
        %v1346 = vadd.f32 %v416, %v1244
        %v1347 = vadd.f32 %v417, %v1247
        %v1348 = vadd.f32 %v418, %v1252
        %v1349 = vadd.f32 %v419, %v1255
        %v1350 = vadd.f32 %v420, %v1260
        %v1351 = vadd.f32 %v421, %v1263
        %v1352 = vadd.f32 %v422, %v1268
        %v1353 = vadd.f32 %v423, %v1271
        %v1354 = vadd.f32 %v424, %v1276
        %v1355 = vadd.f32 %v425, %v1279
        %v1356 = vadd.f32 %v426, %v1284
        %v1357 = vadd.f32 %v427, %v1287
        %v1358 = vadd.f32 %v428, %v1292
        %v1359 = vadd.f32 %v429, %v1295
        %v1360 = vadd.f32 %v430, %v1300
        %v1361 = vadd.f32 %v431, %v1303
        %v1362 = vadd.f32 %v432, %v1308
        %v1363 = vadd.f32 %v433, %v1311
        %v1364 = vadd.f32 %v434, %v1316
        %v1365 = vadd.f32 %v435, %v1319
        %v1366 = vadd.f32 %v436, %v1324
        %v1367 = vadd.f32 %v437, %v1327
        %v1368 = vadd.f32 %v438, %v1332
        %v1369 = vadd.f32 %v439, %v1335
        %1370 = vst [vmem:[#allocation2] sm:$0xff] %v1338
        %1371 = vst [vmem:[#allocation2 + $0x8] sm:$0xff] %v1339
        %1372 = vst [vmem:[#allocation2 + $0x10] sm:$0xff] %v1340
        %1373 = vst [vmem:[#allocation2 + $0x18] sm:$0xff] %v1341
        %1374 = vst [vmem:[#allocation2 + $0x20] sm:$0xff] %v1342
        %1375 = vst [vmem:[#allocation2 + $0x28] sm:$0xff] %v1343
        %1376 = vst [vmem:[#allocation2 + $0x30] sm:$0xff] %v1344
        %1377 = vst [vmem:[#allocation2 + $0x38] sm:$0xff] %v1345
        %1378 = vst [vmem:[#allocation2 + $0x40] sm:$0xff] %v1346
        %1379 = vst [vmem:[#allocation2 + $0x48] sm:$0xff] %v1347
        %1380 = vst [vmem:[#allocation2 + $0x50] sm:$0xff] %v1348
        %1381 = vst [vmem:[#allocation2 + $0x58] sm:$0xff] %v1349
        %1382 = vst [vmem:[#allocation2 + $0x60] sm:$0xff] %v1350
        %1383 = vst [vmem:[#allocation2 + $0x68] sm:$0xff] %v1351
        %1384 = vst [vmem:[#allocation2 + $0x70] sm:$0xff] %v1352
        %1385 = vst [vmem:[#allocation2 + $0x78] sm:$0xff] %v1353
        %1386 = vst [vmem:[#allocation2 + $0x80] sm:$0xff] %v1354
        %1387 = vst [vmem:[#allocation2 + $0x88] sm:$0xff] %v1355
        %1388 = vst [vmem:[#allocation2 + $0x90] sm:$0xff] %v1356
        %1389 = vst [vmem:[#allocation2 + $0x98] sm:$0xff] %v1357
        %1390 = vst [vmem:[#allocation2 + $0xa0] sm:$0xff] %v1358
        %1391 = vst [vmem:[#allocation2 + $0xa8] sm:$0xff] %v1359
        %1392 = vst [vmem:[#allocation2 + $0xb0] sm:$0xff] %v1360
        %1393 = vst [vmem:[#allocation2 + $0xb8] sm:$0xff] %v1361
        %1394 = vst [vmem:[#allocation2 + $0xc0] sm:$0xff] %v1362
        %1395 = vst [vmem:[#allocation2 + $0xc8] sm:$0xff] %v1363
        %1396 = vst [vmem:[#allocation2 + $0xd0] sm:$0xff] %v1364
        %1397 = vst [vmem:[#allocation2 + $0xd8] sm:$0xff] %v1365
        %1398 = vst [vmem:[#allocation2 + $0xe0] sm:$0xff] %v1366
        %1399 = vst [vmem:[#allocation2 + $0xe8] sm:$0xff] %v1367
        %1400 = vst [vmem:[#allocation2 + $0xf0] sm:$0xff] %v1368
        %1401 = vst [vmem:[#allocation2 + $0xf8] sm:$0xff] %v1369
        %p1402 = scmp.eq.s32.totalorder %s26, 1
        // Predicated region
        $region45: #{lightgcn_forward.4} parent=35 // pred_check
          %p1403 = pneg %p1402
        $region46: #{lightgcn_forward.4} parent=35 // pred_check_branch
          %1405 = sbr.rel (%p1403) target = $region48
        $region47: #{lightgcn_forward.4} parent=35 // pred_region
          %v1406 = vld [vmem:[#allocation2] sm:$0xff]
          %v1407 = vld [vmem:[#allocation2 + $0x8] sm:$0xff]
          %v1408 = vld [vmem:[#allocation2 + $0x10] sm:$0xff]
          %v1409 = vld [vmem:[#allocation2 + $0x18] sm:$0xff]
          %v1410 = vld [vmem:[#allocation2 + $0x20] sm:$0xff]
          %v1411 = vld [vmem:[#allocation2 + $0x28] sm:$0xff]
          %v1412 = vld [vmem:[#allocation2 + $0x30] sm:$0xff]
          %v1413 = vld [vmem:[#allocation2 + $0x38] sm:$0xff]
          %v1414 = vld [vmem:[#allocation2 + $0x40] sm:$0xff]
          %v1415 = vld [vmem:[#allocation2 + $0x48] sm:$0xff]
          %v1416 = vld [vmem:[#allocation2 + $0x50] sm:$0xff]
          %v1417 = vld [vmem:[#allocation2 + $0x58] sm:$0xff]
          %v1418 = vld [vmem:[#allocation2 + $0x60] sm:$0xff]
          %v1419 = vld [vmem:[#allocation2 + $0x68] sm:$0xff]
          %v1420 = vld [vmem:[#allocation2 + $0x70] sm:$0xff]
          %v1421 = vld [vmem:[#allocation2 + $0x78] sm:$0xff]
          %v1422 = vld [vmem:[#allocation2 + $0x80] sm:$0xff]
          %v1423 = vld [vmem:[#allocation2 + $0x88] sm:$0xff]
          %v1424 = vld [vmem:[#allocation2 + $0x90] sm:$0xff]
          %v1425 = vld [vmem:[#allocation2 + $0x98] sm:$0xff]
          %v1426 = vld [vmem:[#allocation2 + $0xa0] sm:$0xff]
          %v1427 = vld [vmem:[#allocation2 + $0xa8] sm:$0xff]
          %v1428 = vld [vmem:[#allocation2 + $0xb0] sm:$0xff]
          %v1429 = vld [vmem:[#allocation2 + $0xb8] sm:$0xff]
          %v1430 = vld [vmem:[#allocation2 + $0xc0] sm:$0xff]
          %v1431 = vld [vmem:[#allocation2 + $0xc8] sm:$0xff]
          %v1432 = vld [vmem:[#allocation2 + $0xd0] sm:$0xff]
          %v1433 = vld [vmem:[#allocation2 + $0xd8] sm:$0xff]
          %v1434 = vld [vmem:[#allocation2 + $0xe0] sm:$0xff]
          %v1435 = vld [vmem:[#allocation2 + $0xe8] sm:$0xff]
          %v1436 = vld [vmem:[#allocation2 + $0xf0] sm:$0xff]
          %v1437 = vld [vmem:[#allocation2 + $0xf8] sm:$0xff]
          %v1438 = vpack.c.bf16 %v1407, %v1406
          %v1439 = vpack.c.bf16 %v1409, %v1408
          %v1440 = vpack.c.bf16 %v1411, %v1410
          %v1441 = vpack.c.bf16 %v1413, %v1412
          %v1442 = vpack.c.bf16 %v1415, %v1414
          %v1443 = vpack.c.bf16 %v1417, %v1416
          %v1444 = vpack.c.bf16 %v1419, %v1418
          %v1445 = vpack.c.bf16 %v1421, %v1420
          %v1446 = vpack.c.bf16 %v1423, %v1422
          %v1447 = vpack.c.bf16 %v1425, %v1424
          %v1448 = vpack.c.bf16 %v1427, %v1426
          %v1449 = vpack.c.bf16 %v1429, %v1428
          %v1450 = vpack.c.bf16 %v1431, %v1430
          %v1451 = vpack.c.bf16 %v1433, %v1432
          %v1452 = vpack.c.bf16 %v1435, %v1434
          %v1453 = vpack.c.bf16 %v1437, %v1436
          %v1470 = vunpack.c.l.b16 %v1438
          %v1471 = vunpack.c.h.b16 %v1438
          %v1472 = vunpack.c.l.b16 %v1439
          %v1473 = vunpack.c.h.b16 %v1439
          %v1474 = vunpack.c.l.b16 %v1440
          %v1475 = vunpack.c.h.b16 %v1440
          %v1476 = vunpack.c.l.b16 %v1441
          %v1477 = vunpack.c.h.b16 %v1441
          %v1478 = vunpack.c.l.b16 %v1442
          %v1479 = vunpack.c.h.b16 %v1442
          %v1480 = vunpack.c.l.b16 %v1443
          %v1481 = vunpack.c.h.b16 %v1443
          %v1482 = vunpack.c.l.b16 %v1444
          %v1483 = vunpack.c.h.b16 %v1444
          %v1484 = vunpack.c.l.b16 %v1445
          %v1485 = vunpack.c.h.b16 %v1445
          %v1486 = vunpack.c.l.b16 %v1446
          %v1487 = vunpack.c.h.b16 %v1446
          %v1488 = vunpack.c.l.b16 %v1447
          %v1489 = vunpack.c.h.b16 %v1447
          %v1490 = vunpack.c.l.b16 %v1448
          %v1491 = vunpack.c.h.b16 %v1448
          %v1492 = vunpack.c.l.b16 %v1449
          %v1493 = vunpack.c.h.b16 %v1449
          %v1494 = vunpack.c.l.b16 %v1450
          %v1495 = vunpack.c.h.b16 %v1450
          %v1496 = vunpack.c.l.b16 %v1451
          %v1497 = vunpack.c.h.b16 %v1451
          %v1498 = vunpack.c.l.b16 %v1452
          %v1499 = vunpack.c.h.b16 %v1452
          %v1500 = vunpack.c.l.b16 %v1453
          %v1501 = vunpack.c.h.b16 %v1453
          %v1502 = vpack.c.b16 %v1470, %v1470
          %v1503 = vpack.c.b16 %v1471, %v1471
          %v1504 = vpack.c.b16 %v1472, %v1472
          %v1505 = vpack.c.b16 %v1473, %v1473
          %v1506 = vpack.c.b16 %v1474, %v1474
          %v1507 = vpack.c.b16 %v1475, %v1475
          %v1508 = vpack.c.b16 %v1476, %v1476
          %v1509 = vpack.c.b16 %v1477, %v1477
          %v1510 = vpack.c.b16 %v1478, %v1478
          %v1511 = vpack.c.b16 %v1479, %v1479
          %v1512 = vpack.c.b16 %v1480, %v1480
          %v1513 = vpack.c.b16 %v1481, %v1481
          %v1514 = vpack.c.b16 %v1482, %v1482
          %v1515 = vpack.c.b16 %v1483, %v1483
          %v1516 = vpack.c.b16 %v1484, %v1484
          %v1517 = vpack.c.b16 %v1485, %v1485
          %v1518 = vpack.c.b16 %v1486, %v1486
          %v1519 = vpack.c.b16 %v1487, %v1487
          %v1520 = vpack.c.b16 %v1488, %v1488
          %v1521 = vpack.c.b16 %v1489, %v1489
          %v1522 = vpack.c.b16 %v1490, %v1490
          %v1523 = vpack.c.b16 %v1491, %v1491
          %v1524 = vpack.c.b16 %v1492, %v1492
          %v1525 = vpack.c.b16 %v1493, %v1493
          %v1526 = vpack.c.b16 %v1494, %v1494
          %v1527 = vpack.c.b16 %v1495, %v1495
          %v1528 = vpack.c.b16 %v1496, %v1496
          %v1529 = vpack.c.b16 %v1497, %v1497
          %v1530 = vpack.c.b16 %v1498, %v1498
          %v1531 = vpack.c.b16 %v1499, %v1499
          %v1532 = vpack.c.b16 %v1500, %v1500
          %v1533 = vpack.c.b16 %v1501, %v1501
          %1566 = vst [vmem:[%s294] sm:$0xf] %v1502
          %1567 = vst [vmem:[%s294 + $0x4] sm:$0xf] %v1503
          %1568 = vst [vmem:[%s294 + $0x8] sm:$0xf] %v1504
          %1569 = vst [vmem:[%s294 + $0xc] sm:$0xf] %v1505
          %1570 = vst [vmem:[%s294 + $0x10] sm:$0xf] %v1506
          %1571 = vst [vmem:[%s294 + $0x14] sm:$0xf] %v1507
          %1572 = vst [vmem:[%s294 + $0x18] sm:$0xf] %v1508
          %1573 = vst [vmem:[%s294 + $0x1c] sm:$0xf] %v1509
          %1574 = vst [vmem:[%s294 + $0x20] sm:$0xf] %v1510
          %1575 = vst [vmem:[%s294 + $0x24] sm:$0xf] %v1511
          %1576 = vst [vmem:[%s294 + $0x28] sm:$0xf] %v1512
          %1577 = vst [vmem:[%s294 + $0x2c] sm:$0xf] %v1513
          %1578 = vst [vmem:[%s294 + $0x30] sm:$0xf] %v1514
          %1579 = vst [vmem:[%s294 + $0x34] sm:$0xf] %v1515
          %1580 = vst [vmem:[%s294 + $0x38] sm:$0xf] %v1516
          %1581 = vst [vmem:[%s294 + $0x3c] sm:$0xf] %v1517
          %1582 = vst [vmem:[%s294 + $0x40] sm:$0xf] %v1518
          %1583 = vst [vmem:[%s294 + $0x44] sm:$0xf] %v1519
          %1584 = vst [vmem:[%s294 + $0x48] sm:$0xf] %v1520
          %1585 = vst [vmem:[%s294 + $0x4c] sm:$0xf] %v1521
          %1586 = vst [vmem:[%s294 + $0x50] sm:$0xf] %v1522
          %1587 = vst [vmem:[%s294 + $0x54] sm:$0xf] %v1523
          %1588 = vst [vmem:[%s294 + $0x58] sm:$0xf] %v1524
          %1589 = vst [vmem:[%s294 + $0x5c] sm:$0xf] %v1525
          %1590 = vst [vmem:[%s294 + $0x60] sm:$0xf] %v1526
          %1591 = vst [vmem:[%s294 + $0x64] sm:$0xf] %v1527
          %1592 = vst [vmem:[%s294 + $0x68] sm:$0xf] %v1528
          %1593 = vst [vmem:[%s294 + $0x6c] sm:$0xf] %v1529
          %1594 = vst [vmem:[%s294 + $0x70] sm:$0xf] %v1530
          %1595 = vst [vmem:[%s294 + $0x74] sm:$0xf] %v1531
          %1596 = vst [vmem:[%s294 + $0x78] sm:$0xf] %v1532
          %1597 = vst [vmem:[%s294 + $0x7c] sm:$0xf] %v1533
          %v1598 = vld [vmem:[%s288] sm:$0xff]
          %v1599 = vld [vmem:[%s288 + $0x8] sm:$0xff]
          %v1600 = vld [vmem:[%s288 + $0x10] sm:$0xff]
          %v1601 = vld [vmem:[%s288 + $0x18] sm:$0xff]
          %v1602 = vld [vmem:[%s288 + $0x20] sm:$0xff]
          %v1603 = vld [vmem:[%s288 + $0x28] sm:$0xff]
          %v1604 = vld [vmem:[%s288 + $0x30] sm:$0xff]
          %v1605 = vld [vmem:[%s288 + $0x38] sm:$0xff]
          %v1606 = vld [vmem:[%s288 + $0x40] sm:$0xff]
          %v1607 = vld [vmem:[%s288 + $0x48] sm:$0xff]
          %v1608 = vld [vmem:[%s288 + $0x50] sm:$0xff]
          %v1609 = vld [vmem:[%s288 + $0x58] sm:$0xff]
          %v1610 = vld [vmem:[%s288 + $0x60] sm:$0xff]
          %v1611 = vld [vmem:[%s288 + $0x68] sm:$0xff]
          %v1612 = vld [vmem:[%s288 + $0x70] sm:$0xff]
          %v1613 = vld [vmem:[%s288 + $0x78] sm:$0xff]
          %v1614 = vld [vmem:[%s288 + $0x80] sm:$0xff]
          %v1615 = vld [vmem:[%s288 + $0x88] sm:$0xff]
          %v1616 = vld [vmem:[%s288 + $0x90] sm:$0xff]
          %v1617 = vld [vmem:[%s288 + $0x98] sm:$0xff]
          %v1618 = vld [vmem:[%s288 + $0xa0] sm:$0xff]
          %v1619 = vld [vmem:[%s288 + $0xa8] sm:$0xff]
          %v1620 = vld [vmem:[%s288 + $0xb0] sm:$0xff]
          %v1621 = vld [vmem:[%s288 + $0xb8] sm:$0xff]
          %v1622 = vld [vmem:[%s288 + $0xc0] sm:$0xff]
          %v1623 = vld [vmem:[%s288 + $0xc8] sm:$0xff]
          %v1624 = vld [vmem:[%s288 + $0xd0] sm:$0xff]
          %v1625 = vld [vmem:[%s288 + $0xd8] sm:$0xff]
          %v1626 = vld [vmem:[%s288 + $0xe0] sm:$0xff]
          %v1627 = vld [vmem:[%s288 + $0xe8] sm:$0xff]
          %v1628 = vld [vmem:[%s288 + $0xf0] sm:$0xff]
          %v1629 = vld [vmem:[%s288 + $0xf8] sm:$0xff]
          %s1630 = sld [smem:[#allocation3]]
          %v1631 = vstv %s1630
          %v1632 = vmul.f32 %v1631, %v1406
          %v1633 = vmul.f32 %v1631, %v1407
          %v1634 = vmul.f32 %v1631, %v1408
          %v1635 = vmul.f32 %v1631, %v1409
          %v1636 = vmul.f32 %v1631, %v1410
          %v1637 = vmul.f32 %v1631, %v1411
          %v1638 = vmul.f32 %v1631, %v1412
          %v1639 = vmul.f32 %v1631, %v1413
          %v1640 = vmul.f32 %v1631, %v1414
          %v1641 = vmul.f32 %v1631, %v1415
          %v1642 = vmul.f32 %v1631, %v1416
          %v1643 = vmul.f32 %v1631, %v1417
          %v1644 = vmul.f32 %v1631, %v1418
          %v1645 = vmul.f32 %v1631, %v1419
          %v1646 = vmul.f32 %v1631, %v1420
          %v1647 = vmul.f32 %v1631, %v1421
          %v1648 = vmul.f32 %v1631, %v1422
          %v1649 = vmul.f32 %v1631, %v1423
          %v1650 = vmul.f32 %v1631, %v1424
          %v1651 = vmul.f32 %v1631, %v1425
          %v1652 = vmul.f32 %v1631, %v1426
          %v1653 = vmul.f32 %v1631, %v1427
          %v1654 = vmul.f32 %v1631, %v1428
          %v1655 = vmul.f32 %v1631, %v1429
          %v1656 = vmul.f32 %v1631, %v1430
          %v1657 = vmul.f32 %v1631, %v1431
          %v1658 = vmul.f32 %v1631, %v1432
          %v1659 = vmul.f32 %v1631, %v1433
          %v1660 = vmul.f32 %v1631, %v1434
          %v1661 = vmul.f32 %v1631, %v1435
          %v1662 = vmul.f32 %v1631, %v1436
          %v1663 = vmul.f32 %v1631, %v1437
          %v1664 = vadd.f32 %v1598, %v1632
          %v1665 = vadd.f32 %v1599, %v1633
          %v1666 = vadd.f32 %v1600, %v1634
          %v1667 = vadd.f32 %v1601, %v1635
          %v1668 = vadd.f32 %v1602, %v1636
          %v1669 = vadd.f32 %v1603, %v1637
          %v1670 = vadd.f32 %v1604, %v1638
          %v1671 = vadd.f32 %v1605, %v1639
          %v1672 = vadd.f32 %v1606, %v1640
          %v1673 = vadd.f32 %v1607, %v1641
          %v1674 = vadd.f32 %v1608, %v1642
          %v1675 = vadd.f32 %v1609, %v1643
          %v1676 = vadd.f32 %v1610, %v1644
          %v1677 = vadd.f32 %v1611, %v1645
          %v1678 = vadd.f32 %v1612, %v1646
          %v1679 = vadd.f32 %v1613, %v1647
          %v1680 = vadd.f32 %v1614, %v1648
          %v1681 = vadd.f32 %v1615, %v1649
          %v1682 = vadd.f32 %v1616, %v1650
          %v1683 = vadd.f32 %v1617, %v1651
          %v1684 = vadd.f32 %v1618, %v1652
          %v1685 = vadd.f32 %v1619, %v1653
          %v1686 = vadd.f32 %v1620, %v1654
          %v1687 = vadd.f32 %v1621, %v1655
          %v1688 = vadd.f32 %v1622, %v1656
          %v1689 = vadd.f32 %v1623, %v1657
          %v1690 = vadd.f32 %v1624, %v1658
          %v1691 = vadd.f32 %v1625, %v1659
          %v1692 = vadd.f32 %v1626, %v1660
          %v1693 = vadd.f32 %v1627, %v1661
          %v1694 = vadd.f32 %v1628, %v1662
          %v1695 = vadd.f32 %v1629, %v1663
          %1696 = vst [vmem:[%s300] sm:$0xff] %v1664
          %1697 = vst [vmem:[%s300 + $0x8] sm:$0xff] %v1665
          %1698 = vst [vmem:[%s300 + $0x10] sm:$0xff] %v1666
          %1699 = vst [vmem:[%s300 + $0x18] sm:$0xff] %v1667
          %1700 = vst [vmem:[%s300 + $0x20] sm:$0xff] %v1668
          %1701 = vst [vmem:[%s300 + $0x28] sm:$0xff] %v1669
          %1702 = vst [vmem:[%s300 + $0x30] sm:$0xff] %v1670
          %1703 = vst [vmem:[%s300 + $0x38] sm:$0xff] %v1671
          %1704 = vst [vmem:[%s300 + $0x40] sm:$0xff] %v1672
          %1705 = vst [vmem:[%s300 + $0x48] sm:$0xff] %v1673
          %1706 = vst [vmem:[%s300 + $0x50] sm:$0xff] %v1674
          %1707 = vst [vmem:[%s300 + $0x58] sm:$0xff] %v1675
          %1708 = vst [vmem:[%s300 + $0x60] sm:$0xff] %v1676
          %1709 = vst [vmem:[%s300 + $0x68] sm:$0xff] %v1677
          %1710 = vst [vmem:[%s300 + $0x70] sm:$0xff] %v1678
          %1711 = vst [vmem:[%s300 + $0x78] sm:$0xff] %v1679
          %1712 = vst [vmem:[%s300 + $0x80] sm:$0xff] %v1680
          %1713 = vst [vmem:[%s300 + $0x88] sm:$0xff] %v1681
          %1714 = vst [vmem:[%s300 + $0x90] sm:$0xff] %v1682
          %1715 = vst [vmem:[%s300 + $0x98] sm:$0xff] %v1683
          %1716 = vst [vmem:[%s300 + $0xa0] sm:$0xff] %v1684
          %1717 = vst [vmem:[%s300 + $0xa8] sm:$0xff] %v1685
          %1718 = vst [vmem:[%s300 + $0xb0] sm:$0xff] %v1686
          %1719 = vst [vmem:[%s300 + $0xb8] sm:$0xff] %v1687
          %1720 = vst [vmem:[%s300 + $0xc0] sm:$0xff] %v1688
          %1721 = vst [vmem:[%s300 + $0xc8] sm:$0xff] %v1689
          %1722 = vst [vmem:[%s300 + $0xd0] sm:$0xff] %v1690
          %1723 = vst [vmem:[%s300 + $0xd8] sm:$0xff] %v1691
          %1724 = vst [vmem:[%s300 + $0xe0] sm:$0xff] %v1692
          %1725 = vst [vmem:[%s300 + $0xe8] sm:$0xff] %v1693
          %1726 = vst [vmem:[%s300 + $0xf0] sm:$0xff] %v1694
          %1727 = vst [vmem:[%s300 + $0xf8] sm:$0xff] %v1695
        $region48: #{lightgcn_forward.4} parent=35 // pred_fallthru
          _
        %s1728 = smul.u32 32, %s25
        %p1729 = scmp.lt.s32.totalorder %s1728, 127
        %s1730 = scalar_select %p1729, %s1728, 127
        %s1731 = smul.addr %s1730, 4
        %s1732 = scalar_lea.vmem %s4, %s1731
        %s1733 = smul.u32 32, %s25
        %p1734 = scmp.lt.s32.totalorder %s1733, 127
        %s1735 = scalar_select %p1734, %s1733, 127
        %s1736 = smul.addr %s1735, 8
        %s1737 = scalar_lea.vmem %s5, %s1736
        // Predicated region
        $region49: #{lightgcn_forward.4} parent=35 // pred_check
          %p1738 = pneg %p147
        $region50: #{lightgcn_forward.4} parent=35 // pred_check_branch
          %1740 = sbr.rel (%p1738) target = $region52
        $region51: #{lightgcn_forward.4} parent=35 // pred_region
          %s1741 = smul.u32 32, %s25
        $region52: #{lightgcn_forward.4} parent=35 // pred_fallthru
          _
        // Predicated region
        $region53: #{lightgcn_forward.4} parent=35 // pred_check
          %p1742 = pneg %p173
        $region54: #{lightgcn_forward.4} parent=35 // pred_check_branch
          %1744 = sbr.rel (%p1742) target = $region56
        $region55: #{lightgcn_forward.4} parent=35 // pred_region
          %s1745 = smul.u32 32, %s25
        $region56: #{lightgcn_forward.4} parent=35 // pred_fallthru
          _
      $region36: #{lightgcn_forward.4} parent=5 // pred_fallthru
        _
      %p1746 = scmp.le.s32.totalorder 2, %s16
      // Predicated region
      $region57: #{lightgcn_forward.4} parent=5 // pred_check
        %p1747 = pneg %p1746
      $region58: #{lightgcn_forward.4} parent=5 // pred_check_branch
        %1749 = sbr.rel (%p1747) target = $region60
      $region59: #{lightgcn_forward.4} parent=5 // pred_region
        %s1750 = ssub.s32 %s16, 2
        // Predicated region
        $region61: #{lightgcn_forward.4} parent=59 // pred_check
          %p1751 = pneg %p153
        $region62: #{lightgcn_forward.4} parent=59 // pred_check_branch
          %1753 = sbr.rel (%p1751) target = $region64
        $region63: #{lightgcn_forward.4} parent=59 // pred_region
          %s1754 = smul.u32 32, %s27
          %p1755 = scmp.lt.s32.totalorder %s1754, 127
          %s1756 = scalar_select %p1755, %s1754, 127
          %s1757 = smul.addr %s1756, 4
          %s1758 = scalar_lea.vmem %s4, %s1757
        $region64: #{lightgcn_forward.4} parent=59 // pred_fallthru
          _
        // Predicated region
        $region65: #{lightgcn_forward.4} parent=59 // pred_check
          %p1759 = pneg %p179
        $region66: #{lightgcn_forward.4} parent=59 // pred_check_branch
          %1761 = sbr.rel (%p1759) target = $region68
        $region67: #{lightgcn_forward.4} parent=59 // pred_region
          %s1762 = smul.u32 32, %s27
          %p1763 = scmp.lt.s32.totalorder %s1762, 127
          %s1764 = scalar_select %p1763, %s1762, 127
          %s1765 = smul.addr %s1764, 8
          %s1766 = scalar_lea.vmem %s5, %s1765
        $region68: #{lightgcn_forward.4} parent=59 // pred_fallthru
          _
      $region60: #{lightgcn_forward.4} parent=5 // pred_fallthru
        _
    $region6: #{lightgcn_forward.4} parent=1 // loop_footer
      %s20 = sadd.s32 1, %s16
    $region7: #{lightgcn_forward.4} parent=1 // loop_footer_branch
      %15 = sbr.rel target = $region3
    $region8: #{lightgcn_forward.4} parent=1 // loop_exit
      _
    %1767 = vsyncpa [#allocation5], 1
    %s1768 = scalar_lea.sflag [#allocation5], 1
    %1769 = vsyncpa %s1768, 1

// kernel: lightgcn_forward.5
$region0: #{lightgcn_forward.5}
  #allocation0 [shape = 'u32[]', space=smem, size = 0x4, offset = 0x4, fixed_abs, tag = 'smem constant byte address 0x4 - core index']
  #allocation1 [shape = 'u32[144,128]{1,0:T(1,128)}', space=vmem, size = 0x12000, scoped, tag = 'internal scratch']
  #allocation2 [shape = 'f32[256,128]{1,0:T(8,128)}', space=vmem, size = 0x20000, scoped, tag = 'scratch operand']
  #allocation3 [shape = 'f32[1]{0:T(128)S(6)}', space=smem, size = 0x200, scoped, tag = 'scoped memory for lightgcn_forward.5']
  %s0 = inlined_call_operand.<no memory space> [shape: f32[1], index: 0, kind: input, shape index: {}]
  %s1 = inlined_call_operand.vmem [shape: bf16[1024,1024], index: 1, kind: input, shape index: {}]
  %s2 = inlined_call_operand.vmem [shape: bf16[1024,128], index: 2, kind: input, shape index: {}]
  %s3 = inlined_call_operand.vmem [shape: f32[1024,128], index: 3, kind: input, shape index: {}, may-alias: {3,5}]
  %s4 = inlined_call_operand.vmem [shape: bf16[1024,128], index: 4, kind: output, shape index: {0}]
  %s5 = inlined_call_operand.vmem [shape: f32[1024,128], index: 5, kind: output, shape index: {1}, may-alias: {3,5}]
  %6 = xla_tuple %s4, %s5
  %s7 = sld [smem:[#allocation0]]
  $region88: #{lightgcn_forward.5} parent=0
    _
  %s9 = ssub.s32 1, %s7
  %s10 = scalar_select 0, %s9, %s7
  %11 = sst [smem:[#allocation3]] %s0
  $region1: #{lightgcn_forward.5} parent=0
    #allocation4 [shape = 'u8[524288]{0}', space=vmem, size = 0x80000, scoped, tag = 'input window, operand 1']
    loop: start=0, step=1, limit=10
    $region2: #{lightgcn_forward.5} parent=1 // loop_pre_header
      _
    $region3: #{lightgcn_forward.5} parent=1 // loop_header
      %s13 = sphi 0, %s17
      %p14 = scmp.ge.s32.totalorder %s13, 10
      %s20 = sphi 0, %s32
      %s21 = sphi 0, %s28
      %s22 = sphi 0, %s20
      %s23 = sphi 0, %s21
      %s24 = sphi 0, %s22
      %s25 = sphi 0, %s23
      %s33 = sphi 0, %s33
      %s35 = sphi 0, %s33
      %s36 = sphi 0, %s35
      %s50 = sphi 0, %s36
      %s58 = sphi 0, %s60
      %s61 = sphi 0, %s58
      %s62 = sphi 0, %s61
      %s78 = sphi 0, %s62
      %s82 = sphi 0, %s82
      %s84 = sphi 0, %s82
      %s85 = sphi 0, %s84
      %s99 = sphi 0, %s85
      %s105 = sphi 0, %s107
      %s108 = sphi 0, %s105
      %s109 = sphi 0, %s108
      %s125 = sphi 0, %s109
      %s131 = sphi 0, %s133
      %s134 = sphi 0, %s131
      %s135 = sphi 0, %s134
      %s151 = sphi 0, %s135
      %s157 = sphi 0, %s159
      %s160 = sphi 0, %s157
      %s161 = sphi 0, %s160
      %s177 = sphi 0, %s161
    $region4: #{lightgcn_forward.5} parent=1 // loop_header_branch
      %16 = sbr.rel (%p14) target = $region8
    $region5: #{lightgcn_forward.5} parent=1 // loop_body
      %s18 = ssub.s32 %s13, 1
      %s19 = ssub.s32 %s13, 2
      %s26 = sadd.s32 1, %s21
      %p27 = scmp.ge.s32.totalorder %s26, 2
      %s28 = scalar_select %p27, 0, %s26
      %s29 = sadd.s32 1, %s20
      %s30 = scalar_select %p27, %s29, %s20
      %p31 = scmp.ge.s32.totalorder %s30, 4
      %s32 = scalar_select %p31, 0, %s30
      %s34 = sadd.s32 %s33, 1
      %p37 = scmp.eq.s32.totalorder %s13, 7
      %p38 = scmp.ne.s32.totalorder %s33, %s35
      %p39 = scmp.eq.s32.totalorder %s13, 0
      %p40 = por %p38, %p39
      %p41 = scmp.ne.s32.totalorder %s33, %s35
      %p42 = scmp.eq.s32.totalorder %s18, 7
      %p43 = por %p41, %p42
      %p44 = scmp.ne.s32.totalorder %s35, %s36
      %p45 = scmp.eq.s32.totalorder %s18, 0
      %p46 = por %p44, %p45
      %p47 = scmp.ne.s32.totalorder %s35, %s36
      %p48 = scmp.eq.s32.totalorder %s19, 7
      %p49 = por %p47, %p48
      %p51 = scmp.ne.s32.totalorder %s36, %s50
      %p52 = scmp.eq.s32.totalorder %s19, 0
      %p53 = por %p51, %p52
      %s54 = ssub.s32 %s20, %s32
      %s55 = ssub.s32 %s21, %s28
      %s56 = sor.u32 %s54, %s55
      %p57 = scmp.eq.s32.totalorder %s56, 0
      %s59 = sadd.s32 %s58, 1
      %s60 = scalar_select %p57, %s58, %s59
      %p63 = pneg %p57
      %p64 = scmp.eq.s32.totalorder %s13, 7
      %p65 = por %p63, %p64
      %p66 = scmp.ne.s32.totalorder %s58, %s61
      %p67 = scmp.eq.s32.totalorder %s13, 0
      %p68 = por %p66, %p67
      %p69 = scmp.ne.s32.totalorder %s58, %s61
      %p70 = scmp.eq.s32.totalorder %s18, 7
      %p71 = por %p69, %p70
      %p72 = scmp.ne.s32.totalorder %s61, %s62
      %p73 = scmp.eq.s32.totalorder %s18, 0
      %p74 = por %p72, %p73
      %p75 = scmp.ne.s32.totalorder %s61, %s62
      %p76 = scmp.eq.s32.totalorder %s19, 7
      %p77 = por %p75, %p76
      %p79 = scmp.ne.s32.totalorder %s62, %s78
      %p80 = scmp.eq.s32.totalorder %s19, 0
      %p81 = por %p79, %p80
      %s83 = sadd.s32 %s82, 1
      %p86 = scmp.eq.s32.totalorder %s13, 7
      %p87 = scmp.ne.s32.totalorder %s82, %s84
      %p88 = scmp.eq.s32.totalorder %s13, 0
      %p89 = por %p87, %p88
      %p90 = scmp.ne.s32.totalorder %s82, %s84
      %p91 = scmp.eq.s32.totalorder %s18, 7
      %p92 = por %p90, %p91
      %p93 = scmp.ne.s32.totalorder %s84, %s85
      %p94 = scmp.eq.s32.totalorder %s18, 0
      %p95 = por %p93, %p94
      %p96 = scmp.ne.s32.totalorder %s84, %s85
      %p97 = scmp.eq.s32.totalorder %s19, 7
      %p98 = por %p96, %p97
      %p100 = scmp.ne.s32.totalorder %s85, %s99
      %p101 = scmp.eq.s32.totalorder %s19, 0
      %p102 = por %p100, %p101
      %s103 = ssub.s32 %s20, %s32
      %p104 = scmp.eq.s32.totalorder %s103, 0
      %s106 = sadd.s32 %s105, 1
      %s107 = scalar_select %p104, %s105, %s106
      %p110 = pneg %p104
      %p111 = scmp.eq.s32.totalorder %s13, 7
      %p112 = por %p110, %p111
      %p113 = scmp.ne.s32.totalorder %s105, %s108
      %p114 = scmp.eq.s32.totalorder %s13, 0
      %p115 = por %p113, %p114
      %p116 = scmp.ne.s32.totalorder %s105, %s108
      %p117 = scmp.eq.s32.totalorder %s18, 7
      %p118 = por %p116, %p117
      %p119 = scmp.ne.s32.totalorder %s108, %s109
      %p120 = scmp.eq.s32.totalorder %s18, 0
      %p121 = por %p119, %p120
      %p122 = scmp.ne.s32.totalorder %s108, %s109
      %p123 = scmp.eq.s32.totalorder %s19, 7
      %p124 = por %p122, %p123
      %p126 = scmp.ne.s32.totalorder %s109, %s125
      %p127 = scmp.eq.s32.totalorder %s19, 0
      %p128 = por %p126, %p127
      %s129 = ssub.s32 %s20, %s32
      %p130 = scmp.eq.s32.totalorder %s129, 0
      %s132 = sadd.s32 %s131, 1
      %s133 = scalar_select %p130, %s131, %s132
      %p136 = pneg %p130
      %p137 = scmp.eq.s32.totalorder %s13, 7
      %p138 = por %p136, %p137
      %p139 = scmp.ne.s32.totalorder %s131, %s134
      %p140 = scmp.eq.s32.totalorder %s13, 0
      %p141 = por %p139, %p140
      %p142 = scmp.ne.s32.totalorder %s131, %s134
      %p143 = scmp.eq.s32.totalorder %s18, 7
      %p144 = por %p142, %p143
      %p145 = scmp.ne.s32.totalorder %s134, %s135
      %p146 = scmp.eq.s32.totalorder %s18, 0
      %p147 = por %p145, %p146
      %p148 = scmp.ne.s32.totalorder %s134, %s135
      %p149 = scmp.eq.s32.totalorder %s19, 7
      %p150 = por %p148, %p149
      %p152 = scmp.ne.s32.totalorder %s135, %s151
      %p153 = scmp.eq.s32.totalorder %s19, 0
      %p154 = por %p152, %p153
      %s155 = ssub.s32 %s20, %s32
      %p156 = scmp.eq.s32.totalorder %s155, 0
      %s158 = sadd.s32 %s157, 1
      %s159 = scalar_select %p156, %s157, %s158
      %p162 = pneg %p156
      %p163 = scmp.eq.s32.totalorder %s13, 7
      %p164 = por %p162, %p163
      %p165 = scmp.ne.s32.totalorder %s157, %s160
      %p166 = scmp.eq.s32.totalorder %s13, 0
      %p167 = por %p165, %p166
      %p168 = scmp.ne.s32.totalorder %s157, %s160
      %p169 = scmp.eq.s32.totalorder %s18, 7
      %p170 = por %p168, %p169
      %p171 = scmp.ne.s32.totalorder %s160, %s161
      %p172 = scmp.eq.s32.totalorder %s18, 0
      %p173 = por %p171, %p172
      %p174 = scmp.ne.s32.totalorder %s160, %s161
      %p175 = scmp.eq.s32.totalorder %s19, 7
      %p176 = por %p174, %p175
      %p178 = scmp.ne.s32.totalorder %s161, %s177
      %p179 = scmp.eq.s32.totalorder %s19, 0
      %p180 = por %p178, %p179
      %p181 = scmp.le.s32.totalorder 1, %s13
      %p182 = scmp.lt.s32.totalorder %s13, 9
      %p183 = pnand %p181, %p182
      %p184 = pneg %p183
      // Predicated region
      $region9: #{lightgcn_forward.5} parent=5 // pred_check
        _
      $region10: #{lightgcn_forward.5} parent=5 // pred_check_branch
        %186 = sbr.rel (%p183) target = $region12
      $region11: #{lightgcn_forward.5} parent=5 // pred_region
        %s187 = ssub.s32 %s13, 1
        // Predicated region
        $region13: #{lightgcn_forward.5} parent=11 // pred_check
          %p188 = pneg %p46
        $region14: #{lightgcn_forward.5} parent=11 // pred_check_branch
          %190 = sbr.rel (%p188) target = $region16
        $region15: #{lightgcn_forward.5} parent=11 // pred_region
          _
        $region16: #{lightgcn_forward.5} parent=11 // pred_fallthru
          _
        // Predicated region
        $region17: #{lightgcn_forward.5} parent=11 // pred_check
          %p191 = pneg %p95
        $region18: #{lightgcn_forward.5} parent=11 // pred_check_branch
          %193 = sbr.rel (%p191) target = $region20
        $region19: #{lightgcn_forward.5} parent=11 // pred_region
          _
        $region20: #{lightgcn_forward.5} parent=11 // pred_fallthru
          _
      $region12: #{lightgcn_forward.5} parent=5 // pred_fallthru
        _
      %p194 = scmp.lt.s32.totalorder %s13, 8
      // Predicated region
      $region21: #{lightgcn_forward.5} parent=5 // pred_check
        %p195 = pneg %p194
      $region22: #{lightgcn_forward.5} parent=5 // pred_check_branch
        %197 = sbr.rel (%p195) target = $region24
      $region23: #{lightgcn_forward.5} parent=5 // pred_region
        // Predicated region
        $region25: #{lightgcn_forward.5} parent=23 // pred_check
          %p198 = pneg %p68
        $region26: #{lightgcn_forward.5} parent=23 // pred_check_branch
          %200 = sbr.rel (%p198) target = $region28
        $region27: #{lightgcn_forward.5} parent=23 // pred_region
          %s201 = sand.u32 %s58, 1
          %s202 = sand.u32 %s58, 1
          %s203 = smul.addr %s202, 512
          %s204 = scalar_lea.vmem [#allocation4], %s203
          %s205 = smul.u32 32, %s20
          %s206 = smul.u32 4, %s21
          %s207 = smul.addr %s205, 8
          %s208 = sadd.s32 %s206, %s207
          %s209 = smul.addr %s208, 4
          %s210 = scalar_lea.vmem %s1, %s209
          // Predicated region
          $region29: #{lightgcn_forward.5} parent=27 // pred_check
            _
          $region30: #{lightgcn_forward.5} parent=27 // pred_check_branch
            %212 = sbr.rel (0) target = $region32
          $region31: #{lightgcn_forward.5} parent=27 // pred_region
            // Predicated region
            $region33: #{lightgcn_forward.5} parent=31 // pred_check
              _
            $region34: #{lightgcn_forward.5} parent=31 // pred_check_branch
              %214 = sbr.rel (0) target = $region36
            $region35: #{lightgcn_forward.5} parent=31 // pred_region
              loop: start=0, step=1, limit=1
              $region37: #{lightgcn_forward.5} parent=35 // loop_pre_header
                _
              $region38: #{lightgcn_forward.5} parent=35 // loop_header
                %s216 = sphi 0, %s220
                %p217 = scmp.ge.s32.totalorder %s216, 1
                %s221 = sphi %s210, %s210
                %s222 = sphi %s204, %s204
              $region39: #{lightgcn_forward.5} parent=35 // loop_header_branch
                %219 = sbr.rel (%p217) target = $region43
              $region40: #{lightgcn_forward.5} parent=35 // loop_body
                %v223 = vld [vmem:[%s221] sm:$0xff]
                %224 = vst [vmem:[%s222] sm:$0xff] %v223
                %v225 = vld [vmem:[%s221 + $0x8] sm:$0xff]
                %226 = vst [vmem:[%s222 + $0x8] sm:$0xff] %v225
                %v227 = vld [vmem:[%s221 + $0x20] sm:$0xff]
                %228 = vst [vmem:[%s222 + $0x10] sm:$0xff] %v227
                %v229 = vld [vmem:[%s221 + $0x28] sm:$0xff]
                %230 = vst [vmem:[%s222 + $0x18] sm:$0xff] %v229
                %v231 = vld [vmem:[%s221 + $0x40] sm:$0xff]
                %232 = vst [vmem:[%s222 + $0x20] sm:$0xff] %v231
                %v233 = vld [vmem:[%s221 + $0x48] sm:$0xff]
                %234 = vst [vmem:[%s222 + $0x28] sm:$0xff] %v233
                %v235 = vld [vmem:[%s221 + $0x60] sm:$0xff]
                %236 = vst [vmem:[%s222 + $0x30] sm:$0xff] %v235
                %v237 = vld [vmem:[%s221 + $0x68] sm:$0xff]
                %238 = vst [vmem:[%s222 + $0x38] sm:$0xff] %v237
                %v239 = vld [vmem:[%s221 + $0x80] sm:$0xff]
                %240 = vst [vmem:[%s222 + $0x40] sm:$0xff] %v239
                %v241 = vld [vmem:[%s221 + $0x88] sm:$0xff]
                %242 = vst [vmem:[%s222 + $0x48] sm:$0xff] %v241
                %v243 = vld [vmem:[%s221 + $0xa0] sm:$0xff]
                %244 = vst [vmem:[%s222 + $0x50] sm:$0xff] %v243
                %v245 = vld [vmem:[%s221 + $0xa8] sm:$0xff]
                %246 = vst [vmem:[%s222 + $0x58] sm:$0xff] %v245
                %v247 = vld [vmem:[%s221 + $0xc0] sm:$0xff]
                %248 = vst [vmem:[%s222 + $0x60] sm:$0xff] %v247
                %v249 = vld [vmem:[%s221 + $0xc8] sm:$0xff]
                %250 = vst [vmem:[%s222 + $0x68] sm:$0xff] %v249
                %v251 = vld [vmem:[%s221 + $0xe0] sm:$0xff]
                %252 = vst [vmem:[%s222 + $0x70] sm:$0xff] %v251
                %v253 = vld [vmem:[%s221 + $0xe8] sm:$0xff]
                %254 = vst [vmem:[%s222 + $0x78] sm:$0xff] %v253
                %v255 = vld [vmem:[%s221 + $0x100] sm:$0xff]
                %256 = vst [vmem:[%s222 + $0x80] sm:$0xff] %v255
                %v257 = vld [vmem:[%s221 + $0x108] sm:$0xff]
                %258 = vst [vmem:[%s222 + $0x88] sm:$0xff] %v257
                %v259 = vld [vmem:[%s221 + $0x120] sm:$0xff]
                %260 = vst [vmem:[%s222 + $0x90] sm:$0xff] %v259
                %v261 = vld [vmem:[%s221 + $0x128] sm:$0xff]
                %262 = vst [vmem:[%s222 + $0x98] sm:$0xff] %v261
                %v263 = vld [vmem:[%s221 + $0x140] sm:$0xff]
                %264 = vst [vmem:[%s222 + $0xa0] sm:$0xff] %v263
                %v265 = vld [vmem:[%s221 + $0x148] sm:$0xff]
                %266 = vst [vmem:[%s222 + $0xa8] sm:$0xff] %v265
                %v267 = vld [vmem:[%s221 + $0x160] sm:$0xff]
                %268 = vst [vmem:[%s222 + $0xb0] sm:$0xff] %v267
                %v269 = vld [vmem:[%s221 + $0x168] sm:$0xff]
                %270 = vst [vmem:[%s222 + $0xb8] sm:$0xff] %v269
                %v271 = vld [vmem:[%s221 + $0x180] sm:$0xff]
                %272 = vst [vmem:[%s222 + $0xc0] sm:$0xff] %v271
                %v273 = vld [vmem:[%s221 + $0x188] sm:$0xff]
                %274 = vst [vmem:[%s222 + $0xc8] sm:$0xff] %v273
                %v275 = vld [vmem:[%s221 + $0x1a0] sm:$0xff]
                %276 = vst [vmem:[%s222 + $0xd0] sm:$0xff] %v275
                %v277 = vld [vmem:[%s221 + $0x1a8] sm:$0xff]
                %278 = vst [vmem:[%s222 + $0xd8] sm:$0xff] %v277
                %v279 = vld [vmem:[%s221 + $0x1c0] sm:$0xff]
                %280 = vst [vmem:[%s222 + $0xe0] sm:$0xff] %v279
                %v281 = vld [vmem:[%s221 + $0x1c8] sm:$0xff]
                %282 = vst [vmem:[%s222 + $0xe8] sm:$0xff] %v281
                %v283 = vld [vmem:[%s221 + $0x1e0] sm:$0xff]
                %284 = vst [vmem:[%s222 + $0xf0] sm:$0xff] %v283
                %v285 = vld [vmem:[%s221 + $0x1e8] sm:$0xff]
                %286 = vst [vmem:[%s222 + $0xf8] sm:$0xff] %v285
                %v287 = vld [vmem:[%s221 + $0x200] sm:$0xff]
                %288 = vst [vmem:[%s222 + $0x100] sm:$0xff] %v287
                %v289 = vld [vmem:[%s221 + $0x208] sm:$0xff]
                %290 = vst [vmem:[%s222 + $0x108] sm:$0xff] %v289
                %v291 = vld [vmem:[%s221 + $0x220] sm:$0xff]
                %292 = vst [vmem:[%s222 + $0x110] sm:$0xff] %v291
                %v293 = vld [vmem:[%s221 + $0x228] sm:$0xff]
                %294 = vst [vmem:[%s222 + $0x118] sm:$0xff] %v293
                %v295 = vld [vmem:[%s221 + $0x240] sm:$0xff]
                %296 = vst [vmem:[%s222 + $0x120] sm:$0xff] %v295
                %v297 = vld [vmem:[%s221 + $0x248] sm:$0xff]
                %298 = vst [vmem:[%s222 + $0x128] sm:$0xff] %v297
                %v299 = vld [vmem:[%s221 + $0x260] sm:$0xff]
                %300 = vst [vmem:[%s222 + $0x130] sm:$0xff] %v299
                %v301 = vld [vmem:[%s221 + $0x268] sm:$0xff]
                %302 = vst [vmem:[%s222 + $0x138] sm:$0xff] %v301
                %v303 = vld [vmem:[%s221 + $0x280] sm:$0xff]
                %304 = vst [vmem:[%s222 + $0x140] sm:$0xff] %v303
                %v305 = vld [vmem:[%s221 + $0x288] sm:$0xff]
                %306 = vst [vmem:[%s222 + $0x148] sm:$0xff] %v305
                %v307 = vld [vmem:[%s221 + $0x2a0] sm:$0xff]
                %308 = vst [vmem:[%s222 + $0x150] sm:$0xff] %v307
                %v309 = vld [vmem:[%s221 + $0x2a8] sm:$0xff]
                %310 = vst [vmem:[%s222 + $0x158] sm:$0xff] %v309
                %v311 = vld [vmem:[%s221 + $0x2c0] sm:$0xff]
                %312 = vst [vmem:[%s222 + $0x160] sm:$0xff] %v311
                %v313 = vld [vmem:[%s221 + $0x2c8] sm:$0xff]
                %314 = vst [vmem:[%s222 + $0x168] sm:$0xff] %v313
                %v315 = vld [vmem:[%s221 + $0x2e0] sm:$0xff]
                %316 = vst [vmem:[%s222 + $0x170] sm:$0xff] %v315
                %v317 = vld [vmem:[%s221 + $0x2e8] sm:$0xff]
                %318 = vst [vmem:[%s222 + $0x178] sm:$0xff] %v317
                %v319 = vld [vmem:[%s221 + $0x300] sm:$0xff]
                %320 = vst [vmem:[%s222 + $0x180] sm:$0xff] %v319
                %v321 = vld [vmem:[%s221 + $0x308] sm:$0xff]
                %322 = vst [vmem:[%s222 + $0x188] sm:$0xff] %v321
                %v323 = vld [vmem:[%s221 + $0x320] sm:$0xff]
                %324 = vst [vmem:[%s222 + $0x190] sm:$0xff] %v323
                %v325 = vld [vmem:[%s221 + $0x328] sm:$0xff]
                %326 = vst [vmem:[%s222 + $0x198] sm:$0xff] %v325
                %v327 = vld [vmem:[%s221 + $0x340] sm:$0xff]
                %328 = vst [vmem:[%s222 + $0x1a0] sm:$0xff] %v327
                %v329 = vld [vmem:[%s221 + $0x348] sm:$0xff]
                %330 = vst [vmem:[%s222 + $0x1a8] sm:$0xff] %v329
                %v331 = vld [vmem:[%s221 + $0x360] sm:$0xff]
                %332 = vst [vmem:[%s222 + $0x1b0] sm:$0xff] %v331
                %v333 = vld [vmem:[%s221 + $0x368] sm:$0xff]
                %334 = vst [vmem:[%s222 + $0x1b8] sm:$0xff] %v333
                %v335 = vld [vmem:[%s221 + $0x380] sm:$0xff]
                %336 = vst [vmem:[%s222 + $0x1c0] sm:$0xff] %v335
                %v337 = vld [vmem:[%s221 + $0x388] sm:$0xff]
                %338 = vst [vmem:[%s222 + $0x1c8] sm:$0xff] %v337
                %v339 = vld [vmem:[%s221 + $0x3a0] sm:$0xff]
                %340 = vst [vmem:[%s222 + $0x1d0] sm:$0xff] %v339
                %v341 = vld [vmem:[%s221 + $0x3a8] sm:$0xff]
                %342 = vst [vmem:[%s222 + $0x1d8] sm:$0xff] %v341
                %v343 = vld [vmem:[%s221 + $0x3c0] sm:$0xff]
                %344 = vst [vmem:[%s222 + $0x1e0] sm:$0xff] %v343
                %v345 = vld [vmem:[%s221 + $0x3c8] sm:$0xff]
                %346 = vst [vmem:[%s222 + $0x1e8] sm:$0xff] %v345
                %v347 = vld [vmem:[%s221 + $0x3e0] sm:$0xff]
                %348 = vst [vmem:[%s222 + $0x1f0] sm:$0xff] %v347
                %v349 = vld [vmem:[%s221 + $0x3e8] sm:$0xff]
                %350 = vst [vmem:[%s222 + $0x1f8] sm:$0xff] %v349
              $region41: #{lightgcn_forward.5} parent=35 // loop_footer
                %s220 = sadd.s32 1, %s216
              $region42: #{lightgcn_forward.5} parent=35 // loop_footer_branch
                %215 = sbr.rel target = $region38
              $region43: #{lightgcn_forward.5} parent=35 // loop_exit
                _
            $region36: #{lightgcn_forward.5} parent=31 // pred_fallthru
              _
            // Predicated region
            $region44: #{lightgcn_forward.5} parent=31 // pred_check
              _
            $region45: #{lightgcn_forward.5} parent=31 // pred_check_branch
              %352 = sbr.rel target = $region47
            $region46: #{lightgcn_forward.5} parent=31 // pred_region
              _
            $region47: #{lightgcn_forward.5} parent=31 // pred_fallthru
              _
          $region32: #{lightgcn_forward.5} parent=27 // pred_fallthru
            _
          %353 = vnop
        $region28: #{lightgcn_forward.5} parent=23 // pred_fallthru
          _
        // Predicated region
        $region48: #{lightgcn_forward.5} parent=23 // pred_check
          %p354 = pneg %p115
        $region49: #{lightgcn_forward.5} parent=23 // pred_check_branch
          %356 = sbr.rel (%p354) target = $region51
        $region50: #{lightgcn_forward.5} parent=23 // pred_region
          %s357 = smul.u32 32, %s20
          %p358 = scmp.lt.s32.totalorder %s357, 127
          %s359 = scalar_select %p358, %s357, 127
          %s360 = smul.addr %s359, 8
          %s361 = scalar_lea.vmem %s3, %s360
          %s362 = smul.u32 32, %s20
        $region51: #{lightgcn_forward.5} parent=23 // pred_fallthru
          _
      $region24: #{lightgcn_forward.5} parent=5 // pred_fallthru
        _
      %p363 = scmp.le.s32.totalorder 1, %s13
      %p364 = scmp.lt.s32.totalorder %s13, 9
      %p365 = pnand %p363, %p364
      %p366 = pneg %p365
      // Predicated region
      $region52: #{lightgcn_forward.5} parent=5 // pred_check
        _
      $region53: #{lightgcn_forward.5} parent=5 // pred_check_branch
        %368 = sbr.rel (%p365) target = $region55
      $region54: #{lightgcn_forward.5} parent=5 // pred_region
        %s369 = ssub.s32 %s13, 1
        %s370 = sand.u32 %s61, 1
        %s371 = sand.u32 %s61, 1
        %s372 = smul.addr %s371, 512
        %s373 = scalar_lea.vmem [#allocation4], %s372
        // Predicated region
        $region56: #{lightgcn_forward.5} parent=54 // pred_check
          %p374 = pneg %p74
        $region57: #{lightgcn_forward.5} parent=54 // pred_check_branch
          %376 = sbr.rel (%p374) target = $region59
        $region58: #{lightgcn_forward.5} parent=54 // pred_region
          _
        $region59: #{lightgcn_forward.5} parent=54 // pred_fallthru
          _
        %p377 = pneg %p46
        %p378 = pneg %p43
        %s379 = sand.u32 %s61, 1
        %s380 = sand.u32 %s61, 1
        %s381 = smul.addr %s380, 512
        %s382 = scalar_lea.vmem [#allocation4], %s381
        %p383 = pneg %p74
        %p384 = pneg %p71
        %p385 = pneg %p95
        %p386 = pneg %p92
        %s387 = smul.u32 32, %s22
        %p388 = scmp.lt.s32.totalorder %s387, 127
        %s389 = scalar_select %p388, %s387, 127
        %s390 = smul.addr %s389, 8
        %s391 = scalar_lea.vmem %s3, %s390
        %p392 = pneg %p121
        %p393 = pneg %p118
        %p394 = pneg %p147
        %p395 = pneg %p144
        %s396 = smul.u32 32, %s22
        %p397 = scmp.lt.s32.totalorder %s396, 127
        %s398 = scalar_select %p397, %s396, 127
        %s399 = smul.addr %s398, 4
        %s400 = scalar_lea.vmem %s4, %s399
        %p401 = pneg %p173
        %p402 = pneg %p170
        %s403 = smul.u32 32, %s22
        %p404 = scmp.lt.s32.totalorder %s403, 127
        %s405 = scalar_select %p404, %s403, 127
        %s406 = smul.addr %s405, 8
        %s407 = scalar_lea.vmem %s5, %s406
        %s408 = smul.u32 32, %s22
        %s409 = smul.u32 4, %s23
        %s410 = smul.u32 32, %s22
        %p411 = scmp.lt.s32.totalorder %s410, 127
        %s412 = scalar_select %p411, %s410, 127
        %s413 = smul.addr %s412, 8
        %s414 = scalar_lea.vmem %s3, %s413
        %s415 = smul.u32 32, %s22
        %s416 = smul.u32 32, %s22
        %p417 = scmp.lt.s32.totalorder %s416, 127
        %s418 = scalar_select %p417, %s416, 127
        %s419 = smul.addr %s418, 4
        %s420 = scalar_lea.vmem %s4, %s419
        %s421 = smul.u32 32, %s22
        %s422 = smul.u32 32, %s22
        %p423 = scmp.lt.s32.totalorder %s422, 127
        %s424 = scalar_select %p423, %s422, 127
        %s425 = smul.addr %s424, 8
        %s426 = scalar_lea.vmem %s5, %s425
        %s427 = smul.u32 32, %s22
        %p429 = scmp.eq.s32.totalorder %s23, 0
        // Predicated region
        $region60: #{lightgcn_forward.5} parent=54 // pred_check
          %p430 = pneg %p429
        $region61: #{lightgcn_forward.5} parent=54 // pred_check_branch
          %432 = sbr.rel (%p430) target = $region63
        $region62: #{lightgcn_forward.5} parent=54 // pred_region
          %433 = vst [vmem:[#allocation2] sm:$0xff] 0.0
          %434 = vst [vmem:[#allocation2 + $0x8] sm:$0xff] 0.0
          %435 = vst [vmem:[#allocation2 + $0x10] sm:$0xff] 0.0
          %436 = vst [vmem:[#allocation2 + $0x18] sm:$0xff] 0.0
          %437 = vst [vmem:[#allocation2 + $0x20] sm:$0xff] 0.0
          %438 = vst [vmem:[#allocation2 + $0x28] sm:$0xff] 0.0
          %439 = vst [vmem:[#allocation2 + $0x30] sm:$0xff] 0.0
          %440 = vst [vmem:[#allocation2 + $0x38] sm:$0xff] 0.0
          %441 = vst [vmem:[#allocation2 + $0x40] sm:$0xff] 0.0
          %442 = vst [vmem:[#allocation2 + $0x48] sm:$0xff] 0.0
          %443 = vst [vmem:[#allocation2 + $0x50] sm:$0xff] 0.0
          %444 = vst [vmem:[#allocation2 + $0x58] sm:$0xff] 0.0
          %445 = vst [vmem:[#allocation2 + $0x60] sm:$0xff] 0.0
          %446 = vst [vmem:[#allocation2 + $0x68] sm:$0xff] 0.0
          %447 = vst [vmem:[#allocation2 + $0x70] sm:$0xff] 0.0
          %448 = vst [vmem:[#allocation2 + $0x78] sm:$0xff] 0.0
          %449 = vst [vmem:[#allocation2 + $0x80] sm:$0xff] 0.0
          %450 = vst [vmem:[#allocation2 + $0x88] sm:$0xff] 0.0
          %451 = vst [vmem:[#allocation2 + $0x90] sm:$0xff] 0.0
          %452 = vst [vmem:[#allocation2 + $0x98] sm:$0xff] 0.0
          %453 = vst [vmem:[#allocation2 + $0xa0] sm:$0xff] 0.0
          %454 = vst [vmem:[#allocation2 + $0xa8] sm:$0xff] 0.0
          %455 = vst [vmem:[#allocation2 + $0xb0] sm:$0xff] 0.0
          %456 = vst [vmem:[#allocation2 + $0xb8] sm:$0xff] 0.0
          %457 = vst [vmem:[#allocation2 + $0xc0] sm:$0xff] 0.0
          %458 = vst [vmem:[#allocation2 + $0xc8] sm:$0xff] 0.0
          %459 = vst [vmem:[#allocation2 + $0xd0] sm:$0xff] 0.0
          %460 = vst [vmem:[#allocation2 + $0xd8] sm:$0xff] 0.0
          %461 = vst [vmem:[#allocation2 + $0xe0] sm:$0xff] 0.0
          %462 = vst [vmem:[#allocation2 + $0xe8] sm:$0xff] 0.0
          %463 = vst [vmem:[#allocation2 + $0xf0] sm:$0xff] 0.0
          %464 = vst [vmem:[#allocation2 + $0xf8] sm:$0xff] 0.0
        $region63: #{lightgcn_forward.5} parent=54 // pred_fallthru
          _
        %s465 = smul.u32 %s23, 512
        %s466 = sshra.s32 %s465, 3
        %s467 = sand.u32 %s465, 7
        %s468 = smul.addr %s466, 4
        %s469 = scalar_lea.vmem %s2, %s468
        %v470 = vld [vmem:[%s469] sm:$0xf]
        %v471 = vld [vmem:[%s469 + $0x4] sm:$0xf]
        %v472 = vld [vmem:[%s469 + $0x8] sm:$0xf]
        %v473 = vld [vmem:[%s469 + $0xc] sm:$0xf]
        %v474 = vld [vmem:[%s469 + $0x10] sm:$0xf]
        %v475 = vld [vmem:[%s469 + $0x14] sm:$0xf]
        %v476 = vld [vmem:[%s469 + $0x18] sm:$0xf]
        %v477 = vld [vmem:[%s469 + $0x1c] sm:$0xf]
        %v478 = vld [vmem:[%s469 + $0x20] sm:$0xf]
        %v479 = vld [vmem:[%s469 + $0x24] sm:$0xf]
        %v480 = vld [vmem:[%s469 + $0x28] sm:$0xf]
        %v481 = vld [vmem:[%s469 + $0x2c] sm:$0xf]
        %v482 = vld [vmem:[%s469 + $0x30] sm:$0xf]
        %v483 = vld [vmem:[%s469 + $0x34] sm:$0xf]
        %v484 = vld [vmem:[%s469 + $0x38] sm:$0xf]
        %v485 = vld [vmem:[%s469 + $0x3c] sm:$0xf]
        %v486 = vld [vmem:[%s469 + $0x40] sm:$0xf]
        %v487 = vld [vmem:[%s469 + $0x44] sm:$0xf]
        %v488 = vld [vmem:[%s469 + $0x48] sm:$0xf]
        %v489 = vld [vmem:[%s469 + $0x4c] sm:$0xf]
        %v490 = vld [vmem:[%s469 + $0x50] sm:$0xf]
        %v491 = vld [vmem:[%s469 + $0x54] sm:$0xf]
        %v492 = vld [vmem:[%s469 + $0x58] sm:$0xf]
        %v493 = vld [vmem:[%s469 + $0x5c] sm:$0xf]
        %v494 = vld [vmem:[%s469 + $0x60] sm:$0xf]
        %v495 = vld [vmem:[%s469 + $0x64] sm:$0xf]
        %v496 = vld [vmem:[%s469 + $0x68] sm:$0xf]
        %v497 = vld [vmem:[%s469 + $0x6c] sm:$0xf]
        %v498 = vld [vmem:[%s469 + $0x70] sm:$0xf]
        %v499 = vld [vmem:[%s469 + $0x74] sm:$0xf]
        %v500 = vld [vmem:[%s469 + $0x78] sm:$0xf]
        %v501 = vld [vmem:[%s469 + $0x7c] sm:$0xf]
        %v502 = vld [vmem:[%s469 + $0x80] sm:$0xf]
        %v503 = vld [vmem:[%s469 + $0x84] sm:$0xf]
        %v504 = vld [vmem:[%s469 + $0x88] sm:$0xf]
        %v505 = vld [vmem:[%s469 + $0x8c] sm:$0xf]
        %v506 = vld [vmem:[%s469 + $0x90] sm:$0xf]
        %v507 = vld [vmem:[%s469 + $0x94] sm:$0xf]
        %v508 = vld [vmem:[%s469 + $0x98] sm:$0xf]
        %v509 = vld [vmem:[%s469 + $0x9c] sm:$0xf]
        %v510 = vld [vmem:[%s469 + $0xa0] sm:$0xf]
        %v511 = vld [vmem:[%s469 + $0xa4] sm:$0xf]
        %v512 = vld [vmem:[%s469 + $0xa8] sm:$0xf]
        %v513 = vld [vmem:[%s469 + $0xac] sm:$0xf]
        %v514 = vld [vmem:[%s469 + $0xb0] sm:$0xf]
        %v515 = vld [vmem:[%s469 + $0xb4] sm:$0xf]
        %v516 = vld [vmem:[%s469 + $0xb8] sm:$0xf]
        %v517 = vld [vmem:[%s469 + $0xbc] sm:$0xf]
        %v518 = vld [vmem:[%s469 + $0xc0] sm:$0xf]
        %v519 = vld [vmem:[%s469 + $0xc4] sm:$0xf]
        %v520 = vld [vmem:[%s469 + $0xc8] sm:$0xf]
        %v521 = vld [vmem:[%s469 + $0xcc] sm:$0xf]
        %v522 = vld [vmem:[%s469 + $0xd0] sm:$0xf]
        %v523 = vld [vmem:[%s469 + $0xd4] sm:$0xf]
        %v524 = vld [vmem:[%s469 + $0xd8] sm:$0xf]
        %v525 = vld [vmem:[%s469 + $0xdc] sm:$0xf]
        %v526 = vld [vmem:[%s469 + $0xe0] sm:$0xf]
        %v527 = vld [vmem:[%s469 + $0xe4] sm:$0xf]
        %v528 = vld [vmem:[%s469 + $0xe8] sm:$0xf]
        %v529 = vld [vmem:[%s469 + $0xec] sm:$0xf]
        %v530 = vld [vmem:[%s469 + $0xf0] sm:$0xf]
        %v531 = vld [vmem:[%s469 + $0xf4] sm:$0xf]
        %v532 = vld [vmem:[%s469 + $0xf8] sm:$0xf]
        %v533 = vld [vmem:[%s469 + $0xfc] sm:$0xf]
        %v534 = vld [vmem:[#allocation2] sm:$0xff]
        %v535 = vld [vmem:[#allocation2 + $0x8] sm:$0xff]
        %v536 = vld [vmem:[#allocation2 + $0x10] sm:$0xff]
        %v537 = vld [vmem:[#allocation2 + $0x18] sm:$0xff]
        %v538 = vld [vmem:[#allocation2 + $0x20] sm:$0xff]
        %v539 = vld [vmem:[#allocation2 + $0x28] sm:$0xff]
        %v540 = vld [vmem:[#allocation2 + $0x30] sm:$0xff]
        %v541 = vld [vmem:[#allocation2 + $0x38] sm:$0xff]
        %v542 = vld [vmem:[#allocation2 + $0x40] sm:$0xff]
        %v543 = vld [vmem:[#allocation2 + $0x48] sm:$0xff]
        %v544 = vld [vmem:[#allocation2 + $0x50] sm:$0xff]
        %v545 = vld [vmem:[#allocation2 + $0x58] sm:$0xff]
        %v546 = vld [vmem:[#allocation2 + $0x60] sm:$0xff]
        %v547 = vld [vmem:[#allocation2 + $0x68] sm:$0xff]
        %v548 = vld [vmem:[#allocation2 + $0x70] sm:$0xff]
        %v549 = vld [vmem:[#allocation2 + $0x78] sm:$0xff]
        %v550 = vld [vmem:[#allocation2 + $0x80] sm:$0xff]
        %v551 = vld [vmem:[#allocation2 + $0x88] sm:$0xff]
        %v552 = vld [vmem:[#allocation2 + $0x90] sm:$0xff]
        %v553 = vld [vmem:[#allocation2 + $0x98] sm:$0xff]
        %v554 = vld [vmem:[#allocation2 + $0xa0] sm:$0xff]
        %v555 = vld [vmem:[#allocation2 + $0xa8] sm:$0xff]
        %v556 = vld [vmem:[#allocation2 + $0xb0] sm:$0xff]
        %v557 = vld [vmem:[#allocation2 + $0xb8] sm:$0xff]
        %v558 = vld [vmem:[#allocation2 + $0xc0] sm:$0xff]
        %v559 = vld [vmem:[#allocation2 + $0xc8] sm:$0xff]
        %v560 = vld [vmem:[#allocation2 + $0xd0] sm:$0xff]
        %v561 = vld [vmem:[#allocation2 + $0xd8] sm:$0xff]
        %v562 = vld [vmem:[#allocation2 + $0xe0] sm:$0xff]
        %v563 = vld [vmem:[#allocation2 + $0xe8] sm:$0xff]
        %v564 = vld [vmem:[#allocation2 + $0xf0] sm:$0xff]
        %v565 = vld [vmem:[#allocation2 + $0xf8] sm:$0xff]
        %v566 = vld [vmem:[%s373] sm:$0xff]
        %v567 = vld [vmem:[%s373 + $0x8] sm:$0xff]
        %v568 = vld [vmem:[%s373 + $0x10] sm:$0xff]
        %v569 = vld [vmem:[%s373 + $0x18] sm:$0xff]
        %v570 = vld [vmem:[%s373 + $0x20] sm:$0xff]
        %v571 = vld [vmem:[%s373 + $0x28] sm:$0xff]
        %v572 = vld [vmem:[%s373 + $0x30] sm:$0xff]
        %v573 = vld [vmem:[%s373 + $0x38] sm:$0xff]
        %v574 = vld [vmem:[%s373 + $0x40] sm:$0xff]
        %v575 = vld [vmem:[%s373 + $0x48] sm:$0xff]
        %v576 = vld [vmem:[%s373 + $0x50] sm:$0xff]
        %v577 = vld [vmem:[%s373 + $0x58] sm:$0xff]
        %v578 = vld [vmem:[%s373 + $0x60] sm:$0xff]
        %v579 = vld [vmem:[%s373 + $0x68] sm:$0xff]
        %v580 = vld [vmem:[%s373 + $0x70] sm:$0xff]
        %v581 = vld [vmem:[%s373 + $0x78] sm:$0xff]
        %v582 = vld [vmem:[%s373 + $0x80] sm:$0xff]
        %v583 = vld [vmem:[%s373 + $0x88] sm:$0xff]
        %v584 = vld [vmem:[%s373 + $0x90] sm:$0xff]
        %v585 = vld [vmem:[%s373 + $0x98] sm:$0xff]
        %v586 = vld [vmem:[%s373 + $0xa0] sm:$0xff]
        %v587 = vld [vmem:[%s373 + $0xa8] sm:$0xff]
        %v588 = vld [vmem:[%s373 + $0xb0] sm:$0xff]
        %v589 = vld [vmem:[%s373 + $0xb8] sm:$0xff]
        %v590 = vld [vmem:[%s373 + $0xc0] sm:$0xff]
        %v591 = vld [vmem:[%s373 + $0xc8] sm:$0xff]
        %v592 = vld [vmem:[%s373 + $0xd0] sm:$0xff]
        %v593 = vld [vmem:[%s373 + $0xd8] sm:$0xff]
        %v594 = vld [vmem:[%s373 + $0xe0] sm:$0xff]
        %v595 = vld [vmem:[%s373 + $0xe8] sm:$0xff]
        %v596 = vld [vmem:[%s373 + $0xf0] sm:$0xff]
        %v597 = vld [vmem:[%s373 + $0xf8] sm:$0xff]
        %v598 = vld [vmem:[%s373 + $0x100] sm:$0xff]
        %v599 = vld [vmem:[%s373 + $0x108] sm:$0xff]
        %v600 = vld [vmem:[%s373 + $0x110] sm:$0xff]
        %v601 = vld [vmem:[%s373 + $0x118] sm:$0xff]
        %v602 = vld [vmem:[%s373 + $0x120] sm:$0xff]
        %v603 = vld [vmem:[%s373 + $0x128] sm:$0xff]
        %v604 = vld [vmem:[%s373 + $0x130] sm:$0xff]
        %v605 = vld [vmem:[%s373 + $0x138] sm:$0xff]
        %v606 = vld [vmem:[%s373 + $0x140] sm:$0xff]
        %v607 = vld [vmem:[%s373 + $0x148] sm:$0xff]
        %v608 = vld [vmem:[%s373 + $0x150] sm:$0xff]
        %v609 = vld [vmem:[%s373 + $0x158] sm:$0xff]
        %v610 = vld [vmem:[%s373 + $0x160] sm:$0xff]
        %v611 = vld [vmem:[%s373 + $0x168] sm:$0xff]
        %v612 = vld [vmem:[%s373 + $0x170] sm:$0xff]
        %v613 = vld [vmem:[%s373 + $0x178] sm:$0xff]
        %v614 = vld [vmem:[%s373 + $0x180] sm:$0xff]
        %v615 = vld [vmem:[%s373 + $0x188] sm:$0xff]
        %v616 = vld [vmem:[%s373 + $0x190] sm:$0xff]
        %v617 = vld [vmem:[%s373 + $0x198] sm:$0xff]
        %v618 = vld [vmem:[%s373 + $0x1a0] sm:$0xff]
        %v619 = vld [vmem:[%s373 + $0x1a8] sm:$0xff]
        %v620 = vld [vmem:[%s373 + $0x1b0] sm:$0xff]
        %v621 = vld [vmem:[%s373 + $0x1b8] sm:$0xff]
        %v622 = vld [vmem:[%s373 + $0x1c0] sm:$0xff]
        %v623 = vld [vmem:[%s373 + $0x1c8] sm:$0xff]
        %v624 = vld [vmem:[%s373 + $0x1d0] sm:$0xff]
        %v625 = vld [vmem:[%s373 + $0x1d8] sm:$0xff]
        %v626 = vld [vmem:[%s373 + $0x1e0] sm:$0xff]
        %v627 = vld [vmem:[%s373 + $0x1e8] sm:$0xff]
        %v628 = vld [vmem:[%s373 + $0x1f0] sm:$0xff]
        %v629 = vld [vmem:[%s373 + $0x1f8] sm:$0xff]
        %v694 = vunpack.c.l.b16 %v566
        %v695 = vunpack.c.h.b16 %v566
        %v696 = vunpack.c.l.b16 %v567
        %v697 = vunpack.c.h.b16 %v567
        %v698 = vunpack.c.l.b16 %v568
        %v699 = vunpack.c.h.b16 %v568
        %v700 = vunpack.c.l.b16 %v569
        %v701 = vunpack.c.h.b16 %v569
        %v702 = vunpack.c.l.b16 %v570
        %v703 = vunpack.c.h.b16 %v570
        %v704 = vunpack.c.l.b16 %v571
        %v705 = vunpack.c.h.b16 %v571
        %v706 = vunpack.c.l.b16 %v572
        %v707 = vunpack.c.h.b16 %v572
        %v708 = vunpack.c.l.b16 %v573
        %v709 = vunpack.c.h.b16 %v573
        %v710 = vunpack.c.l.b16 %v574
        %v711 = vunpack.c.h.b16 %v574
        %v712 = vunpack.c.l.b16 %v575
        %v713 = vunpack.c.h.b16 %v575
        %v714 = vunpack.c.l.b16 %v576
        %v715 = vunpack.c.h.b16 %v576
        %v716 = vunpack.c.l.b16 %v577
        %v717 = vunpack.c.h.b16 %v577
        %v718 = vunpack.c.l.b16 %v578
        %v719 = vunpack.c.h.b16 %v578
        %v720 = vunpack.c.l.b16 %v579
        %v721 = vunpack.c.h.b16 %v579
        %v722 = vunpack.c.l.b16 %v580
        %v723 = vunpack.c.h.b16 %v580
        %v724 = vunpack.c.l.b16 %v581
        %v725 = vunpack.c.h.b16 %v581
        %v726 = vunpack.c.l.b16 %v582
        %v727 = vunpack.c.h.b16 %v582
        %v728 = vunpack.c.l.b16 %v583
        %v729 = vunpack.c.h.b16 %v583
        %v730 = vunpack.c.l.b16 %v584
        %v731 = vunpack.c.h.b16 %v584
        %v732 = vunpack.c.l.b16 %v585
        %v733 = vunpack.c.h.b16 %v585
        %v734 = vunpack.c.l.b16 %v586
        %v735 = vunpack.c.h.b16 %v586
        %v736 = vunpack.c.l.b16 %v587
        %v737 = vunpack.c.h.b16 %v587
        %v738 = vunpack.c.l.b16 %v588
        %v739 = vunpack.c.h.b16 %v588
        %v740 = vunpack.c.l.b16 %v589
        %v741 = vunpack.c.h.b16 %v589
        %v742 = vunpack.c.l.b16 %v590
        %v743 = vunpack.c.h.b16 %v590
        %v744 = vunpack.c.l.b16 %v591
        %v745 = vunpack.c.h.b16 %v591
        %v746 = vunpack.c.l.b16 %v592
        %v747 = vunpack.c.h.b16 %v592
        %v748 = vunpack.c.l.b16 %v593
        %v749 = vunpack.c.h.b16 %v593
        %v750 = vunpack.c.l.b16 %v594
        %v751 = vunpack.c.h.b16 %v594
        %v752 = vunpack.c.l.b16 %v595
        %v753 = vunpack.c.h.b16 %v595
        %v754 = vunpack.c.l.b16 %v596
        %v755 = vunpack.c.h.b16 %v596
        %v756 = vunpack.c.l.b16 %v597
        %v757 = vunpack.c.h.b16 %v597
        %v758 = vunpack.c.l.b16 %v598
        %v759 = vunpack.c.h.b16 %v598
        %v760 = vunpack.c.l.b16 %v599
        %v761 = vunpack.c.h.b16 %v599
        %v762 = vunpack.c.l.b16 %v600
        %v763 = vunpack.c.h.b16 %v600
        %v764 = vunpack.c.l.b16 %v601
        %v765 = vunpack.c.h.b16 %v601
        %v766 = vunpack.c.l.b16 %v602
        %v767 = vunpack.c.h.b16 %v602
        %v768 = vunpack.c.l.b16 %v603
        %v769 = vunpack.c.h.b16 %v603
        %v770 = vunpack.c.l.b16 %v604
        %v771 = vunpack.c.h.b16 %v604
        %v772 = vunpack.c.l.b16 %v605
        %v773 = vunpack.c.h.b16 %v605
        %v774 = vunpack.c.l.b16 %v606
        %v775 = vunpack.c.h.b16 %v606
        %v776 = vunpack.c.l.b16 %v607
        %v777 = vunpack.c.h.b16 %v607
        %v778 = vunpack.c.l.b16 %v608
        %v779 = vunpack.c.h.b16 %v608
        %v780 = vunpack.c.l.b16 %v609
        %v781 = vunpack.c.h.b16 %v609
        %v782 = vunpack.c.l.b16 %v610
        %v783 = vunpack.c.h.b16 %v610
        %v784 = vunpack.c.l.b16 %v611
        %v785 = vunpack.c.h.b16 %v611
        %v786 = vunpack.c.l.b16 %v612
        %v787 = vunpack.c.h.b16 %v612
        %v788 = vunpack.c.l.b16 %v613
        %v789 = vunpack.c.h.b16 %v613
        %v790 = vunpack.c.l.b16 %v614
        %v791 = vunpack.c.h.b16 %v614
        %v792 = vunpack.c.l.b16 %v615
        %v793 = vunpack.c.h.b16 %v615
        %v794 = vunpack.c.l.b16 %v616
        %v795 = vunpack.c.h.b16 %v616
        %v796 = vunpack.c.l.b16 %v617
        %v797 = vunpack.c.h.b16 %v617
        %v798 = vunpack.c.l.b16 %v618
        %v799 = vunpack.c.h.b16 %v618
        %v800 = vunpack.c.l.b16 %v619
        %v801 = vunpack.c.h.b16 %v619
        %v802 = vunpack.c.l.b16 %v620
        %v803 = vunpack.c.h.b16 %v620
        %v804 = vunpack.c.l.b16 %v621
        %v805 = vunpack.c.h.b16 %v621
        %v806 = vunpack.c.l.b16 %v622
        %v807 = vunpack.c.h.b16 %v622
        %v808 = vunpack.c.l.b16 %v623
        %v809 = vunpack.c.h.b16 %v623
        %v810 = vunpack.c.l.b16 %v624
        %v811 = vunpack.c.h.b16 %v624
        %v812 = vunpack.c.l.b16 %v625
        %v813 = vunpack.c.h.b16 %v625
        %v814 = vunpack.c.l.b16 %v626
        %v815 = vunpack.c.h.b16 %v626
        %v816 = vunpack.c.l.b16 %v627
        %v817 = vunpack.c.h.b16 %v627
        %v818 = vunpack.c.l.b16 %v628
        %v819 = vunpack.c.h.b16 %v628
        %v820 = vunpack.c.l.b16 %v629
        %v821 = vunpack.c.h.b16 %v629
        %v822 = vpack.c.b16 %v698, %v694
        %v823 = vpack.c.b16 %v699, %v695
        %v824 = vpack.c.b16 %v700, %v696
        %v825 = vpack.c.b16 %v701, %v697
        %v826 = vpack.c.b16 %v706, %v702
        %v827 = vpack.c.b16 %v707, %v703
        %v828 = vpack.c.b16 %v708, %v704
        %v829 = vpack.c.b16 %v709, %v705
        %v830 = vpack.c.b16 %v714, %v710
        %v831 = vpack.c.b16 %v715, %v711
        %v832 = vpack.c.b16 %v716, %v712
        %v833 = vpack.c.b16 %v717, %v713
        %v834 = vpack.c.b16 %v722, %v718
        %v835 = vpack.c.b16 %v723, %v719
        %v836 = vpack.c.b16 %v724, %v720
        %v837 = vpack.c.b16 %v725, %v721
        %v838 = vpack.c.b16 %v730, %v726
        %v839 = vpack.c.b16 %v731, %v727
        %v840 = vpack.c.b16 %v732, %v728
        %v841 = vpack.c.b16 %v733, %v729
        %v842 = vpack.c.b16 %v738, %v734
        %v843 = vpack.c.b16 %v739, %v735
        %v844 = vpack.c.b16 %v740, %v736
        %v845 = vpack.c.b16 %v741, %v737
        %v846 = vpack.c.b16 %v746, %v742
        %v847 = vpack.c.b16 %v747, %v743
        %v848 = vpack.c.b16 %v748, %v744
        %v849 = vpack.c.b16 %v749, %v745
        %v850 = vpack.c.b16 %v754, %v750
        %v851 = vpack.c.b16 %v755, %v751
        %v852 = vpack.c.b16 %v756, %v752
        %v853 = vpack.c.b16 %v757, %v753
        %v854 = vpack.c.b16 %v762, %v758
        %v855 = vpack.c.b16 %v763, %v759
        %v856 = vpack.c.b16 %v764, %v760
        %v857 = vpack.c.b16 %v765, %v761
        %v858 = vpack.c.b16 %v770, %v766
        %v859 = vpack.c.b16 %v771, %v767
        %v860 = vpack.c.b16 %v772, %v768
        %v861 = vpack.c.b16 %v773, %v769
        %v862 = vpack.c.b16 %v778, %v774
        %v863 = vpack.c.b16 %v779, %v775
        %v864 = vpack.c.b16 %v780, %v776
        %v865 = vpack.c.b16 %v781, %v777
        %v866 = vpack.c.b16 %v786, %v782
        %v867 = vpack.c.b16 %v787, %v783
        %v868 = vpack.c.b16 %v788, %v784
        %v869 = vpack.c.b16 %v789, %v785
        %v870 = vpack.c.b16 %v794, %v790
        %v871 = vpack.c.b16 %v795, %v791
        %v872 = vpack.c.b16 %v796, %v792
        %v873 = vpack.c.b16 %v797, %v793
        %v874 = vpack.c.b16 %v802, %v798
        %v875 = vpack.c.b16 %v803, %v799
        %v876 = vpack.c.b16 %v804, %v800
        %v877 = vpack.c.b16 %v805, %v801
        %v878 = vpack.c.b16 %v810, %v806
        %v879 = vpack.c.b16 %v811, %v807
        %v880 = vpack.c.b16 %v812, %v808
        %v881 = vpack.c.b16 %v813, %v809
        %v882 = vpack.c.b16 %v818, %v814
        %v883 = vpack.c.b16 %v819, %v815
        %v884 = vpack.c.b16 %v820, %v816
        %v885 = vpack.c.b16 %v821, %v817
        %v1014 = vunpack.c.l.b16 %v470
        %v1015 = vunpack.c.l.b16 %v471
        %v1016 = vunpack.c.l.b16 %v472
        %v1017 = vunpack.c.l.b16 %v473
        %v1018 = vunpack.c.l.b16 %v474
        %v1019 = vunpack.c.l.b16 %v475
        %v1020 = vunpack.c.l.b16 %v476
        %v1021 = vunpack.c.l.b16 %v477
        %v1022 = vunpack.c.l.b16 %v478
        %v1023 = vunpack.c.l.b16 %v479
        %v1024 = vunpack.c.l.b16 %v480
        %v1025 = vunpack.c.l.b16 %v481
        %v1026 = vunpack.c.l.b16 %v482
        %v1027 = vunpack.c.l.b16 %v483
        %v1028 = vunpack.c.l.b16 %v484
        %v1029 = vunpack.c.l.b16 %v485
        %v1030 = vunpack.c.l.b16 %v486
        %v1031 = vunpack.c.l.b16 %v487
        %v1032 = vunpack.c.l.b16 %v488
        %v1033 = vunpack.c.l.b16 %v489
        %v1034 = vunpack.c.l.b16 %v490
        %v1035 = vunpack.c.l.b16 %v491
        %v1036 = vunpack.c.l.b16 %v492
        %v1037 = vunpack.c.l.b16 %v493
        %v1038 = vunpack.c.l.b16 %v494
        %v1039 = vunpack.c.l.b16 %v495
        %v1040 = vunpack.c.l.b16 %v496
        %v1041 = vunpack.c.l.b16 %v497
        %v1042 = vunpack.c.l.b16 %v498
        %v1043 = vunpack.c.l.b16 %v499
        %v1044 = vunpack.c.l.b16 %v500
        %v1045 = vunpack.c.l.b16 %v501
        %v1046 = vunpack.c.l.b16 %v502
        %v1047 = vunpack.c.l.b16 %v503
        %v1048 = vunpack.c.l.b16 %v504
        %v1049 = vunpack.c.l.b16 %v505
        %v1050 = vunpack.c.l.b16 %v506
        %v1051 = vunpack.c.l.b16 %v507
        %v1052 = vunpack.c.l.b16 %v508
        %v1053 = vunpack.c.l.b16 %v509
        %v1054 = vunpack.c.l.b16 %v510
        %v1055 = vunpack.c.l.b16 %v511
        %v1056 = vunpack.c.l.b16 %v512
        %v1057 = vunpack.c.l.b16 %v513
        %v1058 = vunpack.c.l.b16 %v514
        %v1059 = vunpack.c.l.b16 %v515
        %v1060 = vunpack.c.l.b16 %v516
        %v1061 = vunpack.c.l.b16 %v517
        %v1062 = vunpack.c.l.b16 %v518
        %v1063 = vunpack.c.l.b16 %v519
        %v1064 = vunpack.c.l.b16 %v520
        %v1065 = vunpack.c.l.b16 %v521
        %v1066 = vunpack.c.l.b16 %v522
        %v1067 = vunpack.c.l.b16 %v523
        %v1068 = vunpack.c.l.b16 %v524
        %v1069 = vunpack.c.l.b16 %v525
        %v1070 = vunpack.c.l.b16 %v526
        %v1071 = vunpack.c.l.b16 %v527
        %v1072 = vunpack.c.l.b16 %v528
        %v1073 = vunpack.c.l.b16 %v529
        %v1074 = vunpack.c.l.b16 %v530
        %v1075 = vunpack.c.l.b16 %v531
        %v1076 = vunpack.c.l.b16 %v532
        %v1077 = vunpack.c.l.b16 %v533
        %v1078 = vpack.c.b16 %v1015, %v1014
        %v1079 = vpack.c.b16 %v1017, %v1016
        %v1080 = vpack.c.b16 %v1019, %v1018
        %v1081 = vpack.c.b16 %v1021, %v1020
        %v1082 = vpack.c.b16 %v1023, %v1022
        %v1083 = vpack.c.b16 %v1025, %v1024
        %v1084 = vpack.c.b16 %v1027, %v1026
        %v1085 = vpack.c.b16 %v1029, %v1028
        %v1086 = vpack.c.b16 %v1031, %v1030
        %v1087 = vpack.c.b16 %v1033, %v1032
        %v1088 = vpack.c.b16 %v1035, %v1034
        %v1089 = vpack.c.b16 %v1037, %v1036
        %v1090 = vpack.c.b16 %v1039, %v1038
        %v1091 = vpack.c.b16 %v1041, %v1040
        %v1092 = vpack.c.b16 %v1043, %v1042
        %v1093 = vpack.c.b16 %v1045, %v1044
        %v1094 = vpack.c.b16 %v1047, %v1046
        %v1095 = vpack.c.b16 %v1049, %v1048
        %v1096 = vpack.c.b16 %v1051, %v1050
        %v1097 = vpack.c.b16 %v1053, %v1052
        %v1098 = vpack.c.b16 %v1055, %v1054
        %v1099 = vpack.c.b16 %v1057, %v1056
        %v1100 = vpack.c.b16 %v1059, %v1058
        %v1101 = vpack.c.b16 %v1061, %v1060
        %v1102 = vpack.c.b16 %v1063, %v1062
        %v1103 = vpack.c.b16 %v1065, %v1064
        %v1104 = vpack.c.b16 %v1067, %v1066
        %v1105 = vpack.c.b16 %v1069, %v1068
        %v1106 = vpack.c.b16 %v1071, %v1070
        %v1107 = vpack.c.b16 %v1073, %v1072
        %v1108 = vpack.c.b16 %v1075, %v1074
        %v1109 = vpack.c.b16 %v1077, %v1076
        %1142 = vmatprep.subr.bf16.mxu0 0
        %1143 = vmatpush1.bf16.msra.mxu0 %v1078
        %1144 = vmatprep.subr.bf16.mxu0 0
        %1145 = vmatpush1.bf16.msra.mxu0 %v1079
        %1146 = vmatprep.subr.bf16.mxu0 0
        %1147 = vmatpush1.bf16.msra.mxu0 %v1080
        %1148 = vmatprep.subr.bf16.mxu0 0
        %1149 = vmatpush1.bf16.msra.mxu0 %v1081
        %1150 = vmatprep.subr.bf16.mxu0 0
        %1151 = vmatpush1.bf16.msra.mxu0 %v1082
        %1152 = vmatprep.subr.bf16.mxu0 0
        %1153 = vmatpush1.bf16.msra.mxu0 %v1083
        %1154 = vmatprep.subr.bf16.mxu0 0
        %1155 = vmatpush1.bf16.msra.mxu0 %v1084
        %1156 = vmatprep.subr.bf16.mxu0 0
        %1157 = vmatpush1.bf16.msra.mxu0 %v1085
        %1158 = vmatprep.subr.bf16.mxu0 0
        %1159 = vmatpush1.bf16.msra.mxu0 %v1086
        %1160 = vmatprep.subr.bf16.mxu0 0
        %1161 = vmatpush1.bf16.msra.mxu0 %v1087
        %1162 = vmatprep.subr.bf16.mxu0 0
        %1163 = vmatpush1.bf16.msra.mxu0 %v1088
        %1164 = vmatprep.subr.bf16.mxu0 0
        %1165 = vmatpush1.bf16.msra.mxu0 %v1089
        %1166 = vmatprep.subr.bf16.mxu0 0
        %1167 = vmatpush1.bf16.msra.mxu0 %v1090
        %1168 = vmatprep.subr.bf16.mxu0 0
        %1169 = vmatpush1.bf16.msra.mxu0 %v1091
        %1170 = vmatprep.subr.bf16.mxu0 0
        %1171 = vmatpush1.bf16.msra.mxu0 %v1092
        %1172 = vmatprep.subr.bf16.mxu0 0
        %1173 = vmatpush1.bf16.msra.mxu0 %v1093
        %1174 = vmatprep.mubr.bf16.mxu0 %v823
        %1175 = vmatmul.mubr.bf16.gmra.mrb[0].mxu0 %v822
        %v1176 = vpop.f32.mrb[0].mxu0
        %v1177 = vadd.f32 0.0, %v1176
        %v1178 = vpop.f32.mrb[0].mxu0
        %v1179 = vpop.f32.mrb[0].mxu0
        %v1180 = vadd.f32 0.0, %v1179
        %v1181 = vpop.f32.mrb[0].mxu0
        %1182 = vmatprep.mubr.bf16.mxu0 %v827
        %1183 = vmatmul.mubr.bf16.gmra.mrb[0].mxu0 %v826
        %v1184 = vpop.f32.mrb[0].mxu0
        %v1185 = vadd.f32 0.0, %v1184
        %v1186 = vpop.f32.mrb[0].mxu0
        %v1187 = vpop.f32.mrb[0].mxu0
        %v1188 = vadd.f32 0.0, %v1187
        %v1189 = vpop.f32.mrb[0].mxu0
        %1190 = vmatprep.mubr.bf16.mxu0 %v831
        %1191 = vmatmul.mubr.bf16.gmra.mrb[0].mxu0 %v830
        %v1192 = vpop.f32.mrb[0].mxu0
        %v1193 = vadd.f32 0.0, %v1192
        %v1194 = vpop.f32.mrb[0].mxu0
        %v1195 = vpop.f32.mrb[0].mxu0
        %v1196 = vadd.f32 0.0, %v1195
        %v1197 = vpop.f32.mrb[0].mxu0
        %1198 = vmatprep.mubr.bf16.mxu0 %v835
        %1199 = vmatmul.mubr.bf16.gmra.mrb[0].mxu0 %v834
        %v1200 = vpop.f32.mrb[0].mxu0
        %v1201 = vadd.f32 0.0, %v1200
        %v1202 = vpop.f32.mrb[0].mxu0
        %v1203 = vpop.f32.mrb[0].mxu0
        %v1204 = vadd.f32 0.0, %v1203
        %v1205 = vpop.f32.mrb[0].mxu0
        %1206 = vmatprep.mubr.bf16.mxu0 %v839
        %1207 = vmatmul.mubr.bf16.gmra.mrb[0].mxu0 %v838
        %v1208 = vpop.f32.mrb[0].mxu0
        %v1209 = vadd.f32 0.0, %v1208
        %v1210 = vpop.f32.mrb[0].mxu0
        %v1211 = vpop.f32.mrb[0].mxu0
        %v1212 = vadd.f32 0.0, %v1211
        %v1213 = vpop.f32.mrb[0].mxu0
        %1214 = vmatprep.mubr.bf16.mxu0 %v843
        %1215 = vmatmul.mubr.bf16.gmra.mrb[0].mxu0 %v842
        %v1216 = vpop.f32.mrb[0].mxu0
        %v1217 = vadd.f32 0.0, %v1216
        %v1218 = vpop.f32.mrb[0].mxu0
        %v1219 = vpop.f32.mrb[0].mxu0
        %v1220 = vadd.f32 0.0, %v1219
        %v1221 = vpop.f32.mrb[0].mxu0
        %1222 = vmatprep.mubr.bf16.mxu0 %v847
        %1223 = vmatmul.mubr.bf16.gmra.mrb[0].mxu0 %v846
        %v1224 = vpop.f32.mrb[0].mxu0
        %v1225 = vadd.f32 0.0, %v1224
        %v1226 = vpop.f32.mrb[0].mxu0
        %v1227 = vpop.f32.mrb[0].mxu0
        %v1228 = vadd.f32 0.0, %v1227
        %v1229 = vpop.f32.mrb[0].mxu0
        %1230 = vmatprep.mubr.bf16.mxu0 %v851
        %1231 = vmatmul.mubr.bf16.gmra.mrb[0].mxu0 %v850
        %v1232 = vpop.f32.mrb[0].mxu0
        %v1233 = vadd.f32 0.0, %v1232
        %v1234 = vpop.f32.mrb[0].mxu0
        %v1235 = vpop.f32.mrb[0].mxu0
        %v1236 = vadd.f32 0.0, %v1235
        %v1237 = vpop.f32.mrb[0].mxu0
        %1238 = vmatprep.mubr.bf16.mxu0 %v855
        %1239 = vmatmul.mubr.bf16.gmra.mrb[0].mxu0 %v854
        %v1240 = vpop.f32.mrb[0].mxu0
        %v1241 = vadd.f32 0.0, %v1240
        %v1242 = vpop.f32.mrb[0].mxu0
        %v1243 = vpop.f32.mrb[0].mxu0
        %v1244 = vadd.f32 0.0, %v1243
        %v1245 = vpop.f32.mrb[0].mxu0
        %1246 = vmatprep.mubr.bf16.mxu0 %v859
        %1247 = vmatmul.mubr.bf16.gmra.mrb[0].mxu0 %v858
        %v1248 = vpop.f32.mrb[0].mxu0
        %v1249 = vadd.f32 0.0, %v1248
        %v1250 = vpop.f32.mrb[0].mxu0
        %v1251 = vpop.f32.mrb[0].mxu0
        %v1252 = vadd.f32 0.0, %v1251
        %v1253 = vpop.f32.mrb[0].mxu0
        %1254 = vmatprep.mubr.bf16.mxu0 %v863
        %1255 = vmatmul.mubr.bf16.gmra.mrb[0].mxu0 %v862
        %v1256 = vpop.f32.mrb[0].mxu0
        %v1257 = vadd.f32 0.0, %v1256
        %v1258 = vpop.f32.mrb[0].mxu0
        %v1259 = vpop.f32.mrb[0].mxu0
        %v1260 = vadd.f32 0.0, %v1259
        %v1261 = vpop.f32.mrb[0].mxu0
        %1262 = vmatprep.mubr.bf16.mxu0 %v867
        %1263 = vmatmul.mubr.bf16.gmra.mrb[0].mxu0 %v866
        %v1264 = vpop.f32.mrb[0].mxu0
        %v1265 = vadd.f32 0.0, %v1264
        %v1266 = vpop.f32.mrb[0].mxu0
        %v1267 = vpop.f32.mrb[0].mxu0
        %v1268 = vadd.f32 0.0, %v1267
        %v1269 = vpop.f32.mrb[0].mxu0
        %1270 = vmatprep.mubr.bf16.mxu0 %v871
        %1271 = vmatmul.mubr.bf16.gmra.mrb[0].mxu0 %v870
        %v1272 = vpop.f32.mrb[0].mxu0
        %v1273 = vadd.f32 0.0, %v1272
        %v1274 = vpop.f32.mrb[0].mxu0
        %v1275 = vpop.f32.mrb[0].mxu0
        %v1276 = vadd.f32 0.0, %v1275
        %v1277 = vpop.f32.mrb[0].mxu0
        %1278 = vmatprep.mubr.bf16.mxu0 %v875
        %1279 = vmatmul.mubr.bf16.gmra.mrb[0].mxu0 %v874
        %v1280 = vpop.f32.mrb[0].mxu0
        %v1281 = vadd.f32 0.0, %v1280
        %v1282 = vpop.f32.mrb[0].mxu0
        %v1283 = vpop.f32.mrb[0].mxu0
        %v1284 = vadd.f32 0.0, %v1283
        %v1285 = vpop.f32.mrb[0].mxu0
        %1286 = vmatprep.mubr.bf16.mxu0 %v879
        %1287 = vmatmul.mubr.bf16.gmra.mrb[0].mxu0 %v878
        %v1288 = vpop.f32.mrb[0].mxu0
        %v1289 = vadd.f32 0.0, %v1288
        %v1290 = vpop.f32.mrb[0].mxu0
        %v1291 = vpop.f32.mrb[0].mxu0
        %v1292 = vadd.f32 0.0, %v1291
        %v1293 = vpop.f32.mrb[0].mxu0
        %1294 = vmatprep.mubr.bf16.mxu0 %v883
        %1295 = vmatmul.mubr.bf16.gmra.mrb[0].mxu0 %v882
        %v1296 = vpop.f32.mrb[0].mxu0
        %v1297 = vadd.f32 0.0, %v1296
        %v1298 = vpop.f32.mrb[0].mxu0
        %v1299 = vpop.f32.mrb[0].mxu0
        %v1300 = vadd.f32 0.0, %v1299
        %v1301 = vpop.f32.mrb[0].mxu0
        %1302 = vdwg.mxu0
        %1303 = vmatprep.subr.bf16.mxu0 0
        %1304 = vmatpush1.bf16.msra.mxu0 %v1094
        %1305 = vmatprep.subr.bf16.mxu0 0
        %1306 = vmatpush1.bf16.msra.mxu0 %v1095
        %1307 = vmatprep.subr.bf16.mxu0 0
        %1308 = vmatpush1.bf16.msra.mxu0 %v1096
        %1309 = vmatprep.subr.bf16.mxu0 0
        %1310 = vmatpush1.bf16.msra.mxu0 %v1097
        %1311 = vmatprep.subr.bf16.mxu0 0
        %1312 = vmatpush1.bf16.msra.mxu0 %v1098
        %1313 = vmatprep.subr.bf16.mxu0 0
        %1314 = vmatpush1.bf16.msra.mxu0 %v1099
        %1315 = vmatprep.subr.bf16.mxu0 0
        %1316 = vmatpush1.bf16.msra.mxu0 %v1100
        %1317 = vmatprep.subr.bf16.mxu0 0
        %1318 = vmatpush1.bf16.msra.mxu0 %v1101
        %1319 = vmatprep.subr.bf16.mxu0 0
        %1320 = vmatpush1.bf16.msra.mxu0 %v1102
        %1321 = vmatprep.subr.bf16.mxu0 0
        %1322 = vmatpush1.bf16.msra.mxu0 %v1103
        %1323 = vmatprep.subr.bf16.mxu0 0
        %1324 = vmatpush1.bf16.msra.mxu0 %v1104
        %1325 = vmatprep.subr.bf16.mxu0 0
        %1326 = vmatpush1.bf16.msra.mxu0 %v1105
        %1327 = vmatprep.subr.bf16.mxu0 0
        %1328 = vmatpush1.bf16.msra.mxu0 %v1106
        %1329 = vmatprep.subr.bf16.mxu0 0
        %1330 = vmatpush1.bf16.msra.mxu0 %v1107
        %1331 = vmatprep.subr.bf16.mxu0 0
        %1332 = vmatpush1.bf16.msra.mxu0 %v1108
        %1333 = vmatprep.subr.bf16.mxu0 0
        %1334 = vmatpush1.bf16.msra.mxu0 %v1109
        %1335 = vmatprep.mubr.bf16.mxu0 %v825
        %1336 = vmatmul.mubr.bf16.gmra.mrb[0].mxu0 %v824
        %v1337 = vpop.f32.mrb[0].mxu0
        %v1338 = vadd.f32 %v1177, %v1337
        %v1339 = vpop.f32.mrb[0].mxu0
        %v1340 = vpop.f32.mrb[0].mxu0
        %v1341 = vadd.f32 %v1180, %v1340
        %v1342 = vpop.f32.mrb[0].mxu0
        %1343 = vmatprep.mubr.bf16.mxu0 %v829
        %1344 = vmatmul.mubr.bf16.gmra.mrb[0].mxu0 %v828
        %v1345 = vpop.f32.mrb[0].mxu0
        %v1346 = vadd.f32 %v1185, %v1345
        %v1347 = vpop.f32.mrb[0].mxu0
        %v1348 = vpop.f32.mrb[0].mxu0
        %v1349 = vadd.f32 %v1188, %v1348
        %v1350 = vpop.f32.mrb[0].mxu0
        %1351 = vmatprep.mubr.bf16.mxu0 %v833
        %1352 = vmatmul.mubr.bf16.gmra.mrb[0].mxu0 %v832
        %v1353 = vpop.f32.mrb[0].mxu0
        %v1354 = vadd.f32 %v1193, %v1353
        %v1355 = vpop.f32.mrb[0].mxu0
        %v1356 = vpop.f32.mrb[0].mxu0
        %v1357 = vadd.f32 %v1196, %v1356
        %v1358 = vpop.f32.mrb[0].mxu0
        %1359 = vmatprep.mubr.bf16.mxu0 %v837
        %1360 = vmatmul.mubr.bf16.gmra.mrb[0].mxu0 %v836
        %v1361 = vpop.f32.mrb[0].mxu0
        %v1362 = vadd.f32 %v1201, %v1361
        %v1363 = vpop.f32.mrb[0].mxu0
        %v1364 = vpop.f32.mrb[0].mxu0
        %v1365 = vadd.f32 %v1204, %v1364
        %v1366 = vpop.f32.mrb[0].mxu0
        %1367 = vmatprep.mubr.bf16.mxu0 %v841
        %1368 = vmatmul.mubr.bf16.gmra.mrb[0].mxu0 %v840
        %v1369 = vpop.f32.mrb[0].mxu0
        %v1370 = vadd.f32 %v1209, %v1369
        %v1371 = vpop.f32.mrb[0].mxu0
        %v1372 = vpop.f32.mrb[0].mxu0
        %v1373 = vadd.f32 %v1212, %v1372
        %v1374 = vpop.f32.mrb[0].mxu0
        %1375 = vmatprep.mubr.bf16.mxu0 %v845
        %1376 = vmatmul.mubr.bf16.gmra.mrb[0].mxu0 %v844
        %v1377 = vpop.f32.mrb[0].mxu0
        %v1378 = vadd.f32 %v1217, %v1377
        %v1379 = vpop.f32.mrb[0].mxu0
        %v1380 = vpop.f32.mrb[0].mxu0
        %v1381 = vadd.f32 %v1220, %v1380
        %v1382 = vpop.f32.mrb[0].mxu0
        %1383 = vmatprep.mubr.bf16.mxu0 %v849
        %1384 = vmatmul.mubr.bf16.gmra.mrb[0].mxu0 %v848
        %v1385 = vpop.f32.mrb[0].mxu0
        %v1386 = vadd.f32 %v1225, %v1385
        %v1387 = vpop.f32.mrb[0].mxu0
        %v1388 = vpop.f32.mrb[0].mxu0
        %v1389 = vadd.f32 %v1228, %v1388
        %v1390 = vpop.f32.mrb[0].mxu0
        %1391 = vmatprep.mubr.bf16.mxu0 %v853
        %1392 = vmatmul.mubr.bf16.gmra.mrb[0].mxu0 %v852
        %v1393 = vpop.f32.mrb[0].mxu0
        %v1394 = vadd.f32 %v1233, %v1393
        %v1395 = vpop.f32.mrb[0].mxu0
        %v1396 = vpop.f32.mrb[0].mxu0
        %v1397 = vadd.f32 %v1236, %v1396
        %v1398 = vpop.f32.mrb[0].mxu0
        %1399 = vmatprep.mubr.bf16.mxu0 %v857
        %1400 = vmatmul.mubr.bf16.gmra.mrb[0].mxu0 %v856
        %v1401 = vpop.f32.mrb[0].mxu0
        %v1402 = vadd.f32 %v1241, %v1401
        %v1403 = vpop.f32.mrb[0].mxu0
        %v1404 = vpop.f32.mrb[0].mxu0
        %v1405 = vadd.f32 %v1244, %v1404
        %v1406 = vpop.f32.mrb[0].mxu0
        %1407 = vmatprep.mubr.bf16.mxu0 %v861
        %1408 = vmatmul.mubr.bf16.gmra.mrb[0].mxu0 %v860
        %v1409 = vpop.f32.mrb[0].mxu0
        %v1410 = vadd.f32 %v1249, %v1409
        %v1411 = vpop.f32.mrb[0].mxu0
        %v1412 = vpop.f32.mrb[0].mxu0
        %v1413 = vadd.f32 %v1252, %v1412
        %v1414 = vpop.f32.mrb[0].mxu0
        %1415 = vmatprep.mubr.bf16.mxu0 %v865
        %1416 = vmatmul.mubr.bf16.gmra.mrb[0].mxu0 %v864
        %v1417 = vpop.f32.mrb[0].mxu0
        %v1418 = vadd.f32 %v1257, %v1417
        %v1419 = vpop.f32.mrb[0].mxu0
        %v1420 = vpop.f32.mrb[0].mxu0
        %v1421 = vadd.f32 %v1260, %v1420
        %v1422 = vpop.f32.mrb[0].mxu0
        %1423 = vmatprep.mubr.bf16.mxu0 %v869
        %1424 = vmatmul.mubr.bf16.gmra.mrb[0].mxu0 %v868
        %v1425 = vpop.f32.mrb[0].mxu0
        %v1426 = vadd.f32 %v1265, %v1425
        %v1427 = vpop.f32.mrb[0].mxu0
        %v1428 = vpop.f32.mrb[0].mxu0
        %v1429 = vadd.f32 %v1268, %v1428
        %v1430 = vpop.f32.mrb[0].mxu0
        %1431 = vmatprep.mubr.bf16.mxu0 %v873
        %1432 = vmatmul.mubr.bf16.gmra.mrb[0].mxu0 %v872
        %v1433 = vpop.f32.mrb[0].mxu0
        %v1434 = vadd.f32 %v1273, %v1433
        %v1435 = vpop.f32.mrb[0].mxu0
        %v1436 = vpop.f32.mrb[0].mxu0
        %v1437 = vadd.f32 %v1276, %v1436
        %v1438 = vpop.f32.mrb[0].mxu0
        %1439 = vmatprep.mubr.bf16.mxu0 %v877
        %1440 = vmatmul.mubr.bf16.gmra.mrb[0].mxu0 %v876
        %v1441 = vpop.f32.mrb[0].mxu0
        %v1442 = vadd.f32 %v1281, %v1441
        %v1443 = vpop.f32.mrb[0].mxu0
        %v1444 = vpop.f32.mrb[0].mxu0
        %v1445 = vadd.f32 %v1284, %v1444
        %v1446 = vpop.f32.mrb[0].mxu0
        %1447 = vmatprep.mubr.bf16.mxu0 %v881
        %1448 = vmatmul.mubr.bf16.gmra.mrb[0].mxu0 %v880
        %v1449 = vpop.f32.mrb[0].mxu0
        %v1450 = vadd.f32 %v1289, %v1449
        %v1451 = vpop.f32.mrb[0].mxu0
        %v1452 = vpop.f32.mrb[0].mxu0
        %v1453 = vadd.f32 %v1292, %v1452
        %v1454 = vpop.f32.mrb[0].mxu0
        %1455 = vmatprep.mubr.bf16.mxu0 %v885
        %1456 = vmatmul.mubr.bf16.gmra.mrb[0].mxu0 %v884
        %v1457 = vpop.f32.mrb[0].mxu0
        %v1458 = vadd.f32 %v1297, %v1457
        %v1459 = vpop.f32.mrb[0].mxu0
        %v1460 = vpop.f32.mrb[0].mxu0
        %v1461 = vadd.f32 %v1300, %v1460
        %v1462 = vpop.f32.mrb[0].mxu0
        %1463 = vdwg.mxu0
        %v1464 = vadd.f32 %v534, %v1338
        %v1465 = vadd.f32 %v535, %v1341
        %v1466 = vadd.f32 %v536, %v1346
        %v1467 = vadd.f32 %v537, %v1349
        %v1468 = vadd.f32 %v538, %v1354
        %v1469 = vadd.f32 %v539, %v1357
        %v1470 = vadd.f32 %v540, %v1362
        %v1471 = vadd.f32 %v541, %v1365
        %v1472 = vadd.f32 %v542, %v1370
        %v1473 = vadd.f32 %v543, %v1373
        %v1474 = vadd.f32 %v544, %v1378
        %v1475 = vadd.f32 %v545, %v1381
        %v1476 = vadd.f32 %v546, %v1386
        %v1477 = vadd.f32 %v547, %v1389
        %v1478 = vadd.f32 %v548, %v1394
        %v1479 = vadd.f32 %v549, %v1397
        %v1480 = vadd.f32 %v550, %v1402
        %v1481 = vadd.f32 %v551, %v1405
        %v1482 = vadd.f32 %v552, %v1410
        %v1483 = vadd.f32 %v553, %v1413
        %v1484 = vadd.f32 %v554, %v1418
        %v1485 = vadd.f32 %v555, %v1421
        %v1486 = vadd.f32 %v556, %v1426
        %v1487 = vadd.f32 %v557, %v1429
        %v1488 = vadd.f32 %v558, %v1434
        %v1489 = vadd.f32 %v559, %v1437
        %v1490 = vadd.f32 %v560, %v1442
        %v1491 = vadd.f32 %v561, %v1445
        %v1492 = vadd.f32 %v562, %v1450
        %v1493 = vadd.f32 %v563, %v1453
        %v1494 = vadd.f32 %v564, %v1458
        %v1495 = vadd.f32 %v565, %v1461
        %1496 = vst [vmem:[#allocation2] sm:$0xff] %v1464
        %1497 = vst [vmem:[#allocation2 + $0x8] sm:$0xff] %v1465
        %1498 = vst [vmem:[#allocation2 + $0x10] sm:$0xff] %v1466
        %1499 = vst [vmem:[#allocation2 + $0x18] sm:$0xff] %v1467
        %1500 = vst [vmem:[#allocation2 + $0x20] sm:$0xff] %v1468
        %1501 = vst [vmem:[#allocation2 + $0x28] sm:$0xff] %v1469
        %1502 = vst [vmem:[#allocation2 + $0x30] sm:$0xff] %v1470
        %1503 = vst [vmem:[#allocation2 + $0x38] sm:$0xff] %v1471
        %1504 = vst [vmem:[#allocation2 + $0x40] sm:$0xff] %v1472
        %1505 = vst [vmem:[#allocation2 + $0x48] sm:$0xff] %v1473
        %1506 = vst [vmem:[#allocation2 + $0x50] sm:$0xff] %v1474
        %1507 = vst [vmem:[#allocation2 + $0x58] sm:$0xff] %v1475
        %1508 = vst [vmem:[#allocation2 + $0x60] sm:$0xff] %v1476
        %1509 = vst [vmem:[#allocation2 + $0x68] sm:$0xff] %v1477
        %1510 = vst [vmem:[#allocation2 + $0x70] sm:$0xff] %v1478
        %1511 = vst [vmem:[#allocation2 + $0x78] sm:$0xff] %v1479
        %1512 = vst [vmem:[#allocation2 + $0x80] sm:$0xff] %v1480
        %1513 = vst [vmem:[#allocation2 + $0x88] sm:$0xff] %v1481
        %1514 = vst [vmem:[#allocation2 + $0x90] sm:$0xff] %v1482
        %1515 = vst [vmem:[#allocation2 + $0x98] sm:$0xff] %v1483
        %1516 = vst [vmem:[#allocation2 + $0xa0] sm:$0xff] %v1484
        %1517 = vst [vmem:[#allocation2 + $0xa8] sm:$0xff] %v1485
        %1518 = vst [vmem:[#allocation2 + $0xb0] sm:$0xff] %v1486
        %1519 = vst [vmem:[#allocation2 + $0xb8] sm:$0xff] %v1487
        %1520 = vst [vmem:[#allocation2 + $0xc0] sm:$0xff] %v1488
        %1521 = vst [vmem:[#allocation2 + $0xc8] sm:$0xff] %v1489
        %1522 = vst [vmem:[#allocation2 + $0xd0] sm:$0xff] %v1490
        %1523 = vst [vmem:[#allocation2 + $0xd8] sm:$0xff] %v1491
        %1524 = vst [vmem:[#allocation2 + $0xe0] sm:$0xff] %v1492
        %1525 = vst [vmem:[#allocation2 + $0xe8] sm:$0xff] %v1493
        %1526 = vst [vmem:[#allocation2 + $0xf0] sm:$0xff] %v1494
        %1527 = vst [vmem:[#allocation2 + $0xf8] sm:$0xff] %v1495
        %p1528 = scmp.eq.s32.totalorder %s23, 1
        // Predicated region
        $region64: #{lightgcn_forward.5} parent=54 // pred_check
          %p1529 = pneg %p1528
        $region65: #{lightgcn_forward.5} parent=54 // pred_check_branch
          %1531 = sbr.rel (%p1529) target = $region67
        $region66: #{lightgcn_forward.5} parent=54 // pred_region
          %v1532 = vld [vmem:[#allocation2] sm:$0xff]
          %v1533 = vld [vmem:[#allocation2 + $0x8] sm:$0xff]
          %v1534 = vld [vmem:[#allocation2 + $0x10] sm:$0xff]
          %v1535 = vld [vmem:[#allocation2 + $0x18] sm:$0xff]
          %v1536 = vld [vmem:[#allocation2 + $0x20] sm:$0xff]
          %v1537 = vld [vmem:[#allocation2 + $0x28] sm:$0xff]
          %v1538 = vld [vmem:[#allocation2 + $0x30] sm:$0xff]
          %v1539 = vld [vmem:[#allocation2 + $0x38] sm:$0xff]
          %v1540 = vld [vmem:[#allocation2 + $0x40] sm:$0xff]
          %v1541 = vld [vmem:[#allocation2 + $0x48] sm:$0xff]
          %v1542 = vld [vmem:[#allocation2 + $0x50] sm:$0xff]
          %v1543 = vld [vmem:[#allocation2 + $0x58] sm:$0xff]
          %v1544 = vld [vmem:[#allocation2 + $0x60] sm:$0xff]
          %v1545 = vld [vmem:[#allocation2 + $0x68] sm:$0xff]
          %v1546 = vld [vmem:[#allocation2 + $0x70] sm:$0xff]
          %v1547 = vld [vmem:[#allocation2 + $0x78] sm:$0xff]
          %v1548 = vld [vmem:[#allocation2 + $0x80] sm:$0xff]
          %v1549 = vld [vmem:[#allocation2 + $0x88] sm:$0xff]
          %v1550 = vld [vmem:[#allocation2 + $0x90] sm:$0xff]
          %v1551 = vld [vmem:[#allocation2 + $0x98] sm:$0xff]
          %v1552 = vld [vmem:[#allocation2 + $0xa0] sm:$0xff]
          %v1553 = vld [vmem:[#allocation2 + $0xa8] sm:$0xff]
          %v1554 = vld [vmem:[#allocation2 + $0xb0] sm:$0xff]
          %v1555 = vld [vmem:[#allocation2 + $0xb8] sm:$0xff]
          %v1556 = vld [vmem:[#allocation2 + $0xc0] sm:$0xff]
          %v1557 = vld [vmem:[#allocation2 + $0xc8] sm:$0xff]
          %v1558 = vld [vmem:[#allocation2 + $0xd0] sm:$0xff]
          %v1559 = vld [vmem:[#allocation2 + $0xd8] sm:$0xff]
          %v1560 = vld [vmem:[#allocation2 + $0xe0] sm:$0xff]
          %v1561 = vld [vmem:[#allocation2 + $0xe8] sm:$0xff]
          %v1562 = vld [vmem:[#allocation2 + $0xf0] sm:$0xff]
          %v1563 = vld [vmem:[#allocation2 + $0xf8] sm:$0xff]
          %v1564 = vpack.c.bf16 %v1533, %v1532
          %v1565 = vpack.c.bf16 %v1535, %v1534
          %v1566 = vpack.c.bf16 %v1537, %v1536
          %v1567 = vpack.c.bf16 %v1539, %v1538
          %v1568 = vpack.c.bf16 %v1541, %v1540
          %v1569 = vpack.c.bf16 %v1543, %v1542
          %v1570 = vpack.c.bf16 %v1545, %v1544
          %v1571 = vpack.c.bf16 %v1547, %v1546
          %v1572 = vpack.c.bf16 %v1549, %v1548
          %v1573 = vpack.c.bf16 %v1551, %v1550
          %v1574 = vpack.c.bf16 %v1553, %v1552
          %v1575 = vpack.c.bf16 %v1555, %v1554
          %v1576 = vpack.c.bf16 %v1557, %v1556
          %v1577 = vpack.c.bf16 %v1559, %v1558
          %v1578 = vpack.c.bf16 %v1561, %v1560
          %v1579 = vpack.c.bf16 %v1563, %v1562
          %v1596 = vunpack.c.l.b16 %v1564
          %v1597 = vunpack.c.h.b16 %v1564
          %v1598 = vunpack.c.l.b16 %v1565
          %v1599 = vunpack.c.h.b16 %v1565
          %v1600 = vunpack.c.l.b16 %v1566
          %v1601 = vunpack.c.h.b16 %v1566
          %v1602 = vunpack.c.l.b16 %v1567
          %v1603 = vunpack.c.h.b16 %v1567
          %v1604 = vunpack.c.l.b16 %v1568
          %v1605 = vunpack.c.h.b16 %v1568
          %v1606 = vunpack.c.l.b16 %v1569
          %v1607 = vunpack.c.h.b16 %v1569
          %v1608 = vunpack.c.l.b16 %v1570
          %v1609 = vunpack.c.h.b16 %v1570
          %v1610 = vunpack.c.l.b16 %v1571
          %v1611 = vunpack.c.h.b16 %v1571
          %v1612 = vunpack.c.l.b16 %v1572
          %v1613 = vunpack.c.h.b16 %v1572
          %v1614 = vunpack.c.l.b16 %v1573
          %v1615 = vunpack.c.h.b16 %v1573
          %v1616 = vunpack.c.l.b16 %v1574
          %v1617 = vunpack.c.h.b16 %v1574
          %v1618 = vunpack.c.l.b16 %v1575
          %v1619 = vunpack.c.h.b16 %v1575
          %v1620 = vunpack.c.l.b16 %v1576
          %v1621 = vunpack.c.h.b16 %v1576
          %v1622 = vunpack.c.l.b16 %v1577
          %v1623 = vunpack.c.h.b16 %v1577
          %v1624 = vunpack.c.l.b16 %v1578
          %v1625 = vunpack.c.h.b16 %v1578
          %v1626 = vunpack.c.l.b16 %v1579
          %v1627 = vunpack.c.h.b16 %v1579
          %v1628 = vpack.c.b16 %v1596, %v1596
          %v1629 = vpack.c.b16 %v1597, %v1597
          %v1630 = vpack.c.b16 %v1598, %v1598
          %v1631 = vpack.c.b16 %v1599, %v1599
          %v1632 = vpack.c.b16 %v1600, %v1600
          %v1633 = vpack.c.b16 %v1601, %v1601
          %v1634 = vpack.c.b16 %v1602, %v1602
          %v1635 = vpack.c.b16 %v1603, %v1603
          %v1636 = vpack.c.b16 %v1604, %v1604
          %v1637 = vpack.c.b16 %v1605, %v1605
          %v1638 = vpack.c.b16 %v1606, %v1606
          %v1639 = vpack.c.b16 %v1607, %v1607
          %v1640 = vpack.c.b16 %v1608, %v1608
          %v1641 = vpack.c.b16 %v1609, %v1609
          %v1642 = vpack.c.b16 %v1610, %v1610
          %v1643 = vpack.c.b16 %v1611, %v1611
          %v1644 = vpack.c.b16 %v1612, %v1612
          %v1645 = vpack.c.b16 %v1613, %v1613
          %v1646 = vpack.c.b16 %v1614, %v1614
          %v1647 = vpack.c.b16 %v1615, %v1615
          %v1648 = vpack.c.b16 %v1616, %v1616
          %v1649 = vpack.c.b16 %v1617, %v1617
          %v1650 = vpack.c.b16 %v1618, %v1618
          %v1651 = vpack.c.b16 %v1619, %v1619
          %v1652 = vpack.c.b16 %v1620, %v1620
          %v1653 = vpack.c.b16 %v1621, %v1621
          %v1654 = vpack.c.b16 %v1622, %v1622
          %v1655 = vpack.c.b16 %v1623, %v1623
          %v1656 = vpack.c.b16 %v1624, %v1624
          %v1657 = vpack.c.b16 %v1625, %v1625
          %v1658 = vpack.c.b16 %v1626, %v1626
          %v1659 = vpack.c.b16 %v1627, %v1627
          %1692 = vst [vmem:[%s420] sm:$0xf] %v1628
          %1693 = vst [vmem:[%s420 + $0x4] sm:$0xf] %v1629
          %1694 = vst [vmem:[%s420 + $0x8] sm:$0xf] %v1630
          %1695 = vst [vmem:[%s420 + $0xc] sm:$0xf] %v1631
          %1696 = vst [vmem:[%s420 + $0x10] sm:$0xf] %v1632
          %1697 = vst [vmem:[%s420 + $0x14] sm:$0xf] %v1633
          %1698 = vst [vmem:[%s420 + $0x18] sm:$0xf] %v1634
          %1699 = vst [vmem:[%s420 + $0x1c] sm:$0xf] %v1635
          %1700 = vst [vmem:[%s420 + $0x20] sm:$0xf] %v1636
          %1701 = vst [vmem:[%s420 + $0x24] sm:$0xf] %v1637
          %1702 = vst [vmem:[%s420 + $0x28] sm:$0xf] %v1638
          %1703 = vst [vmem:[%s420 + $0x2c] sm:$0xf] %v1639
          %1704 = vst [vmem:[%s420 + $0x30] sm:$0xf] %v1640
          %1705 = vst [vmem:[%s420 + $0x34] sm:$0xf] %v1641
          %1706 = vst [vmem:[%s420 + $0x38] sm:$0xf] %v1642
          %1707 = vst [vmem:[%s420 + $0x3c] sm:$0xf] %v1643
          %1708 = vst [vmem:[%s420 + $0x40] sm:$0xf] %v1644
          %1709 = vst [vmem:[%s420 + $0x44] sm:$0xf] %v1645
          %1710 = vst [vmem:[%s420 + $0x48] sm:$0xf] %v1646
          %1711 = vst [vmem:[%s420 + $0x4c] sm:$0xf] %v1647
          %1712 = vst [vmem:[%s420 + $0x50] sm:$0xf] %v1648
          %1713 = vst [vmem:[%s420 + $0x54] sm:$0xf] %v1649
          %1714 = vst [vmem:[%s420 + $0x58] sm:$0xf] %v1650
          %1715 = vst [vmem:[%s420 + $0x5c] sm:$0xf] %v1651
          %1716 = vst [vmem:[%s420 + $0x60] sm:$0xf] %v1652
          %1717 = vst [vmem:[%s420 + $0x64] sm:$0xf] %v1653
          %1718 = vst [vmem:[%s420 + $0x68] sm:$0xf] %v1654
          %1719 = vst [vmem:[%s420 + $0x6c] sm:$0xf] %v1655
          %1720 = vst [vmem:[%s420 + $0x70] sm:$0xf] %v1656
          %1721 = vst [vmem:[%s420 + $0x74] sm:$0xf] %v1657
          %1722 = vst [vmem:[%s420 + $0x78] sm:$0xf] %v1658
          %1723 = vst [vmem:[%s420 + $0x7c] sm:$0xf] %v1659
          %v1724 = vld [vmem:[%s414] sm:$0xff]
          %v1725 = vld [vmem:[%s414 + $0x8] sm:$0xff]
          %v1726 = vld [vmem:[%s414 + $0x10] sm:$0xff]
          %v1727 = vld [vmem:[%s414 + $0x18] sm:$0xff]
          %v1728 = vld [vmem:[%s414 + $0x20] sm:$0xff]
          %v1729 = vld [vmem:[%s414 + $0x28] sm:$0xff]
          %v1730 = vld [vmem:[%s414 + $0x30] sm:$0xff]
          %v1731 = vld [vmem:[%s414 + $0x38] sm:$0xff]
          %v1732 = vld [vmem:[%s414 + $0x40] sm:$0xff]
          %v1733 = vld [vmem:[%s414 + $0x48] sm:$0xff]
          %v1734 = vld [vmem:[%s414 + $0x50] sm:$0xff]
          %v1735 = vld [vmem:[%s414 + $0x58] sm:$0xff]
          %v1736 = vld [vmem:[%s414 + $0x60] sm:$0xff]
          %v1737 = vld [vmem:[%s414 + $0x68] sm:$0xff]
          %v1738 = vld [vmem:[%s414 + $0x70] sm:$0xff]
          %v1739 = vld [vmem:[%s414 + $0x78] sm:$0xff]
          %v1740 = vld [vmem:[%s414 + $0x80] sm:$0xff]
          %v1741 = vld [vmem:[%s414 + $0x88] sm:$0xff]
          %v1742 = vld [vmem:[%s414 + $0x90] sm:$0xff]
          %v1743 = vld [vmem:[%s414 + $0x98] sm:$0xff]
          %v1744 = vld [vmem:[%s414 + $0xa0] sm:$0xff]
          %v1745 = vld [vmem:[%s414 + $0xa8] sm:$0xff]
          %v1746 = vld [vmem:[%s414 + $0xb0] sm:$0xff]
          %v1747 = vld [vmem:[%s414 + $0xb8] sm:$0xff]
          %v1748 = vld [vmem:[%s414 + $0xc0] sm:$0xff]
          %v1749 = vld [vmem:[%s414 + $0xc8] sm:$0xff]
          %v1750 = vld [vmem:[%s414 + $0xd0] sm:$0xff]
          %v1751 = vld [vmem:[%s414 + $0xd8] sm:$0xff]
          %v1752 = vld [vmem:[%s414 + $0xe0] sm:$0xff]
          %v1753 = vld [vmem:[%s414 + $0xe8] sm:$0xff]
          %v1754 = vld [vmem:[%s414 + $0xf0] sm:$0xff]
          %v1755 = vld [vmem:[%s414 + $0xf8] sm:$0xff]
          %s1756 = sld [smem:[#allocation3]]
          %v1757 = vstv %s1756
          %v1758 = vmul.f32 %v1757, %v1532
          %v1759 = vmul.f32 %v1757, %v1533
          %v1760 = vmul.f32 %v1757, %v1534
          %v1761 = vmul.f32 %v1757, %v1535
          %v1762 = vmul.f32 %v1757, %v1536
          %v1763 = vmul.f32 %v1757, %v1537
          %v1764 = vmul.f32 %v1757, %v1538
          %v1765 = vmul.f32 %v1757, %v1539
          %v1766 = vmul.f32 %v1757, %v1540
          %v1767 = vmul.f32 %v1757, %v1541
          %v1768 = vmul.f32 %v1757, %v1542
          %v1769 = vmul.f32 %v1757, %v1543
          %v1770 = vmul.f32 %v1757, %v1544
          %v1771 = vmul.f32 %v1757, %v1545
          %v1772 = vmul.f32 %v1757, %v1546
          %v1773 = vmul.f32 %v1757, %v1547
          %v1774 = vmul.f32 %v1757, %v1548
          %v1775 = vmul.f32 %v1757, %v1549
          %v1776 = vmul.f32 %v1757, %v1550
          %v1777 = vmul.f32 %v1757, %v1551
          %v1778 = vmul.f32 %v1757, %v1552
          %v1779 = vmul.f32 %v1757, %v1553
          %v1780 = vmul.f32 %v1757, %v1554
          %v1781 = vmul.f32 %v1757, %v1555
          %v1782 = vmul.f32 %v1757, %v1556
          %v1783 = vmul.f32 %v1757, %v1557
          %v1784 = vmul.f32 %v1757, %v1558
          %v1785 = vmul.f32 %v1757, %v1559
          %v1786 = vmul.f32 %v1757, %v1560
          %v1787 = vmul.f32 %v1757, %v1561
          %v1788 = vmul.f32 %v1757, %v1562
          %v1789 = vmul.f32 %v1757, %v1563
          %v1790 = vadd.f32 %v1724, %v1758
          %v1791 = vadd.f32 %v1725, %v1759
          %v1792 = vadd.f32 %v1726, %v1760
          %v1793 = vadd.f32 %v1727, %v1761
          %v1794 = vadd.f32 %v1728, %v1762
          %v1795 = vadd.f32 %v1729, %v1763
          %v1796 = vadd.f32 %v1730, %v1764
          %v1797 = vadd.f32 %v1731, %v1765
          %v1798 = vadd.f32 %v1732, %v1766
          %v1799 = vadd.f32 %v1733, %v1767
          %v1800 = vadd.f32 %v1734, %v1768
          %v1801 = vadd.f32 %v1735, %v1769
          %v1802 = vadd.f32 %v1736, %v1770
          %v1803 = vadd.f32 %v1737, %v1771
          %v1804 = vadd.f32 %v1738, %v1772
          %v1805 = vadd.f32 %v1739, %v1773
          %v1806 = vadd.f32 %v1740, %v1774
          %v1807 = vadd.f32 %v1741, %v1775
          %v1808 = vadd.f32 %v1742, %v1776
          %v1809 = vadd.f32 %v1743, %v1777
          %v1810 = vadd.f32 %v1744, %v1778
          %v1811 = vadd.f32 %v1745, %v1779
          %v1812 = vadd.f32 %v1746, %v1780
          %v1813 = vadd.f32 %v1747, %v1781
          %v1814 = vadd.f32 %v1748, %v1782
          %v1815 = vadd.f32 %v1749, %v1783
          %v1816 = vadd.f32 %v1750, %v1784
          %v1817 = vadd.f32 %v1751, %v1785
          %v1818 = vadd.f32 %v1752, %v1786
          %v1819 = vadd.f32 %v1753, %v1787
          %v1820 = vadd.f32 %v1754, %v1788
          %v1821 = vadd.f32 %v1755, %v1789
          %1822 = vst [vmem:[%s426] sm:$0xff] %v1790
          %1823 = vst [vmem:[%s426 + $0x8] sm:$0xff] %v1791
          %1824 = vst [vmem:[%s426 + $0x10] sm:$0xff] %v1792
          %1825 = vst [vmem:[%s426 + $0x18] sm:$0xff] %v1793
          %1826 = vst [vmem:[%s426 + $0x20] sm:$0xff] %v1794
          %1827 = vst [vmem:[%s426 + $0x28] sm:$0xff] %v1795
          %1828 = vst [vmem:[%s426 + $0x30] sm:$0xff] %v1796
          %1829 = vst [vmem:[%s426 + $0x38] sm:$0xff] %v1797
          %1830 = vst [vmem:[%s426 + $0x40] sm:$0xff] %v1798
          %1831 = vst [vmem:[%s426 + $0x48] sm:$0xff] %v1799
          %1832 = vst [vmem:[%s426 + $0x50] sm:$0xff] %v1800
          %1833 = vst [vmem:[%s426 + $0x58] sm:$0xff] %v1801
          %1834 = vst [vmem:[%s426 + $0x60] sm:$0xff] %v1802
          %1835 = vst [vmem:[%s426 + $0x68] sm:$0xff] %v1803
          %1836 = vst [vmem:[%s426 + $0x70] sm:$0xff] %v1804
          %1837 = vst [vmem:[%s426 + $0x78] sm:$0xff] %v1805
          %1838 = vst [vmem:[%s426 + $0x80] sm:$0xff] %v1806
          %1839 = vst [vmem:[%s426 + $0x88] sm:$0xff] %v1807
          %1840 = vst [vmem:[%s426 + $0x90] sm:$0xff] %v1808
          %1841 = vst [vmem:[%s426 + $0x98] sm:$0xff] %v1809
          %1842 = vst [vmem:[%s426 + $0xa0] sm:$0xff] %v1810
          %1843 = vst [vmem:[%s426 + $0xa8] sm:$0xff] %v1811
          %1844 = vst [vmem:[%s426 + $0xb0] sm:$0xff] %v1812
          %1845 = vst [vmem:[%s426 + $0xb8] sm:$0xff] %v1813
          %1846 = vst [vmem:[%s426 + $0xc0] sm:$0xff] %v1814
          %1847 = vst [vmem:[%s426 + $0xc8] sm:$0xff] %v1815
          %1848 = vst [vmem:[%s426 + $0xd0] sm:$0xff] %v1816
          %1849 = vst [vmem:[%s426 + $0xd8] sm:$0xff] %v1817
          %1850 = vst [vmem:[%s426 + $0xe0] sm:$0xff] %v1818
          %1851 = vst [vmem:[%s426 + $0xe8] sm:$0xff] %v1819
          %1852 = vst [vmem:[%s426 + $0xf0] sm:$0xff] %v1820
          %1853 = vst [vmem:[%s426 + $0xf8] sm:$0xff] %v1821
        $region67: #{lightgcn_forward.5} parent=54 // pred_fallthru
          _
        %s1854 = smul.u32 32, %s22
        %p1855 = scmp.lt.s32.totalorder %s1854, 127
        %s1856 = scalar_select %p1855, %s1854, 127
        %s1857 = smul.addr %s1856, 4
        %s1858 = scalar_lea.vmem %s4, %s1857
        %s1859 = smul.u32 32, %s22
        %p1860 = scmp.lt.s32.totalorder %s1859, 127
        %s1861 = scalar_select %p1860, %s1859, 127
        %s1862 = smul.addr %s1861, 8
        %s1863 = scalar_lea.vmem %s5, %s1862
        // Predicated region
        $region68: #{lightgcn_forward.5} parent=54 // pred_check
          %p1864 = pneg %p144
        $region69: #{lightgcn_forward.5} parent=54 // pred_check_branch
          %1866 = sbr.rel (%p1864) target = $region71
        $region70: #{lightgcn_forward.5} parent=54 // pred_region
          %s1867 = smul.u32 32, %s22
        $region71: #{lightgcn_forward.5} parent=54 // pred_fallthru
          _
        // Predicated region
        $region72: #{lightgcn_forward.5} parent=54 // pred_check
          %p1868 = pneg %p170
        $region73: #{lightgcn_forward.5} parent=54 // pred_check_branch
          %1870 = sbr.rel (%p1868) target = $region75
        $region74: #{lightgcn_forward.5} parent=54 // pred_region
          %s1871 = smul.u32 32, %s22
        $region75: #{lightgcn_forward.5} parent=54 // pred_fallthru
          _
      $region55: #{lightgcn_forward.5} parent=5 // pred_fallthru
        _
      %p1872 = scmp.le.s32.totalorder 2, %s13
      // Predicated region
      $region76: #{lightgcn_forward.5} parent=5 // pred_check
        %p1873 = pneg %p1872
      $region77: #{lightgcn_forward.5} parent=5 // pred_check_branch
        %1875 = sbr.rel (%p1873) target = $region79
      $region78: #{lightgcn_forward.5} parent=5 // pred_region
        %s1876 = ssub.s32 %s13, 2
        // Predicated region
        $region80: #{lightgcn_forward.5} parent=78 // pred_check
          %p1877 = pneg %p150
        $region81: #{lightgcn_forward.5} parent=78 // pred_check_branch
          %1879 = sbr.rel (%p1877) target = $region83
        $region82: #{lightgcn_forward.5} parent=78 // pred_region
          %s1880 = smul.u32 32, %s24
          %p1881 = scmp.lt.s32.totalorder %s1880, 127
          %s1882 = scalar_select %p1881, %s1880, 127
          %s1883 = smul.addr %s1882, 4
          %s1884 = scalar_lea.vmem %s4, %s1883
        $region83: #{lightgcn_forward.5} parent=78 // pred_fallthru
          _
        // Predicated region
        $region84: #{lightgcn_forward.5} parent=78 // pred_check
          %p1885 = pneg %p176
        $region85: #{lightgcn_forward.5} parent=78 // pred_check_branch
          %1887 = sbr.rel (%p1885) target = $region87
        $region86: #{lightgcn_forward.5} parent=78 // pred_region
          %s1888 = smul.u32 32, %s24
          %p1889 = scmp.lt.s32.totalorder %s1888, 127
          %s1890 = scalar_select %p1889, %s1888, 127
          %s1891 = smul.addr %s1890, 8
          %s1892 = scalar_lea.vmem %s5, %s1891
        $region87: #{lightgcn_forward.5} parent=78 // pred_fallthru
          _
      $region79: #{lightgcn_forward.5} parent=5 // pred_fallthru
        _
    $region6: #{lightgcn_forward.5} parent=1 // loop_footer
      %s17 = sadd.s32 1, %s13
    $region7: #{lightgcn_forward.5} parent=1 // loop_footer_branch
      %12 = sbr.rel target = $region3
    $region8: #{lightgcn_forward.5} parent=1 // loop_exit
      _

// kernel: lightgcn_forward.6
$region0: #{lightgcn_forward.6}
  #allocation0 [shape = 'u32[]', space=smem, size = 0x4, offset = 0x4, fixed_abs, tag = 'smem constant byte address 0x4 - core index']
  #allocation1 [shape = 'u32[144,128]{1,0:T(1,128)}', space=vmem, size = 0x12000, scoped, tag = 'internal scratch']
  #allocation2 [shape = 'f32[256,128]{1,0:T(8,128)}', space=vmem, size = 0x20000, scoped, tag = 'scratch operand']
  #allocation3 [shape = 'f32[1]{0:T(128)S(6)}', space=smem, size = 0x200, scoped, tag = 'scoped memory for lightgcn_forward.6']
  %s0 = inlined_call_operand.<no memory space> [shape: f32[1], index: 0, kind: input, shape index: {}]
  %s1 = inlined_call_operand.vmem [shape: bf16[1024,1024], index: 1, kind: input, shape index: {}]
  %s2 = inlined_call_operand.vmem [shape: bf16[1024,128], index: 2, kind: input, shape index: {}]
  %s3 = inlined_call_operand.vmem [shape: f32[1024,128], index: 3, kind: input, shape index: {}, may-alias: {3,5}]
  %s4 = inlined_call_operand.hbm [shape: bf16[1024,128], index: 4, kind: output, shape index: {0}]
  %s5 = inlined_call_operand.vmem [shape: f32[1024,128], index: 5, kind: output, shape index: {1}, may-alias: {3,5}]
  %6 = xla_tuple %s4, %s5
  %s7 = sld [smem:[#allocation0]]
  $region88: #{lightgcn_forward.6} parent=0
    _
  %s9 = ssub.s32 1, %s7
  %s10 = scalar_select 0, %s9, %s7
  %11 = sst [smem:[#allocation3]] %s0
  $region1: #{lightgcn_forward.6} parent=0
    #allocation4 [shape = 'u8[524288]{0}', space=vmem, size = 0x80000, scoped, tag = 'input window, operand 1']
    #allocation5 [shape = 'u8[131072]{0}', space=vmem, size = 0x20000, scoped, tag = 'output window, operand 0']
    #allocation6 [shape = 's32[2]{0}', space=sflag, size = 0x8, scoped, tag = 'scoped memory for lightgcn_forward.6']
    %12 = vsyncpa [#allocation6], 0
    %s13 = scalar_lea.sflag [#allocation6], 1
    %14 = vsyncpa %s13, 0
    loop: start=0, step=1, limit=10
    $region2: #{lightgcn_forward.6} parent=1 // loop_pre_header
      _
    $region3: #{lightgcn_forward.6} parent=1 // loop_header
      %s16 = sphi 0, %s20
      %p17 = scmp.ge.s32.totalorder %s16, 10
      %s23 = sphi 0, %s35
      %s24 = sphi 0, %s31
      %s25 = sphi 0, %s23
      %s26 = sphi 0, %s24
      %s27 = sphi 0, %s25
      %s28 = sphi 0, %s26
      %s36 = sphi 0, %s36
      %s38 = sphi 0, %s36
      %s39 = sphi 0, %s38
      %s53 = sphi 0, %s39
      %s61 = sphi 0, %s63
      %s64 = sphi 0, %s61
      %s65 = sphi 0, %s64
      %s81 = sphi 0, %s65
      %s85 = sphi 0, %s85
      %s87 = sphi 0, %s85
      %s88 = sphi 0, %s87
      %s102 = sphi 0, %s88
      %s108 = sphi 0, %s110
      %s111 = sphi 0, %s108
      %s112 = sphi 0, %s111
      %s128 = sphi 0, %s112
      %s134 = sphi 0, %s136
      %s137 = sphi 0, %s134
      %s138 = sphi 0, %s137
      %s154 = sphi 0, %s138
      %s160 = sphi 0, %s162
      %s163 = sphi 0, %s160
      %s164 = sphi 0, %s163
      %s180 = sphi 0, %s164
    $region4: #{lightgcn_forward.6} parent=1 // loop_header_branch
      %19 = sbr.rel (%p17) target = $region8
    $region5: #{lightgcn_forward.6} parent=1 // loop_body
      %s21 = ssub.s32 %s16, 1
      %s22 = ssub.s32 %s16, 2
      %s29 = sadd.s32 1, %s24
      %p30 = scmp.ge.s32.totalorder %s29, 2
      %s31 = scalar_select %p30, 0, %s29
      %s32 = sadd.s32 1, %s23
      %s33 = scalar_select %p30, %s32, %s23
      %p34 = scmp.ge.s32.totalorder %s33, 4
      %s35 = scalar_select %p34, 0, %s33
      %s37 = sadd.s32 %s36, 1
      %p40 = scmp.eq.s32.totalorder %s16, 7
      %p41 = scmp.ne.s32.totalorder %s36, %s38
      %p42 = scmp.eq.s32.totalorder %s16, 0
      %p43 = por %p41, %p42
      %p44 = scmp.ne.s32.totalorder %s36, %s38
      %p45 = scmp.eq.s32.totalorder %s21, 7
      %p46 = por %p44, %p45
      %p47 = scmp.ne.s32.totalorder %s38, %s39
      %p48 = scmp.eq.s32.totalorder %s21, 0
      %p49 = por %p47, %p48
      %p50 = scmp.ne.s32.totalorder %s38, %s39
      %p51 = scmp.eq.s32.totalorder %s22, 7
      %p52 = por %p50, %p51
      %p54 = scmp.ne.s32.totalorder %s39, %s53
      %p55 = scmp.eq.s32.totalorder %s22, 0
      %p56 = por %p54, %p55
      %s57 = ssub.s32 %s23, %s35
      %s58 = ssub.s32 %s24, %s31
      %s59 = sor.u32 %s57, %s58
      %p60 = scmp.eq.s32.totalorder %s59, 0
      %s62 = sadd.s32 %s61, 1
      %s63 = scalar_select %p60, %s61, %s62
      %p66 = pneg %p60
      %p67 = scmp.eq.s32.totalorder %s16, 7
      %p68 = por %p66, %p67
      %p69 = scmp.ne.s32.totalorder %s61, %s64
      %p70 = scmp.eq.s32.totalorder %s16, 0
      %p71 = por %p69, %p70
      %p72 = scmp.ne.s32.totalorder %s61, %s64
      %p73 = scmp.eq.s32.totalorder %s21, 7
      %p74 = por %p72, %p73
      %p75 = scmp.ne.s32.totalorder %s64, %s65
      %p76 = scmp.eq.s32.totalorder %s21, 0
      %p77 = por %p75, %p76
      %p78 = scmp.ne.s32.totalorder %s64, %s65
      %p79 = scmp.eq.s32.totalorder %s22, 7
      %p80 = por %p78, %p79
      %p82 = scmp.ne.s32.totalorder %s65, %s81
      %p83 = scmp.eq.s32.totalorder %s22, 0
      %p84 = por %p82, %p83
      %s86 = sadd.s32 %s85, 1
      %p89 = scmp.eq.s32.totalorder %s16, 7
      %p90 = scmp.ne.s32.totalorder %s85, %s87
      %p91 = scmp.eq.s32.totalorder %s16, 0
      %p92 = por %p90, %p91
      %p93 = scmp.ne.s32.totalorder %s85, %s87
      %p94 = scmp.eq.s32.totalorder %s21, 7
      %p95 = por %p93, %p94
      %p96 = scmp.ne.s32.totalorder %s87, %s88
      %p97 = scmp.eq.s32.totalorder %s21, 0
      %p98 = por %p96, %p97
      %p99 = scmp.ne.s32.totalorder %s87, %s88
      %p100 = scmp.eq.s32.totalorder %s22, 7
      %p101 = por %p99, %p100
      %p103 = scmp.ne.s32.totalorder %s88, %s102
      %p104 = scmp.eq.s32.totalorder %s22, 0
      %p105 = por %p103, %p104
      %s106 = ssub.s32 %s23, %s35
      %p107 = scmp.eq.s32.totalorder %s106, 0
      %s109 = sadd.s32 %s108, 1
      %s110 = scalar_select %p107, %s108, %s109
      %p113 = pneg %p107
      %p114 = scmp.eq.s32.totalorder %s16, 7
      %p115 = por %p113, %p114
      %p116 = scmp.ne.s32.totalorder %s108, %s111
      %p117 = scmp.eq.s32.totalorder %s16, 0
      %p118 = por %p116, %p117
      %p119 = scmp.ne.s32.totalorder %s108, %s111
      %p120 = scmp.eq.s32.totalorder %s21, 7
      %p121 = por %p119, %p120
      %p122 = scmp.ne.s32.totalorder %s111, %s112
      %p123 = scmp.eq.s32.totalorder %s21, 0
      %p124 = por %p122, %p123
      %p125 = scmp.ne.s32.totalorder %s111, %s112
      %p126 = scmp.eq.s32.totalorder %s22, 7
      %p127 = por %p125, %p126
      %p129 = scmp.ne.s32.totalorder %s112, %s128
      %p130 = scmp.eq.s32.totalorder %s22, 0
      %p131 = por %p129, %p130
      %s132 = ssub.s32 %s23, %s35
      %p133 = scmp.eq.s32.totalorder %s132, 0
      %s135 = sadd.s32 %s134, 1
      %s136 = scalar_select %p133, %s134, %s135
      %p139 = pneg %p133
      %p140 = scmp.eq.s32.totalorder %s16, 7
      %p141 = por %p139, %p140
      %p142 = scmp.ne.s32.totalorder %s134, %s137
      %p143 = scmp.eq.s32.totalorder %s16, 0
      %p144 = por %p142, %p143
      %p145 = scmp.ne.s32.totalorder %s134, %s137
      %p146 = scmp.eq.s32.totalorder %s21, 7
      %p147 = por %p145, %p146
      %p148 = scmp.ne.s32.totalorder %s137, %s138
      %p149 = scmp.eq.s32.totalorder %s21, 0
      %p150 = por %p148, %p149
      %p151 = scmp.ne.s32.totalorder %s137, %s138
      %p152 = scmp.eq.s32.totalorder %s22, 7
      %p153 = por %p151, %p152
      %p155 = scmp.ne.s32.totalorder %s138, %s154
      %p156 = scmp.eq.s32.totalorder %s22, 0
      %p157 = por %p155, %p156
      %s158 = ssub.s32 %s23, %s35
      %p159 = scmp.eq.s32.totalorder %s158, 0
      %s161 = sadd.s32 %s160, 1
      %s162 = scalar_select %p159, %s160, %s161
      %p165 = pneg %p159
      %p166 = scmp.eq.s32.totalorder %s16, 7
      %p167 = por %p165, %p166
      %p168 = scmp.ne.s32.totalorder %s160, %s163
      %p169 = scmp.eq.s32.totalorder %s16, 0
      %p170 = por %p168, %p169
      %p171 = scmp.ne.s32.totalorder %s160, %s163
      %p172 = scmp.eq.s32.totalorder %s21, 7
      %p173 = por %p171, %p172
      %p174 = scmp.ne.s32.totalorder %s163, %s164
      %p175 = scmp.eq.s32.totalorder %s21, 0
      %p176 = por %p174, %p175
      %p177 = scmp.ne.s32.totalorder %s163, %s164
      %p178 = scmp.eq.s32.totalorder %s22, 7
      %p179 = por %p177, %p178
      %p181 = scmp.ne.s32.totalorder %s164, %s180
      %p182 = scmp.eq.s32.totalorder %s22, 0
      %p183 = por %p181, %p182
      %p184 = scmp.le.s32.totalorder 1, %s16
      %p185 = scmp.lt.s32.totalorder %s16, 9
      %p186 = pnand %p184, %p185
      %p187 = pneg %p186
      // Predicated region
      $region9: #{lightgcn_forward.6} parent=5 // pred_check
        _
      $region10: #{lightgcn_forward.6} parent=5 // pred_check_branch
        %189 = sbr.rel (%p186) target = $region12
      $region11: #{lightgcn_forward.6} parent=5 // pred_region
        %s190 = ssub.s32 %s16, 1
        // Predicated region
        $region13: #{lightgcn_forward.6} parent=11 // pred_check
          %p191 = pneg %p49
        $region14: #{lightgcn_forward.6} parent=11 // pred_check_branch
          %193 = sbr.rel (%p191) target = $region16
        $region15: #{lightgcn_forward.6} parent=11 // pred_region
          _
        $region16: #{lightgcn_forward.6} parent=11 // pred_fallthru
          _
        // Predicated region
        $region17: #{lightgcn_forward.6} parent=11 // pred_check
          %p194 = pneg %p98
        $region18: #{lightgcn_forward.6} parent=11 // pred_check_branch
          %196 = sbr.rel (%p194) target = $region20
        $region19: #{lightgcn_forward.6} parent=11 // pred_region
          _
        $region20: #{lightgcn_forward.6} parent=11 // pred_fallthru
          _
      $region12: #{lightgcn_forward.6} parent=5 // pred_fallthru
        _
      %p197 = scmp.lt.s32.totalorder %s16, 8
      // Predicated region
      $region21: #{lightgcn_forward.6} parent=5 // pred_check
        %p198 = pneg %p197
      $region22: #{lightgcn_forward.6} parent=5 // pred_check_branch
        %200 = sbr.rel (%p198) target = $region24
      $region23: #{lightgcn_forward.6} parent=5 // pred_region
        // Predicated region
        $region25: #{lightgcn_forward.6} parent=23 // pred_check
          %p201 = pneg %p71
        $region26: #{lightgcn_forward.6} parent=23 // pred_check_branch
          %203 = sbr.rel (%p201) target = $region28
        $region27: #{lightgcn_forward.6} parent=23 // pred_region
          %s204 = sand.u32 %s61, 1
          %s205 = sand.u32 %s61, 1
          %s206 = smul.addr %s205, 512
          %s207 = scalar_lea.vmem [#allocation4], %s206
          %s208 = smul.u32 32, %s23
          %s209 = smul.u32 4, %s24
          %s210 = smul.addr %s208, 8
          %s211 = sadd.s32 %s209, %s210
          %s212 = smul.addr %s211, 4
          %s213 = scalar_lea.vmem %s1, %s212
          // Predicated region
          $region29: #{lightgcn_forward.6} parent=27 // pred_check
            _
          $region30: #{lightgcn_forward.6} parent=27 // pred_check_branch
            %215 = sbr.rel (0) target = $region32
          $region31: #{lightgcn_forward.6} parent=27 // pred_region
            // Predicated region
            $region33: #{lightgcn_forward.6} parent=31 // pred_check
              _
            $region34: #{lightgcn_forward.6} parent=31 // pred_check_branch
              %217 = sbr.rel (0) target = $region36
            $region35: #{lightgcn_forward.6} parent=31 // pred_region
              loop: start=0, step=1, limit=1
              $region37: #{lightgcn_forward.6} parent=35 // loop_pre_header
                _
              $region38: #{lightgcn_forward.6} parent=35 // loop_header
                %s219 = sphi 0, %s223
                %p220 = scmp.ge.s32.totalorder %s219, 1
                %s224 = sphi %s213, %s213
                %s225 = sphi %s207, %s207
              $region39: #{lightgcn_forward.6} parent=35 // loop_header_branch
                %222 = sbr.rel (%p220) target = $region43
              $region40: #{lightgcn_forward.6} parent=35 // loop_body
                %v226 = vld [vmem:[%s224] sm:$0xff]
                %227 = vst [vmem:[%s225] sm:$0xff] %v226
                %v228 = vld [vmem:[%s224 + $0x8] sm:$0xff]
                %229 = vst [vmem:[%s225 + $0x8] sm:$0xff] %v228
                %v230 = vld [vmem:[%s224 + $0x20] sm:$0xff]
                %231 = vst [vmem:[%s225 + $0x10] sm:$0xff] %v230
                %v232 = vld [vmem:[%s224 + $0x28] sm:$0xff]
                %233 = vst [vmem:[%s225 + $0x18] sm:$0xff] %v232
                %v234 = vld [vmem:[%s224 + $0x40] sm:$0xff]
                %235 = vst [vmem:[%s225 + $0x20] sm:$0xff] %v234
                %v236 = vld [vmem:[%s224 + $0x48] sm:$0xff]
                %237 = vst [vmem:[%s225 + $0x28] sm:$0xff] %v236
                %v238 = vld [vmem:[%s224 + $0x60] sm:$0xff]
                %239 = vst [vmem:[%s225 + $0x30] sm:$0xff] %v238
                %v240 = vld [vmem:[%s224 + $0x68] sm:$0xff]
                %241 = vst [vmem:[%s225 + $0x38] sm:$0xff] %v240
                %v242 = vld [vmem:[%s224 + $0x80] sm:$0xff]
                %243 = vst [vmem:[%s225 + $0x40] sm:$0xff] %v242
                %v244 = vld [vmem:[%s224 + $0x88] sm:$0xff]
                %245 = vst [vmem:[%s225 + $0x48] sm:$0xff] %v244
                %v246 = vld [vmem:[%s224 + $0xa0] sm:$0xff]
                %247 = vst [vmem:[%s225 + $0x50] sm:$0xff] %v246
                %v248 = vld [vmem:[%s224 + $0xa8] sm:$0xff]
                %249 = vst [vmem:[%s225 + $0x58] sm:$0xff] %v248
                %v250 = vld [vmem:[%s224 + $0xc0] sm:$0xff]
                %251 = vst [vmem:[%s225 + $0x60] sm:$0xff] %v250
                %v252 = vld [vmem:[%s224 + $0xc8] sm:$0xff]
                %253 = vst [vmem:[%s225 + $0x68] sm:$0xff] %v252
                %v254 = vld [vmem:[%s224 + $0xe0] sm:$0xff]
                %255 = vst [vmem:[%s225 + $0x70] sm:$0xff] %v254
                %v256 = vld [vmem:[%s224 + $0xe8] sm:$0xff]
                %257 = vst [vmem:[%s225 + $0x78] sm:$0xff] %v256
                %v258 = vld [vmem:[%s224 + $0x100] sm:$0xff]
                %259 = vst [vmem:[%s225 + $0x80] sm:$0xff] %v258
                %v260 = vld [vmem:[%s224 + $0x108] sm:$0xff]
                %261 = vst [vmem:[%s225 + $0x88] sm:$0xff] %v260
                %v262 = vld [vmem:[%s224 + $0x120] sm:$0xff]
                %263 = vst [vmem:[%s225 + $0x90] sm:$0xff] %v262
                %v264 = vld [vmem:[%s224 + $0x128] sm:$0xff]
                %265 = vst [vmem:[%s225 + $0x98] sm:$0xff] %v264
                %v266 = vld [vmem:[%s224 + $0x140] sm:$0xff]
                %267 = vst [vmem:[%s225 + $0xa0] sm:$0xff] %v266
                %v268 = vld [vmem:[%s224 + $0x148] sm:$0xff]
                %269 = vst [vmem:[%s225 + $0xa8] sm:$0xff] %v268
                %v270 = vld [vmem:[%s224 + $0x160] sm:$0xff]
                %271 = vst [vmem:[%s225 + $0xb0] sm:$0xff] %v270
                %v272 = vld [vmem:[%s224 + $0x168] sm:$0xff]
                %273 = vst [vmem:[%s225 + $0xb8] sm:$0xff] %v272
                %v274 = vld [vmem:[%s224 + $0x180] sm:$0xff]
                %275 = vst [vmem:[%s225 + $0xc0] sm:$0xff] %v274
                %v276 = vld [vmem:[%s224 + $0x188] sm:$0xff]
                %277 = vst [vmem:[%s225 + $0xc8] sm:$0xff] %v276
                %v278 = vld [vmem:[%s224 + $0x1a0] sm:$0xff]
                %279 = vst [vmem:[%s225 + $0xd0] sm:$0xff] %v278
                %v280 = vld [vmem:[%s224 + $0x1a8] sm:$0xff]
                %281 = vst [vmem:[%s225 + $0xd8] sm:$0xff] %v280
                %v282 = vld [vmem:[%s224 + $0x1c0] sm:$0xff]
                %283 = vst [vmem:[%s225 + $0xe0] sm:$0xff] %v282
                %v284 = vld [vmem:[%s224 + $0x1c8] sm:$0xff]
                %285 = vst [vmem:[%s225 + $0xe8] sm:$0xff] %v284
                %v286 = vld [vmem:[%s224 + $0x1e0] sm:$0xff]
                %287 = vst [vmem:[%s225 + $0xf0] sm:$0xff] %v286
                %v288 = vld [vmem:[%s224 + $0x1e8] sm:$0xff]
                %289 = vst [vmem:[%s225 + $0xf8] sm:$0xff] %v288
                %v290 = vld [vmem:[%s224 + $0x200] sm:$0xff]
                %291 = vst [vmem:[%s225 + $0x100] sm:$0xff] %v290
                %v292 = vld [vmem:[%s224 + $0x208] sm:$0xff]
                %293 = vst [vmem:[%s225 + $0x108] sm:$0xff] %v292
                %v294 = vld [vmem:[%s224 + $0x220] sm:$0xff]
                %295 = vst [vmem:[%s225 + $0x110] sm:$0xff] %v294
                %v296 = vld [vmem:[%s224 + $0x228] sm:$0xff]
                %297 = vst [vmem:[%s225 + $0x118] sm:$0xff] %v296
                %v298 = vld [vmem:[%s224 + $0x240] sm:$0xff]
                %299 = vst [vmem:[%s225 + $0x120] sm:$0xff] %v298
                %v300 = vld [vmem:[%s224 + $0x248] sm:$0xff]
                %301 = vst [vmem:[%s225 + $0x128] sm:$0xff] %v300
                %v302 = vld [vmem:[%s224 + $0x260] sm:$0xff]
                %303 = vst [vmem:[%s225 + $0x130] sm:$0xff] %v302
                %v304 = vld [vmem:[%s224 + $0x268] sm:$0xff]
                %305 = vst [vmem:[%s225 + $0x138] sm:$0xff] %v304
                %v306 = vld [vmem:[%s224 + $0x280] sm:$0xff]
                %307 = vst [vmem:[%s225 + $0x140] sm:$0xff] %v306
                %v308 = vld [vmem:[%s224 + $0x288] sm:$0xff]
                %309 = vst [vmem:[%s225 + $0x148] sm:$0xff] %v308
                %v310 = vld [vmem:[%s224 + $0x2a0] sm:$0xff]
                %311 = vst [vmem:[%s225 + $0x150] sm:$0xff] %v310
                %v312 = vld [vmem:[%s224 + $0x2a8] sm:$0xff]
                %313 = vst [vmem:[%s225 + $0x158] sm:$0xff] %v312
                %v314 = vld [vmem:[%s224 + $0x2c0] sm:$0xff]
                %315 = vst [vmem:[%s225 + $0x160] sm:$0xff] %v314
                %v316 = vld [vmem:[%s224 + $0x2c8] sm:$0xff]
                %317 = vst [vmem:[%s225 + $0x168] sm:$0xff] %v316
                %v318 = vld [vmem:[%s224 + $0x2e0] sm:$0xff]
                %319 = vst [vmem:[%s225 + $0x170] sm:$0xff] %v318
                %v320 = vld [vmem:[%s224 + $0x2e8] sm:$0xff]
                %321 = vst [vmem:[%s225 + $0x178] sm:$0xff] %v320
                %v322 = vld [vmem:[%s224 + $0x300] sm:$0xff]
                %323 = vst [vmem:[%s225 + $0x180] sm:$0xff] %v322
                %v324 = vld [vmem:[%s224 + $0x308] sm:$0xff]
                %325 = vst [vmem:[%s225 + $0x188] sm:$0xff] %v324
                %v326 = vld [vmem:[%s224 + $0x320] sm:$0xff]
                %327 = vst [vmem:[%s225 + $0x190] sm:$0xff] %v326
                %v328 = vld [vmem:[%s224 + $0x328] sm:$0xff]
                %329 = vst [vmem:[%s225 + $0x198] sm:$0xff] %v328
                %v330 = vld [vmem:[%s224 + $0x340] sm:$0xff]
                %331 = vst [vmem:[%s225 + $0x1a0] sm:$0xff] %v330
                %v332 = vld [vmem:[%s224 + $0x348] sm:$0xff]
                %333 = vst [vmem:[%s225 + $0x1a8] sm:$0xff] %v332
                %v334 = vld [vmem:[%s224 + $0x360] sm:$0xff]
                %335 = vst [vmem:[%s225 + $0x1b0] sm:$0xff] %v334
                %v336 = vld [vmem:[%s224 + $0x368] sm:$0xff]
                %337 = vst [vmem:[%s225 + $0x1b8] sm:$0xff] %v336
                %v338 = vld [vmem:[%s224 + $0x380] sm:$0xff]
                %339 = vst [vmem:[%s225 + $0x1c0] sm:$0xff] %v338
                %v340 = vld [vmem:[%s224 + $0x388] sm:$0xff]
                %341 = vst [vmem:[%s225 + $0x1c8] sm:$0xff] %v340
                %v342 = vld [vmem:[%s224 + $0x3a0] sm:$0xff]
                %343 = vst [vmem:[%s225 + $0x1d0] sm:$0xff] %v342
                %v344 = vld [vmem:[%s224 + $0x3a8] sm:$0xff]
                %345 = vst [vmem:[%s225 + $0x1d8] sm:$0xff] %v344
                %v346 = vld [vmem:[%s224 + $0x3c0] sm:$0xff]
                %347 = vst [vmem:[%s225 + $0x1e0] sm:$0xff] %v346
                %v348 = vld [vmem:[%s224 + $0x3c8] sm:$0xff]
                %349 = vst [vmem:[%s225 + $0x1e8] sm:$0xff] %v348
                %v350 = vld [vmem:[%s224 + $0x3e0] sm:$0xff]
                %351 = vst [vmem:[%s225 + $0x1f0] sm:$0xff] %v350
                %v352 = vld [vmem:[%s224 + $0x3e8] sm:$0xff]
                %353 = vst [vmem:[%s225 + $0x1f8] sm:$0xff] %v352
              $region41: #{lightgcn_forward.6} parent=35 // loop_footer
                %s223 = sadd.s32 1, %s219
              $region42: #{lightgcn_forward.6} parent=35 // loop_footer_branch
                %218 = sbr.rel target = $region38
              $region43: #{lightgcn_forward.6} parent=35 // loop_exit
                _
            $region36: #{lightgcn_forward.6} parent=31 // pred_fallthru
              _
            // Predicated region
            $region44: #{lightgcn_forward.6} parent=31 // pred_check
              _
            $region45: #{lightgcn_forward.6} parent=31 // pred_check_branch
              %355 = sbr.rel target = $region47
            $region46: #{lightgcn_forward.6} parent=31 // pred_region
              _
            $region47: #{lightgcn_forward.6} parent=31 // pred_fallthru
              _
          $region32: #{lightgcn_forward.6} parent=27 // pred_fallthru
            _
          %356 = vnop
        $region28: #{lightgcn_forward.6} parent=23 // pred_fallthru
          _
        // Predicated region
        $region48: #{lightgcn_forward.6} parent=23 // pred_check
          %p357 = pneg %p118
        $region49: #{lightgcn_forward.6} parent=23 // pred_check_branch
          %359 = sbr.rel (%p357) target = $region51
        $region50: #{lightgcn_forward.6} parent=23 // pred_region
          %s360 = smul.u32 32, %s23
          %p361 = scmp.lt.s32.totalorder %s360, 127
          %s362 = scalar_select %p361, %s360, 127
          %s363 = smul.addr %s362, 8
          %s364 = scalar_lea.vmem %s3, %s363
          %s365 = smul.u32 32, %s23
        $region51: #{lightgcn_forward.6} parent=23 // pred_fallthru
          _
      $region24: #{lightgcn_forward.6} parent=5 // pred_fallthru
        _
      %p366 = scmp.le.s32.totalorder 1, %s16
      %p367 = scmp.lt.s32.totalorder %s16, 9
      %p368 = pnand %p366, %p367
      %p369 = pneg %p368
      // Predicated region
      $region52: #{lightgcn_forward.6} parent=5 // pred_check
        _
      $region53: #{lightgcn_forward.6} parent=5 // pred_check_branch
        %371 = sbr.rel (%p368) target = $region55
      $region54: #{lightgcn_forward.6} parent=5 // pred_region
        %s372 = ssub.s32 %s16, 1
        %s373 = sand.u32 %s64, 1
        %s374 = sand.u32 %s64, 1
        %s375 = smul.addr %s374, 512
        %s376 = scalar_lea.vmem [#allocation4], %s375
        // Predicated region
        $region56: #{lightgcn_forward.6} parent=54 // pred_check
          %p377 = pneg %p77
        $region57: #{lightgcn_forward.6} parent=54 // pred_check_branch
          %379 = sbr.rel (%p377) target = $region59
        $region58: #{lightgcn_forward.6} parent=54 // pred_region
          _
        $region59: #{lightgcn_forward.6} parent=54 // pred_fallthru
          _
        %p380 = pneg %p49
        %p381 = pneg %p46
        %s382 = sand.u32 %s64, 1
        %s383 = sand.u32 %s64, 1
        %s384 = smul.addr %s383, 512
        %s385 = scalar_lea.vmem [#allocation4], %s384
        %p386 = pneg %p77
        %p387 = pneg %p74
        %p388 = pneg %p98
        %p389 = pneg %p95
        %s390 = smul.u32 32, %s25
        %p391 = scmp.lt.s32.totalorder %s390, 127
        %s392 = scalar_select %p391, %s390, 127
        %s393 = smul.addr %s392, 8
        %s394 = scalar_lea.vmem %s3, %s393
        %p395 = pneg %p124
        %p396 = pneg %p121
        %p397 = pneg %p150
        %p398 = pneg %p147
        %s399 = sand.u32 %s137, 1
        %s400 = scalar_lea.sflag [#allocation6], %s399
        %s401 = sand.u32 %s137, 1
        %s402 = smul.addr %s401, 128
        %s403 = scalar_lea.vmem [#allocation5], %s402
        %p404 = pneg %p176
        %p405 = pneg %p173
        %s406 = smul.u32 32, %s25
        %p407 = scmp.lt.s32.totalorder %s406, 127
        %s408 = scalar_select %p407, %s406, 127
        %s409 = smul.addr %s408, 8
        %s410 = scalar_lea.vmem %s5, %s409
        %s411 = smul.u32 32, %s25
        %s412 = smul.u32 4, %s26
        %s413 = smul.u32 32, %s25
        %p414 = scmp.lt.s32.totalorder %s413, 127
        %s415 = scalar_select %p414, %s413, 127
        %s416 = smul.addr %s415, 8
        %s417 = scalar_lea.vmem %s3, %s416
        %s418 = smul.u32 32, %s25
        %s419 = smul.u32 32, %s25
        %s420 = smul.u32 32, %s25
        %p421 = scmp.lt.s32.totalorder %s420, 127
        %s422 = scalar_select %p421, %s420, 127
        %s423 = smul.addr %s422, 8
        %s424 = scalar_lea.vmem %s5, %s423
        %s425 = smul.u32 32, %s25
        %p427 = scmp.eq.s32.totalorder %s26, 0
        // Predicated region
        $region60: #{lightgcn_forward.6} parent=54 // pred_check
          %p428 = pneg %p427
        $region61: #{lightgcn_forward.6} parent=54 // pred_check_branch
          %430 = sbr.rel (%p428) target = $region63
        $region62: #{lightgcn_forward.6} parent=54 // pred_region
          %431 = vst [vmem:[#allocation2] sm:$0xff] 0.0
          %432 = vst [vmem:[#allocation2 + $0x8] sm:$0xff] 0.0
          %433 = vst [vmem:[#allocation2 + $0x10] sm:$0xff] 0.0
          %434 = vst [vmem:[#allocation2 + $0x18] sm:$0xff] 0.0
          %435 = vst [vmem:[#allocation2 + $0x20] sm:$0xff] 0.0
          %436 = vst [vmem:[#allocation2 + $0x28] sm:$0xff] 0.0
          %437 = vst [vmem:[#allocation2 + $0x30] sm:$0xff] 0.0
          %438 = vst [vmem:[#allocation2 + $0x38] sm:$0xff] 0.0
          %439 = vst [vmem:[#allocation2 + $0x40] sm:$0xff] 0.0
          %440 = vst [vmem:[#allocation2 + $0x48] sm:$0xff] 0.0
          %441 = vst [vmem:[#allocation2 + $0x50] sm:$0xff] 0.0
          %442 = vst [vmem:[#allocation2 + $0x58] sm:$0xff] 0.0
          %443 = vst [vmem:[#allocation2 + $0x60] sm:$0xff] 0.0
          %444 = vst [vmem:[#allocation2 + $0x68] sm:$0xff] 0.0
          %445 = vst [vmem:[#allocation2 + $0x70] sm:$0xff] 0.0
          %446 = vst [vmem:[#allocation2 + $0x78] sm:$0xff] 0.0
          %447 = vst [vmem:[#allocation2 + $0x80] sm:$0xff] 0.0
          %448 = vst [vmem:[#allocation2 + $0x88] sm:$0xff] 0.0
          %449 = vst [vmem:[#allocation2 + $0x90] sm:$0xff] 0.0
          %450 = vst [vmem:[#allocation2 + $0x98] sm:$0xff] 0.0
          %451 = vst [vmem:[#allocation2 + $0xa0] sm:$0xff] 0.0
          %452 = vst [vmem:[#allocation2 + $0xa8] sm:$0xff] 0.0
          %453 = vst [vmem:[#allocation2 + $0xb0] sm:$0xff] 0.0
          %454 = vst [vmem:[#allocation2 + $0xb8] sm:$0xff] 0.0
          %455 = vst [vmem:[#allocation2 + $0xc0] sm:$0xff] 0.0
          %456 = vst [vmem:[#allocation2 + $0xc8] sm:$0xff] 0.0
          %457 = vst [vmem:[#allocation2 + $0xd0] sm:$0xff] 0.0
          %458 = vst [vmem:[#allocation2 + $0xd8] sm:$0xff] 0.0
          %459 = vst [vmem:[#allocation2 + $0xe0] sm:$0xff] 0.0
          %460 = vst [vmem:[#allocation2 + $0xe8] sm:$0xff] 0.0
          %461 = vst [vmem:[#allocation2 + $0xf0] sm:$0xff] 0.0
          %462 = vst [vmem:[#allocation2 + $0xf8] sm:$0xff] 0.0
        $region63: #{lightgcn_forward.6} parent=54 // pred_fallthru
          _
        %s463 = smul.u32 %s26, 512
        %s464 = sshra.s32 %s463, 3
        %s465 = sand.u32 %s463, 7
        %s466 = smul.addr %s464, 4
        %s467 = scalar_lea.vmem %s2, %s466
        %v468 = vld [vmem:[%s467] sm:$0xf]
        %v469 = vld [vmem:[%s467 + $0x4] sm:$0xf]
        %v470 = vld [vmem:[%s467 + $0x8] sm:$0xf]
        %v471 = vld [vmem:[%s467 + $0xc] sm:$0xf]
        %v472 = vld [vmem:[%s467 + $0x10] sm:$0xf]
        %v473 = vld [vmem:[%s467 + $0x14] sm:$0xf]
        %v474 = vld [vmem:[%s467 + $0x18] sm:$0xf]
        %v475 = vld [vmem:[%s467 + $0x1c] sm:$0xf]
        %v476 = vld [vmem:[%s467 + $0x20] sm:$0xf]
        %v477 = vld [vmem:[%s467 + $0x24] sm:$0xf]
        %v478 = vld [vmem:[%s467 + $0x28] sm:$0xf]
        %v479 = vld [vmem:[%s467 + $0x2c] sm:$0xf]
        %v480 = vld [vmem:[%s467 + $0x30] sm:$0xf]
        %v481 = vld [vmem:[%s467 + $0x34] sm:$0xf]
        %v482 = vld [vmem:[%s467 + $0x38] sm:$0xf]
        %v483 = vld [vmem:[%s467 + $0x3c] sm:$0xf]
        %v484 = vld [vmem:[%s467 + $0x40] sm:$0xf]
        %v485 = vld [vmem:[%s467 + $0x44] sm:$0xf]
        %v486 = vld [vmem:[%s467 + $0x48] sm:$0xf]
        %v487 = vld [vmem:[%s467 + $0x4c] sm:$0xf]
        %v488 = vld [vmem:[%s467 + $0x50] sm:$0xf]
        %v489 = vld [vmem:[%s467 + $0x54] sm:$0xf]
        %v490 = vld [vmem:[%s467 + $0x58] sm:$0xf]
        %v491 = vld [vmem:[%s467 + $0x5c] sm:$0xf]
        %v492 = vld [vmem:[%s467 + $0x60] sm:$0xf]
        %v493 = vld [vmem:[%s467 + $0x64] sm:$0xf]
        %v494 = vld [vmem:[%s467 + $0x68] sm:$0xf]
        %v495 = vld [vmem:[%s467 + $0x6c] sm:$0xf]
        %v496 = vld [vmem:[%s467 + $0x70] sm:$0xf]
        %v497 = vld [vmem:[%s467 + $0x74] sm:$0xf]
        %v498 = vld [vmem:[%s467 + $0x78] sm:$0xf]
        %v499 = vld [vmem:[%s467 + $0x7c] sm:$0xf]
        %v500 = vld [vmem:[%s467 + $0x80] sm:$0xf]
        %v501 = vld [vmem:[%s467 + $0x84] sm:$0xf]
        %v502 = vld [vmem:[%s467 + $0x88] sm:$0xf]
        %v503 = vld [vmem:[%s467 + $0x8c] sm:$0xf]
        %v504 = vld [vmem:[%s467 + $0x90] sm:$0xf]
        %v505 = vld [vmem:[%s467 + $0x94] sm:$0xf]
        %v506 = vld [vmem:[%s467 + $0x98] sm:$0xf]
        %v507 = vld [vmem:[%s467 + $0x9c] sm:$0xf]
        %v508 = vld [vmem:[%s467 + $0xa0] sm:$0xf]
        %v509 = vld [vmem:[%s467 + $0xa4] sm:$0xf]
        %v510 = vld [vmem:[%s467 + $0xa8] sm:$0xf]
        %v511 = vld [vmem:[%s467 + $0xac] sm:$0xf]
        %v512 = vld [vmem:[%s467 + $0xb0] sm:$0xf]
        %v513 = vld [vmem:[%s467 + $0xb4] sm:$0xf]
        %v514 = vld [vmem:[%s467 + $0xb8] sm:$0xf]
        %v515 = vld [vmem:[%s467 + $0xbc] sm:$0xf]
        %v516 = vld [vmem:[%s467 + $0xc0] sm:$0xf]
        %v517 = vld [vmem:[%s467 + $0xc4] sm:$0xf]
        %v518 = vld [vmem:[%s467 + $0xc8] sm:$0xf]
        %v519 = vld [vmem:[%s467 + $0xcc] sm:$0xf]
        %v520 = vld [vmem:[%s467 + $0xd0] sm:$0xf]
        %v521 = vld [vmem:[%s467 + $0xd4] sm:$0xf]
        %v522 = vld [vmem:[%s467 + $0xd8] sm:$0xf]
        %v523 = vld [vmem:[%s467 + $0xdc] sm:$0xf]
        %v524 = vld [vmem:[%s467 + $0xe0] sm:$0xf]
        %v525 = vld [vmem:[%s467 + $0xe4] sm:$0xf]
        %v526 = vld [vmem:[%s467 + $0xe8] sm:$0xf]
        %v527 = vld [vmem:[%s467 + $0xec] sm:$0xf]
        %v528 = vld [vmem:[%s467 + $0xf0] sm:$0xf]
        %v529 = vld [vmem:[%s467 + $0xf4] sm:$0xf]
        %v530 = vld [vmem:[%s467 + $0xf8] sm:$0xf]
        %v531 = vld [vmem:[%s467 + $0xfc] sm:$0xf]
        %v532 = vld [vmem:[#allocation2] sm:$0xff]
        %v533 = vld [vmem:[#allocation2 + $0x8] sm:$0xff]
        %v534 = vld [vmem:[#allocation2 + $0x10] sm:$0xff]
        %v535 = vld [vmem:[#allocation2 + $0x18] sm:$0xff]
        %v536 = vld [vmem:[#allocation2 + $0x20] sm:$0xff]
        %v537 = vld [vmem:[#allocation2 + $0x28] sm:$0xff]
        %v538 = vld [vmem:[#allocation2 + $0x30] sm:$0xff]
        %v539 = vld [vmem:[#allocation2 + $0x38] sm:$0xff]
        %v540 = vld [vmem:[#allocation2 + $0x40] sm:$0xff]
        %v541 = vld [vmem:[#allocation2 + $0x48] sm:$0xff]
        %v542 = vld [vmem:[#allocation2 + $0x50] sm:$0xff]
        %v543 = vld [vmem:[#allocation2 + $0x58] sm:$0xff]
        %v544 = vld [vmem:[#allocation2 + $0x60] sm:$0xff]
        %v545 = vld [vmem:[#allocation2 + $0x68] sm:$0xff]
        %v546 = vld [vmem:[#allocation2 + $0x70] sm:$0xff]
        %v547 = vld [vmem:[#allocation2 + $0x78] sm:$0xff]
        %v548 = vld [vmem:[#allocation2 + $0x80] sm:$0xff]
        %v549 = vld [vmem:[#allocation2 + $0x88] sm:$0xff]
        %v550 = vld [vmem:[#allocation2 + $0x90] sm:$0xff]
        %v551 = vld [vmem:[#allocation2 + $0x98] sm:$0xff]
        %v552 = vld [vmem:[#allocation2 + $0xa0] sm:$0xff]
        %v553 = vld [vmem:[#allocation2 + $0xa8] sm:$0xff]
        %v554 = vld [vmem:[#allocation2 + $0xb0] sm:$0xff]
        %v555 = vld [vmem:[#allocation2 + $0xb8] sm:$0xff]
        %v556 = vld [vmem:[#allocation2 + $0xc0] sm:$0xff]
        %v557 = vld [vmem:[#allocation2 + $0xc8] sm:$0xff]
        %v558 = vld [vmem:[#allocation2 + $0xd0] sm:$0xff]
        %v559 = vld [vmem:[#allocation2 + $0xd8] sm:$0xff]
        %v560 = vld [vmem:[#allocation2 + $0xe0] sm:$0xff]
        %v561 = vld [vmem:[#allocation2 + $0xe8] sm:$0xff]
        %v562 = vld [vmem:[#allocation2 + $0xf0] sm:$0xff]
        %v563 = vld [vmem:[#allocation2 + $0xf8] sm:$0xff]
        %v564 = vld [vmem:[%s376] sm:$0xff]
        %v565 = vld [vmem:[%s376 + $0x8] sm:$0xff]
        %v566 = vld [vmem:[%s376 + $0x10] sm:$0xff]
        %v567 = vld [vmem:[%s376 + $0x18] sm:$0xff]
        %v568 = vld [vmem:[%s376 + $0x20] sm:$0xff]
        %v569 = vld [vmem:[%s376 + $0x28] sm:$0xff]
        %v570 = vld [vmem:[%s376 + $0x30] sm:$0xff]
        %v571 = vld [vmem:[%s376 + $0x38] sm:$0xff]
        %v572 = vld [vmem:[%s376 + $0x40] sm:$0xff]
        %v573 = vld [vmem:[%s376 + $0x48] sm:$0xff]
        %v574 = vld [vmem:[%s376 + $0x50] sm:$0xff]
        %v575 = vld [vmem:[%s376 + $0x58] sm:$0xff]
        %v576 = vld [vmem:[%s376 + $0x60] sm:$0xff]
        %v577 = vld [vmem:[%s376 + $0x68] sm:$0xff]
        %v578 = vld [vmem:[%s376 + $0x70] sm:$0xff]
        %v579 = vld [vmem:[%s376 + $0x78] sm:$0xff]
        %v580 = vld [vmem:[%s376 + $0x80] sm:$0xff]
        %v581 = vld [vmem:[%s376 + $0x88] sm:$0xff]
        %v582 = vld [vmem:[%s376 + $0x90] sm:$0xff]
        %v583 = vld [vmem:[%s376 + $0x98] sm:$0xff]
        %v584 = vld [vmem:[%s376 + $0xa0] sm:$0xff]
        %v585 = vld [vmem:[%s376 + $0xa8] sm:$0xff]
        %v586 = vld [vmem:[%s376 + $0xb0] sm:$0xff]
        %v587 = vld [vmem:[%s376 + $0xb8] sm:$0xff]
        %v588 = vld [vmem:[%s376 + $0xc0] sm:$0xff]
        %v589 = vld [vmem:[%s376 + $0xc8] sm:$0xff]
        %v590 = vld [vmem:[%s376 + $0xd0] sm:$0xff]
        %v591 = vld [vmem:[%s376 + $0xd8] sm:$0xff]
        %v592 = vld [vmem:[%s376 + $0xe0] sm:$0xff]
        %v593 = vld [vmem:[%s376 + $0xe8] sm:$0xff]
        %v594 = vld [vmem:[%s376 + $0xf0] sm:$0xff]
        %v595 = vld [vmem:[%s376 + $0xf8] sm:$0xff]
        %v596 = vld [vmem:[%s376 + $0x100] sm:$0xff]
        %v597 = vld [vmem:[%s376 + $0x108] sm:$0xff]
        %v598 = vld [vmem:[%s376 + $0x110] sm:$0xff]
        %v599 = vld [vmem:[%s376 + $0x118] sm:$0xff]
        %v600 = vld [vmem:[%s376 + $0x120] sm:$0xff]
        %v601 = vld [vmem:[%s376 + $0x128] sm:$0xff]
        %v602 = vld [vmem:[%s376 + $0x130] sm:$0xff]
        %v603 = vld [vmem:[%s376 + $0x138] sm:$0xff]
        %v604 = vld [vmem:[%s376 + $0x140] sm:$0xff]
        %v605 = vld [vmem:[%s376 + $0x148] sm:$0xff]
        %v606 = vld [vmem:[%s376 + $0x150] sm:$0xff]
        %v607 = vld [vmem:[%s376 + $0x158] sm:$0xff]
        %v608 = vld [vmem:[%s376 + $0x160] sm:$0xff]
        %v609 = vld [vmem:[%s376 + $0x168] sm:$0xff]
        %v610 = vld [vmem:[%s376 + $0x170] sm:$0xff]
        %v611 = vld [vmem:[%s376 + $0x178] sm:$0xff]
        %v612 = vld [vmem:[%s376 + $0x180] sm:$0xff]
        %v613 = vld [vmem:[%s376 + $0x188] sm:$0xff]
        %v614 = vld [vmem:[%s376 + $0x190] sm:$0xff]
        %v615 = vld [vmem:[%s376 + $0x198] sm:$0xff]
        %v616 = vld [vmem:[%s376 + $0x1a0] sm:$0xff]
        %v617 = vld [vmem:[%s376 + $0x1a8] sm:$0xff]
        %v618 = vld [vmem:[%s376 + $0x1b0] sm:$0xff]
        %v619 = vld [vmem:[%s376 + $0x1b8] sm:$0xff]
        %v620 = vld [vmem:[%s376 + $0x1c0] sm:$0xff]
        %v621 = vld [vmem:[%s376 + $0x1c8] sm:$0xff]
        %v622 = vld [vmem:[%s376 + $0x1d0] sm:$0xff]
        %v623 = vld [vmem:[%s376 + $0x1d8] sm:$0xff]
        %v624 = vld [vmem:[%s376 + $0x1e0] sm:$0xff]
        %v625 = vld [vmem:[%s376 + $0x1e8] sm:$0xff]
        %v626 = vld [vmem:[%s376 + $0x1f0] sm:$0xff]
        %v627 = vld [vmem:[%s376 + $0x1f8] sm:$0xff]
        %v692 = vunpack.c.l.b16 %v564
        %v693 = vunpack.c.h.b16 %v564
        %v694 = vunpack.c.l.b16 %v565
        %v695 = vunpack.c.h.b16 %v565
        %v696 = vunpack.c.l.b16 %v566
        %v697 = vunpack.c.h.b16 %v566
        %v698 = vunpack.c.l.b16 %v567
        %v699 = vunpack.c.h.b16 %v567
        %v700 = vunpack.c.l.b16 %v568
        %v701 = vunpack.c.h.b16 %v568
        %v702 = vunpack.c.l.b16 %v569
        %v703 = vunpack.c.h.b16 %v569
        %v704 = vunpack.c.l.b16 %v570
        %v705 = vunpack.c.h.b16 %v570
        %v706 = vunpack.c.l.b16 %v571
        %v707 = vunpack.c.h.b16 %v571
        %v708 = vunpack.c.l.b16 %v572
        %v709 = vunpack.c.h.b16 %v572
        %v710 = vunpack.c.l.b16 %v573
        %v711 = vunpack.c.h.b16 %v573
        %v712 = vunpack.c.l.b16 %v574
        %v713 = vunpack.c.h.b16 %v574
        %v714 = vunpack.c.l.b16 %v575
        %v715 = vunpack.c.h.b16 %v575
        %v716 = vunpack.c.l.b16 %v576
        %v717 = vunpack.c.h.b16 %v576
        %v718 = vunpack.c.l.b16 %v577
        %v719 = vunpack.c.h.b16 %v577
        %v720 = vunpack.c.l.b16 %v578
        %v721 = vunpack.c.h.b16 %v578
        %v722 = vunpack.c.l.b16 %v579
        %v723 = vunpack.c.h.b16 %v579
        %v724 = vunpack.c.l.b16 %v580
        %v725 = vunpack.c.h.b16 %v580
        %v726 = vunpack.c.l.b16 %v581
        %v727 = vunpack.c.h.b16 %v581
        %v728 = vunpack.c.l.b16 %v582
        %v729 = vunpack.c.h.b16 %v582
        %v730 = vunpack.c.l.b16 %v583
        %v731 = vunpack.c.h.b16 %v583
        %v732 = vunpack.c.l.b16 %v584
        %v733 = vunpack.c.h.b16 %v584
        %v734 = vunpack.c.l.b16 %v585
        %v735 = vunpack.c.h.b16 %v585
        %v736 = vunpack.c.l.b16 %v586
        %v737 = vunpack.c.h.b16 %v586
        %v738 = vunpack.c.l.b16 %v587
        %v739 = vunpack.c.h.b16 %v587
        %v740 = vunpack.c.l.b16 %v588
        %v741 = vunpack.c.h.b16 %v588
        %v742 = vunpack.c.l.b16 %v589
        %v743 = vunpack.c.h.b16 %v589
        %v744 = vunpack.c.l.b16 %v590
        %v745 = vunpack.c.h.b16 %v590
        %v746 = vunpack.c.l.b16 %v591
        %v747 = vunpack.c.h.b16 %v591
        %v748 = vunpack.c.l.b16 %v592
        %v749 = vunpack.c.h.b16 %v592
        %v750 = vunpack.c.l.b16 %v593
        %v751 = vunpack.c.h.b16 %v593
        %v752 = vunpack.c.l.b16 %v594
        %v753 = vunpack.c.h.b16 %v594
        %v754 = vunpack.c.l.b16 %v595
        %v755 = vunpack.c.h.b16 %v595
        %v756 = vunpack.c.l.b16 %v596
        %v757 = vunpack.c.h.b16 %v596
        %v758 = vunpack.c.l.b16 %v597
        %v759 = vunpack.c.h.b16 %v597
        %v760 = vunpack.c.l.b16 %v598
        %v761 = vunpack.c.h.b16 %v598
        %v762 = vunpack.c.l.b16 %v599
        %v763 = vunpack.c.h.b16 %v599
        %v764 = vunpack.c.l.b16 %v600
        %v765 = vunpack.c.h.b16 %v600
        %v766 = vunpack.c.l.b16 %v601
        %v767 = vunpack.c.h.b16 %v601
        %v768 = vunpack.c.l.b16 %v602
        %v769 = vunpack.c.h.b16 %v602
        %v770 = vunpack.c.l.b16 %v603
        %v771 = vunpack.c.h.b16 %v603
        %v772 = vunpack.c.l.b16 %v604
        %v773 = vunpack.c.h.b16 %v604
        %v774 = vunpack.c.l.b16 %v605
        %v775 = vunpack.c.h.b16 %v605
        %v776 = vunpack.c.l.b16 %v606
        %v777 = vunpack.c.h.b16 %v606
        %v778 = vunpack.c.l.b16 %v607
        %v779 = vunpack.c.h.b16 %v607
        %v780 = vunpack.c.l.b16 %v608
        %v781 = vunpack.c.h.b16 %v608
        %v782 = vunpack.c.l.b16 %v609
        %v783 = vunpack.c.h.b16 %v609
        %v784 = vunpack.c.l.b16 %v610
        %v785 = vunpack.c.h.b16 %v610
        %v786 = vunpack.c.l.b16 %v611
        %v787 = vunpack.c.h.b16 %v611
        %v788 = vunpack.c.l.b16 %v612
        %v789 = vunpack.c.h.b16 %v612
        %v790 = vunpack.c.l.b16 %v613
        %v791 = vunpack.c.h.b16 %v613
        %v792 = vunpack.c.l.b16 %v614
        %v793 = vunpack.c.h.b16 %v614
        %v794 = vunpack.c.l.b16 %v615
        %v795 = vunpack.c.h.b16 %v615
        %v796 = vunpack.c.l.b16 %v616
        %v797 = vunpack.c.h.b16 %v616
        %v798 = vunpack.c.l.b16 %v617
        %v799 = vunpack.c.h.b16 %v617
        %v800 = vunpack.c.l.b16 %v618
        %v801 = vunpack.c.h.b16 %v618
        %v802 = vunpack.c.l.b16 %v619
        %v803 = vunpack.c.h.b16 %v619
        %v804 = vunpack.c.l.b16 %v620
        %v805 = vunpack.c.h.b16 %v620
        %v806 = vunpack.c.l.b16 %v621
        %v807 = vunpack.c.h.b16 %v621
        %v808 = vunpack.c.l.b16 %v622
        %v809 = vunpack.c.h.b16 %v622
        %v810 = vunpack.c.l.b16 %v623
        %v811 = vunpack.c.h.b16 %v623
        %v812 = vunpack.c.l.b16 %v624
        %v813 = vunpack.c.h.b16 %v624
        %v814 = vunpack.c.l.b16 %v625
        %v815 = vunpack.c.h.b16 %v625
        %v816 = vunpack.c.l.b16 %v626
        %v817 = vunpack.c.h.b16 %v626
        %v818 = vunpack.c.l.b16 %v627
        %v819 = vunpack.c.h.b16 %v627
        %v820 = vpack.c.b16 %v696, %v692
        %v821 = vpack.c.b16 %v697, %v693
        %v822 = vpack.c.b16 %v698, %v694
        %v823 = vpack.c.b16 %v699, %v695
        %v824 = vpack.c.b16 %v704, %v700
        %v825 = vpack.c.b16 %v705, %v701
        %v826 = vpack.c.b16 %v706, %v702
        %v827 = vpack.c.b16 %v707, %v703
        %v828 = vpack.c.b16 %v712, %v708
        %v829 = vpack.c.b16 %v713, %v709
        %v830 = vpack.c.b16 %v714, %v710
        %v831 = vpack.c.b16 %v715, %v711
        %v832 = vpack.c.b16 %v720, %v716
        %v833 = vpack.c.b16 %v721, %v717
        %v834 = vpack.c.b16 %v722, %v718
        %v835 = vpack.c.b16 %v723, %v719
        %v836 = vpack.c.b16 %v728, %v724
        %v837 = vpack.c.b16 %v729, %v725
        %v838 = vpack.c.b16 %v730, %v726
        %v839 = vpack.c.b16 %v731, %v727
        %v840 = vpack.c.b16 %v736, %v732
        %v841 = vpack.c.b16 %v737, %v733
        %v842 = vpack.c.b16 %v738, %v734
        %v843 = vpack.c.b16 %v739, %v735
        %v844 = vpack.c.b16 %v744, %v740
        %v845 = vpack.c.b16 %v745, %v741
        %v846 = vpack.c.b16 %v746, %v742
        %v847 = vpack.c.b16 %v747, %v743
        %v848 = vpack.c.b16 %v752, %v748
        %v849 = vpack.c.b16 %v753, %v749
        %v850 = vpack.c.b16 %v754, %v750
        %v851 = vpack.c.b16 %v755, %v751
        %v852 = vpack.c.b16 %v760, %v756
        %v853 = vpack.c.b16 %v761, %v757
        %v854 = vpack.c.b16 %v762, %v758
        %v855 = vpack.c.b16 %v763, %v759
        %v856 = vpack.c.b16 %v768, %v764
        %v857 = vpack.c.b16 %v769, %v765
        %v858 = vpack.c.b16 %v770, %v766
        %v859 = vpack.c.b16 %v771, %v767
        %v860 = vpack.c.b16 %v776, %v772
        %v861 = vpack.c.b16 %v777, %v773
        %v862 = vpack.c.b16 %v778, %v774
        %v863 = vpack.c.b16 %v779, %v775
        %v864 = vpack.c.b16 %v784, %v780
        %v865 = vpack.c.b16 %v785, %v781
        %v866 = vpack.c.b16 %v786, %v782
        %v867 = vpack.c.b16 %v787, %v783
        %v868 = vpack.c.b16 %v792, %v788
        %v869 = vpack.c.b16 %v793, %v789
        %v870 = vpack.c.b16 %v794, %v790
        %v871 = vpack.c.b16 %v795, %v791
        %v872 = vpack.c.b16 %v800, %v796
        %v873 = vpack.c.b16 %v801, %v797
        %v874 = vpack.c.b16 %v802, %v798
        %v875 = vpack.c.b16 %v803, %v799
        %v876 = vpack.c.b16 %v808, %v804
        %v877 = vpack.c.b16 %v809, %v805
        %v878 = vpack.c.b16 %v810, %v806
        %v879 = vpack.c.b16 %v811, %v807
        %v880 = vpack.c.b16 %v816, %v812
        %v881 = vpack.c.b16 %v817, %v813
        %v882 = vpack.c.b16 %v818, %v814
        %v883 = vpack.c.b16 %v819, %v815
        %v1012 = vunpack.c.l.b16 %v468
        %v1013 = vunpack.c.l.b16 %v469
        %v1014 = vunpack.c.l.b16 %v470
        %v1015 = vunpack.c.l.b16 %v471
        %v1016 = vunpack.c.l.b16 %v472
        %v1017 = vunpack.c.l.b16 %v473
        %v1018 = vunpack.c.l.b16 %v474
        %v1019 = vunpack.c.l.b16 %v475
        %v1020 = vunpack.c.l.b16 %v476
        %v1021 = vunpack.c.l.b16 %v477
        %v1022 = vunpack.c.l.b16 %v478
        %v1023 = vunpack.c.l.b16 %v479
        %v1024 = vunpack.c.l.b16 %v480
        %v1025 = vunpack.c.l.b16 %v481
        %v1026 = vunpack.c.l.b16 %v482
        %v1027 = vunpack.c.l.b16 %v483
        %v1028 = vunpack.c.l.b16 %v484
        %v1029 = vunpack.c.l.b16 %v485
        %v1030 = vunpack.c.l.b16 %v486
        %v1031 = vunpack.c.l.b16 %v487
        %v1032 = vunpack.c.l.b16 %v488
        %v1033 = vunpack.c.l.b16 %v489
        %v1034 = vunpack.c.l.b16 %v490
        %v1035 = vunpack.c.l.b16 %v491
        %v1036 = vunpack.c.l.b16 %v492
        %v1037 = vunpack.c.l.b16 %v493
        %v1038 = vunpack.c.l.b16 %v494
        %v1039 = vunpack.c.l.b16 %v495
        %v1040 = vunpack.c.l.b16 %v496
        %v1041 = vunpack.c.l.b16 %v497
        %v1042 = vunpack.c.l.b16 %v498
        %v1043 = vunpack.c.l.b16 %v499
        %v1044 = vunpack.c.l.b16 %v500
        %v1045 = vunpack.c.l.b16 %v501
        %v1046 = vunpack.c.l.b16 %v502
        %v1047 = vunpack.c.l.b16 %v503
        %v1048 = vunpack.c.l.b16 %v504
        %v1049 = vunpack.c.l.b16 %v505
        %v1050 = vunpack.c.l.b16 %v506
        %v1051 = vunpack.c.l.b16 %v507
        %v1052 = vunpack.c.l.b16 %v508
        %v1053 = vunpack.c.l.b16 %v509
        %v1054 = vunpack.c.l.b16 %v510
        %v1055 = vunpack.c.l.b16 %v511
        %v1056 = vunpack.c.l.b16 %v512
        %v1057 = vunpack.c.l.b16 %v513
        %v1058 = vunpack.c.l.b16 %v514
        %v1059 = vunpack.c.l.b16 %v515
        %v1060 = vunpack.c.l.b16 %v516
        %v1061 = vunpack.c.l.b16 %v517
        %v1062 = vunpack.c.l.b16 %v518
        %v1063 = vunpack.c.l.b16 %v519
        %v1064 = vunpack.c.l.b16 %v520
        %v1065 = vunpack.c.l.b16 %v521
        %v1066 = vunpack.c.l.b16 %v522
        %v1067 = vunpack.c.l.b16 %v523
        %v1068 = vunpack.c.l.b16 %v524
        %v1069 = vunpack.c.l.b16 %v525
        %v1070 = vunpack.c.l.b16 %v526
        %v1071 = vunpack.c.l.b16 %v527
        %v1072 = vunpack.c.l.b16 %v528
        %v1073 = vunpack.c.l.b16 %v529
        %v1074 = vunpack.c.l.b16 %v530
        %v1075 = vunpack.c.l.b16 %v531
        %v1076 = vpack.c.b16 %v1013, %v1012
        %v1077 = vpack.c.b16 %v1015, %v1014
        %v1078 = vpack.c.b16 %v1017, %v1016
        %v1079 = vpack.c.b16 %v1019, %v1018
        %v1080 = vpack.c.b16 %v1021, %v1020
        %v1081 = vpack.c.b16 %v1023, %v1022
        %v1082 = vpack.c.b16 %v1025, %v1024
        %v1083 = vpack.c.b16 %v1027, %v1026
        %v1084 = vpack.c.b16 %v1029, %v1028
        %v1085 = vpack.c.b16 %v1031, %v1030
        %v1086 = vpack.c.b16 %v1033, %v1032
        %v1087 = vpack.c.b16 %v1035, %v1034
        %v1088 = vpack.c.b16 %v1037, %v1036
        %v1089 = vpack.c.b16 %v1039, %v1038
        %v1090 = vpack.c.b16 %v1041, %v1040
        %v1091 = vpack.c.b16 %v1043, %v1042
        %v1092 = vpack.c.b16 %v1045, %v1044
        %v1093 = vpack.c.b16 %v1047, %v1046
        %v1094 = vpack.c.b16 %v1049, %v1048
        %v1095 = vpack.c.b16 %v1051, %v1050
        %v1096 = vpack.c.b16 %v1053, %v1052
        %v1097 = vpack.c.b16 %v1055, %v1054
        %v1098 = vpack.c.b16 %v1057, %v1056
        %v1099 = vpack.c.b16 %v1059, %v1058
        %v1100 = vpack.c.b16 %v1061, %v1060
        %v1101 = vpack.c.b16 %v1063, %v1062
        %v1102 = vpack.c.b16 %v1065, %v1064
        %v1103 = vpack.c.b16 %v1067, %v1066
        %v1104 = vpack.c.b16 %v1069, %v1068
        %v1105 = vpack.c.b16 %v1071, %v1070
        %v1106 = vpack.c.b16 %v1073, %v1072
        %v1107 = vpack.c.b16 %v1075, %v1074
        %1140 = vmatprep.subr.bf16.mxu0 0
        %1141 = vmatpush1.bf16.msra.mxu0 %v1076
        %1142 = vmatprep.subr.bf16.mxu0 0
        %1143 = vmatpush1.bf16.msra.mxu0 %v1077
        %1144 = vmatprep.subr.bf16.mxu0 0
        %1145 = vmatpush1.bf16.msra.mxu0 %v1078
        %1146 = vmatprep.subr.bf16.mxu0 0
        %1147 = vmatpush1.bf16.msra.mxu0 %v1079
        %1148 = vmatprep.subr.bf16.mxu0 0
        %1149 = vmatpush1.bf16.msra.mxu0 %v1080
        %1150 = vmatprep.subr.bf16.mxu0 0
        %1151 = vmatpush1.bf16.msra.mxu0 %v1081
        %1152 = vmatprep.subr.bf16.mxu0 0
        %1153 = vmatpush1.bf16.msra.mxu0 %v1082
        %1154 = vmatprep.subr.bf16.mxu0 0
        %1155 = vmatpush1.bf16.msra.mxu0 %v1083
        %1156 = vmatprep.subr.bf16.mxu0 0
        %1157 = vmatpush1.bf16.msra.mxu0 %v1084
        %1158 = vmatprep.subr.bf16.mxu0 0
        %1159 = vmatpush1.bf16.msra.mxu0 %v1085
        %1160 = vmatprep.subr.bf16.mxu0 0
        %1161 = vmatpush1.bf16.msra.mxu0 %v1086
        %1162 = vmatprep.subr.bf16.mxu0 0
        %1163 = vmatpush1.bf16.msra.mxu0 %v1087
        %1164 = vmatprep.subr.bf16.mxu0 0
        %1165 = vmatpush1.bf16.msra.mxu0 %v1088
        %1166 = vmatprep.subr.bf16.mxu0 0
        %1167 = vmatpush1.bf16.msra.mxu0 %v1089
        %1168 = vmatprep.subr.bf16.mxu0 0
        %1169 = vmatpush1.bf16.msra.mxu0 %v1090
        %1170 = vmatprep.subr.bf16.mxu0 0
        %1171 = vmatpush1.bf16.msra.mxu0 %v1091
        %1172 = vmatprep.mubr.bf16.mxu0 %v821
        %1173 = vmatmul.mubr.bf16.gmra.mrb[0].mxu0 %v820
        %v1174 = vpop.f32.mrb[0].mxu0
        %v1175 = vadd.f32 0.0, %v1174
        %v1176 = vpop.f32.mrb[0].mxu0
        %v1177 = vpop.f32.mrb[0].mxu0
        %v1178 = vadd.f32 0.0, %v1177
        %v1179 = vpop.f32.mrb[0].mxu0
        %1180 = vmatprep.mubr.bf16.mxu0 %v825
        %1181 = vmatmul.mubr.bf16.gmra.mrb[0].mxu0 %v824
        %v1182 = vpop.f32.mrb[0].mxu0
        %v1183 = vadd.f32 0.0, %v1182
        %v1184 = vpop.f32.mrb[0].mxu0
        %v1185 = vpop.f32.mrb[0].mxu0
        %v1186 = vadd.f32 0.0, %v1185
        %v1187 = vpop.f32.mrb[0].mxu0
        %1188 = vmatprep.mubr.bf16.mxu0 %v829
        %1189 = vmatmul.mubr.bf16.gmra.mrb[0].mxu0 %v828
        %v1190 = vpop.f32.mrb[0].mxu0
        %v1191 = vadd.f32 0.0, %v1190
        %v1192 = vpop.f32.mrb[0].mxu0
        %v1193 = vpop.f32.mrb[0].mxu0
        %v1194 = vadd.f32 0.0, %v1193
        %v1195 = vpop.f32.mrb[0].mxu0
        %1196 = vmatprep.mubr.bf16.mxu0 %v833
        %1197 = vmatmul.mubr.bf16.gmra.mrb[0].mxu0 %v832
        %v1198 = vpop.f32.mrb[0].mxu0
        %v1199 = vadd.f32 0.0, %v1198
        %v1200 = vpop.f32.mrb[0].mxu0
        %v1201 = vpop.f32.mrb[0].mxu0
        %v1202 = vadd.f32 0.0, %v1201
        %v1203 = vpop.f32.mrb[0].mxu0
        %1204 = vmatprep.mubr.bf16.mxu0 %v837
        %1205 = vmatmul.mubr.bf16.gmra.mrb[0].mxu0 %v836
        %v1206 = vpop.f32.mrb[0].mxu0
        %v1207 = vadd.f32 0.0, %v1206
        %v1208 = vpop.f32.mrb[0].mxu0
        %v1209 = vpop.f32.mrb[0].mxu0
        %v1210 = vadd.f32 0.0, %v1209
        %v1211 = vpop.f32.mrb[0].mxu0
        %1212 = vmatprep.mubr.bf16.mxu0 %v841
        %1213 = vmatmul.mubr.bf16.gmra.mrb[0].mxu0 %v840
        %v1214 = vpop.f32.mrb[0].mxu0
        %v1215 = vadd.f32 0.0, %v1214
        %v1216 = vpop.f32.mrb[0].mxu0
        %v1217 = vpop.f32.mrb[0].mxu0
        %v1218 = vadd.f32 0.0, %v1217
        %v1219 = vpop.f32.mrb[0].mxu0
        %1220 = vmatprep.mubr.bf16.mxu0 %v845
        %1221 = vmatmul.mubr.bf16.gmra.mrb[0].mxu0 %v844
        %v1222 = vpop.f32.mrb[0].mxu0
        %v1223 = vadd.f32 0.0, %v1222
        %v1224 = vpop.f32.mrb[0].mxu0
        %v1225 = vpop.f32.mrb[0].mxu0
        %v1226 = vadd.f32 0.0, %v1225
        %v1227 = vpop.f32.mrb[0].mxu0
        %1228 = vmatprep.mubr.bf16.mxu0 %v849
        %1229 = vmatmul.mubr.bf16.gmra.mrb[0].mxu0 %v848
        %v1230 = vpop.f32.mrb[0].mxu0
        %v1231 = vadd.f32 0.0, %v1230
        %v1232 = vpop.f32.mrb[0].mxu0
        %v1233 = vpop.f32.mrb[0].mxu0
        %v1234 = vadd.f32 0.0, %v1233
        %v1235 = vpop.f32.mrb[0].mxu0
        %1236 = vmatprep.mubr.bf16.mxu0 %v853
        %1237 = vmatmul.mubr.bf16.gmra.mrb[0].mxu0 %v852
        %v1238 = vpop.f32.mrb[0].mxu0
        %v1239 = vadd.f32 0.0, %v1238
        %v1240 = vpop.f32.mrb[0].mxu0
        %v1241 = vpop.f32.mrb[0].mxu0
        %v1242 = vadd.f32 0.0, %v1241
        %v1243 = vpop.f32.mrb[0].mxu0
        %1244 = vmatprep.mubr.bf16.mxu0 %v857
        %1245 = vmatmul.mubr.bf16.gmra.mrb[0].mxu0 %v856
        %v1246 = vpop.f32.mrb[0].mxu0
        %v1247 = vadd.f32 0.0, %v1246
        %v1248 = vpop.f32.mrb[0].mxu0
        %v1249 = vpop.f32.mrb[0].mxu0
        %v1250 = vadd.f32 0.0, %v1249
        %v1251 = vpop.f32.mrb[0].mxu0
        %1252 = vmatprep.mubr.bf16.mxu0 %v861
        %1253 = vmatmul.mubr.bf16.gmra.mrb[0].mxu0 %v860
        %v1254 = vpop.f32.mrb[0].mxu0
        %v1255 = vadd.f32 0.0, %v1254
        %v1256 = vpop.f32.mrb[0].mxu0
        %v1257 = vpop.f32.mrb[0].mxu0
        %v1258 = vadd.f32 0.0, %v1257
        %v1259 = vpop.f32.mrb[0].mxu0
        %1260 = vmatprep.mubr.bf16.mxu0 %v865
        %1261 = vmatmul.mubr.bf16.gmra.mrb[0].mxu0 %v864
        %v1262 = vpop.f32.mrb[0].mxu0
        %v1263 = vadd.f32 0.0, %v1262
        %v1264 = vpop.f32.mrb[0].mxu0
        %v1265 = vpop.f32.mrb[0].mxu0
        %v1266 = vadd.f32 0.0, %v1265
        %v1267 = vpop.f32.mrb[0].mxu0
        %1268 = vmatprep.mubr.bf16.mxu0 %v869
        %1269 = vmatmul.mubr.bf16.gmra.mrb[0].mxu0 %v868
        %v1270 = vpop.f32.mrb[0].mxu0
        %v1271 = vadd.f32 0.0, %v1270
        %v1272 = vpop.f32.mrb[0].mxu0
        %v1273 = vpop.f32.mrb[0].mxu0
        %v1274 = vadd.f32 0.0, %v1273
        %v1275 = vpop.f32.mrb[0].mxu0
        %1276 = vmatprep.mubr.bf16.mxu0 %v873
        %1277 = vmatmul.mubr.bf16.gmra.mrb[0].mxu0 %v872
        %v1278 = vpop.f32.mrb[0].mxu0
        %v1279 = vadd.f32 0.0, %v1278
        %v1280 = vpop.f32.mrb[0].mxu0
        %v1281 = vpop.f32.mrb[0].mxu0
        %v1282 = vadd.f32 0.0, %v1281
        %v1283 = vpop.f32.mrb[0].mxu0
        %1284 = vmatprep.mubr.bf16.mxu0 %v877
        %1285 = vmatmul.mubr.bf16.gmra.mrb[0].mxu0 %v876
        %v1286 = vpop.f32.mrb[0].mxu0
        %v1287 = vadd.f32 0.0, %v1286
        %v1288 = vpop.f32.mrb[0].mxu0
        %v1289 = vpop.f32.mrb[0].mxu0
        %v1290 = vadd.f32 0.0, %v1289
        %v1291 = vpop.f32.mrb[0].mxu0
        %1292 = vmatprep.mubr.bf16.mxu0 %v881
        %1293 = vmatmul.mubr.bf16.gmra.mrb[0].mxu0 %v880
        %v1294 = vpop.f32.mrb[0].mxu0
        %v1295 = vadd.f32 0.0, %v1294
        %v1296 = vpop.f32.mrb[0].mxu0
        %v1297 = vpop.f32.mrb[0].mxu0
        %v1298 = vadd.f32 0.0, %v1297
        %v1299 = vpop.f32.mrb[0].mxu0
        %1300 = vdwg.mxu0
        %1301 = vmatprep.subr.bf16.mxu0 0
        %1302 = vmatpush1.bf16.msra.mxu0 %v1092
        %1303 = vmatprep.subr.bf16.mxu0 0
        %1304 = vmatpush1.bf16.msra.mxu0 %v1093
        %1305 = vmatprep.subr.bf16.mxu0 0
        %1306 = vmatpush1.bf16.msra.mxu0 %v1094
        %1307 = vmatprep.subr.bf16.mxu0 0
        %1308 = vmatpush1.bf16.msra.mxu0 %v1095
        %1309 = vmatprep.subr.bf16.mxu0 0
        %1310 = vmatpush1.bf16.msra.mxu0 %v1096
        %1311 = vmatprep.subr.bf16.mxu0 0
        %1312 = vmatpush1.bf16.msra.mxu0 %v1097
        %1313 = vmatprep.subr.bf16.mxu0 0
        %1314 = vmatpush1.bf16.msra.mxu0 %v1098
        %1315 = vmatprep.subr.bf16.mxu0 0
        %1316 = vmatpush1.bf16.msra.mxu0 %v1099
        %1317 = vmatprep.subr.bf16.mxu0 0
        %1318 = vmatpush1.bf16.msra.mxu0 %v1100
        %1319 = vmatprep.subr.bf16.mxu0 0
        %1320 = vmatpush1.bf16.msra.mxu0 %v1101
        %1321 = vmatprep.subr.bf16.mxu0 0
        %1322 = vmatpush1.bf16.msra.mxu0 %v1102
        %1323 = vmatprep.subr.bf16.mxu0 0
        %1324 = vmatpush1.bf16.msra.mxu0 %v1103
        %1325 = vmatprep.subr.bf16.mxu0 0
        %1326 = vmatpush1.bf16.msra.mxu0 %v1104
        %1327 = vmatprep.subr.bf16.mxu0 0
        %1328 = vmatpush1.bf16.msra.mxu0 %v1105
        %1329 = vmatprep.subr.bf16.mxu0 0
        %1330 = vmatpush1.bf16.msra.mxu0 %v1106
        %1331 = vmatprep.subr.bf16.mxu0 0
        %1332 = vmatpush1.bf16.msra.mxu0 %v1107
        %1333 = vmatprep.mubr.bf16.mxu0 %v823
        %1334 = vmatmul.mubr.bf16.gmra.mrb[0].mxu0 %v822
        %v1335 = vpop.f32.mrb[0].mxu0
        %v1336 = vadd.f32 %v1175, %v1335
        %v1337 = vpop.f32.mrb[0].mxu0
        %v1338 = vpop.f32.mrb[0].mxu0
        %v1339 = vadd.f32 %v1178, %v1338
        %v1340 = vpop.f32.mrb[0].mxu0
        %1341 = vmatprep.mubr.bf16.mxu0 %v827
        %1342 = vmatmul.mubr.bf16.gmra.mrb[0].mxu0 %v826
        %v1343 = vpop.f32.mrb[0].mxu0
        %v1344 = vadd.f32 %v1183, %v1343
        %v1345 = vpop.f32.mrb[0].mxu0
        %v1346 = vpop.f32.mrb[0].mxu0
        %v1347 = vadd.f32 %v1186, %v1346
        %v1348 = vpop.f32.mrb[0].mxu0
        %1349 = vmatprep.mubr.bf16.mxu0 %v831
        %1350 = vmatmul.mubr.bf16.gmra.mrb[0].mxu0 %v830
        %v1351 = vpop.f32.mrb[0].mxu0
        %v1352 = vadd.f32 %v1191, %v1351
        %v1353 = vpop.f32.mrb[0].mxu0
        %v1354 = vpop.f32.mrb[0].mxu0
        %v1355 = vadd.f32 %v1194, %v1354
        %v1356 = vpop.f32.mrb[0].mxu0
        %1357 = vmatprep.mubr.bf16.mxu0 %v835
        %1358 = vmatmul.mubr.bf16.gmra.mrb[0].mxu0 %v834
        %v1359 = vpop.f32.mrb[0].mxu0
        %v1360 = vadd.f32 %v1199, %v1359
        %v1361 = vpop.f32.mrb[0].mxu0
        %v1362 = vpop.f32.mrb[0].mxu0
        %v1363 = vadd.f32 %v1202, %v1362
        %v1364 = vpop.f32.mrb[0].mxu0
        %1365 = vmatprep.mubr.bf16.mxu0 %v839
        %1366 = vmatmul.mubr.bf16.gmra.mrb[0].mxu0 %v838
        %v1367 = vpop.f32.mrb[0].mxu0
        %v1368 = vadd.f32 %v1207, %v1367
        %v1369 = vpop.f32.mrb[0].mxu0
        %v1370 = vpop.f32.mrb[0].mxu0
        %v1371 = vadd.f32 %v1210, %v1370
        %v1372 = vpop.f32.mrb[0].mxu0
        %1373 = vmatprep.mubr.bf16.mxu0 %v843
        %1374 = vmatmul.mubr.bf16.gmra.mrb[0].mxu0 %v842
        %v1375 = vpop.f32.mrb[0].mxu0
        %v1376 = vadd.f32 %v1215, %v1375
        %v1377 = vpop.f32.mrb[0].mxu0
        %v1378 = vpop.f32.mrb[0].mxu0
        %v1379 = vadd.f32 %v1218, %v1378
        %v1380 = vpop.f32.mrb[0].mxu0
        %1381 = vmatprep.mubr.bf16.mxu0 %v847
        %1382 = vmatmul.mubr.bf16.gmra.mrb[0].mxu0 %v846
        %v1383 = vpop.f32.mrb[0].mxu0
        %v1384 = vadd.f32 %v1223, %v1383
        %v1385 = vpop.f32.mrb[0].mxu0
        %v1386 = vpop.f32.mrb[0].mxu0
        %v1387 = vadd.f32 %v1226, %v1386
        %v1388 = vpop.f32.mrb[0].mxu0
        %1389 = vmatprep.mubr.bf16.mxu0 %v851
        %1390 = vmatmul.mubr.bf16.gmra.mrb[0].mxu0 %v850
        %v1391 = vpop.f32.mrb[0].mxu0
        %v1392 = vadd.f32 %v1231, %v1391
        %v1393 = vpop.f32.mrb[0].mxu0
        %v1394 = vpop.f32.mrb[0].mxu0
        %v1395 = vadd.f32 %v1234, %v1394
        %v1396 = vpop.f32.mrb[0].mxu0
        %1397 = vmatprep.mubr.bf16.mxu0 %v855
        %1398 = vmatmul.mubr.bf16.gmra.mrb[0].mxu0 %v854
        %v1399 = vpop.f32.mrb[0].mxu0
        %v1400 = vadd.f32 %v1239, %v1399
        %v1401 = vpop.f32.mrb[0].mxu0
        %v1402 = vpop.f32.mrb[0].mxu0
        %v1403 = vadd.f32 %v1242, %v1402
        %v1404 = vpop.f32.mrb[0].mxu0
        %1405 = vmatprep.mubr.bf16.mxu0 %v859
        %1406 = vmatmul.mubr.bf16.gmra.mrb[0].mxu0 %v858
        %v1407 = vpop.f32.mrb[0].mxu0
        %v1408 = vadd.f32 %v1247, %v1407
        %v1409 = vpop.f32.mrb[0].mxu0
        %v1410 = vpop.f32.mrb[0].mxu0
        %v1411 = vadd.f32 %v1250, %v1410
        %v1412 = vpop.f32.mrb[0].mxu0
        %1413 = vmatprep.mubr.bf16.mxu0 %v863
        %1414 = vmatmul.mubr.bf16.gmra.mrb[0].mxu0 %v862
        %v1415 = vpop.f32.mrb[0].mxu0
        %v1416 = vadd.f32 %v1255, %v1415
        %v1417 = vpop.f32.mrb[0].mxu0
        %v1418 = vpop.f32.mrb[0].mxu0
        %v1419 = vadd.f32 %v1258, %v1418
        %v1420 = vpop.f32.mrb[0].mxu0
        %1421 = vmatprep.mubr.bf16.mxu0 %v867
        %1422 = vmatmul.mubr.bf16.gmra.mrb[0].mxu0 %v866
        %v1423 = vpop.f32.mrb[0].mxu0
        %v1424 = vadd.f32 %v1263, %v1423
        %v1425 = vpop.f32.mrb[0].mxu0
        %v1426 = vpop.f32.mrb[0].mxu0
        %v1427 = vadd.f32 %v1266, %v1426
        %v1428 = vpop.f32.mrb[0].mxu0
        %1429 = vmatprep.mubr.bf16.mxu0 %v871
        %1430 = vmatmul.mubr.bf16.gmra.mrb[0].mxu0 %v870
        %v1431 = vpop.f32.mrb[0].mxu0
        %v1432 = vadd.f32 %v1271, %v1431
        %v1433 = vpop.f32.mrb[0].mxu0
        %v1434 = vpop.f32.mrb[0].mxu0
        %v1435 = vadd.f32 %v1274, %v1434
        %v1436 = vpop.f32.mrb[0].mxu0
        %1437 = vmatprep.mubr.bf16.mxu0 %v875
        %1438 = vmatmul.mubr.bf16.gmra.mrb[0].mxu0 %v874
        %v1439 = vpop.f32.mrb[0].mxu0
        %v1440 = vadd.f32 %v1279, %v1439
        %v1441 = vpop.f32.mrb[0].mxu0
        %v1442 = vpop.f32.mrb[0].mxu0
        %v1443 = vadd.f32 %v1282, %v1442
        %v1444 = vpop.f32.mrb[0].mxu0
        %1445 = vmatprep.mubr.bf16.mxu0 %v879
        %1446 = vmatmul.mubr.bf16.gmra.mrb[0].mxu0 %v878
        %v1447 = vpop.f32.mrb[0].mxu0
        %v1448 = vadd.f32 %v1287, %v1447
        %v1449 = vpop.f32.mrb[0].mxu0
        %v1450 = vpop.f32.mrb[0].mxu0
        %v1451 = vadd.f32 %v1290, %v1450
        %v1452 = vpop.f32.mrb[0].mxu0
        %1453 = vmatprep.mubr.bf16.mxu0 %v883
        %1454 = vmatmul.mubr.bf16.gmra.mrb[0].mxu0 %v882
        %v1455 = vpop.f32.mrb[0].mxu0
        %v1456 = vadd.f32 %v1295, %v1455
        %v1457 = vpop.f32.mrb[0].mxu0
        %v1458 = vpop.f32.mrb[0].mxu0
        %v1459 = vadd.f32 %v1298, %v1458
        %v1460 = vpop.f32.mrb[0].mxu0
        %1461 = vdwg.mxu0
        %v1462 = vadd.f32 %v532, %v1336
        %v1463 = vadd.f32 %v533, %v1339
        %v1464 = vadd.f32 %v534, %v1344
        %v1465 = vadd.f32 %v535, %v1347
        %v1466 = vadd.f32 %v536, %v1352
        %v1467 = vadd.f32 %v537, %v1355
        %v1468 = vadd.f32 %v538, %v1360
        %v1469 = vadd.f32 %v539, %v1363
        %v1470 = vadd.f32 %v540, %v1368
        %v1471 = vadd.f32 %v541, %v1371
        %v1472 = vadd.f32 %v542, %v1376
        %v1473 = vadd.f32 %v543, %v1379
        %v1474 = vadd.f32 %v544, %v1384
        %v1475 = vadd.f32 %v545, %v1387
        %v1476 = vadd.f32 %v546, %v1392
        %v1477 = vadd.f32 %v547, %v1395
        %v1478 = vadd.f32 %v548, %v1400
        %v1479 = vadd.f32 %v549, %v1403
        %v1480 = vadd.f32 %v550, %v1408
        %v1481 = vadd.f32 %v551, %v1411
        %v1482 = vadd.f32 %v552, %v1416
        %v1483 = vadd.f32 %v553, %v1419
        %v1484 = vadd.f32 %v554, %v1424
        %v1485 = vadd.f32 %v555, %v1427
        %v1486 = vadd.f32 %v556, %v1432
        %v1487 = vadd.f32 %v557, %v1435
        %v1488 = vadd.f32 %v558, %v1440
        %v1489 = vadd.f32 %v559, %v1443
        %v1490 = vadd.f32 %v560, %v1448
        %v1491 = vadd.f32 %v561, %v1451
        %v1492 = vadd.f32 %v562, %v1456
        %v1493 = vadd.f32 %v563, %v1459
        %1494 = vst [vmem:[#allocation2] sm:$0xff] %v1462
        %1495 = vst [vmem:[#allocation2 + $0x8] sm:$0xff] %v1463
        %1496 = vst [vmem:[#allocation2 + $0x10] sm:$0xff] %v1464
        %1497 = vst [vmem:[#allocation2 + $0x18] sm:$0xff] %v1465
        %1498 = vst [vmem:[#allocation2 + $0x20] sm:$0xff] %v1466
        %1499 = vst [vmem:[#allocation2 + $0x28] sm:$0xff] %v1467
        %1500 = vst [vmem:[#allocation2 + $0x30] sm:$0xff] %v1468
        %1501 = vst [vmem:[#allocation2 + $0x38] sm:$0xff] %v1469
        %1502 = vst [vmem:[#allocation2 + $0x40] sm:$0xff] %v1470
        %1503 = vst [vmem:[#allocation2 + $0x48] sm:$0xff] %v1471
        %1504 = vst [vmem:[#allocation2 + $0x50] sm:$0xff] %v1472
        %1505 = vst [vmem:[#allocation2 + $0x58] sm:$0xff] %v1473
        %1506 = vst [vmem:[#allocation2 + $0x60] sm:$0xff] %v1474
        %1507 = vst [vmem:[#allocation2 + $0x68] sm:$0xff] %v1475
        %1508 = vst [vmem:[#allocation2 + $0x70] sm:$0xff] %v1476
        %1509 = vst [vmem:[#allocation2 + $0x78] sm:$0xff] %v1477
        %1510 = vst [vmem:[#allocation2 + $0x80] sm:$0xff] %v1478
        %1511 = vst [vmem:[#allocation2 + $0x88] sm:$0xff] %v1479
        %1512 = vst [vmem:[#allocation2 + $0x90] sm:$0xff] %v1480
        %1513 = vst [vmem:[#allocation2 + $0x98] sm:$0xff] %v1481
        %1514 = vst [vmem:[#allocation2 + $0xa0] sm:$0xff] %v1482
        %1515 = vst [vmem:[#allocation2 + $0xa8] sm:$0xff] %v1483
        %1516 = vst [vmem:[#allocation2 + $0xb0] sm:$0xff] %v1484
        %1517 = vst [vmem:[#allocation2 + $0xb8] sm:$0xff] %v1485
        %1518 = vst [vmem:[#allocation2 + $0xc0] sm:$0xff] %v1486
        %1519 = vst [vmem:[#allocation2 + $0xc8] sm:$0xff] %v1487
        %1520 = vst [vmem:[#allocation2 + $0xd0] sm:$0xff] %v1488
        %1521 = vst [vmem:[#allocation2 + $0xd8] sm:$0xff] %v1489
        %1522 = vst [vmem:[#allocation2 + $0xe0] sm:$0xff] %v1490
        %1523 = vst [vmem:[#allocation2 + $0xe8] sm:$0xff] %v1491
        %1524 = vst [vmem:[#allocation2 + $0xf0] sm:$0xff] %v1492
        %1525 = vst [vmem:[#allocation2 + $0xf8] sm:$0xff] %v1493
        %p1526 = scmp.eq.s32.totalorder %s26, 1
        // Predicated region
        $region64: #{lightgcn_forward.6} parent=54 // pred_check
          %p1527 = pneg %p1526
        $region65: #{lightgcn_forward.6} parent=54 // pred_check_branch
          %1529 = sbr.rel (%p1527) target = $region67
        $region66: #{lightgcn_forward.6} parent=54 // pred_region
          %v1530 = vld [vmem:[#allocation2] sm:$0xff]
          %v1531 = vld [vmem:[#allocation2 + $0x8] sm:$0xff]
          %v1532 = vld [vmem:[#allocation2 + $0x10] sm:$0xff]
          %v1533 = vld [vmem:[#allocation2 + $0x18] sm:$0xff]
          %v1534 = vld [vmem:[#allocation2 + $0x20] sm:$0xff]
          %v1535 = vld [vmem:[#allocation2 + $0x28] sm:$0xff]
          %v1536 = vld [vmem:[#allocation2 + $0x30] sm:$0xff]
          %v1537 = vld [vmem:[#allocation2 + $0x38] sm:$0xff]
          %v1538 = vld [vmem:[#allocation2 + $0x40] sm:$0xff]
          %v1539 = vld [vmem:[#allocation2 + $0x48] sm:$0xff]
          %v1540 = vld [vmem:[#allocation2 + $0x50] sm:$0xff]
          %v1541 = vld [vmem:[#allocation2 + $0x58] sm:$0xff]
          %v1542 = vld [vmem:[#allocation2 + $0x60] sm:$0xff]
          %v1543 = vld [vmem:[#allocation2 + $0x68] sm:$0xff]
          %v1544 = vld [vmem:[#allocation2 + $0x70] sm:$0xff]
          %v1545 = vld [vmem:[#allocation2 + $0x78] sm:$0xff]
          %v1546 = vld [vmem:[#allocation2 + $0x80] sm:$0xff]
          %v1547 = vld [vmem:[#allocation2 + $0x88] sm:$0xff]
          %v1548 = vld [vmem:[#allocation2 + $0x90] sm:$0xff]
          %v1549 = vld [vmem:[#allocation2 + $0x98] sm:$0xff]
          %v1550 = vld [vmem:[#allocation2 + $0xa0] sm:$0xff]
          %v1551 = vld [vmem:[#allocation2 + $0xa8] sm:$0xff]
          %v1552 = vld [vmem:[#allocation2 + $0xb0] sm:$0xff]
          %v1553 = vld [vmem:[#allocation2 + $0xb8] sm:$0xff]
          %v1554 = vld [vmem:[#allocation2 + $0xc0] sm:$0xff]
          %v1555 = vld [vmem:[#allocation2 + $0xc8] sm:$0xff]
          %v1556 = vld [vmem:[#allocation2 + $0xd0] sm:$0xff]
          %v1557 = vld [vmem:[#allocation2 + $0xd8] sm:$0xff]
          %v1558 = vld [vmem:[#allocation2 + $0xe0] sm:$0xff]
          %v1559 = vld [vmem:[#allocation2 + $0xe8] sm:$0xff]
          %v1560 = vld [vmem:[#allocation2 + $0xf0] sm:$0xff]
          %v1561 = vld [vmem:[#allocation2 + $0xf8] sm:$0xff]
          %v1562 = vpack.c.bf16 %v1531, %v1530
          %v1563 = vpack.c.bf16 %v1533, %v1532
          %v1564 = vpack.c.bf16 %v1535, %v1534
          %v1565 = vpack.c.bf16 %v1537, %v1536
          %v1566 = vpack.c.bf16 %v1539, %v1538
          %v1567 = vpack.c.bf16 %v1541, %v1540
          %v1568 = vpack.c.bf16 %v1543, %v1542
          %v1569 = vpack.c.bf16 %v1545, %v1544
          %v1570 = vpack.c.bf16 %v1547, %v1546
          %v1571 = vpack.c.bf16 %v1549, %v1548
          %v1572 = vpack.c.bf16 %v1551, %v1550
          %v1573 = vpack.c.bf16 %v1553, %v1552
          %v1574 = vpack.c.bf16 %v1555, %v1554
          %v1575 = vpack.c.bf16 %v1557, %v1556
          %v1576 = vpack.c.bf16 %v1559, %v1558
          %v1577 = vpack.c.bf16 %v1561, %v1560
          %v1594 = vunpack.c.l.b16 %v1562
          %v1595 = vunpack.c.h.b16 %v1562
          %v1596 = vunpack.c.l.b16 %v1563
          %v1597 = vunpack.c.h.b16 %v1563
          %v1598 = vunpack.c.l.b16 %v1564
          %v1599 = vunpack.c.h.b16 %v1564
          %v1600 = vunpack.c.l.b16 %v1565
          %v1601 = vunpack.c.h.b16 %v1565
          %v1602 = vunpack.c.l.b16 %v1566
          %v1603 = vunpack.c.h.b16 %v1566
          %v1604 = vunpack.c.l.b16 %v1567
          %v1605 = vunpack.c.h.b16 %v1567
          %v1606 = vunpack.c.l.b16 %v1568
          %v1607 = vunpack.c.h.b16 %v1568
          %v1608 = vunpack.c.l.b16 %v1569
          %v1609 = vunpack.c.h.b16 %v1569
          %v1610 = vunpack.c.l.b16 %v1570
          %v1611 = vunpack.c.h.b16 %v1570
          %v1612 = vunpack.c.l.b16 %v1571
          %v1613 = vunpack.c.h.b16 %v1571
          %v1614 = vunpack.c.l.b16 %v1572
          %v1615 = vunpack.c.h.b16 %v1572
          %v1616 = vunpack.c.l.b16 %v1573
          %v1617 = vunpack.c.h.b16 %v1573
          %v1618 = vunpack.c.l.b16 %v1574
          %v1619 = vunpack.c.h.b16 %v1574
          %v1620 = vunpack.c.l.b16 %v1575
          %v1621 = vunpack.c.h.b16 %v1575
          %v1622 = vunpack.c.l.b16 %v1576
          %v1623 = vunpack.c.h.b16 %v1576
          %v1624 = vunpack.c.l.b16 %v1577
          %v1625 = vunpack.c.h.b16 %v1577
          %v1626 = vpack.c.b16 %v1594, %v1594
          %v1627 = vpack.c.b16 %v1595, %v1595
          %v1628 = vpack.c.b16 %v1596, %v1596
          %v1629 = vpack.c.b16 %v1597, %v1597
          %v1630 = vpack.c.b16 %v1598, %v1598
          %v1631 = vpack.c.b16 %v1599, %v1599
          %v1632 = vpack.c.b16 %v1600, %v1600
          %v1633 = vpack.c.b16 %v1601, %v1601
          %v1634 = vpack.c.b16 %v1602, %v1602
          %v1635 = vpack.c.b16 %v1603, %v1603
          %v1636 = vpack.c.b16 %v1604, %v1604
          %v1637 = vpack.c.b16 %v1605, %v1605
          %v1638 = vpack.c.b16 %v1606, %v1606
          %v1639 = vpack.c.b16 %v1607, %v1607
          %v1640 = vpack.c.b16 %v1608, %v1608
          %v1641 = vpack.c.b16 %v1609, %v1609
          %v1642 = vpack.c.b16 %v1610, %v1610
          %v1643 = vpack.c.b16 %v1611, %v1611
          %v1644 = vpack.c.b16 %v1612, %v1612
          %v1645 = vpack.c.b16 %v1613, %v1613
          %v1646 = vpack.c.b16 %v1614, %v1614
          %v1647 = vpack.c.b16 %v1615, %v1615
          %v1648 = vpack.c.b16 %v1616, %v1616
          %v1649 = vpack.c.b16 %v1617, %v1617
          %v1650 = vpack.c.b16 %v1618, %v1618
          %v1651 = vpack.c.b16 %v1619, %v1619
          %v1652 = vpack.c.b16 %v1620, %v1620
          %v1653 = vpack.c.b16 %v1621, %v1621
          %v1654 = vpack.c.b16 %v1622, %v1622
          %v1655 = vpack.c.b16 %v1623, %v1623
          %v1656 = vpack.c.b16 %v1624, %v1624
          %v1657 = vpack.c.b16 %v1625, %v1625
          %1690 = vst [vmem:[%s403] sm:$0xf] %v1626
          %1691 = vst [vmem:[%s403 + $0x4] sm:$0xf] %v1627
          %1692 = vst [vmem:[%s403 + $0x8] sm:$0xf] %v1628
          %1693 = vst [vmem:[%s403 + $0xc] sm:$0xf] %v1629
          %1694 = vst [vmem:[%s403 + $0x10] sm:$0xf] %v1630
          %1695 = vst [vmem:[%s403 + $0x14] sm:$0xf] %v1631
          %1696 = vst [vmem:[%s403 + $0x18] sm:$0xf] %v1632
          %1697 = vst [vmem:[%s403 + $0x1c] sm:$0xf] %v1633
          %1698 = vst [vmem:[%s403 + $0x20] sm:$0xf] %v1634
          %1699 = vst [vmem:[%s403 + $0x24] sm:$0xf] %v1635
          %1700 = vst [vmem:[%s403 + $0x28] sm:$0xf] %v1636
          %1701 = vst [vmem:[%s403 + $0x2c] sm:$0xf] %v1637
          %1702 = vst [vmem:[%s403 + $0x30] sm:$0xf] %v1638
          %1703 = vst [vmem:[%s403 + $0x34] sm:$0xf] %v1639
          %1704 = vst [vmem:[%s403 + $0x38] sm:$0xf] %v1640
          %1705 = vst [vmem:[%s403 + $0x3c] sm:$0xf] %v1641
          %1706 = vst [vmem:[%s403 + $0x40] sm:$0xf] %v1642
          %1707 = vst [vmem:[%s403 + $0x44] sm:$0xf] %v1643
          %1708 = vst [vmem:[%s403 + $0x48] sm:$0xf] %v1644
          %1709 = vst [vmem:[%s403 + $0x4c] sm:$0xf] %v1645
          %1710 = vst [vmem:[%s403 + $0x50] sm:$0xf] %v1646
          %1711 = vst [vmem:[%s403 + $0x54] sm:$0xf] %v1647
          %1712 = vst [vmem:[%s403 + $0x58] sm:$0xf] %v1648
          %1713 = vst [vmem:[%s403 + $0x5c] sm:$0xf] %v1649
          %1714 = vst [vmem:[%s403 + $0x60] sm:$0xf] %v1650
          %1715 = vst [vmem:[%s403 + $0x64] sm:$0xf] %v1651
          %1716 = vst [vmem:[%s403 + $0x68] sm:$0xf] %v1652
          %1717 = vst [vmem:[%s403 + $0x6c] sm:$0xf] %v1653
          %1718 = vst [vmem:[%s403 + $0x70] sm:$0xf] %v1654
          %1719 = vst [vmem:[%s403 + $0x74] sm:$0xf] %v1655
          %1720 = vst [vmem:[%s403 + $0x78] sm:$0xf] %v1656
          %1721 = vst [vmem:[%s403 + $0x7c] sm:$0xf] %v1657
          %v1722 = vld [vmem:[%s417] sm:$0xff]
          %v1723 = vld [vmem:[%s417 + $0x8] sm:$0xff]
          %v1724 = vld [vmem:[%s417 + $0x10] sm:$0xff]
          %v1725 = vld [vmem:[%s417 + $0x18] sm:$0xff]
          %v1726 = vld [vmem:[%s417 + $0x20] sm:$0xff]
          %v1727 = vld [vmem:[%s417 + $0x28] sm:$0xff]
          %v1728 = vld [vmem:[%s417 + $0x30] sm:$0xff]
          %v1729 = vld [vmem:[%s417 + $0x38] sm:$0xff]
          %v1730 = vld [vmem:[%s417 + $0x40] sm:$0xff]
          %v1731 = vld [vmem:[%s417 + $0x48] sm:$0xff]
          %v1732 = vld [vmem:[%s417 + $0x50] sm:$0xff]
          %v1733 = vld [vmem:[%s417 + $0x58] sm:$0xff]
          %v1734 = vld [vmem:[%s417 + $0x60] sm:$0xff]
          %v1735 = vld [vmem:[%s417 + $0x68] sm:$0xff]
          %v1736 = vld [vmem:[%s417 + $0x70] sm:$0xff]
          %v1737 = vld [vmem:[%s417 + $0x78] sm:$0xff]
          %v1738 = vld [vmem:[%s417 + $0x80] sm:$0xff]
          %v1739 = vld [vmem:[%s417 + $0x88] sm:$0xff]
          %v1740 = vld [vmem:[%s417 + $0x90] sm:$0xff]
          %v1741 = vld [vmem:[%s417 + $0x98] sm:$0xff]
          %v1742 = vld [vmem:[%s417 + $0xa0] sm:$0xff]
          %v1743 = vld [vmem:[%s417 + $0xa8] sm:$0xff]
          %v1744 = vld [vmem:[%s417 + $0xb0] sm:$0xff]
          %v1745 = vld [vmem:[%s417 + $0xb8] sm:$0xff]
          %v1746 = vld [vmem:[%s417 + $0xc0] sm:$0xff]
          %v1747 = vld [vmem:[%s417 + $0xc8] sm:$0xff]
          %v1748 = vld [vmem:[%s417 + $0xd0] sm:$0xff]
          %v1749 = vld [vmem:[%s417 + $0xd8] sm:$0xff]
          %v1750 = vld [vmem:[%s417 + $0xe0] sm:$0xff]
          %v1751 = vld [vmem:[%s417 + $0xe8] sm:$0xff]
          %v1752 = vld [vmem:[%s417 + $0xf0] sm:$0xff]
          %v1753 = vld [vmem:[%s417 + $0xf8] sm:$0xff]
          %s1754 = sld [smem:[#allocation3]]
          %v1755 = vstv %s1754
          %v1756 = vmul.f32 %v1755, %v1530
          %v1757 = vmul.f32 %v1755, %v1531
          %v1758 = vmul.f32 %v1755, %v1532
          %v1759 = vmul.f32 %v1755, %v1533
          %v1760 = vmul.f32 %v1755, %v1534
          %v1761 = vmul.f32 %v1755, %v1535
          %v1762 = vmul.f32 %v1755, %v1536
          %v1763 = vmul.f32 %v1755, %v1537
          %v1764 = vmul.f32 %v1755, %v1538
          %v1765 = vmul.f32 %v1755, %v1539
          %v1766 = vmul.f32 %v1755, %v1540
          %v1767 = vmul.f32 %v1755, %v1541
          %v1768 = vmul.f32 %v1755, %v1542
          %v1769 = vmul.f32 %v1755, %v1543
          %v1770 = vmul.f32 %v1755, %v1544
          %v1771 = vmul.f32 %v1755, %v1545
          %v1772 = vmul.f32 %v1755, %v1546
          %v1773 = vmul.f32 %v1755, %v1547
          %v1774 = vmul.f32 %v1755, %v1548
          %v1775 = vmul.f32 %v1755, %v1549
          %v1776 = vmul.f32 %v1755, %v1550
          %v1777 = vmul.f32 %v1755, %v1551
          %v1778 = vmul.f32 %v1755, %v1552
          %v1779 = vmul.f32 %v1755, %v1553
          %v1780 = vmul.f32 %v1755, %v1554
          %v1781 = vmul.f32 %v1755, %v1555
          %v1782 = vmul.f32 %v1755, %v1556
          %v1783 = vmul.f32 %v1755, %v1557
          %v1784 = vmul.f32 %v1755, %v1558
          %v1785 = vmul.f32 %v1755, %v1559
          %v1786 = vmul.f32 %v1755, %v1560
          %v1787 = vmul.f32 %v1755, %v1561
          %v1788 = vadd.f32 %v1722, %v1756
          %v1789 = vadd.f32 %v1723, %v1757
          %v1790 = vadd.f32 %v1724, %v1758
          %v1791 = vadd.f32 %v1725, %v1759
          %v1792 = vadd.f32 %v1726, %v1760
          %v1793 = vadd.f32 %v1727, %v1761
          %v1794 = vadd.f32 %v1728, %v1762
          %v1795 = vadd.f32 %v1729, %v1763
          %v1796 = vadd.f32 %v1730, %v1764
          %v1797 = vadd.f32 %v1731, %v1765
          %v1798 = vadd.f32 %v1732, %v1766
          %v1799 = vadd.f32 %v1733, %v1767
          %v1800 = vadd.f32 %v1734, %v1768
          %v1801 = vadd.f32 %v1735, %v1769
          %v1802 = vadd.f32 %v1736, %v1770
          %v1803 = vadd.f32 %v1737, %v1771
          %v1804 = vadd.f32 %v1738, %v1772
          %v1805 = vadd.f32 %v1739, %v1773
          %v1806 = vadd.f32 %v1740, %v1774
          %v1807 = vadd.f32 %v1741, %v1775
          %v1808 = vadd.f32 %v1742, %v1776
          %v1809 = vadd.f32 %v1743, %v1777
          %v1810 = vadd.f32 %v1744, %v1778
          %v1811 = vadd.f32 %v1745, %v1779
          %v1812 = vadd.f32 %v1746, %v1780
          %v1813 = vadd.f32 %v1747, %v1781
          %v1814 = vadd.f32 %v1748, %v1782
          %v1815 = vadd.f32 %v1749, %v1783
          %v1816 = vadd.f32 %v1750, %v1784
          %v1817 = vadd.f32 %v1751, %v1785
          %v1818 = vadd.f32 %v1752, %v1786
          %v1819 = vadd.f32 %v1753, %v1787
          %1820 = vst [vmem:[%s424] sm:$0xff] %v1788
          %1821 = vst [vmem:[%s424 + $0x8] sm:$0xff] %v1789
          %1822 = vst [vmem:[%s424 + $0x10] sm:$0xff] %v1790
          %1823 = vst [vmem:[%s424 + $0x18] sm:$0xff] %v1791
          %1824 = vst [vmem:[%s424 + $0x20] sm:$0xff] %v1792
          %1825 = vst [vmem:[%s424 + $0x28] sm:$0xff] %v1793
          %1826 = vst [vmem:[%s424 + $0x30] sm:$0xff] %v1794
          %1827 = vst [vmem:[%s424 + $0x38] sm:$0xff] %v1795
          %1828 = vst [vmem:[%s424 + $0x40] sm:$0xff] %v1796
          %1829 = vst [vmem:[%s424 + $0x48] sm:$0xff] %v1797
          %1830 = vst [vmem:[%s424 + $0x50] sm:$0xff] %v1798
          %1831 = vst [vmem:[%s424 + $0x58] sm:$0xff] %v1799
          %1832 = vst [vmem:[%s424 + $0x60] sm:$0xff] %v1800
          %1833 = vst [vmem:[%s424 + $0x68] sm:$0xff] %v1801
          %1834 = vst [vmem:[%s424 + $0x70] sm:$0xff] %v1802
          %1835 = vst [vmem:[%s424 + $0x78] sm:$0xff] %v1803
          %1836 = vst [vmem:[%s424 + $0x80] sm:$0xff] %v1804
          %1837 = vst [vmem:[%s424 + $0x88] sm:$0xff] %v1805
          %1838 = vst [vmem:[%s424 + $0x90] sm:$0xff] %v1806
          %1839 = vst [vmem:[%s424 + $0x98] sm:$0xff] %v1807
          %1840 = vst [vmem:[%s424 + $0xa0] sm:$0xff] %v1808
          %1841 = vst [vmem:[%s424 + $0xa8] sm:$0xff] %v1809
          %1842 = vst [vmem:[%s424 + $0xb0] sm:$0xff] %v1810
          %1843 = vst [vmem:[%s424 + $0xb8] sm:$0xff] %v1811
          %1844 = vst [vmem:[%s424 + $0xc0] sm:$0xff] %v1812
          %1845 = vst [vmem:[%s424 + $0xc8] sm:$0xff] %v1813
          %1846 = vst [vmem:[%s424 + $0xd0] sm:$0xff] %v1814
          %1847 = vst [vmem:[%s424 + $0xd8] sm:$0xff] %v1815
          %1848 = vst [vmem:[%s424 + $0xe0] sm:$0xff] %v1816
          %1849 = vst [vmem:[%s424 + $0xe8] sm:$0xff] %v1817
          %1850 = vst [vmem:[%s424 + $0xf0] sm:$0xff] %v1818
          %1851 = vst [vmem:[%s424 + $0xf8] sm:$0xff] %v1819
        $region67: #{lightgcn_forward.6} parent=54 // pred_fallthru
          _
        %s1852 = sand.u32 %s137, 1
        %s1853 = scalar_lea.sflag [#allocation6], %s1852
        %s1854 = sand.u32 %s137, 1
        %s1855 = smul.addr %s1854, 128
        %s1856 = scalar_lea.vmem [#allocation5], %s1855
        %s1857 = smul.u32 32, %s25
        %p1858 = scmp.lt.s32.totalorder %s1857, 127
        %s1859 = scalar_select %p1858, %s1857, 127
        %s1860 = smul.addr %s1859, 8
        %s1861 = scalar_lea.vmem %s5, %s1860
        // Predicated region
        $region68: #{lightgcn_forward.6} parent=54 // pred_check
          %p1862 = pneg %p147
        $region69: #{lightgcn_forward.6} parent=54 // pred_check_branch
          %1864 = sbr.rel (%p1862) target = $region71
        $region70: #{lightgcn_forward.6} parent=54 // pred_region
          %s1865 = smul.u32 32, %s25
          %s1867 = ssub.s32 2048, 2048
          %1868 = vsyncadd %s1853, %s1867
          %s1869 = smul.addr %s1865, 64
          %s1870 = scalar_lea.hbm %s4, %s1869
          %s1871 = sshll.u32 %s1856, 4
          %s1872 = int_to_ptr.vmem [resolvable:$true] %s1871
          %1877 = dma.vmem_to_hbm [thread:$0]  %s1872, 2048, %s1870, %s1853, 64, 64, 4
        $region71: #{lightgcn_forward.6} parent=54 // pred_fallthru
          _
        // Predicated region
        $region72: #{lightgcn_forward.6} parent=54 // pred_check
          %p1878 = pneg %p173
        $region73: #{lightgcn_forward.6} parent=54 // pred_check_branch
          %1880 = sbr.rel (%p1878) target = $region75
        $region74: #{lightgcn_forward.6} parent=54 // pred_region
          %s1881 = smul.u32 32, %s25
        $region75: #{lightgcn_forward.6} parent=54 // pred_fallthru
          _
      $region55: #{lightgcn_forward.6} parent=5 // pred_fallthru
        _
      %p1882 = scmp.le.s32.totalorder 2, %s16
      // Predicated region
      $region76: #{lightgcn_forward.6} parent=5 // pred_check
        %p1883 = pneg %p1882
      $region77: #{lightgcn_forward.6} parent=5 // pred_check_branch
        %1885 = sbr.rel (%p1883) target = $region79
      $region78: #{lightgcn_forward.6} parent=5 // pred_region
        %s1886 = ssub.s32 %s16, 2
        // Predicated region
        $region80: #{lightgcn_forward.6} parent=78 // pred_check
          %p1887 = pneg %p153
        $region81: #{lightgcn_forward.6} parent=78 // pred_check_branch
          %1889 = sbr.rel (%p1887) target = $region83
        $region82: #{lightgcn_forward.6} parent=78 // pred_region
          %s1890 = sand.u32 %s138, 1
          %s1891 = scalar_lea.sflag [#allocation6], %s1890
          %s1892 = sand.u32 %s138, 1
          %s1893 = smul.addr %s1892, 128
          %s1894 = scalar_lea.vmem [#allocation5], %s1893
          %1895 = dma.done %s1891, 2048
        $region83: #{lightgcn_forward.6} parent=78 // pred_fallthru
          _
        // Predicated region
        $region84: #{lightgcn_forward.6} parent=78 // pred_check
          %p1896 = pneg %p179
        $region85: #{lightgcn_forward.6} parent=78 // pred_check_branch
          %1898 = sbr.rel (%p1896) target = $region87
        $region86: #{lightgcn_forward.6} parent=78 // pred_region
          %s1899 = smul.u32 32, %s27
          %p1900 = scmp.lt.s32.totalorder %s1899, 127
          %s1901 = scalar_select %p1900, %s1899, 127
          %s1902 = smul.addr %s1901, 8
          %s1903 = scalar_lea.vmem %s5, %s1902
        $region87: #{lightgcn_forward.6} parent=78 // pred_fallthru
          _
      $region79: #{lightgcn_forward.6} parent=5 // pred_fallthru
        _
    $region6: #{lightgcn_forward.6} parent=1 // loop_footer
      %s20 = sadd.s32 1, %s16
    $region7: #{lightgcn_forward.6} parent=1 // loop_footer_branch
      %15 = sbr.rel target = $region3
    $region8: #{lightgcn_forward.6} parent=1 // loop_exit
      _
    %1904 = vsyncpa [#allocation6], 1
    %s1905 = scalar_lea.sflag [#allocation6], 1
    %1906 = vsyncpa %s1905, 1

// kernel: lightgcn_forward.7
$region0: #{lightgcn_forward.7}
  #allocation0 [shape = 'u32[]', space=smem, size = 0x4, offset = 0x4, fixed_abs, tag = 'smem constant byte address 0x4 - core index']
  #allocation1 [shape = 'u32[144,128]{1,0:T(1,128)}', space=vmem, size = 0x12000, scoped, tag = 'internal scratch']
  #allocation2 [shape = 'f32[2,512,128]{2,1,0:T(8,128)}', space=vmem, size = 0x80000, scoped, tag = 'scratch operand']
  #allocation3 [shape = 'f32[2,512,128]{2,1,0:T(8,128)}', space=vmem, size = 0x80000, scoped, tag = 'scratch operand']
  #allocation4 [shape = 's32[4]{0}', space=sflag, size = 0x10, scoped, tag = 'scratch operand']
  #allocation5 [shape = 's32[1]{0}', space=sflag, size = 0x4, scoped, tag = 'scoped memory for lightgcn_forward.7']
  #allocation6 [shape = 'u8[4096]{0}', space=smem, size = 0x1000, scoped, tag = 'prefetched SMEM operand 0']
  #allocation7 [shape = 'u8[4096]{0}', space=smem, size = 0x1000, scoped, tag = 'prefetched SMEM operand 1']
  #allocation8 [shape = 's32[]', space=sflag, size = 0x4, offset = 0, fixed_abs, tag = 'sflag constant byte address 0x0 - dummy sync flag']
  #allocation9 [shape = 's32[]', space=sflag, size = 0x4, offset = 0, fixed_abs, tag = 'sflag constant byte address 0x0 - dummy sync flag']
  #allocation10 [shape = 's32[]', space=sflag, size = 0x4, offset = 0, fixed_abs, tag = 'sflag constant byte address 0x0 - dummy sync flag']
  #allocation11 [shape = 's32[]', space=sflag, size = 0x4, offset = 0, fixed_abs, tag = 'sflag constant byte address 0x0 - dummy sync flag']
  %s0 = inlined_call_operand.vmem [shape: s32[1024], index: 0, kind: input, shape index: {}]
  %s1 = inlined_call_operand.vmem [shape: s32[1024], index: 1, kind: input, shape index: {}]
  %s2 = inlined_call_operand.vmem [shape: f32[1024,128], index: 2, kind: input, shape index: {}]
  %s3 = inlined_call_operand.vmem [shape: f32[1024,1], index: 3, kind: output, shape index: {}]
  %s4 = sld [smem:[#allocation0]]
  $region174: #{lightgcn_forward.7} parent=0
    _
  %s6 = ssub.s32 1, %s4
  %s7 = scalar_select 0, %s6, %s4
  %s8 = sshll.u32 %s0, 4
  %s9 = int_to_ptr.vmem [resolvable:$true] %s8
  %11 = dma.vmem_to_smem %s9, 128, [#allocation6], [#allocation5]
  %s12 = sshll.u32 %s1, 4
  %s13 = int_to_ptr.vmem [resolvable:$true] %s12
  %15 = dma.vmem_to_smem %s13, 128, [#allocation7], [#allocation5]
  %16 = dma.done [#allocation5], 256
  %17 = sfence
  loop: start=0, step=1, limit=3
  $region2: #{lightgcn_forward.7} parent=0 // loop_pre_header
    _
  $region3: #{lightgcn_forward.7} parent=0 // loop_header
    %s19 = sphi 0, %s23
    %p20 = scmp.ge.s32.totalorder %s19, 3
    %s28 = sphi 0, %s30
    %s31 = sphi 0, %s28
    %s41 = sphi 0, %s31
  $region4: #{lightgcn_forward.7} parent=0 // loop_header_branch
    %22 = sbr.rel (%p20) target = $region8
  $region5: #{lightgcn_forward.7} parent=0 // loop_body
    %s24 = ssub.s32 %s19, 1
    %s25 = sadd.s32 %s19, 1
    %s26 = ssub.s32 %s19, %s25
    %p27 = scmp.eq.s32.totalorder %s26, 0
    %s29 = sadd.s32 %s28, 1
    %s30 = scalar_select %p27, %s28, %s29
    %p32 = pneg %p27
    %p33 = scmp.eq.s32.totalorder %s19, 1
    %p34 = por %p32, %p33
    %p35 = scmp.ne.s32.totalorder %s28, %s31
    %p36 = scmp.eq.s32.totalorder %s19, 0
    %p37 = por %p35, %p36
    %p38 = scmp.ne.s32.totalorder %s28, %s31
    %p39 = scmp.eq.s32.totalorder %s24, 1
    %p40 = por %p38, %p39
    %p42 = scmp.ne.s32.totalorder %s31, %s41
    %p43 = scmp.eq.s32.totalorder %s24, 0
    %p44 = por %p42, %p43
    %p45 = scmp.lt.s32.totalorder %s19, 2
    // Predicated region
    $region9: #{lightgcn_forward.7} parent=5 // pred_check
      %p46 = pneg %p45
    $region10: #{lightgcn_forward.7} parent=5 // pred_check_branch
      %48 = sbr.rel (%p46) target = $region12
    $region11: #{lightgcn_forward.7} parent=5 // pred_region
      %p49 = pneg %p37
      %p50 = pneg %p34
      %s51 = smul.u32 64, %s19
      %p52 = scmp.lt.s32.totalorder %s51, 127
      %s53 = scalar_select %p52, %s51, 127
      %s54 = smul.addr %s53, 8
      %s55 = scalar_lea.vmem %s3, %s54
      %s56 = smul.u32 64, %s19
      %p57 = scmp.lt.s32.totalorder %s56, 127
      %s58 = scalar_select %p57, %s56, 127
      %s59 = smul.addr %s58, 8
      %s60 = scalar_lea.vmem %s3, %s59
      %s61 = smul.u32 64, %s19
      %p62 = scmp.lt.s32.totalorder %s19, 0
      %s63 = ssub.s32 0, %s19
      %s64 = scalar_select %p62, %s63, %s19
      %s65 = sand.u32 %s64, 1
      %s66 = ssub.s32 0, %s65
      %s67 = scalar_select %p62, %s66, %s65
      %p68 = scmp.ne.s32.totalorder %s67, 0
      %p69 = scmp.lt.s32.totalorder %s67, 0
      %p70 = pnand %p69, %p68
      %p71 = pneg %p70
      %s72 = sadd.s32 %s67, 2
      %s73 = scalar_select %p71, %s72, %s67
      %p74 = scmp.eq.s32.totalorder %s19, 0
      // Predicated region
      $region13: #{lightgcn_forward.7} parent=11 // pred_check
        %p75 = pneg %p74
      $region14: #{lightgcn_forward.7} parent=11 // pred_check_branch
        %77 = sbr.rel (%p75) target = $region16
      $region15: #{lightgcn_forward.7} parent=11 // pred_region
        loop: start=0, step=1, limit=512
        $region17: #{lightgcn_forward.7} parent=15 // loop_pre_header
          _
        $region18: #{lightgcn_forward.7} parent=15 // loop_header
          %s79 = sphi 0, %s83
          %p80 = scmp.ge.s32.totalorder %s79, 512
        $region19: #{lightgcn_forward.7} parent=15 // loop_header_branch
          %82 = sbr.rel (%p80) target = $region23
        $region20: #{lightgcn_forward.7} parent=15 // loop_body
          %s84 = sld [smem:[#allocation6 + %s79]]
          %s85 = sld [smem:[#allocation7 + %s79]]
          %s86 = scalar_lea.vmem %s2, %s84
          %s87 = scalar_lea.vmem [#allocation2], %s79
          %p89 = scmp.lt.u32.totalorder 1, 8
          %p90 = pneg %p89
          // Predicated region
          $region24: #{lightgcn_forward.7} parent=20 // pred_check
            _
          $region25: #{lightgcn_forward.7} parent=20 // pred_check_branch
            %92 = sbr.rel (%p89) target = $region27
          $region26: #{lightgcn_forward.7} parent=20 // pred_region
            %s107 = sand.u32 1, 7
            %p108 = scmp.eq.s32.totalorder %s107, 0
            %p109 = pneg %p108
            // Predicated region
            $region39: #{lightgcn_forward.7} parent=26 // pred_check
              _
            $region40: #{lightgcn_forward.7} parent=26 // pred_check_branch
              %111 = sbr.rel (%p108) target = $region42
            $region41: #{lightgcn_forward.7} parent=26 // pred_region
              %s112 = sand.u32 1, 7
              %s113 = ssub.s32 1, %s112
              %s114 = scalar_lea.vmem %s86, %s113
              %s115 = ssub.s32 1, %s112
              %s116 = scalar_lea.vmem %s87, %s115 [#allocation2]
              %s117 = sshllo.u32 0, %s112
              loop: start=0, step=1, limit=1
              $region43: #{lightgcn_forward.7} parent=41 // loop_pre_header
                _
              $region44: #{lightgcn_forward.7} parent=41 // loop_header
                %s119 = sphi 0, %s123
                %p120 = scmp.ge.s32.totalorder %s119, 1
                %s124 = sphi %s114, %s114
                %s125 = sphi %s116, %s116
              $region45: #{lightgcn_forward.7} parent=41 // loop_header_branch
                %122 = sbr.rel (%p120) target = $region49
              $region46: #{lightgcn_forward.7} parent=41 // loop_body
                %v126 = vld [vmem:[%s124] sm:%s117]
                %127 = vst [vmem:[%s125] sm:%s117] %v126
              $region47: #{lightgcn_forward.7} parent=41 // loop_footer
                %s123 = sadd.s32 1, %s119
              $region48: #{lightgcn_forward.7} parent=41 // loop_footer_branch
                %118 = sbr.rel target = $region44
              $region49: #{lightgcn_forward.7} parent=41 // loop_exit
                _
            $region42: #{lightgcn_forward.7} parent=26 // pred_fallthru
              _
          $region27: #{lightgcn_forward.7} parent=20 // pred_fallthru
            _
          // Predicated region
          $region28: #{lightgcn_forward.7} parent=20 // pred_check
            %p93 = pneg %p89
          $region29: #{lightgcn_forward.7} parent=20 // pred_check_branch
            %95 = sbr.rel (%p93) target = $region31
          $region30: #{lightgcn_forward.7} parent=20 // pred_region
            %s96 = sshllo.u32 0, 1
            loop: start=0, step=1, limit=1
            $region32: #{lightgcn_forward.7} parent=30 // loop_pre_header
              _
            $region33: #{lightgcn_forward.7} parent=30 // loop_header
              %s98 = sphi 0, %s102
              %p99 = scmp.ge.s32.totalorder %s98, 1
              %s103 = sphi %s86, %s86
              %s104 = sphi %s87, %s87
            $region34: #{lightgcn_forward.7} parent=30 // loop_header_branch
              %101 = sbr.rel (%p99) target = $region38
            $region35: #{lightgcn_forward.7} parent=30 // loop_body
              %v105 = vld [vmem:[%s103] sm:%s96]
              %106 = vst [vmem:[%s104] sm:%s96] %v105
            $region36: #{lightgcn_forward.7} parent=30 // loop_footer
              %s102 = sadd.s32 1, %s98
            $region37: #{lightgcn_forward.7} parent=30 // loop_footer_branch
              %97 = sbr.rel target = $region33
            $region38: #{lightgcn_forward.7} parent=30 // loop_exit
              _
          $region31: #{lightgcn_forward.7} parent=20 // pred_fallthru
            _
          // Predicated region
          $region50: #{lightgcn_forward.7} parent=20 // pred_check
            _
          $region51: #{lightgcn_forward.7} parent=20 // pred_check_branch
            %130 = sbr.rel (0) target = $region53
          $region52: #{lightgcn_forward.7} parent=20 // pred_region
            %131 = vsyncadd [#allocation4], 16
          $region53: #{lightgcn_forward.7} parent=20 // pred_fallthru
            _
          %s132 = scalar_lea.vmem %s2, %s85
          %s133 = scalar_lea.vmem [#allocation3], %s79
          %s134 = scalar_lea.sflag [#allocation4], 2
          %p136 = scmp.lt.u32.totalorder 1, 8
          %p137 = pneg %p136
          // Predicated region
          $region54: #{lightgcn_forward.7} parent=20 // pred_check
            _
          $region55: #{lightgcn_forward.7} parent=20 // pred_check_branch
            %139 = sbr.rel (%p136) target = $region57
          $region56: #{lightgcn_forward.7} parent=20 // pred_region
            %s154 = sand.u32 1, 7
            %p155 = scmp.eq.s32.totalorder %s154, 0
            %p156 = pneg %p155
            // Predicated region
            $region69: #{lightgcn_forward.7} parent=56 // pred_check
              _
            $region70: #{lightgcn_forward.7} parent=56 // pred_check_branch
              %158 = sbr.rel (%p155) target = $region72
            $region71: #{lightgcn_forward.7} parent=56 // pred_region
              %s159 = sand.u32 1, 7
              %s160 = ssub.s32 1, %s159
              %s161 = scalar_lea.vmem %s132, %s160
              %s162 = ssub.s32 1, %s159
              %s163 = scalar_lea.vmem %s133, %s162 [#allocation3]
              %s164 = sshllo.u32 0, %s159
              loop: start=0, step=1, limit=1
              $region73: #{lightgcn_forward.7} parent=71 // loop_pre_header
                _
              $region74: #{lightgcn_forward.7} parent=71 // loop_header
                %s166 = sphi 0, %s170
                %p167 = scmp.ge.s32.totalorder %s166, 1
                %s171 = sphi %s161, %s161
                %s172 = sphi %s163, %s163
              $region75: #{lightgcn_forward.7} parent=71 // loop_header_branch
                %169 = sbr.rel (%p167) target = $region79
              $region76: #{lightgcn_forward.7} parent=71 // loop_body
                %v173 = vld [vmem:[%s171] sm:%s164]
                %174 = vst [vmem:[%s172] sm:%s164] %v173
              $region77: #{lightgcn_forward.7} parent=71 // loop_footer
                %s170 = sadd.s32 1, %s166
              $region78: #{lightgcn_forward.7} parent=71 // loop_footer_branch
                %165 = sbr.rel target = $region74
              $region79: #{lightgcn_forward.7} parent=71 // loop_exit
                _
            $region72: #{lightgcn_forward.7} parent=56 // pred_fallthru
              _
          $region57: #{lightgcn_forward.7} parent=20 // pred_fallthru
            _
          // Predicated region
          $region58: #{lightgcn_forward.7} parent=20 // pred_check
            %p140 = pneg %p136
          $region59: #{lightgcn_forward.7} parent=20 // pred_check_branch
            %142 = sbr.rel (%p140) target = $region61
          $region60: #{lightgcn_forward.7} parent=20 // pred_region
            %s143 = sshllo.u32 0, 1
            loop: start=0, step=1, limit=1
            $region62: #{lightgcn_forward.7} parent=60 // loop_pre_header
              _
            $region63: #{lightgcn_forward.7} parent=60 // loop_header
              %s145 = sphi 0, %s149
              %p146 = scmp.ge.s32.totalorder %s145, 1
              %s150 = sphi %s132, %s132
              %s151 = sphi %s133, %s133
            $region64: #{lightgcn_forward.7} parent=60 // loop_header_branch
              %148 = sbr.rel (%p146) target = $region68
            $region65: #{lightgcn_forward.7} parent=60 // loop_body
              %v152 = vld [vmem:[%s150] sm:%s143]
              %153 = vst [vmem:[%s151] sm:%s143] %v152
            $region66: #{lightgcn_forward.7} parent=60 // loop_footer
              %s149 = sadd.s32 1, %s145
            $region67: #{lightgcn_forward.7} parent=60 // loop_footer_branch
              %144 = sbr.rel target = $region63
            $region68: #{lightgcn_forward.7} parent=60 // loop_exit
              _
          $region61: #{lightgcn_forward.7} parent=20 // pred_fallthru
            _
          // Predicated region
          $region80: #{lightgcn_forward.7} parent=20 // pred_check
            _
          $region81: #{lightgcn_forward.7} parent=20 // pred_check_branch
            %177 = sbr.rel (0) target = $region83
          $region82: #{lightgcn_forward.7} parent=20 // pred_region
            %178 = vsyncadd %s134, 16
          $region83: #{lightgcn_forward.7} parent=20 // pred_fallthru
            _
        $region21: #{lightgcn_forward.7} parent=15 // loop_footer
          %s83 = sadd.s32 1, %s79
        $region22: #{lightgcn_forward.7} parent=15 // loop_footer_branch
          %78 = sbr.rel target = $region18
        $region23: #{lightgcn_forward.7} parent=15 // loop_exit
          _
      $region16: #{lightgcn_forward.7} parent=11 // pred_fallthru
        _
      loop: start=0, step=1, limit=512
      $region84: #{lightgcn_forward.7} parent=11 // loop_pre_header
        _
      $region85: #{lightgcn_forward.7} parent=11 // loop_header
        %s180 = sphi 0, %s184
        %p181 = scmp.ge.s32.totalorder %s180, 512
      $region86: #{lightgcn_forward.7} parent=11 // loop_header_branch
        %183 = sbr.rel (%p181) target = $region90
      $region87: #{lightgcn_forward.7} parent=11 // loop_body
        %s185 = scalar_lea.sflag [#allocation4], %s73
        %s186 = smul.u32 1, 1
        %s187 = sshll.u32 %s186, 4
        %188 = dma.done %s185, %s187
        %s189 = sadd.s32 %s73, 2
        %s190 = scalar_lea.sflag [#allocation4], %s189
        %s191 = sshll.u32 %s186, 4
        %192 = dma.done %s190, %s191
      $region88: #{lightgcn_forward.7} parent=11 // loop_footer
        %s184 = sadd.s32 1, %s180
      $region89: #{lightgcn_forward.7} parent=11 // loop_footer_branch
        %179 = sbr.rel target = $region85
      $region90: #{lightgcn_forward.7} parent=11 // loop_exit
        _
      %s193 = sadd.s32 %s19, 1
      %p194 = scmp.lt.s32.totalorder %s193, 2
      // Predicated region
      $region91: #{lightgcn_forward.7} parent=11 // pred_check
        %p195 = pneg %p194
      $region92: #{lightgcn_forward.7} parent=11 // pred_check_branch
        %197 = sbr.rel (%p195) target = $region94
      $region93: #{lightgcn_forward.7} parent=11 // pred_region
        %s198 = ssub.s32 1, %s73
        %s199 = smul.u32 %s193, 512
        loop: start=0, step=1, limit=512
        $region95: #{lightgcn_forward.7} parent=93 // loop_pre_header
          _
        $region96: #{lightgcn_forward.7} parent=93 // loop_header
          %s201 = sphi 0, %s205
          %p202 = scmp.ge.s32.totalorder %s201, 512
        $region97: #{lightgcn_forward.7} parent=93 // loop_header_branch
          %204 = sbr.rel (%p202) target = $region101
        $region98: #{lightgcn_forward.7} parent=93 // loop_body
          %s206 = sadd.s32 %s199, %s201
          %s207 = sld [smem:[#allocation6 + %s206]]
          %s208 = sld [smem:[#allocation7 + %s206]]
          %s209 = scalar_lea.vmem %s2, %s207
          %s210 = smul.u32 %s198, 512
          %s211 = sadd.s32 %s201, %s210
          %s212 = scalar_lea.vmem [#allocation2], %s211
          %s213 = scalar_lea.sflag [#allocation4], %s198
          %p215 = scmp.lt.u32.totalorder 1, 8
          %p216 = pneg %p215
          // Predicated region
          $region102: #{lightgcn_forward.7} parent=98 // pred_check
            _
          $region103: #{lightgcn_forward.7} parent=98 // pred_check_branch
            %218 = sbr.rel (%p215) target = $region105
          $region104: #{lightgcn_forward.7} parent=98 // pred_region
            %s233 = sand.u32 1, 7
            %p234 = scmp.eq.s32.totalorder %s233, 0
            %p235 = pneg %p234
            // Predicated region
            $region117: #{lightgcn_forward.7} parent=104 // pred_check
              _
            $region118: #{lightgcn_forward.7} parent=104 // pred_check_branch
              %237 = sbr.rel (%p234) target = $region120
            $region119: #{lightgcn_forward.7} parent=104 // pred_region
              %s238 = sand.u32 1, 7
              %s239 = ssub.s32 1, %s238
              %s240 = scalar_lea.vmem %s209, %s239
              %s241 = ssub.s32 1, %s238
              %s242 = scalar_lea.vmem %s212, %s241 [#allocation2]
              %s243 = sshllo.u32 0, %s238
              loop: start=0, step=1, limit=1
              $region121: #{lightgcn_forward.7} parent=119 // loop_pre_header
                _
              $region122: #{lightgcn_forward.7} parent=119 // loop_header
                %s245 = sphi 0, %s249
                %p246 = scmp.ge.s32.totalorder %s245, 1
                %s250 = sphi %s240, %s240
                %s251 = sphi %s242, %s242
              $region123: #{lightgcn_forward.7} parent=119 // loop_header_branch
                %248 = sbr.rel (%p246) target = $region127
              $region124: #{lightgcn_forward.7} parent=119 // loop_body
                %v252 = vld [vmem:[%s250] sm:%s243]
                %253 = vst [vmem:[%s251] sm:%s243] %v252
              $region125: #{lightgcn_forward.7} parent=119 // loop_footer
                %s249 = sadd.s32 1, %s245
              $region126: #{lightgcn_forward.7} parent=119 // loop_footer_branch
                %244 = sbr.rel target = $region122
              $region127: #{lightgcn_forward.7} parent=119 // loop_exit
                _
            $region120: #{lightgcn_forward.7} parent=104 // pred_fallthru
              _
          $region105: #{lightgcn_forward.7} parent=98 // pred_fallthru
            _
          // Predicated region
          $region106: #{lightgcn_forward.7} parent=98 // pred_check
            %p219 = pneg %p215
          $region107: #{lightgcn_forward.7} parent=98 // pred_check_branch
            %221 = sbr.rel (%p219) target = $region109
          $region108: #{lightgcn_forward.7} parent=98 // pred_region
            %s222 = sshllo.u32 0, 1
            loop: start=0, step=1, limit=1
            $region110: #{lightgcn_forward.7} parent=108 // loop_pre_header
              _
            $region111: #{lightgcn_forward.7} parent=108 // loop_header
              %s224 = sphi 0, %s228
              %p225 = scmp.ge.s32.totalorder %s224, 1
              %s229 = sphi %s209, %s209
              %s230 = sphi %s212, %s212
            $region112: #{lightgcn_forward.7} parent=108 // loop_header_branch
              %227 = sbr.rel (%p225) target = $region116
            $region113: #{lightgcn_forward.7} parent=108 // loop_body
              %v231 = vld [vmem:[%s229] sm:%s222]
              %232 = vst [vmem:[%s230] sm:%s222] %v231
            $region114: #{lightgcn_forward.7} parent=108 // loop_footer
              %s228 = sadd.s32 1, %s224
            $region115: #{lightgcn_forward.7} parent=108 // loop_footer_branch
              %223 = sbr.rel target = $region111
            $region116: #{lightgcn_forward.7} parent=108 // loop_exit
              _
          $region109: #{lightgcn_forward.7} parent=98 // pred_fallthru
            _
          // Predicated region
          $region128: #{lightgcn_forward.7} parent=98 // pred_check
            _
          $region129: #{lightgcn_forward.7} parent=98 // pred_check_branch
            %256 = sbr.rel (0) target = $region131
          $region130: #{lightgcn_forward.7} parent=98 // pred_region
            %257 = vsyncadd %s213, 16
          $region131: #{lightgcn_forward.7} parent=98 // pred_fallthru
            _
          %s258 = scalar_lea.vmem %s2, %s208
          %s259 = scalar_lea.vmem [#allocation3], %s211
          %s260 = sadd.s32 %s198, 2
          %s261 = scalar_lea.sflag [#allocation4], %s260
          %p263 = scmp.lt.u32.totalorder 1, 8
          %p264 = pneg %p263
          // Predicated region
          $region132: #{lightgcn_forward.7} parent=98 // pred_check
            _
          $region133: #{lightgcn_forward.7} parent=98 // pred_check_branch
            %266 = sbr.rel (%p263) target = $region135
          $region134: #{lightgcn_forward.7} parent=98 // pred_region
            %s281 = sand.u32 1, 7
            %p282 = scmp.eq.s32.totalorder %s281, 0
            %p283 = pneg %p282
            // Predicated region
            $region147: #{lightgcn_forward.7} parent=134 // pred_check
              _
            $region148: #{lightgcn_forward.7} parent=134 // pred_check_branch
              %285 = sbr.rel (%p282) target = $region150
            $region149: #{lightgcn_forward.7} parent=134 // pred_region
              %s286 = sand.u32 1, 7
              %s287 = ssub.s32 1, %s286
              %s288 = scalar_lea.vmem %s258, %s287
              %s289 = ssub.s32 1, %s286
              %s290 = scalar_lea.vmem %s259, %s289 [#allocation3]
              %s291 = sshllo.u32 0, %s286
              loop: start=0, step=1, limit=1
              $region151: #{lightgcn_forward.7} parent=149 // loop_pre_header
                _
              $region152: #{lightgcn_forward.7} parent=149 // loop_header
                %s293 = sphi 0, %s297
                %p294 = scmp.ge.s32.totalorder %s293, 1
                %s298 = sphi %s288, %s288
                %s299 = sphi %s290, %s290
              $region153: #{lightgcn_forward.7} parent=149 // loop_header_branch
                %296 = sbr.rel (%p294) target = $region157
              $region154: #{lightgcn_forward.7} parent=149 // loop_body
                %v300 = vld [vmem:[%s298] sm:%s291]
                %301 = vst [vmem:[%s299] sm:%s291] %v300
              $region155: #{lightgcn_forward.7} parent=149 // loop_footer
                %s297 = sadd.s32 1, %s293
              $region156: #{lightgcn_forward.7} parent=149 // loop_footer_branch
                %292 = sbr.rel target = $region152
              $region157: #{lightgcn_forward.7} parent=149 // loop_exit
                _
            $region150: #{lightgcn_forward.7} parent=134 // pred_fallthru
              _
          $region135: #{lightgcn_forward.7} parent=98 // pred_fallthru
            _
          // Predicated region
          $region136: #{lightgcn_forward.7} parent=98 // pred_check
            %p267 = pneg %p263
          $region137: #{lightgcn_forward.7} parent=98 // pred_check_branch
            %269 = sbr.rel (%p267) target = $region139
          $region138: #{lightgcn_forward.7} parent=98 // pred_region
            %s270 = sshllo.u32 0, 1
            loop: start=0, step=1, limit=1
            $region140: #{lightgcn_forward.7} parent=138 // loop_pre_header
              _
            $region141: #{lightgcn_forward.7} parent=138 // loop_header
              %s272 = sphi 0, %s276
              %p273 = scmp.ge.s32.totalorder %s272, 1
              %s277 = sphi %s258, %s258
              %s278 = sphi %s259, %s259
            $region142: #{lightgcn_forward.7} parent=138 // loop_header_branch
              %275 = sbr.rel (%p273) target = $region146
            $region143: #{lightgcn_forward.7} parent=138 // loop_body
              %v279 = vld [vmem:[%s277] sm:%s270]
              %280 = vst [vmem:[%s278] sm:%s270] %v279
            $region144: #{lightgcn_forward.7} parent=138 // loop_footer
              %s276 = sadd.s32 1, %s272
            $region145: #{lightgcn_forward.7} parent=138 // loop_footer_branch
              %271 = sbr.rel target = $region141
            $region146: #{lightgcn_forward.7} parent=138 // loop_exit
              _
          $region139: #{lightgcn_forward.7} parent=98 // pred_fallthru
            _
          // Predicated region
          $region158: #{lightgcn_forward.7} parent=98 // pred_check
            _
          $region159: #{lightgcn_forward.7} parent=98 // pred_check_branch
            %304 = sbr.rel (0) target = $region161
          $region160: #{lightgcn_forward.7} parent=98 // pred_region
            %305 = vsyncadd %s261, 16
          $region161: #{lightgcn_forward.7} parent=98 // pred_fallthru
            _
        $region99: #{lightgcn_forward.7} parent=93 // loop_footer
          %s205 = sadd.s32 1, %s201
        $region100: #{lightgcn_forward.7} parent=93 // loop_footer_branch
          %200 = sbr.rel target = $region96
        $region101: #{lightgcn_forward.7} parent=93 // loop_exit
          _
      $region94: #{lightgcn_forward.7} parent=11 // pred_fallthru
        _
      %s306 = smul.u32 %s73, 512
      %s307 = scalar_lea.vmem [#allocation2], %s306
      %v308 = vld [vmem:[%s307] sm:$0xff]
      %v309 = vld [vmem:[%s307 + $0x8] sm:$0xff]
      %v310 = vld [vmem:[%s307 + $0x10] sm:$0xff]
      %v311 = vld [vmem:[%s307 + $0x18] sm:$0xff]
      %v312 = vld [vmem:[%s307 + $0x20] sm:$0xff]
      %v313 = vld [vmem:[%s307 + $0x28] sm:$0xff]
      %v314 = vld [vmem:[%s307 + $0x30] sm:$0xff]
      %v315 = vld [vmem:[%s307 + $0x38] sm:$0xff]
      %v316 = vld [vmem:[%s307 + $0x40] sm:$0xff]
      %v317 = vld [vmem:[%s307 + $0x48] sm:$0xff]
      %v318 = vld [vmem:[%s307 + $0x50] sm:$0xff]
      %v319 = vld [vmem:[%s307 + $0x58] sm:$0xff]
      %v320 = vld [vmem:[%s307 + $0x60] sm:$0xff]
      %v321 = vld [vmem:[%s307 + $0x68] sm:$0xff]
      %v322 = vld [vmem:[%s307 + $0x70] sm:$0xff]
      %v323 = vld [vmem:[%s307 + $0x78] sm:$0xff]
      %v324 = vld [vmem:[%s307 + $0x80] sm:$0xff]
      %v325 = vld [vmem:[%s307 + $0x88] sm:$0xff]
      %v326 = vld [vmem:[%s307 + $0x90] sm:$0xff]
      %v327 = vld [vmem:[%s307 + $0x98] sm:$0xff]
      %v328 = vld [vmem:[%s307 + $0xa0] sm:$0xff]
      %v329 = vld [vmem:[%s307 + $0xa8] sm:$0xff]
      %v330 = vld [vmem:[%s307 + $0xb0] sm:$0xff]
      %v331 = vld [vmem:[%s307 + $0xb8] sm:$0xff]
      %v332 = vld [vmem:[%s307 + $0xc0] sm:$0xff]
      %v333 = vld [vmem:[%s307 + $0xc8] sm:$0xff]
      %v334 = vld [vmem:[%s307 + $0xd0] sm:$0xff]
      %v335 = vld [vmem:[%s307 + $0xd8] sm:$0xff]
      %v336 = vld [vmem:[%s307 + $0xe0] sm:$0xff]
      %v337 = vld [vmem:[%s307 + $0xe8] sm:$0xff]
      %v338 = vld [vmem:[%s307 + $0xf0] sm:$0xff]
      %v339 = vld [vmem:[%s307 + $0xf8] sm:$0xff]
      %v340 = vld [vmem:[%s307 + $0x100] sm:$0xff]
      %v341 = vld [vmem:[%s307 + $0x108] sm:$0xff]
      %v342 = vld [vmem:[%s307 + $0x110] sm:$0xff]
      %v343 = vld [vmem:[%s307 + $0x118] sm:$0xff]
      %v344 = vld [vmem:[%s307 + $0x120] sm:$0xff]
      %v345 = vld [vmem:[%s307 + $0x128] sm:$0xff]
      %v346 = vld [vmem:[%s307 + $0x130] sm:$0xff]
      %v347 = vld [vmem:[%s307 + $0x138] sm:$0xff]
      %v348 = vld [vmem:[%s307 + $0x140] sm:$0xff]
      %v349 = vld [vmem:[%s307 + $0x148] sm:$0xff]
      %v350 = vld [vmem:[%s307 + $0x150] sm:$0xff]
      %v351 = vld [vmem:[%s307 + $0x158] sm:$0xff]
      %v352 = vld [vmem:[%s307 + $0x160] sm:$0xff]
      %v353 = vld [vmem:[%s307 + $0x168] sm:$0xff]
      %v354 = vld [vmem:[%s307 + $0x170] sm:$0xff]
      %v355 = vld [vmem:[%s307 + $0x178] sm:$0xff]
      %v356 = vld [vmem:[%s307 + $0x180] sm:$0xff]
      %v357 = vld [vmem:[%s307 + $0x188] sm:$0xff]
      %v358 = vld [vmem:[%s307 + $0x190] sm:$0xff]
      %v359 = vld [vmem:[%s307 + $0x198] sm:$0xff]
      %v360 = vld [vmem:[%s307 + $0x1a0] sm:$0xff]
      %v361 = vld [vmem:[%s307 + $0x1a8] sm:$0xff]
      %v362 = vld [vmem:[%s307 + $0x1b0] sm:$0xff]
      %v363 = vld [vmem:[%s307 + $0x1b8] sm:$0xff]
      %v364 = vld [vmem:[%s307 + $0x1c0] sm:$0xff]
      %v365 = vld [vmem:[%s307 + $0x1c8] sm:$0xff]
      %v366 = vld [vmem:[%s307 + $0x1d0] sm:$0xff]
      %v367 = vld [vmem:[%s307 + $0x1d8] sm:$0xff]
      %v368 = vld [vmem:[%s307 + $0x1e0] sm:$0xff]
      %v369 = vld [vmem:[%s307 + $0x1e8] sm:$0xff]
      %v370 = vld [vmem:[%s307 + $0x1f0] sm:$0xff]
      %v371 = vld [vmem:[%s307 + $0x1f8] sm:$0xff]
      %s372 = scalar_lea.vmem [#allocation3], %s306
      %v373 = vld [vmem:[%s372] sm:$0xff]
      %v374 = vld [vmem:[%s372 + $0x8] sm:$0xff]
      %v375 = vld [vmem:[%s372 + $0x10] sm:$0xff]
      %v376 = vld [vmem:[%s372 + $0x18] sm:$0xff]
      %v377 = vld [vmem:[%s372 + $0x20] sm:$0xff]
      %v378 = vld [vmem:[%s372 + $0x28] sm:$0xff]
      %v379 = vld [vmem:[%s372 + $0x30] sm:$0xff]
      %v380 = vld [vmem:[%s372 + $0x38] sm:$0xff]
      %v381 = vld [vmem:[%s372 + $0x40] sm:$0xff]
      %v382 = vld [vmem:[%s372 + $0x48] sm:$0xff]
      %v383 = vld [vmem:[%s372 + $0x50] sm:$0xff]
      %v384 = vld [vmem:[%s372 + $0x58] sm:$0xff]
      %v385 = vld [vmem:[%s372 + $0x60] sm:$0xff]
      %v386 = vld [vmem:[%s372 + $0x68] sm:$0xff]
      %v387 = vld [vmem:[%s372 + $0x70] sm:$0xff]
      %v388 = vld [vmem:[%s372 + $0x78] sm:$0xff]
      %v389 = vld [vmem:[%s372 + $0x80] sm:$0xff]
      %v390 = vld [vmem:[%s372 + $0x88] sm:$0xff]
      %v391 = vld [vmem:[%s372 + $0x90] sm:$0xff]
      %v392 = vld [vmem:[%s372 + $0x98] sm:$0xff]
      %v393 = vld [vmem:[%s372 + $0xa0] sm:$0xff]
      %v394 = vld [vmem:[%s372 + $0xa8] sm:$0xff]
      %v395 = vld [vmem:[%s372 + $0xb0] sm:$0xff]
      %v396 = vld [vmem:[%s372 + $0xb8] sm:$0xff]
      %v397 = vld [vmem:[%s372 + $0xc0] sm:$0xff]
      %v398 = vld [vmem:[%s372 + $0xc8] sm:$0xff]
      %v399 = vld [vmem:[%s372 + $0xd0] sm:$0xff]
      %v400 = vld [vmem:[%s372 + $0xd8] sm:$0xff]
      %v401 = vld [vmem:[%s372 + $0xe0] sm:$0xff]
      %v402 = vld [vmem:[%s372 + $0xe8] sm:$0xff]
      %v403 = vld [vmem:[%s372 + $0xf0] sm:$0xff]
      %v404 = vld [vmem:[%s372 + $0xf8] sm:$0xff]
      %v405 = vld [vmem:[%s372 + $0x100] sm:$0xff]
      %v406 = vld [vmem:[%s372 + $0x108] sm:$0xff]
      %v407 = vld [vmem:[%s372 + $0x110] sm:$0xff]
      %v408 = vld [vmem:[%s372 + $0x118] sm:$0xff]
      %v409 = vld [vmem:[%s372 + $0x120] sm:$0xff]
      %v410 = vld [vmem:[%s372 + $0x128] sm:$0xff]
      %v411 = vld [vmem:[%s372 + $0x130] sm:$0xff]
      %v412 = vld [vmem:[%s372 + $0x138] sm:$0xff]
      %v413 = vld [vmem:[%s372 + $0x140] sm:$0xff]
      %v414 = vld [vmem:[%s372 + $0x148] sm:$0xff]
      %v415 = vld [vmem:[%s372 + $0x150] sm:$0xff]
      %v416 = vld [vmem:[%s372 + $0x158] sm:$0xff]
      %v417 = vld [vmem:[%s372 + $0x160] sm:$0xff]
      %v418 = vld [vmem:[%s372 + $0x168] sm:$0xff]
      %v419 = vld [vmem:[%s372 + $0x170] sm:$0xff]
      %v420 = vld [vmem:[%s372 + $0x178] sm:$0xff]
      %v421 = vld [vmem:[%s372 + $0x180] sm:$0xff]
      %v422 = vld [vmem:[%s372 + $0x188] sm:$0xff]
      %v423 = vld [vmem:[%s372 + $0x190] sm:$0xff]
      %v424 = vld [vmem:[%s372 + $0x198] sm:$0xff]
      %v425 = vld [vmem:[%s372 + $0x1a0] sm:$0xff]
      %v426 = vld [vmem:[%s372 + $0x1a8] sm:$0xff]
      %v427 = vld [vmem:[%s372 + $0x1b0] sm:$0xff]
      %v428 = vld [vmem:[%s372 + $0x1b8] sm:$0xff]
      %v429 = vld [vmem:[%s372 + $0x1c0] sm:$0xff]
      %v430 = vld [vmem:[%s372 + $0x1c8] sm:$0xff]
      %v431 = vld [vmem:[%s372 + $0x1d0] sm:$0xff]
      %v432 = vld [vmem:[%s372 + $0x1d8] sm:$0xff]
      %v433 = vld [vmem:[%s372 + $0x1e0] sm:$0xff]
      %v434 = vld [vmem:[%s372 + $0x1e8] sm:$0xff]
      %v435 = vld [vmem:[%s372 + $0x1f0] sm:$0xff]
      %v436 = vld [vmem:[%s372 + $0x1f8] sm:$0xff]
      %v437 = vmul.f32 %v308, %v373
      %v438 = vmul.f32 %v309, %v374
      %v439 = vmul.f32 %v310, %v375
      %v440 = vmul.f32 %v311, %v376
      %v441 = vmul.f32 %v312, %v377
      %v442 = vmul.f32 %v313, %v378
      %v443 = vmul.f32 %v314, %v379
      %v444 = vmul.f32 %v315, %v380
      %v445 = vmul.f32 %v316, %v381
      %v446 = vmul.f32 %v317, %v382
      %v447 = vmul.f32 %v318, %v383
      %v448 = vmul.f32 %v319, %v384
      %v449 = vmul.f32 %v320, %v385
      %v450 = vmul.f32 %v321, %v386
      %v451 = vmul.f32 %v322, %v387
      %v452 = vmul.f32 %v323, %v388
      %v453 = vmul.f32 %v324, %v389
      %v454 = vmul.f32 %v325, %v390
      %v455 = vmul.f32 %v326, %v391
      %v456 = vmul.f32 %v327, %v392
      %v457 = vmul.f32 %v328, %v393
      %v458 = vmul.f32 %v329, %v394
      %v459 = vmul.f32 %v330, %v395
      %v460 = vmul.f32 %v331, %v396
      %v461 = vmul.f32 %v332, %v397
      %v462 = vmul.f32 %v333, %v398
      %v463 = vmul.f32 %v334, %v399
      %v464 = vmul.f32 %v335, %v400
      %v465 = vmul.f32 %v336, %v401
      %v466 = vmul.f32 %v337, %v402
      %v467 = vmul.f32 %v338, %v403
      %v468 = vmul.f32 %v339, %v404
      %v469 = vmul.f32 %v340, %v405
      %v470 = vmul.f32 %v341, %v406
      %v471 = vmul.f32 %v342, %v407
      %v472 = vmul.f32 %v343, %v408
      %v473 = vmul.f32 %v344, %v409
      %v474 = vmul.f32 %v345, %v410
      %v475 = vmul.f32 %v346, %v411
      %v476 = vmul.f32 %v347, %v412
      %v477 = vmul.f32 %v348, %v413
      %v478 = vmul.f32 %v349, %v414
      %v479 = vmul.f32 %v350, %v415
      %v480 = vmul.f32 %v351, %v416
      %v481 = vmul.f32 %v352, %v417
      %v482 = vmul.f32 %v353, %v418
      %v483 = vmul.f32 %v354, %v419
      %v484 = vmul.f32 %v355, %v420
      %v485 = vmul.f32 %v356, %v421
      %v486 = vmul.f32 %v357, %v422
      %v487 = vmul.f32 %v358, %v423
      %v488 = vmul.f32 %v359, %v424
      %v489 = vmul.f32 %v360, %v425
      %v490 = vmul.f32 %v361, %v426
      %v491 = vmul.f32 %v362, %v427
      %v492 = vmul.f32 %v363, %v428
      %v493 = vmul.f32 %v364, %v429
      %v494 = vmul.f32 %v365, %v430
      %v495 = vmul.f32 %v366, %v431
      %v496 = vmul.f32 %v367, %v432
      %v497 = vmul.f32 %v368, %v433
      %v498 = vmul.f32 %v369, %v434
      %v499 = vmul.f32 %v370, %v435
      %v500 = vmul.f32 %v371, %v436
      %501 = vadd.xlane.f32.xlu0 %v437
      %v502 = vpop.xlane.xlu0 %501
      %503 = vadd.xlane.f32.xlu0 %v438
      %v504 = vpop.xlane.xlu0 %503
      %505 = vadd.xlane.f32.xlu0 %v439
      %v506 = vpop.xlane.xlu0 %505
      %507 = vadd.xlane.f32.xlu0 %v440
      %v508 = vpop.xlane.xlu0 %507
      %509 = vadd.xlane.f32.xlu0 %v441
      %v510 = vpop.xlane.xlu0 %509
      %511 = vadd.xlane.f32.xlu0 %v442
      %v512 = vpop.xlane.xlu0 %511
      %513 = vadd.xlane.f32.xlu0 %v443
      %v514 = vpop.xlane.xlu0 %513
      %515 = vadd.xlane.f32.xlu0 %v444
      %v516 = vpop.xlane.xlu0 %515
      %517 = vadd.xlane.f32.xlu0 %v445
      %v518 = vpop.xlane.xlu0 %517
      %519 = vadd.xlane.f32.xlu0 %v446
      %v520 = vpop.xlane.xlu0 %519
      %521 = vadd.xlane.f32.xlu0 %v447
      %v522 = vpop.xlane.xlu0 %521
      %523 = vadd.xlane.f32.xlu0 %v448
      %v524 = vpop.xlane.xlu0 %523
      %525 = vadd.xlane.f32.xlu0 %v449
      %v526 = vpop.xlane.xlu0 %525
      %527 = vadd.xlane.f32.xlu0 %v450
      %v528 = vpop.xlane.xlu0 %527
      %529 = vadd.xlane.f32.xlu0 %v451
      %v530 = vpop.xlane.xlu0 %529
      %531 = vadd.xlane.f32.xlu0 %v452
      %v532 = vpop.xlane.xlu0 %531
      %533 = vadd.xlane.f32.xlu0 %v453
      %v534 = vpop.xlane.xlu0 %533
      %535 = vadd.xlane.f32.xlu0 %v454
      %v536 = vpop.xlane.xlu0 %535
      %537 = vadd.xlane.f32.xlu0 %v455
      %v538 = vpop.xlane.xlu0 %537
      %539 = vadd.xlane.f32.xlu0 %v456
      %v540 = vpop.xlane.xlu0 %539
      %541 = vadd.xlane.f32.xlu0 %v457
      %v542 = vpop.xlane.xlu0 %541
      %543 = vadd.xlane.f32.xlu0 %v458
      %v544 = vpop.xlane.xlu0 %543
      %545 = vadd.xlane.f32.xlu0 %v459
      %v546 = vpop.xlane.xlu0 %545
      %547 = vadd.xlane.f32.xlu0 %v460
      %v548 = vpop.xlane.xlu0 %547
      %549 = vadd.xlane.f32.xlu0 %v461
      %v550 = vpop.xlane.xlu0 %549
      %551 = vadd.xlane.f32.xlu0 %v462
      %v552 = vpop.xlane.xlu0 %551
      %553 = vadd.xlane.f32.xlu0 %v463
      %v554 = vpop.xlane.xlu0 %553
      %555 = vadd.xlane.f32.xlu0 %v464
      %v556 = vpop.xlane.xlu0 %555
      %557 = vadd.xlane.f32.xlu0 %v465
      %v558 = vpop.xlane.xlu0 %557
      %559 = vadd.xlane.f32.xlu0 %v466
      %v560 = vpop.xlane.xlu0 %559
      %561 = vadd.xlane.f32.xlu0 %v467
      %v562 = vpop.xlane.xlu0 %561
      %563 = vadd.xlane.f32.xlu0 %v468
      %v564 = vpop.xlane.xlu0 %563
      %565 = vadd.xlane.f32.xlu0 %v469
      %v566 = vpop.xlane.xlu0 %565
      %567 = vadd.xlane.f32.xlu0 %v470
      %v568 = vpop.xlane.xlu0 %567
      %569 = vadd.xlane.f32.xlu0 %v471
      %v570 = vpop.xlane.xlu0 %569
      %571 = vadd.xlane.f32.xlu0 %v472
      %v572 = vpop.xlane.xlu0 %571
      %573 = vadd.xlane.f32.xlu0 %v473
      %v574 = vpop.xlane.xlu0 %573
      %575 = vadd.xlane.f32.xlu0 %v474
      %v576 = vpop.xlane.xlu0 %575
      %577 = vadd.xlane.f32.xlu0 %v475
      %v578 = vpop.xlane.xlu0 %577
      %579 = vadd.xlane.f32.xlu0 %v476
      %v580 = vpop.xlane.xlu0 %579
      %581 = vadd.xlane.f32.xlu0 %v477
      %v582 = vpop.xlane.xlu0 %581
      %583 = vadd.xlane.f32.xlu0 %v478
      %v584 = vpop.xlane.xlu0 %583
      %585 = vadd.xlane.f32.xlu0 %v479
      %v586 = vpop.xlane.xlu0 %585
      %587 = vadd.xlane.f32.xlu0 %v480
      %v588 = vpop.xlane.xlu0 %587
      %589 = vadd.xlane.f32.xlu0 %v481
      %v590 = vpop.xlane.xlu0 %589
      %591 = vadd.xlane.f32.xlu0 %v482
      %v592 = vpop.xlane.xlu0 %591
      %593 = vadd.xlane.f32.xlu0 %v483
      %v594 = vpop.xlane.xlu0 %593
      %595 = vadd.xlane.f32.xlu0 %v484
      %v596 = vpop.xlane.xlu0 %595
      %597 = vadd.xlane.f32.xlu0 %v485
      %v598 = vpop.xlane.xlu0 %597
      %599 = vadd.xlane.f32.xlu0 %v486
      %v600 = vpop.xlane.xlu0 %599
      %601 = vadd.xlane.f32.xlu0 %v487
      %v602 = vpop.xlane.xlu0 %601
      %603 = vadd.xlane.f32.xlu0 %v488
      %v604 = vpop.xlane.xlu0 %603
      %605 = vadd.xlane.f32.xlu0 %v489
      %v606 = vpop.xlane.xlu0 %605
      %607 = vadd.xlane.f32.xlu0 %v490
      %v608 = vpop.xlane.xlu0 %607
      %609 = vadd.xlane.f32.xlu0 %v491
      %v610 = vpop.xlane.xlu0 %609
      %611 = vadd.xlane.f32.xlu0 %v492
      %v612 = vpop.xlane.xlu0 %611
      %613 = vadd.xlane.f32.xlu0 %v493
      %v614 = vpop.xlane.xlu0 %613
      %615 = vadd.xlane.f32.xlu0 %v494
      %v616 = vpop.xlane.xlu0 %615
      %617 = vadd.xlane.f32.xlu0 %v495
      %v618 = vpop.xlane.xlu0 %617
      %619 = vadd.xlane.f32.xlu0 %v496
      %v620 = vpop.xlane.xlu0 %619
      %621 = vadd.xlane.f32.xlu0 %v497
      %v622 = vpop.xlane.xlu0 %621
      %623 = vadd.xlane.f32.xlu0 %v498
      %v624 = vpop.xlane.xlu0 %623
      %625 = vadd.xlane.f32.xlu0 %v499
      %v626 = vpop.xlane.xlu0 %625
      %627 = vadd.xlane.f32.xlu0 %v500
      %v628 = vpop.xlane.xlu0 %627
      %vm629 = vcmask 7168
      %630 = vst.msk [vmem:[%s60] sm:$0xff] %vm629, %v502
      %631 = vst.msk [vmem:[%s60 + $0x8] sm:$0xff] %vm629, %v504
      %632 = vst.msk [vmem:[%s60 + $0x10] sm:$0xff] %vm629, %v506
      %633 = vst.msk [vmem:[%s60 + $0x18] sm:$0xff] %vm629, %v508
      %634 = vst.msk [vmem:[%s60 + $0x20] sm:$0xff] %vm629, %v510
      %635 = vst.msk [vmem:[%s60 + $0x28] sm:$0xff] %vm629, %v512
      %636 = vst.msk [vmem:[%s60 + $0x30] sm:$0xff] %vm629, %v514
      %637 = vst.msk [vmem:[%s60 + $0x38] sm:$0xff] %vm629, %v516
      %638 = vst.msk [vmem:[%s60 + $0x40] sm:$0xff] %vm629, %v518
      %639 = vst.msk [vmem:[%s60 + $0x48] sm:$0xff] %vm629, %v520
      %640 = vst.msk [vmem:[%s60 + $0x50] sm:$0xff] %vm629, %v522
      %641 = vst.msk [vmem:[%s60 + $0x58] sm:$0xff] %vm629, %v524
      %642 = vst.msk [vmem:[%s60 + $0x60] sm:$0xff] %vm629, %v526
      %643 = vst.msk [vmem:[%s60 + $0x68] sm:$0xff] %vm629, %v528
      %644 = vst.msk [vmem:[%s60 + $0x70] sm:$0xff] %vm629, %v530
      %645 = vst.msk [vmem:[%s60 + $0x78] sm:$0xff] %vm629, %v532
      %646 = vst.msk [vmem:[%s60 + $0x80] sm:$0xff] %vm629, %v534
      %647 = vst.msk [vmem:[%s60 + $0x88] sm:$0xff] %vm629, %v536
      %648 = vst.msk [vmem:[%s60 + $0x90] sm:$0xff] %vm629, %v538
      %649 = vst.msk [vmem:[%s60 + $0x98] sm:$0xff] %vm629, %v540
      %650 = vst.msk [vmem:[%s60 + $0xa0] sm:$0xff] %vm629, %v542
      %651 = vst.msk [vmem:[%s60 + $0xa8] sm:$0xff] %vm629, %v544
      %652 = vst.msk [vmem:[%s60 + $0xb0] sm:$0xff] %vm629, %v546
      %653 = vst.msk [vmem:[%s60 + $0xb8] sm:$0xff] %vm629, %v548
      %654 = vst.msk [vmem:[%s60 + $0xc0] sm:$0xff] %vm629, %v550
      %655 = vst.msk [vmem:[%s60 + $0xc8] sm:$0xff] %vm629, %v552
      %656 = vst.msk [vmem:[%s60 + $0xd0] sm:$0xff] %vm629, %v554
      %657 = vst.msk [vmem:[%s60 + $0xd8] sm:$0xff] %vm629, %v556
      %658 = vst.msk [vmem:[%s60 + $0xe0] sm:$0xff] %vm629, %v558
      %659 = vst.msk [vmem:[%s60 + $0xe8] sm:$0xff] %vm629, %v560
      %660 = vst.msk [vmem:[%s60 + $0xf0] sm:$0xff] %vm629, %v562
      %661 = vst.msk [vmem:[%s60 + $0xf8] sm:$0xff] %vm629, %v564
      %662 = vst.msk [vmem:[%s60 + $0x100] sm:$0xff] %vm629, %v566
      %663 = vst.msk [vmem:[%s60 + $0x108] sm:$0xff] %vm629, %v568
      %664 = vst.msk [vmem:[%s60 + $0x110] sm:$0xff] %vm629, %v570
      %665 = vst.msk [vmem:[%s60 + $0x118] sm:$0xff] %vm629, %v572
      %666 = vst.msk [vmem:[%s60 + $0x120] sm:$0xff] %vm629, %v574
      %667 = vst.msk [vmem:[%s60 + $0x128] sm:$0xff] %vm629, %v576
      %668 = vst.msk [vmem:[%s60 + $0x130] sm:$0xff] %vm629, %v578
      %669 = vst.msk [vmem:[%s60 + $0x138] sm:$0xff] %vm629, %v580
      %670 = vst.msk [vmem:[%s60 + $0x140] sm:$0xff] %vm629, %v582
      %671 = vst.msk [vmem:[%s60 + $0x148] sm:$0xff] %vm629, %v584
      %672 = vst.msk [vmem:[%s60 + $0x150] sm:$0xff] %vm629, %v586
      %673 = vst.msk [vmem:[%s60 + $0x158] sm:$0xff] %vm629, %v588
      %674 = vst.msk [vmem:[%s60 + $0x160] sm:$0xff] %vm629, %v590
      %675 = vst.msk [vmem:[%s60 + $0x168] sm:$0xff] %vm629, %v592
      %676 = vst.msk [vmem:[%s60 + $0x170] sm:$0xff] %vm629, %v594
      %677 = vst.msk [vmem:[%s60 + $0x178] sm:$0xff] %vm629, %v596
      %678 = vst.msk [vmem:[%s60 + $0x180] sm:$0xff] %vm629, %v598
      %679 = vst.msk [vmem:[%s60 + $0x188] sm:$0xff] %vm629, %v600
      %680 = vst.msk [vmem:[%s60 + $0x190] sm:$0xff] %vm629, %v602
      %681 = vst.msk [vmem:[%s60 + $0x198] sm:$0xff] %vm629, %v604
      %682 = vst.msk [vmem:[%s60 + $0x1a0] sm:$0xff] %vm629, %v606
      %683 = vst.msk [vmem:[%s60 + $0x1a8] sm:$0xff] %vm629, %v608
      %684 = vst.msk [vmem:[%s60 + $0x1b0] sm:$0xff] %vm629, %v610
      %685 = vst.msk [vmem:[%s60 + $0x1b8] sm:$0xff] %vm629, %v612
      %686 = vst.msk [vmem:[%s60 + $0x1c0] sm:$0xff] %vm629, %v614
      %687 = vst.msk [vmem:[%s60 + $0x1c8] sm:$0xff] %vm629, %v616
      %688 = vst.msk [vmem:[%s60 + $0x1d0] sm:$0xff] %vm629, %v618
      %689 = vst.msk [vmem:[%s60 + $0x1d8] sm:$0xff] %vm629, %v620
      %690 = vst.msk [vmem:[%s60 + $0x1e0] sm:$0xff] %vm629, %v622
      %691 = vst.msk [vmem:[%s60 + $0x1e8] sm:$0xff] %vm629, %v624
      %692 = vst.msk [vmem:[%s60 + $0x1f0] sm:$0xff] %vm629, %v626
      %693 = vst.msk [vmem:[%s60 + $0x1f8] sm:$0xff] %vm629, %v628
      %s694 = smul.u32 64, %s19
      %p695 = scmp.lt.s32.totalorder %s694, 127
      %s696 = scalar_select %p695, %s694, 127
      %s697 = smul.addr %s696, 8
      %s698 = scalar_lea.vmem %s3, %s697
      // Predicated region
      $region162: #{lightgcn_forward.7} parent=11 // pred_check
        %p699 = pneg %p34
      $region163: #{lightgcn_forward.7} parent=11 // pred_check_branch
        %701 = sbr.rel (%p699) target = $region165
      $region164: #{lightgcn_forward.7} parent=11 // pred_region
        %s702 = smul.u32 64, %s19
      $region165: #{lightgcn_forward.7} parent=11 // pred_fallthru
        _
    $region12: #{lightgcn_forward.7} parent=5 // pred_fallthru
      _
    %p703 = scmp.le.s32.totalorder 1, %s19
    // Predicated region
    $region166: #{lightgcn_forward.7} parent=5 // pred_check
      %p704 = pneg %p703
    $region167: #{lightgcn_forward.7} parent=5 // pred_check_branch
      %706 = sbr.rel (%p704) target = $region169
    $region168: #{lightgcn_forward.7} parent=5 // pred_region
      %s707 = ssub.s32 %s19, 1
      // Predicated region
      $region170: #{lightgcn_forward.7} parent=168 // pred_check
        %p708 = pneg %p40
      $region171: #{lightgcn_forward.7} parent=168 // pred_check_branch
        %710 = sbr.rel (%p708) target = $region173
      $region172: #{lightgcn_forward.7} parent=168 // pred_region
        %s711 = smul.u32 64, %s24
        %p712 = scmp.lt.s32.totalorder %s711, 127
        %s713 = scalar_select %p712, %s711, 127
        %s714 = smul.addr %s713, 8
        %s715 = scalar_lea.vmem %s3, %s714
      $region173: #{lightgcn_forward.7} parent=168 // pred_fallthru
        _
    $region169: #{lightgcn_forward.7} parent=5 // pred_fallthru
      _
  $region6: #{lightgcn_forward.7} parent=0 // loop_footer
    %s23 = sadd.s32 1, %s19
  $region7: #{lightgcn_forward.7} parent=0 // loop_footer_branch
    %18 = sbr.rel target = $region3
  $region8: #{lightgcn_forward.7} parent=0 // loop_exit
    _
  %716 = vsyncmov [#allocation4]
  %s717 = vpop.sfrf %716
  %p718 = scmp.eq.s32.totalorder %s717, 0
  %p719 = pneg %p718
  %721 = shalt.err (%p719)
  %s722 = scalar_lea.sflag [#allocation4], 1
  %723 = vsyncmov %s722
  %s724 = vpop.sfrf %723
  %p725 = scmp.eq.s32.totalorder %s724, 0
  %p726 = pneg %p725
  %728 = shalt.err (%p726)
  %s729 = scalar_lea.sflag [#allocation4], 2
  %730 = vsyncmov %s729
  %s731 = vpop.sfrf %730
  %p732 = scmp.eq.s32.totalorder %s731, 0
  %p733 = pneg %p732
  %735 = shalt.err (%p733)
  %s736 = scalar_lea.sflag [#allocation4], 3
  %737 = vsyncmov %s736
  %s738 = vpop.sfrf %737
  %p739 = scmp.eq.s32.totalorder %s738, 0
  %p740 = pneg %p739
  %742 = shalt.err (%p740)

</llo_original>
